<compile_context>
chip_gen: v7x
topology: tpu7x:2x2x1
jax: 0.10.0
libtpu: 0.0.40
codegen_flags: <defaults>
</compile_context>

<pallas_src>
import functools

import jax
import jax.numpy as jnp
from jax.experimental import pallas as pl
from jax.experimental.pallas import tpu as pltpu

EPS = 1e-5  # PyTorch BatchNorm default eps


# --------------------------------------------------------------------------
# shared helpers
# --------------------------------------------------------------------------
def _bn_scale_shift(stats, gamma, beta, nrows):
    """Per-channel affine (scale, shift) so that BN(z) == z * scale + shift.
    `stats` is a (2, C) array of (sum, sum-of-squares) over all nrows points."""
    mu = stats[0:1, :] * (1.0 / nrows)
    var = jnp.maximum(stats[1:2, :] * (1.0 / nrows) - mu * mu, 0.0)
    scale = gamma * jax.lax.rsqrt(var + EPS)
    shift = beta - mu * scale
    return scale, shift


def _accum_stats(stats_ref, z):
    """Accumulate per-channel (sum, sum-of-squares) across row tiles (grid axis 0)."""
    @pl.when(pl.program_id(0) == 0)
    def _():
        stats_ref[...] = jnp.zeros_like(stats_ref)

    # Two separate row writes (no concatenate -> no sublane shuffle).
    stats_ref[0:1, :] += jnp.sum(z, axis=0, keepdims=True)
    stats_ref[1:2, :] += jnp.sum(z * z, axis=0, keepdims=True)


# --------------------------------------------------------------------------
# kernel bodies
# --------------------------------------------------------------------------
def _conv1_stats_kernel(x_ref, w_ref, b_ref, stats_ref):
    """conv1 on the VPU (cin = 3 -> three broadcast FMAs); BN1 stats only."""
    x = x_ref[...]                                           # (T, 3) f32
    z = (x[:, 0:1] * w_ref[0:1, :]
         + x[:, 1:2] * w_ref[1:2, :]
         + x[:, 2:3] * w_ref[2:3, :]
         + b_ref[...])                                       # (T, 64) f32
    _accum_stats(stats_ref, z)


def _conv1_bn_relu_conv2_kernel(nrows, x_ref, w1_ref, b1_ref, s1_ref, g1_ref,
                                be1_ref, w2_ref, b2_ref, z2_ref, s2_ref):
    """Recompute conv1 (cheap, avoids materializing z1), bn1+relu with GLOBAL
    batch stats, conv2 on the MXU, emit bf16 z2 + BN2 stats (from f32 z2)."""
    x = x_ref[...]
    z1 = (x[:, 0:1] * w1_ref[0:1, :]
          + x[:, 1:2] * w1_ref[1:2, :]
          + x[:, 2:3] * w1_ref[2:3, :]
          + b1_ref[...])
    scale, shift = _bn_scale_shift(s1_ref[...], g1_ref[...], be1_ref[...], nrows)
    h = jnp.maximum(z1 * scale + shift, 0.0)                 # f32 VPU math
    z2 = jnp.dot(h.astype(jnp.bfloat16), w2_ref[...],
                 preferred_element_type=jnp.float32) + b2_ref[...]
    z2_ref[...] = z2.astype(z2_ref.dtype)                    # bf16 to HBM
    _accum_stats(s2_ref, z2)                                 # f32 stats


def _bn_relu_matmul_stats_kernel(nrows, z_in_ref, s_in_ref, g_ref, be_ref,
                                 w_ref, b_ref, z_out_ref, s_out_ref):
    """bn_k (global stats) + relu, next point-wise linear on the MXU,
    bf16 activation out + new BN stats (from the f32 pre-cast activation)."""
    scale, shift = _bn_scale_shift(s_in_ref[...], g_ref[...], be_ref[...], nrows)
    h = jnp.maximum(z_in_ref[...].astype(jnp.float32) * scale + shift, 0.0)
    z = jnp.dot(h.astype(jnp.bfloat16), w_ref[...],
                preferred_element_type=jnp.float32) + b_ref[...]
    z_out_ref[...] = z.astype(z_out_ref.dtype)
    _accum_stats(s_out_ref, z)


def _bn_relu_conv5_pool_kernel(nrows, z4_ref, s4_ref, g4_ref, be4_ref, w5_ref,
                               b5_ref, s5_ref, pmax_ref, pmin_ref):
    """bn4+relu+conv5 fused with the global max-pool: never writes z5.
    Accumulates per-cloud channel-wise max/min of the pre-BN z5 and per-cloud
    BN5 stats (summed over clouds in the head kernel)."""
    scale, shift = _bn_scale_shift(s4_ref[...], g4_ref[...], be4_ref[...], nrows)
    h = jnp.maximum(z4_ref[...].astype(jnp.float32) * scale + shift, 0.0)
    z5 = jnp.dot(h.astype(jnp.bfloat16), w5_ref[...],
                 preferred_element_type=jnp.float32) + b5_ref[...]   # (T,1024) f32

    @pl.when(pl.program_id(1) == 0)    # first point tile of this cloud
    def _():
        s5_ref[...] = jnp.zeros_like(s5_ref)
        # Pre-BN z5 can be negative -> identities must be +/- inf, not 0.
        pmax_ref[...] = jnp.full(pmax_ref.shape, -jnp.inf, pmax_ref.dtype)
        pmin_ref[...] = jnp.full(pmin_ref.shape, jnp.inf, pmin_ref.dtype)

    s5_ref[0:1, :] += jnp.sum(z5, axis=0, keepdims=True)
    s5_ref[1:2, :] += jnp.sum(z5 * z5, axis=0, keepdims=True)
    pmax_ref[...] = jnp.maximum(pmax_ref[...], jnp.max(z5, axis=0, keepdims=True))
    pmin_ref[...] = jnp.minimum(pmin_ref[...], jnp.min(z5, axis=0, keepdims=True))


def _head_kernel(nrows, pmax_ref, pmin_ref, s5_ref, g5_ref, be5_ref,
                 w6_ref, b6_ref, g6_ref, be6_ref, out_ref):
    """bn5 affine on the pooled extrema (+relu), mlp1, bn6 over batch, relu."""
    stats5 = jnp.sum(s5_ref[...], axis=0)                    # (2,1024) global
    scale, shift = _bn_scale_shift(stats5, g5_ref[...], be5_ref[...], nrows)
    pmax = pmax_ref[...][:, 0, :]                            # (B,1024)
    pmin = pmin_ref[...][:, 0, :]
    # max_n(z*scale+shift) = scale*max_n(z)+shift if scale>=0 else scale*min_n(z)+shift.
    pooled = jnp.maximum(
        jnp.where(scale >= 0.0, pmax * scale, pmin * scale) + shift, 0.0)
    z = jnp.dot(pooled.astype(jnp.bfloat16), w6_ref[...],
                preferred_element_type=jnp.float32) + b6_ref[...]
    mu = jnp.mean(z, axis=0, keepdims=True)
    var = jnp.mean((z - mu) * (z - mu), axis=0, keepdims=True)
    zn = (z - mu) * jax.lax.rsqrt(var + EPS)
    out_ref[...] = jnp.maximum(zn * g6_ref[...] + be6_ref[...], 0.0)


# --------------------------------------------------------------------------
# parameters / wrapper
# --------------------------------------------------------------------------
def init_params(key, emb_dim):
    """Init mirroring the module's layer shapes.  Conv1d(cin,cout,1) weight is
    stored as (cin,cout) so the kernel computes x @ W.  bn5 gets a mixed-sign
    gamma to exercise the fused max/min pooling path; other gammas are 1."""
    dims = [(3, 64), (64, 64), (64, 64), (64, 128), (128, 1024),
            (1024, emb_dim)]
    params = []
    for li, (cin, cout) in enumerate(dims):
        key, kw, kb, kg, kbe = jax.random.split(key, 5)
        bound = 1.0 / (cin ** 0.5)
        W = jax.random.uniform(kw, (cin, cout), jnp.float32, -bound, bound)
        b = jax.random.uniform(kb, (1, cout), jnp.float32, -bound, bound)
        if li == 4:   # bn5: exercise negative-gamma handling in the pool fusion
            gamma = jax.random.uniform(kg, (1, cout), jnp.float32, -1.0, 1.0)
        else:
            gamma = jnp.ones((1, cout), jnp.float32)
        beta = jax.random.uniform(kbe, (1, cout), jnp.float32, -0.1, 0.1)
        params += [W, b, gamma, beta]
    return params


def _pick_tile(n, cap):
    """Largest tile (multiple of 8, <= cap) dividing n."""
    for cand in (2048, 1024, 512, 256, 128, 64, 32, 16, 8):
        if cand <= cap and n % cand == 0:
            return cand
    # TODO(synk): support ragged sizes (not a multiple of 8) via masked last tile.
    raise ValueError("size must be a multiple of 8")


def pointnet2_forward(x, params, tile_rows=None, pool_tile_rows=None):
    B, N, cin = x.shape
    assert cin == 3
    R = B * N
    # Streamed stages 1-4 tile the flat B*N axis (decoupled from N);
    # only the fused max-pool stage needs cloud-aligned tiles.
    if tile_rows is None:
        tile_rows = _pick_tile(R, cap=2048)
    if pool_tile_rows is None:
        pool_tile_rows = _pick_tile(N, cap=1024)   # keep 1024-ch working set small (v7x VMEM)
    assert R % tile_rows == 0 and tile_rows % 8 == 0
    assert N % pool_tile_rows == 0 and pool_tile_rows % 8 == 0
    nt = R // tile_rows            # row tiles over all B*N points (stages 1-4)
    npb = N // pool_tile_rows      # point tiles per cloud (stage 5)

    (W1, b1, g1, be1, W2, b2, g2, be2, W3, b3, g3, be3,
     W4, b4, g4, be4, W5, b5, g5, be5, W6, b6, g6, be6) = params

    x_flat = x.reshape(R, 3).astype(jnp.float32)

    # 32 MiB is comfortable on every generation (v7x physical VMEM is 64 MiB);
    # working sets here are far below it even at 2048-row tiles.
    cp_rows = pltpu.CompilerParams(dimension_semantics=("arbitrary",),
                                   vmem_limit_bytes=32 * 1024 * 1024)
    # TODO(synk): v7x megacore -- add a leading size-2 "parallel" grid axis with
    # per-core partial stats for stages 1-4 (stage 5 is already "parallel" over clouds).

    def row_spec(c):
        return pl.BlockSpec((tile_rows, c), lambda i: (i, 0))

    def const_spec(shape):
        return pl.BlockSpec(shape, lambda i: (0, 0))

    # ---- Stage 1: conv1 (VPU) -> BN1 stats only (z1 never materialized). ----
    s1 = pl.pallas_call(
        _conv1_stats_kernel,
        grid=(nt,),
        in_specs=[row_spec(3), const_spec((3, 64)), const_spec((1, 64))],
        out_specs=const_spec((2, 64)),
        out_shape=jax.ShapeDtypeStruct((2, 64), jnp.float32),
        compiler_params=cp_rows,
    )(x_flat, W1, b1)

    # ---- Stage 2: recompute conv1, bn1+relu, conv2 -> z2 (bf16) + stats. ----
    z2, s2 = pl.pallas_call(
        functools.partial(_conv1_bn_relu_conv2_kernel, R),
        grid=(nt,),
        in_specs=[row_spec(3), const_spec((3, 64)), const_spec((1, 64)),
                  const_spec((2, 64)), const_spec((1, 64)), const_spec((1, 64)),
                  const_spec((64, 64)), const_spec((1, 64))],
        out_specs=[row_spec(64), const_spec((2, 64))],
        out_shape=[jax.ShapeDtypeStruct((R, 64), jnp.bfloat16),
                   jax.ShapeDtypeStruct((2, 64), jnp.float32)],
        compiler_params=cp_rows,
    )(x_flat, W1, b1, s1, g1, be1, W2.astype(jnp.bfloat16), b2)

    # ---- Stages 3-4: bn_k + relu + conv_{k+1} -> bf16 activation + stats. ----
    def mid_stage(z_in, s_in, gamma, beta, W, b):
        cin_, cout = W.shape
        return pl.pallas_call(
            functools.partial(_bn_relu_matmul_stats_kernel, R),
            grid=(nt,),
            in_specs=[row_spec(cin_), const_spec((2, cin_)),
                      const_spec((1, cin_)), const_spec((1, cin_)),
                      const_spec((cin_, cout)), const_spec((1, cout))],
            out_specs=[row_spec(cout), const_spec((2, cout))],
            out_shape=[jax.ShapeDtypeStruct((R, cout), jnp.bfloat16),
                       jax.ShapeDtypeStruct((2, cout), jnp.float32)],
            compiler_params=cp_rows,
        )(z_in, s_in, gamma, beta, W.astype(jnp.bfloat16), b)

    z3, s3 = mid_stage(z2, s2, g2, be2, W3, b3)   # bn2+relu+conv3
    z4, s4 = mid_stage(z3, s3, g3, be3, W4, b4)   # bn3+relu+conv4

    # ---- Stage 5: bn4+relu+conv5 fused with per-cloud max/min pooling. ----
    s5, pmax, pmin = pl.pallas_call(
        functools.partial(_bn_relu_conv5_pool_kernel, R),
        grid=(B, npb),
        in_specs=[pl.BlockSpec((pool_tile_rows, 128),
                               lambda bi, j: (bi * npb + j, 0)),
                  pl.BlockSpec((2, 128), lambda bi, j: (0, 0)),
                  pl.BlockSpec((1, 128), lambda bi, j: (0, 0)),
                  pl.BlockSpec((1, 128), lambda bi, j: (0, 0)),
                  pl.BlockSpec((128, 1024), lambda bi, j: (0, 0)),
                  pl.BlockSpec((1, 1024), lambda bi, j: (0, 0))],
        out_specs=[pl.BlockSpec((None, 2, 1024), lambda bi, j: (bi, 0, 0)),
                   pl.BlockSpec((None, 1, 1024), lambda bi, j: (bi, 0, 0)),
                   pl.BlockSpec((None, 1, 1024), lambda bi, j: (bi, 0, 0))],
        out_shape=[jax.ShapeDtypeStruct((B, 2, 1024), jnp.float32),
                   jax.ShapeDtypeStruct((B, 1, 1024), jnp.float32),
                   jax.ShapeDtypeStruct((B, 1, 1024), jnp.float32)],
        compiler_params=pltpu.CompilerParams(
            dimension_semantics=("parallel", "arbitrary"),
            vmem_limit_bytes=32 * 1024 * 1024),
    )(z4, s4, g4, be4, W5.astype(jnp.bfloat16), b5)

    # ---- Head: bn5 affine on pooled extrema + relu, mlp1, bn6, relu. ----
    emb_dim = W6.shape[1]
    out = pl.pallas_call(
        functools.partial(_head_kernel, R),
        in_specs=[pl.BlockSpec(memory_space=pltpu.MemorySpace.VMEM)] * 9,
        out_specs=pl.BlockSpec(memory_space=pltpu.MemorySpace.VMEM),
        out_shape=jax.ShapeDtypeStruct((B, emb_dim), jnp.float32),
    )(pmax, pmin, s5, g5, be5, W6.astype(jnp.bfloat16), b6, g6, be6)
    return out


# --------------------------------------------------------------------------
# pure-JAX reference (same math: bf16 MXU operands, f32 accumulation, bf16
# storage of z2..z4 with BN stats from the pre-cast f32 activation,
# training-mode batch statistics over all B*N positions)
# --------------------------------------------------------------------------
def reference_forward(x, params):
    B, N, _ = x.shape
    R = B * N
    xf = x.reshape(R, 3).astype(jnp.float32)
    (W1, b1, g1, be1, W2, b2, g2, be2, W3, b3, g3, be3,
     W4, b4, g4, be4, W5, b5, g5, be5, W6, b6, g6, be6) = params

    def bn_scale_shift(z, gamma, beta):
        mu = jnp.sum(z, axis=0, keepdims=True) * (1.0 / R)
        var = jnp.maximum(jnp.sum(z * z, axis=0, keepdims=True) * (1.0 / R)
                          - mu * mu, 0.0)
        scale = gamma * jax.lax.rsqrt(var + EPS)
        return scale, beta - mu * scale

    # layer 1 (conv1): f32 everywhere (kernel recomputes z1 in f32)
    z1 = (xf[:, 0:1] * W1[0:1, :] + xf[:, 1:2] * W1[1:2, :]
          + xf[:, 2:3] * W1[2:3, :] + b1)
    sc, sh = bn_scale_shift(z1, g1, be1)
    h = jnp.maximum(z1 * sc + sh, 0.0)

    # layers 2-4: bf16 MXU, stats from f32 z, bf16 round-trip of the stored z
    for (W, b, g, be) in ((W2, b2, g2, be2), (W3, b3, g3, be3),
                          (W4, b4, g4, be4)):
        z = jnp.dot(h.astype(jnp.bfloat16), W.astype(jnp.bfloat16),
                    preferred_element_type=jnp.float32) + b
        sc, sh = bn_scale_shift(z, g, be)
        zq = z.astype(jnp.bfloat16).astype(jnp.float32)
        h = jnp.maximum(zq * sc + sh, 0.0)

    # layer 5 + global max-pool (kernel keeps z5 in f32, never stores it)
    z5 = jnp.dot(h.astype(jnp.bfloat16), W5.astype(jnp.bfloat16),
                 preferred_element_type=jnp.float32) + b5
    sc5, sh5 = bn_scale_shift(z5, g5, be5)
    h5 = jnp.maximum(z5 * sc5 + sh5, 0.0)
    pooled = jnp.max(h5.reshape(B, N, -1), axis=1)

    z6 = jnp.dot(pooled.astype(jnp.bfloat16), W6.astype(jnp.bfloat16),
                 preferred_element_type=jnp.float32) + b6
    mu = jnp.mean(z6, axis=0, keepdims=True)
    var = jnp.mean((z6 - mu) ** 2, axis=0, keepdims=True)
    return jnp.maximum((z6 - mu) * jax.lax.rsqrt(var + EPS) * g6 + be6, 0.0)


if __name__ == "__main__":
    B, N, emb_dim = 4, 128, 32   # small: 4 point clouds of 128 xyz points

    key = jax.random.PRNGKey(0)
    kx, kp = jax.random.split(key)
    x = jax.random.normal(kx, (B, N, 3), dtype=jnp.float32)
    params = init_params(kp, emb_dim)

    # tile_rows=128 -> 4 row tiles (exercises cross-tile BN statistics);
    # pool_tile_rows=32 -> 4 point tiles per cloud (exercises the per-cloud
    # running max/min accumulator and per-cloud BN5 stats merge).
    fwd = jax.jit(functools.partial(pointnet2_forward,
                                    tile_rows=128, pool_tile_rows=32))
    out = jax.block_until_ready(fwd(x, params))

    ref = jax.block_until_ready(reference_forward(x, params))
    assert out.shape == (B, emb_dim)
    assert jnp.allclose(out, ref, rtol=2e-3, atol=2e-3), \
        "mismatch vs JAX reference"

    print("KERNEL_OK")
</pallas_src>

<mosaic_0001>
module attributes {stable_mosaic.version = 11 : i64} {
  func.func @_conv1_stats_kernel(%arg0: i32, %arg1: memref<128x3xf32, #tpu.memory_space<vmem>>, %arg2: memref<3x64xf32, #tpu.memory_space<vmem>>, %arg3: memref<1x64xf32, #tpu.memory_space<vmem>>, %arg4: memref<2x64xf32, #tpu.memory_space<vmem>>) attributes {dimension_semantics = [#tpu.dimension_semantics<arbitrary>], iteration_bounds = array<i64: 4>, scalar_prefetch = 0 : i64, scratch_operands = 0 : i64, tpu.core_type = #tpu.core_type<tc>, window_params = [{transform_indices = @transform_0, window_bounds = array<i64: 128, 3>}, {pipeline_mode = #tpu.pipeline_mode<synchronous>, transform_indices = @transform_1, window_bounds = array<i64: 3, 64>}, {pipeline_mode = #tpu.pipeline_mode<synchronous>, transform_indices = @transform_2, window_bounds = array<i64: 1, 64>}, {pipeline_mode = #tpu.pipeline_mode<synchronous>, transform_indices = @transform_3, window_bounds = array<i64: 2, 64>}]} {
    %c0 = arith.constant 0 : index
    %c0_0 = arith.constant 0 : index
    %0 = vector.load %arg1[%c0, %c0_0] : memref<128x3xf32, #tpu.memory_space<vmem>>, vector<128x3xf32>
    %1 = vector.extract_strided_slice %0 {offsets = [0, 0], sizes = [128, 1], strides = [1, 1]} : vector<128x3xf32> to vector<128x1xf32>
    %c0_1 = arith.constant 0 : index
    %c0_2 = arith.constant 0 : index
    %2 = vector.load %arg2[%c0_1, %c0_2] : memref<3x64xf32, #tpu.memory_space<vmem>>, vector<1x64xf32>
    %3 = vector.broadcast %1 : vector<128x1xf32> to vector<128x64xf32>
    %4 = vector.broadcast %2 : vector<1x64xf32> to vector<128x64xf32>
    %5 = arith.mulf %3, %4 : vector<128x64xf32>
    %6 = vector.extract_strided_slice %0 {offsets = [0, 1], sizes = [128, 1], strides = [1, 1]} : vector<128x3xf32> to vector<128x1xf32>
    %c1 = arith.constant 1 : index
    %c0_3 = arith.constant 0 : index
    %7 = vector.load %arg2[%c1, %c0_3] : memref<3x64xf32, #tpu.memory_space<vmem>>, vector<1x64xf32>
    %8 = vector.broadcast %6 : vector<128x1xf32> to vector<128x64xf32>
    %9 = vector.broadcast %7 : vector<1x64xf32> to vector<128x64xf32>
    %10 = arith.mulf %8, %9 : vector<128x64xf32>
    %11 = arith.addf %5, %10 : vector<128x64xf32>
    %12 = vector.extract_strided_slice %0 {offsets = [0, 2], sizes = [128, 1], strides = [1, 1]} : vector<128x3xf32> to vector<128x1xf32>
    %c2 = arith.constant 2 : index
    %c0_4 = arith.constant 0 : index
    %13 = vector.load %arg2[%c2, %c0_4] : memref<3x64xf32, #tpu.memory_space<vmem>>, vector<1x64xf32>
    %14 = vector.broadcast %12 : vector<128x1xf32> to vector<128x64xf32>
    %15 = vector.broadcast %13 : vector<1x64xf32> to vector<128x64xf32>
    %16 = arith.mulf %14, %15 : vector<128x64xf32>
    %17 = arith.addf %11, %16 : vector<128x64xf32>
    %c0_5 = arith.constant 0 : index
    %c0_6 = arith.constant 0 : index
    %18 = vector.load %arg3[%c0_5, %c0_6] : memref<1x64xf32, #tpu.memory_space<vmem>>, vector<1x64xf32>
    %19 = vector.broadcast %18 : vector<1x64xf32> to vector<128x64xf32>
    %20 = arith.addf %17, %19 : vector<128x64xf32>
    %c0_i32 = arith.constant 0 : i32
    %21 = arith.cmpi eq, %arg0, %c0_i32 : i32
    %22 = arith.extui %21 : i1 to i32
    %c0_i32_7 = arith.constant 0 : i32
    %23 = arith.cmpi ne, %22, %c0_i32_7 : i32
    scf.if %23 {
      %cst_17 = arith.constant 0.000000e+00 : f32
      %35 = vector.broadcast %cst_17 : f32 to vector<2x64xf32>
      %c0_18 = arith.constant 0 : index
      %c0_19 = arith.constant 0 : index
      %36 = vector.load %arg4[%c0_18, %c0_19] : memref<2x64xf32, #tpu.memory_space<vmem>>, vector<2x64xf32>
      tpu.vector_store %arg4[%c0_18, %c0_19], %35 {strides = array<i32>} : memref<2x64xf32, #tpu.memory_space<vmem>>, vector<2x64xf32>,
    } else {
    }
    %c0_8 = arith.constant 0 : index
    %c0_9 = arith.constant 0 : index
    %24 = vector.load %arg4[%c0_8, %c0_9] : memref<2x64xf32, #tpu.memory_space<vmem>>, vector<1x64xf32>
    %cst = arith.constant dense<0.000000e+00> : vector<64xf32>
    %25 = vector.multi_reduction <add>, %20, %cst [0] : vector<128x64xf32> to vector<64xf32>
    %26 = vector.shape_cast %25 : vector<64xf32> to vector<1x64xf32>
    %27 = arith.addf %24, %26 : vector<1x64xf32>
    %c0_10 = arith.constant 0 : index
    %c0_11 = arith.constant 0 : index
    %28 = vector.load %arg4[%c0_10, %c0_11] : memref<2x64xf32, #tpu.memory_space<vmem>>, vector<1x64xf32>
    tpu.vector_store %arg4[%c0_10, %c0_11], %27 {strides = array<i32>} : memref<2x64xf32, #tpu.memory_space<vmem>>, vector<1x64xf32>,
    %c1_12 = arith.constant 1 : index
    %c0_13 = arith.constant 0 : index
    %29 = vector.load %arg4[%c1_12, %c0_13] : memref<2x64xf32, #tpu.memory_space<vmem>>, vector<1x64xf32>
    %30 = arith.mulf %20, %20 : vector<128x64xf32>
    %cst_14 = arith.constant dense<0.000000e+00> : vector<64xf32>
    %31 = vector.multi_reduction <add>, %30, %cst_14 [0] : vector<128x64xf32> to vector<64xf32>
    %32 = vector.shape_cast %31 : vector<64xf32> to vector<1x64xf32>
    %33 = arith.addf %29, %32 : vector<1x64xf32>
    %c1_15 = arith.constant 1 : index
    %c0_16 = arith.constant 0 : index
    %34 = vector.load %arg4[%c1_15, %c0_16] : memref<2x64xf32, #tpu.memory_space<vmem>>, vector<1x64xf32>
    tpu.vector_store %arg4[%c1_15, %c0_16], %33 {strides = array<i32>} : memref<2x64xf32, #tpu.memory_space<vmem>>, vector<1x64xf32>,
    return
  }
  func.func @transform_0(%arg0: i32) -> (i32, i32) {
    %c0_i32 = arith.constant 0 : i32
    %c0_i32_0 = arith.constant 0 : i32
    return %arg0, %c0_i32 : i32, i32
  }
  func.func @transform_1(%arg0: i32) -> (i32, i32) {
    %c0_i32 = arith.constant 0 : i32
    %c0_i32_0 = arith.constant 0 : i32
    %c0_i32_1 = arith.constant 0 : i32
    return %c0_i32, %c0_i32_0 : i32, i32
  }
  func.func @transform_2(%arg0: i32) -> (i32, i32) {
    %c0_i32 = arith.constant 0 : i32
    %c0_i32_0 = arith.constant 0 : i32
    %c0_i32_1 = arith.constant 0 : i32
    return %c0_i32, %c0_i32_0 : i32, i32
  }
  func.func @transform_3(%arg0: i32) -> (i32, i32) {
    %c0_i32 = arith.constant 0 : i32
    %c0_i32_0 = arith.constant 0 : i32
    %c0_i32_1 = arith.constant 0 : i32
    return %c0_i32, %c0_i32_0 : i32, i32
  }
}

module attributes {stable_mosaic.version = 11 : i64} {
  func.func @_conv1_bn_relu_conv2_kernel(%arg0: i32, %arg1: memref<128x3xf32, #tpu.memory_space<vmem>>, %arg2: memref<3x64xf32, #tpu.memory_space<vmem>>, %arg3: memref<1x64xf32, #tpu.memory_space<vmem>>, %arg4: memref<2x64xf32, #tpu.memory_space<vmem>>, %arg5: memref<1x64xf32, #tpu.memory_space<vmem>>, %arg6: memref<1x64xf32, #tpu.memory_space<vmem>>, %arg7: memref<64x64xbf16, #tpu.memory_space<vmem>>, %arg8: memref<1x64xf32, #tpu.memory_space<vmem>>, %arg9: memref<128x64xbf16, #tpu.memory_space<vmem>>, %arg10: memref<2x64xf32, #tpu.memory_space<vmem>>) attributes {dimension_semantics = [#tpu.dimension_semantics<arbitrary>], iteration_bounds = array<i64: 4>, scalar_prefetch = 0 : i64, scratch_operands = 0 : i64, tpu.core_type = #tpu.core_type<tc>, window_params = [{transform_indices = @transform_0, window_bounds = array<i64: 128, 3>}, {pipeline_mode = #tpu.pipeline_mode<synchronous>, transform_indices = @transform_1, window_bounds = array<i64: 3, 64>}, {pipeline_mode = #tpu.pipeline_mode<synchronous>, transform_indices = @transform_2, window_bounds = array<i64: 1, 64>}, {pipeline_mode = #tpu.pipeline_mode<synchronous>, transform_indices = @transform_3, window_bounds = array<i64: 2, 64>}, {pipeline_mode = #tpu.pipeline_mode<synchronous>, transform_indices = @transform_4, window_bounds = array<i64: 1, 64>}, {pipeline_mode = #tpu.pipeline_mode<synchronous>, transform_indices = @transform_5, window_bounds = array<i64: 1, 64>}, {pipeline_mode = #tpu.pipeline_mode<synchronous>, transform_indices = @transform_6, window_bounds = array<i64: 64, 64>}, {pipeline_mode = #tpu.pipeline_mode<synchronous>, transform_indices = @transform_7, window_bounds = array<i64: 1, 64>}, {transform_indices = @transform_8, window_bounds = array<i64: 128, 64>}, {pipeline_mode = #tpu.pipeline_mode<synchronous>, transform_indices = @transform_9, window_bounds = array<i64: 2, 64>}]} {
    %c0 = arith.constant 0 : index
    %c0_0 = arith.constant 0 : index
    %0 = vector.load %arg1[%c0, %c0_0] : memref<128x3xf32, #tpu.memory_space<vmem>>, vector<128x3xf32>
    %1 = vector.extract_strided_slice %0 {offsets = [0, 0], sizes = [128, 1], strides = [1, 1]} : vector<128x3xf32> to vector<128x1xf32>
    %c0_1 = arith.constant 0 : index
    %c0_2 = arith.constant 0 : index
    %2 = vector.load %arg2[%c0_1, %c0_2] : memref<3x64xf32, #tpu.memory_space<vmem>>, vector<1x64xf32>
    %3 = vector.broadcast %1 : vector<128x1xf32> to vector<128x64xf32>
    %4 = vector.broadcast %2 : vector<1x64xf32> to vector<128x64xf32>
    %5 = arith.mulf %3, %4 : vector<128x64xf32>
    %6 = vector.extract_strided_slice %0 {offsets = [0, 1], sizes = [128, 1], strides = [1, 1]} : vector<128x3xf32> to vector<128x1xf32>
    %c1 = arith.constant 1 : index
    %c0_3 = arith.constant 0 : index
    %7 = vector.load %arg2[%c1, %c0_3] : memref<3x64xf32, #tpu.memory_space<vmem>>, vector<1x64xf32>
    %8 = vector.broadcast %6 : vector<128x1xf32> to vector<128x64xf32>
    %9 = vector.broadcast %7 : vector<1x64xf32> to vector<128x64xf32>
    %10 = arith.mulf %8, %9 : vector<128x64xf32>
    %11 = arith.addf %5, %10 : vector<128x64xf32>
    %12 = vector.extract_strided_slice %0 {offsets = [0, 2], sizes = [128, 1], strides = [1, 1]} : vector<128x3xf32> to vector<128x1xf32>
    %c2 = arith.constant 2 : index
    %c0_4 = arith.constant 0 : index
    %13 = vector.load %arg2[%c2, %c0_4] : memref<3x64xf32, #tpu.memory_space<vmem>>, vector<1x64xf32>
    %14 = vector.broadcast %12 : vector<128x1xf32> to vector<128x64xf32>
    %15 = vector.broadcast %13 : vector<1x64xf32> to vector<128x64xf32>
    %16 = arith.mulf %14, %15 : vector<128x64xf32>
    %17 = arith.addf %11, %16 : vector<128x64xf32>
    %c0_5 = arith.constant 0 : index
    %c0_6 = arith.constant 0 : index
    %18 = vector.load %arg3[%c0_5, %c0_6] : memref<1x64xf32, #tpu.memory_space<vmem>>, vector<1x64xf32>
    %19 = vector.broadcast %18 : vector<1x64xf32> to vector<128x64xf32>
    %20 = arith.addf %17, %19 : vector<128x64xf32>
    %c0_7 = arith.constant 0 : index
    %c0_8 = arith.constant 0 : index
    %21 = vector.load %arg4[%c0_7, %c0_8] : memref<2x64xf32, #tpu.memory_space<vmem>>, vector<2x64xf32>
    %c0_9 = arith.constant 0 : index
    %c0_10 = arith.constant 0 : index
    %22 = vector.load %arg5[%c0_9, %c0_10] : memref<1x64xf32, #tpu.memory_space<vmem>>, vector<1x64xf32>
    %c0_11 = arith.constant 0 : index
    %c0_12 = arith.constant 0 : index
    %23 = vector.load %arg6[%c0_11, %c0_12] : memref<1x64xf32, #tpu.memory_space<vmem>>, vector<1x64xf32>
    %24 = vector.extract_strided_slice %21 {offsets = [0, 0], sizes = [1, 64], strides = [1, 1]} : vector<2x64xf32> to vector<1x64xf32>
    %cst = arith.constant 0.001953125 : f32
    %25 = vector.broadcast %cst : f32 to vector<1x64xf32>
    %26 = arith.mulf %24, %25 : vector<1x64xf32>
    %27 = vector.extract_strided_slice %21 {offsets = [1, 0], sizes = [1, 64], strides = [1, 1]} : vector<2x64xf32> to vector<1x64xf32>
    %cst_13 = arith.constant 0.001953125 : f32
    %28 = vector.broadcast %cst_13 : f32 to vector<1x64xf32>
    %29 = arith.mulf %27, %28 : vector<1x64xf32>
    %30 = arith.mulf %26, %26 : vector<1x64xf32>
    %31 = arith.subf %29, %30 : vector<1x64xf32>
    %cst_14 = arith.constant 0.000000e+00 : f32
    %32 = vector.broadcast %cst_14 : f32 to vector<1x64xf32>
    %33 = arith.maximumf %31, %32 : vector<1x64xf32>
    %cst_15 = arith.constant 9.99999974E-6 : f32
    %34 = vector.broadcast %cst_15 : f32 to vector<1x64xf32>
    %35 = arith.addf %33, %34 : vector<1x64xf32>
    %36 = math.rsqrt %35 : vector<1x64xf32>
    %37 = arith.mulf %22, %36 : vector<1x64xf32>
    %38 = arith.mulf %26, %37 : vector<1x64xf32>
    %39 = arith.subf %23, %38 : vector<1x64xf32>
    %40 = vector.broadcast %37 : vector<1x64xf32> to vector<128x64xf32>
    %41 = arith.mulf %20, %40 : vector<128x64xf32>
    %42 = vector.broadcast %39 : vector<1x64xf32> to vector<128x64xf32>
    %43 = arith.addf %41, %42 : vector<128x64xf32>
    %cst_16 = arith.constant 0.000000e+00 : f32
    %44 = vector.broadcast %cst_16 : f32 to vector<128x64xf32>
    %45 = arith.maximumf %43, %44 : vector<128x64xf32>
    %46 = arith.truncf %45 : vector<128x64xf32> to vector<128x64xbf16>
    %c0_17 = arith.constant 0 : index
    %c0_18 = arith.constant 0 : index
    %47 = vector.load %arg7[%c0_17, %c0_18] : memref<64x64xbf16, #tpu.memory_space<vmem>>, vector<64x64xbf16>
    %cst_19 = arith.constant dense<0.000000e+00> : vector<128x64xf32>
    %48 = tpu.matmul %46, %47, %cst_19 {dimension_numbers = #tpu.dot_dimension_numbers<[1], [0], [0], [1], [0, 0, 1, 1], [], []>} : vector<128x64xbf16>, vector<64x64xbf16>, vector<128x64xf32> -> vector<128x64xf32>
    %c0_20 = arith.constant 0 : index
    %c0_21 = arith.constant 0 : index
    %49 = vector.load %arg8[%c0_20, %c0_21] : memref<1x64xf32, #tpu.memory_space<vmem>>, vector<1x64xf32>
    %50 = vector.broadcast %49 : vector<1x64xf32> to vector<128x64xf32>
    %51 = arith.addf %48, %50 : vector<128x64xf32>
    %52 = arith.truncf %51 : vector<128x64xf32> to vector<128x64xbf16>
    %c0_22 = arith.constant 0 : index
    %c0_23 = arith.constant 0 : index
    %53 = vector.load %arg9[%c0_22, %c0_23] : memref<128x64xbf16, #tpu.memory_space<vmem>>, vector<128x64xbf16>
    tpu.vector_store %arg9[%c0_22, %c0_23], %52 {strides = array<i32>} : memref<128x64xbf16, #tpu.memory_space<vmem>>, vector<128x64xbf16>,
    %c0_i32 = arith.constant 0 : i32
    %54 = arith.cmpi eq, %arg0, %c0_i32 : i32
    %55 = arith.extui %54 : i1 to i32
    %c0_i32_24 = arith.constant 0 : i32
    %56 = arith.cmpi ne, %55, %c0_i32_24 : i32
    scf.if %56 {
      %cst_35 = arith.constant 0.000000e+00 : f32
      %68 = vector.broadcast %cst_35 : f32 to vector<2x64xf32>
      %c0_36 = arith.constant 0 : index
      %c0_37 = arith.constant 0 : index
      %69 = vector.load %arg10[%c0_36, %c0_37] : memref<2x64xf32, #tpu.memory_space<vmem>>, vector<2x64xf32>
      tpu.vector_store %arg10[%c0_36, %c0_37], %68 {strides = array<i32>} : memref<2x64xf32, #tpu.memory_space<vmem>>, vector<2x64xf32>,
    } else {
    }
    %c0_25 = arith.constant 0 : index
    %c0_26 = arith.constant 0 : index
    %57 = vector.load %arg10[%c0_25, %c0_26] : memref<2x64xf32, #tpu.memory_space<vmem>>, vector<1x64xf32>
    %cst_27 = arith.constant dense<0.000000e+00> : vector<64xf32>
    %58 = vector.multi_reduction <add>, %51, %cst_27 [0] : vector<128x64xf32> to vector<64xf32>
    %59 = vector.shape_cast %58 : vector<64xf32> to vector<1x64xf32>
    %60 = arith.addf %57, %59 : vector<1x64xf32>
    %c0_28 = arith.constant 0 : index
    %c0_29 = arith.constant 0 : index
    %61 = vector.load %arg10[%c0_28, %c0_29] : memref<2x64xf32, #tpu.memory_space<vmem>>, vector<1x64xf32>
    tpu.vector_store %arg10[%c0_28, %c0_29], %60 {strides = array<i32>} : memref<2x64xf32, #tpu.memory_space<vmem>>, vector<1x64xf32>,
    %c1_30 = arith.constant 1 : index
    %c0_31 = arith.constant 0 : index
    %62 = vector.load %arg10[%c1_30, %c0_31] : memref<2x64xf32, #tpu.memory_space<vmem>>, vector<1x64xf32>
    %63 = arith.mulf %51, %51 : vector<128x64xf32>
    %cst_32 = arith.constant dense<0.000000e+00> : vector<64xf32>
    %64 = vector.multi_reduction <add>, %63, %cst_32 [0] : vector<128x64xf32> to vector<64xf32>
    %65 = vector.shape_cast %64 : vector<64xf32> to vector<1x64xf32>
    %66 = arith.addf %62, %65 : vector<1x64xf32>
    %c1_33 = arith.constant 1 : index
    %c0_34 = arith.constant 0 : index
    %67 = vector.load %arg10[%c1_33, %c0_34] : memref<2x64xf32, #tpu.memory_space<vmem>>, vector<1x64xf32>
    tpu.vector_store %arg10[%c1_33, %c0_34], %66 {strides = array<i32>} : memref<2x64xf32, #tpu.memory_space<vmem>>, vector<1x64xf32>,
    return
  }
  func.func @transform_0(%arg0: i32) -> (i32, i32) {
    %c0_i32 = arith.constant 0 : i32
    %c0_i32_0 = arith.constant 0 : i32
    return %arg0, %c0_i32 : i32, i32
  }
  func.func @transform_1(%arg0: i32) -> (i32, i32) {
    %c0_i32 = arith.constant 0 : i32
    %c0_i32_0 = arith.constant 0 : i32
    %c0_i32_1 = arith.constant 0 : i32
    return %c0_i32, %c0_i32_0 : i32, i32
  }
  func.func @transform_2(%arg0: i32) -> (i32, i32) {
    %c0_i32 = arith.constant 0 : i32
    %c0_i32_0 = arith.constant 0 : i32
    %c0_i32_1 = arith.constant 0 : i32
    return %c0_i32, %c0_i32_0 : i32, i32
  }
  func.func @transform_3(%arg0: i32) -> (i32, i32) {
    %c0_i32 = arith.constant 0 : i32
    %c0_i32_0 = arith.constant 0 : i32
    %c0_i32_1 = arith.constant 0 : i32
    return %c0_i32, %c0_i32_0 : i32, i32
  }
  func.func @transform_4(%arg0: i32) -> (i32, i32) {
    %c0_i32 = arith.constant 0 : i32
    %c0_i32_0 = arith.constant 0 : i32
    %c0_i32_1 = arith.constant 0 : i32
    return %c0_i32, %c0_i32_0 : i32, i32
  }
  func.func @transform_5(%arg0: i32) -> (i32, i32) {
    %c0_i32 = arith.constant 0 : i32
    %c0_i32_0 = arith.constant 0 : i32
    %c0_i32_1 = arith.constant 0 : i32
    return %c0_i32, %c0_i32_0 : i32, i32
  }
  func.func @transform_6(%arg0: i32) -> (i32, i32) {
    %c0_i32 = arith.constant 0 : i32
    %c0_i32_0 = arith.constant 0 : i32
    %c0_i32_1 = arith.constant 0 : i32
    return %c0_i32, %c0_i32_0 : i32, i32
  }
  func.func @transform_7(%arg0: i32) -> (i32, i32) {
    %c0_i32 = arith.constant 0 : i32
    %c0_i32_0 = arith.constant 0 : i32
    %c0_i32_1 = arith.constant 0 : i32
    return %c0_i32, %c0_i32_0 : i32, i32
  }
  func.func @transform_8(%arg0: i32) -> (i32, i32) {
    %c0_i32 = arith.constant 0 : i32
    %c0_i32_0 = arith.constant 0 : i32
    return %arg0, %c0_i32 : i32, i32
  }
  func.func @transform_9(%arg0: i32) -> (i32, i32) {
    %c0_i32 = arith.constant 0 : i32
    %c0_i32_0 = arith.constant 0 : i32
    %c0_i32_1 = arith.constant 0 : i32
    return %c0_i32, %c0_i32_0 : i32, i32
  }
}

module attributes {stable_mosaic.version = 11 : i64} {
  func.func @_bn_relu_matmul_stats_kernel(%arg0: i32, %arg1: memref<128x64xbf16, #tpu.memory_space<vmem>>, %arg2: memref<2x64xf32, #tpu.memory_space<vmem>>, %arg3: memref<1x64xf32, #tpu.memory_space<vmem>>, %arg4: memref<1x64xf32, #tpu.memory_space<vmem>>, %arg5: memref<64x64xbf16, #tpu.memory_space<vmem>>, %arg6: memref<1x64xf32, #tpu.memory_space<vmem>>, %arg7: memref<128x64xbf16, #tpu.memory_space<vmem>>, %arg8: memref<2x64xf32, #tpu.memory_space<vmem>>) attributes {dimension_semantics = [#tpu.dimension_semantics<arbitrary>], iteration_bounds = array<i64: 4>, scalar_prefetch = 0 : i64, scratch_operands = 0 : i64, tpu.core_type = #tpu.core_type<tc>, window_params = [{transform_indices = @transform_0, window_bounds = array<i64: 128, 64>}, {pipeline_mode = #tpu.pipeline_mode<synchronous>, transform_indices = @transform_1, window_bounds = array<i64: 2, 64>}, {pipeline_mode = #tpu.pipeline_mode<synchronous>, transform_indices = @transform_2, window_bounds = array<i64: 1, 64>}, {pipeline_mode = #tpu.pipeline_mode<synchronous>, transform_indices = @transform_3, window_bounds = array<i64: 1, 64>}, {pipeline_mode = #tpu.pipeline_mode<synchronous>, transform_indices = @transform_4, window_bounds = array<i64: 64, 64>}, {pipeline_mode = #tpu.pipeline_mode<synchronous>, transform_indices = @transform_5, window_bounds = array<i64: 1, 64>}, {transform_indices = @transform_6, window_bounds = array<i64: 128, 64>}, {pipeline_mode = #tpu.pipeline_mode<synchronous>, transform_indices = @transform_7, window_bounds = array<i64: 2, 64>}]} {
    %c0 = arith.constant 0 : index
    %c0_0 = arith.constant 0 : index
    %0 = vector.load %arg2[%c0, %c0_0] : memref<2x64xf32, #tpu.memory_space<vmem>>, vector<2x64xf32>
    %c0_1 = arith.constant 0 : index
    %c0_2 = arith.constant 0 : index
    %1 = vector.load %arg3[%c0_1, %c0_2] : memref<1x64xf32, #tpu.memory_space<vmem>>, vector<1x64xf32>
    %c0_3 = arith.constant 0 : index
    %c0_4 = arith.constant 0 : index
    %2 = vector.load %arg4[%c0_3, %c0_4] : memref<1x64xf32, #tpu.memory_space<vmem>>, vector<1x64xf32>
    %3 = vector.extract_strided_slice %0 {offsets = [0, 0], sizes = [1, 64], strides = [1, 1]} : vector<2x64xf32> to vector<1x64xf32>
    %cst = arith.constant 0.001953125 : f32
    %4 = vector.broadcast %cst : f32 to vector<1x64xf32>
    %5 = arith.mulf %3, %4 : vector<1x64xf32>
    %6 = vector.extract_strided_slice %0 {offsets = [1, 0], sizes = [1, 64], strides = [1, 1]} : vector<2x64xf32> to vector<1x64xf32>
    %cst_5 = arith.constant 0.001953125 : f32
    %7 = vector.broadcast %cst_5 : f32 to vector<1x64xf32>
    %8 = arith.mulf %6, %7 : vector<1x64xf32>
    %9 = arith.mulf %5, %5 : vector<1x64xf32>
    %10 = arith.subf %8, %9 : vector<1x64xf32>
    %cst_6 = arith.constant 0.000000e+00 : f32
    %11 = vector.broadcast %cst_6 : f32 to vector<1x64xf32>
    %12 = arith.maximumf %10, %11 : vector<1x64xf32>
    %cst_7 = arith.constant 9.99999974E-6 : f32
    %13 = vector.broadcast %cst_7 : f32 to vector<1x64xf32>
    %14 = arith.addf %12, %13 : vector<1x64xf32>
    %15 = math.rsqrt %14 : vector<1x64xf32>
    %16 = arith.mulf %1, %15 : vector<1x64xf32>
    %17 = arith.mulf %5, %16 : vector<1x64xf32>
    %18 = arith.subf %2, %17 : vector<1x64xf32>
    %c0_8 = arith.constant 0 : index
    %c0_9 = arith.constant 0 : index
    %19 = vector.load %arg1[%c0_8, %c0_9] : memref<128x64xbf16, #tpu.memory_space<vmem>>, vector<128x64xbf16>
    %20 = arith.extf %19 : vector<128x64xbf16> to vector<128x64xf32>
    %21 = vector.broadcast %16 : vector<1x64xf32> to vector<128x64xf32>
    %22 = arith.mulf %20, %21 : vector<128x64xf32>
    %23 = vector.broadcast %18 : vector<1x64xf32> to vector<128x64xf32>
    %24 = arith.addf %22, %23 : vector<128x64xf32>
    %cst_10 = arith.constant 0.000000e+00 : f32
    %25 = vector.broadcast %cst_10 : f32 to vector<128x64xf32>
    %26 = arith.maximumf %24, %25 : vector<128x64xf32>
    %27 = arith.truncf %26 : vector<128x64xf32> to vector<128x64xbf16>
    %c0_11 = arith.constant 0 : index
    %c0_12 = arith.constant 0 : index
    %28 = vector.load %arg5[%c0_11, %c0_12] : memref<64x64xbf16, #tpu.memory_space<vmem>>, vector<64x64xbf16>
    %cst_13 = arith.constant dense<0.000000e+00> : vector<128x64xf32>
    %29 = tpu.matmul %27, %28, %cst_13 {dimension_numbers = #tpu.dot_dimension_numbers<[1], [0], [0], [1], [0, 0, 1, 1], [], []>} : vector<128x64xbf16>, vector<64x64xbf16>, vector<128x64xf32> -> vector<128x64xf32>
    %c0_14 = arith.constant 0 : index
    %c0_15 = arith.constant 0 : index
    %30 = vector.load %arg6[%c0_14, %c0_15] : memref<1x64xf32, #tpu.memory_space<vmem>>, vector<1x64xf32>
    %31 = vector.broadcast %30 : vector<1x64xf32> to vector<128x64xf32>
    %32 = arith.addf %29, %31 : vector<128x64xf32>
    %33 = arith.truncf %32 : vector<128x64xf32> to vector<128x64xbf16>
    %c0_16 = arith.constant 0 : index
    %c0_17 = arith.constant 0 : index
    %34 = vector.load %arg7[%c0_16, %c0_17] : memref<128x64xbf16, #tpu.memory_space<vmem>>, vector<128x64xbf16>
    tpu.vector_store %arg7[%c0_16, %c0_17], %33 {strides = array<i32>} : memref<128x64xbf16, #tpu.memory_space<vmem>>, vector<128x64xbf16>,
    %c0_i32 = arith.constant 0 : i32
    %35 = arith.cmpi eq, %arg0, %c0_i32 : i32
    %36 = arith.extui %35 : i1 to i32
    %c0_i32_18 = arith.constant 0 : i32
    %37 = arith.cmpi ne, %36, %c0_i32_18 : i32
    scf.if %37 {
      %cst_28 = arith.constant 0.000000e+00 : f32
      %49 = vector.broadcast %cst_28 : f32 to vector<2x64xf32>
      %c0_29 = arith.constant 0 : index
      %c0_30 = arith.constant 0 : index
      %50 = vector.load %arg8[%c0_29, %c0_30] : memref<2x64xf32, #tpu.memory_space<vmem>>, vector<2x64xf32>
      tpu.vector_store %arg8[%c0_29, %c0_30], %49 {strides = array<i32>} : memref<2x64xf32, #tpu.memory_space<vmem>>, vector<2x64xf32>,
    } else {
    }
    %c0_19 = arith.constant 0 : index
    %c0_20 = arith.constant 0 : index
    %38 = vector.load %arg8[%c0_19, %c0_20] : memref<2x64xf32, #tpu.memory_space<vmem>>, vector<1x64xf32>
    %cst_21 = arith.constant dense<0.000000e+00> : vector<64xf32>
    %39 = vector.multi_reduction <add>, %32, %cst_21 [0] : vector<128x64xf32> to vector<64xf32>
    %40 = vector.shape_cast %39 : vector<64xf32> to vector<1x64xf32>
    %41 = arith.addf %38, %40 : vector<1x64xf32>
    %c0_22 = arith.constant 0 : index
    %c0_23 = arith.constant 0 : index
    %42 = vector.load %arg8[%c0_22, %c0_23] : memref<2x64xf32, #tpu.memory_space<vmem>>, vector<1x64xf32>
    tpu.vector_store %arg8[%c0_22, %c0_23], %41 {strides = array<i32>} : memref<2x64xf32, #tpu.memory_space<vmem>>, vector<1x64xf32>,
    %c1 = arith.constant 1 : index
    %c0_24 = arith.constant 0 : index
    %43 = vector.load %arg8[%c1, %c0_24] : memref<2x64xf32, #tpu.memory_space<vmem>>, vector<1x64xf32>
    %44 = arith.mulf %32, %32 : vector<128x64xf32>
    %cst_25 = arith.constant dense<0.000000e+00> : vector<64xf32>
    %45 = vector.multi_reduction <add>, %44, %cst_25 [0] : vector<128x64xf32> to vector<64xf32>
    %46 = vector.shape_cast %45 : vector<64xf32> to vector<1x64xf32>
    %47 = arith.addf %43, %46 : vector<1x64xf32>
    %c1_26 = arith.constant 1 : index
    %c0_27 = arith.constant 0 : index
    %48 = vector.load %arg8[%c1_26, %c0_27] : memref<2x64xf32, #tpu.memory_space<vmem>>, vector<1x64xf32>
    tpu.vector_store %arg8[%c1_26, %c0_27], %47 {strides = array<i32>} : memref<2x64xf32, #tpu.memory_space<vmem>>, vector<1x64xf32>,
    return
  }
  func.func @transform_0(%arg0: i32) -> (i32, i32) {
    %c0_i32 = arith.constant 0 : i32
    %c0_i32_0 = arith.constant 0 : i32
    return %arg0, %c0_i32 : i32, i32
  }
  func.func @transform_1(%arg0: i32) -> (i32, i32) {
    %c0_i32 = arith.constant 0 : i32
    %c0_i32_0 = arith.constant 0 : i32
    %c0_i32_1 = arith.constant 0 : i32
    return %c0_i32, %c0_i32_0 : i32, i32
  }
  func.func @transform_2(%arg0: i32) -> (i32, i32) {
    %c0_i32 = arith.constant 0 : i32
    %c0_i32_0 = arith.constant 0 : i32
    %c0_i32_1 = arith.constant 0 : i32
    return %c0_i32, %c0_i32_0 : i32, i32
  }
  func.func @transform_3(%arg0: i32) -> (i32, i32) {
    %c0_i32 = arith.constant 0 : i32
    %c0_i32_0 = arith.constant 0 : i32
    %c0_i32_1 = arith.constant 0 : i32
    return %c0_i32, %c0_i32_0 : i32, i32
  }
  func.func @transform_4(%arg0: i32) -> (i32, i32) {
    %c0_i32 = arith.constant 0 : i32
    %c0_i32_0 = arith.constant 0 : i32
    %c0_i32_1 = arith.constant 0 : i32
    return %c0_i32, %c0_i32_0 : i32, i32
  }
  func.func @transform_5(%arg0: i32) -> (i32, i32) {
    %c0_i32 = arith.constant 0 : i32
    %c0_i32_0 = arith.constant 0 : i32
    %c0_i32_1 = arith.constant 0 : i32
    return %c0_i32, %c0_i32_0 : i32, i32
  }
  func.func @transform_6(%arg0: i32) -> (i32, i32) {
    %c0_i32 = arith.constant 0 : i32
    %c0_i32_0 = arith.constant 0 : i32
    return %arg0, %c0_i32 : i32, i32
  }
  func.func @transform_7(%arg0: i32) -> (i32, i32) {
    %c0_i32 = arith.constant 0 : i32
    %c0_i32_0 = arith.constant 0 : i32
    %c0_i32_1 = arith.constant 0 : i32
    return %c0_i32, %c0_i32_0 : i32, i32
  }
}

module attributes {stable_mosaic.version = 11 : i64} {
  func.func @_bn_relu_matmul_stats_kernel(%arg0: i32, %arg1: memref<128x64xbf16, #tpu.memory_space<vmem>>, %arg2: memref<2x64xf32, #tpu.memory_space<vmem>>, %arg3: memref<1x64xf32, #tpu.memory_space<vmem>>, %arg4: memref<1x64xf32, #tpu.memory_space<vmem>>, %arg5: memref<64x128xbf16, #tpu.memory_space<vmem>>, %arg6: memref<1x128xf32, #tpu.memory_space<vmem>>, %arg7: memref<128x128xbf16, #tpu.memory_space<vmem>>, %arg8: memref<2x128xf32, #tpu.memory_space<vmem>>) attributes {dimension_semantics = [#tpu.dimension_semantics<arbitrary>], iteration_bounds = array<i64: 4>, scalar_prefetch = 0 : i64, scratch_operands = 0 : i64, tpu.core_type = #tpu.core_type<tc>, window_params = [{transform_indices = @transform_0, window_bounds = array<i64: 128, 64>}, {pipeline_mode = #tpu.pipeline_mode<synchronous>, transform_indices = @transform_1, window_bounds = array<i64: 2, 64>}, {pipeline_mode = #tpu.pipeline_mode<synchronous>, transform_indices = @transform_2, window_bounds = array<i64: 1, 64>}, {pipeline_mode = #tpu.pipeline_mode<synchronous>, transform_indices = @transform_3, window_bounds = array<i64: 1, 64>}, {pipeline_mode = #tpu.pipeline_mode<synchronous>, transform_indices = @transform_4, window_bounds = array<i64: 64, 128>}, {pipeline_mode = #tpu.pipeline_mode<synchronous>, transform_indices = @transform_5, window_bounds = array<i64: 1, 128>}, {transform_indices = @transform_6, window_bounds = array<i64: 128, 128>}, {pipeline_mode = #tpu.pipeline_mode<synchronous>, transform_indices = @transform_7, window_bounds = array<i64: 2, 128>}]} {
    %c0 = arith.constant 0 : index
    %c0_0 = arith.constant 0 : index
    %0 = vector.load %arg2[%c0, %c0_0] : memref<2x64xf32, #tpu.memory_space<vmem>>, vector<2x64xf32>
    %c0_1 = arith.constant 0 : index
    %c0_2 = arith.constant 0 : index
    %1 = vector.load %arg3[%c0_1, %c0_2] : memref<1x64xf32, #tpu.memory_space<vmem>>, vector<1x64xf32>
    %c0_3 = arith.constant 0 : index
    %c0_4 = arith.constant 0 : index
    %2 = vector.load %arg4[%c0_3, %c0_4] : memref<1x64xf32, #tpu.memory_space<vmem>>, vector<1x64xf32>
    %3 = vector.extract_strided_slice %0 {offsets = [0, 0], sizes = [1, 64], strides = [1, 1]} : vector<2x64xf32> to vector<1x64xf32>
    %cst = arith.constant 0.001953125 : f32
    %4 = vector.broadcast %cst : f32 to vector<1x64xf32>
    %5 = arith.mulf %3, %4 : vector<1x64xf32>
    %6 = vector.extract_strided_slice %0 {offsets = [1, 0], sizes = [1, 64], strides = [1, 1]} : vector<2x64xf32> to vector<1x64xf32>
    %cst_5 = arith.constant 0.001953125 : f32
    %7 = vector.broadcast %cst_5 : f32 to vector<1x64xf32>
    %8 = arith.mulf %6, %7 : vector<1x64xf32>
    %9 = arith.mulf %5, %5 : vector<1x64xf32>
    %10 = arith.subf %8, %9 : vector<1x64xf32>
    %cst_6 = arith.constant 0.000000e+00 : f32
    %11 = vector.broadcast %cst_6 : f32 to vector<1x64xf32>
    %12 = arith.maximumf %10, %11 : vector<1x64xf32>
    %cst_7 = arith.constant 9.99999974E-6 : f32
    %13 = vector.broadcast %cst_7 : f32 to vector<1x64xf32>
    %14 = arith.addf %12, %13 : vector<1x64xf32>
    %15 = math.rsqrt %14 : vector<1x64xf32>
    %16 = arith.mulf %1, %15 : vector<1x64xf32>
    %17 = arith.mulf %5, %16 : vector<1x64xf32>
    %18 = arith.subf %2, %17 : vector<1x64xf32>
    %c0_8 = arith.constant 0 : index
    %c0_9 = arith.constant 0 : index
    %19 = vector.load %arg1[%c0_8, %c0_9] : memref<128x64xbf16, #tpu.memory_space<vmem>>, vector<128x64xbf16>
    %20 = arith.extf %19 : vector<128x64xbf16> to vector<128x64xf32>
    %21 = vector.broadcast %16 : vector<1x64xf32> to vector<128x64xf32>
    %22 = arith.mulf %20, %21 : vector<128x64xf32>
    %23 = vector.broadcast %18 : vector<1x64xf32> to vector<128x64xf32>
    %24 = arith.addf %22, %23 : vector<128x64xf32>
    %cst_10 = arith.constant 0.000000e+00 : f32
    %25 = vector.broadcast %cst_10 : f32 to vector<128x64xf32>
    %26 = arith.maximumf %24, %25 : vector<128x64xf32>
    %27 = arith.truncf %26 : vector<128x64xf32> to vector<128x64xbf16>
    %c0_11 = arith.constant 0 : index
    %c0_12 = arith.constant 0 : index
    %28 = vector.load %arg5[%c0_11, %c0_12] : memref<64x128xbf16, #tpu.memory_space<vmem>>, vector<64x128xbf16>
    %cst_13 = arith.constant dense<0.000000e+00> : vector<128x128xf32>
    %29 = tpu.matmul %27, %28, %cst_13 {dimension_numbers = #tpu.dot_dimension_numbers<[1], [0], [0], [1], [0, 0, 1, 1], [], []>} : vector<128x64xbf16>, vector<64x128xbf16>, vector<128x128xf32> -> vector<128x128xf32>
    %c0_14 = arith.constant 0 : index
    %c0_15 = arith.constant 0 : index
    %30 = vector.load %arg6[%c0_14, %c0_15] : memref<1x128xf32, #tpu.memory_space<vmem>>, vector<1x128xf32>
    %31 = vector.broadcast %30 : vector<1x128xf32> to vector<128x128xf32>
    %32 = arith.addf %29, %31 : vector<128x128xf32>
    %33 = arith.truncf %32 : vector<128x128xf32> to vector<128x128xbf16>
    %c0_16 = arith.constant 0 : index
    %c0_17 = arith.constant 0 : index
    %34 = vector.load %arg7[%c0_16, %c0_17] : memref<128x128xbf16, #tpu.memory_space<vmem>>, vector<128x128xbf16>
    tpu.vector_store %arg7[%c0_16, %c0_17], %33 {strides = array<i32>} : memref<128x128xbf16, #tpu.memory_space<vmem>>, vector<128x128xbf16>,
    %c0_i32 = arith.constant 0 : i32
    %35 = arith.cmpi eq, %arg0, %c0_i32 : i32
    %36 = arith.extui %35 : i1 to i32
    %c0_i32_18 = arith.constant 0 : i32
    %37 = arith.cmpi ne, %36, %c0_i32_18 : i32
    scf.if %37 {
      %cst_28 = arith.constant 0.000000e+00 : f32
      %49 = vector.broadcast %cst_28 : f32 to vector<2x128xf32>
      %c0_29 = arith.constant 0 : index
      %c0_30 = arith.constant 0 : index
      %50 = vector.load %arg8[%c0_29, %c0_30] : memref<2x128xf32, #tpu.memory_space<vmem>>, vector<2x128xf32>
      tpu.vector_store %arg8[%c0_29, %c0_30], %49 {strides = array<i32>} : memref<2x128xf32, #tpu.memory_space<vmem>>, vector<2x128xf32>,
    } else {
    }
    %c0_19 = arith.constant 0 : index
    %c0_20 = arith.constant 0 : index
    %38 = vector.load %arg8[%c0_19, %c0_20] : memref<2x128xf32, #tpu.memory_space<vmem>>, vector<1x128xf32>
    %cst_21 = arith.constant dense<0.000000e+00> : vector<128xf32>
    %39 = vector.multi_reduction <add>, %32, %cst_21 [0] : vector<128x128xf32> to vector<128xf32>
    %40 = vector.shape_cast %39 : vector<128xf32> to vector<1x128xf32>
    %41 = arith.addf %38, %40 : vector<1x128xf32>
    %c0_22 = arith.constant 0 : index
    %c0_23 = arith.constant 0 : index
    %42 = vector.load %arg8[%c0_22, %c0_23] : memref<2x128xf32, #tpu.memory_space<vmem>>, vector<1x128xf32>
    tpu.vector_store %arg8[%c0_22, %c0_23], %41 {strides = array<i32>} : memref<2x128xf32, #tpu.memory_space<vmem>>, vector<1x128xf32>,
    %c1 = arith.constant 1 : index
    %c0_24 = arith.constant 0 : index
    %43 = vector.load %arg8[%c1, %c0_24] : memref<2x128xf32, #tpu.memory_space<vmem>>, vector<1x128xf32>
    %44 = arith.mulf %32, %32 : vector<128x128xf32>
    %cst_25 = arith.constant dense<0.000000e+00> : vector<128xf32>
    %45 = vector.multi_reduction <add>, %44, %cst_25 [0] : vector<128x128xf32> to vector<128xf32>
    %46 = vector.shape_cast %45 : vector<128xf32> to vector<1x128xf32>
    %47 = arith.addf %43, %46 : vector<1x128xf32>
    %c1_26 = arith.constant 1 : index
    %c0_27 = arith.constant 0 : index
    %48 = vector.load %arg8[%c1_26, %c0_27] : memref<2x128xf32, #tpu.memory_space<vmem>>, vector<1x128xf32>
    tpu.vector_store %arg8[%c1_26, %c0_27], %47 {strides = array<i32>} : memref<2x128xf32, #tpu.memory_space<vmem>>, vector<1x128xf32>,
    return
  }
  func.func @transform_0(%arg0: i32) -> (i32, i32) {
    %c0_i32 = arith.constant 0 : i32
    %c0_i32_0 = arith.constant 0 : i32
    return %arg0, %c0_i32 : i32, i32
  }
  func.func @transform_1(%arg0: i32) -> (i32, i32) {
    %c0_i32 = arith.constant 0 : i32
    %c0_i32_0 = arith.constant 0 : i32
    %c0_i32_1 = arith.constant 0 : i32
    return %c0_i32, %c0_i32_0 : i32, i32
  }
  func.func @transform_2(%arg0: i32) -> (i32, i32) {
    %c0_i32 = arith.constant 0 : i32
    %c0_i32_0 = arith.constant 0 : i32
    %c0_i32_1 = arith.constant 0 : i32
    return %c0_i32, %c0_i32_0 : i32, i32
  }
  func.func @transform_3(%arg0: i32) -> (i32, i32) {
    %c0_i32 = arith.constant 0 : i32
    %c0_i32_0 = arith.constant 0 : i32
    %c0_i32_1 = arith.constant 0 : i32
    return %c0_i32, %c0_i32_0 : i32, i32
  }
  func.func @transform_4(%arg0: i32) -> (i32, i32) {
    %c0_i32 = arith.constant 0 : i32
    %c0_i32_0 = arith.constant 0 : i32
    %c0_i32_1 = arith.constant 0 : i32
    return %c0_i32, %c0_i32_0 : i32, i32
  }
  func.func @transform_5(%arg0: i32) -> (i32, i32) {
    %c0_i32 = arith.constant 0 : i32
    %c0_i32_0 = arith.constant 0 : i32
    %c0_i32_1 = arith.constant 0 : i32
    return %c0_i32, %c0_i32_0 : i32, i32
  }
  func.func @transform_6(%arg0: i32) -> (i32, i32) {
    %c0_i32 = arith.constant 0 : i32
    %c0_i32_0 = arith.constant 0 : i32
    return %arg0, %c0_i32 : i32, i32
  }
  func.func @transform_7(%arg0: i32) -> (i32, i32) {
    %c0_i32 = arith.constant 0 : i32
    %c0_i32_0 = arith.constant 0 : i32
    %c0_i32_1 = arith.constant 0 : i32
    return %c0_i32, %c0_i32_0 : i32, i32
  }
}

module attributes {stable_mosaic.version = 11 : i64} {
  func.func @_bn_relu_conv5_pool_kernel(%arg0: i32, %arg1: i32, %arg2: memref<32x128xbf16, #tpu.memory_space<vmem>>, %arg3: memref<2x128xf32, #tpu.memory_space<vmem>>, %arg4: memref<1x128xf32, #tpu.memory_space<vmem>>, %arg5: memref<1x128xf32, #tpu.memory_space<vmem>>, %arg6: memref<128x1024xbf16, #tpu.memory_space<vmem>>, %arg7: memref<1x1024xf32, #tpu.memory_space<vmem>>, %arg8: memref<1x2x1024xf32, #tpu.memory_space<vmem>>, %arg9: memref<1x1x1024xf32, #tpu.memory_space<vmem>>, %arg10: memref<1x1x1024xf32, #tpu.memory_space<vmem>>) attributes {dimension_semantics = [#tpu.dimension_semantics<parallel>, #tpu.dimension_semantics<arbitrary>], iteration_bounds = array<i64: 4, 4>, scalar_prefetch = 0 : i64, scratch_operands = 0 : i64, tpu.core_type = #tpu.core_type<tc>, window_params = [{transform_indices = @transform_0, window_bounds = array<i64: 32, 128>}, {pipeline_mode = #tpu.pipeline_mode<synchronous>, transform_indices = @transform_1, window_bounds = array<i64: 2, 128>}, {pipeline_mode = #tpu.pipeline_mode<synchronous>, transform_indices = @transform_2, window_bounds = array<i64: 1, 128>}, {pipeline_mode = #tpu.pipeline_mode<synchronous>, transform_indices = @transform_3, window_bounds = array<i64: 1, 128>}, {pipeline_mode = #tpu.pipeline_mode<synchronous>, transform_indices = @transform_4, window_bounds = array<i64: 128, 1024>}, {pipeline_mode = #tpu.pipeline_mode<synchronous>, transform_indices = @transform_5, window_bounds = array<i64: 1, 1024>}, {transform_indices = @transform_6, window_bounds = array<i64: 1, 2, 1024>}, {transform_indices = @transform_7, window_bounds = array<i64: 1, 1, 1024>}, {transform_indices = @transform_8, window_bounds = array<i64: 1, 1, 1024>}]} {
    %c0 = arith.constant 0 : index
    %c0_0 = arith.constant 0 : index
    %0 = vector.load %arg3[%c0, %c0_0] : memref<2x128xf32, #tpu.memory_space<vmem>>, vector<2x128xf32>
    %c0_1 = arith.constant 0 : index
    %c0_2 = arith.constant 0 : index
    %1 = vector.load %arg4[%c0_1, %c0_2] : memref<1x128xf32, #tpu.memory_space<vmem>>, vector<1x128xf32>
    %c0_3 = arith.constant 0 : index
    %c0_4 = arith.constant 0 : index
    %2 = vector.load %arg5[%c0_3, %c0_4] : memref<1x128xf32, #tpu.memory_space<vmem>>, vector<1x128xf32>
    %3 = vector.extract_strided_slice %0 {offsets = [0, 0], sizes = [1, 128], strides = [1, 1]} : vector<2x128xf32> to vector<1x128xf32>
    %cst = arith.constant 0.001953125 : f32
    %4 = vector.broadcast %cst : f32 to vector<1x128xf32>
    %5 = arith.mulf %3, %4 : vector<1x128xf32>
    %6 = vector.extract_strided_slice %0 {offsets = [1, 0], sizes = [1, 128], strides = [1, 1]} : vector<2x128xf32> to vector<1x128xf32>
    %cst_5 = arith.constant 0.001953125 : f32
    %7 = vector.broadcast %cst_5 : f32 to vector<1x128xf32>
    %8 = arith.mulf %6, %7 : vector<1x128xf32>
    %9 = arith.mulf %5, %5 : vector<1x128xf32>
    %10 = arith.subf %8, %9 : vector<1x128xf32>
    %cst_6 = arith.constant 0.000000e+00 : f32
    %11 = vector.broadcast %cst_6 : f32 to vector<1x128xf32>
    %12 = arith.maximumf %10, %11 : vector<1x128xf32>
    %cst_7 = arith.constant 9.99999974E-6 : f32
    %13 = vector.broadcast %cst_7 : f32 to vector<1x128xf32>
    %14 = arith.addf %12, %13 : vector<1x128xf32>
    %15 = math.rsqrt %14 : vector<1x128xf32>
    %16 = arith.mulf %1, %15 : vector<1x128xf32>
    %17 = arith.mulf %5, %16 : vector<1x128xf32>
    %18 = arith.subf %2, %17 : vector<1x128xf32>
    %c0_8 = arith.constant 0 : index
    %c0_9 = arith.constant 0 : index
    %19 = vector.load %arg2[%c0_8, %c0_9] : memref<32x128xbf16, #tpu.memory_space<vmem>>, vector<32x128xbf16>
    %20 = arith.extf %19 : vector<32x128xbf16> to vector<32x128xf32>
    %21 = vector.broadcast %16 : vector<1x128xf32> to vector<32x128xf32>
    %22 = arith.mulf %20, %21 : vector<32x128xf32>
    %23 = vector.broadcast %18 : vector<1x128xf32> to vector<32x128xf32>
    %24 = arith.addf %22, %23 : vector<32x128xf32>
    %cst_10 = arith.constant 0.000000e+00 : f32
    %25 = vector.broadcast %cst_10 : f32 to vector<32x128xf32>
    %26 = arith.maximumf %24, %25 : vector<32x128xf32>
    %27 = arith.truncf %26 : vector<32x128xf32> to vector<32x128xbf16>
    %c0_11 = arith.constant 0 : index
    %c0_12 = arith.constant 0 : index
    %28 = vector.load %arg6[%c0_11, %c0_12] : memref<128x1024xbf16, #tpu.memory_space<vmem>>, vector<128x1024xbf16>
    %cst_13 = arith.constant dense<0.000000e+00> : vector<32x1024xf32>
    %29 = tpu.matmul %27, %28, %cst_13 {dimension_numbers = #tpu.dot_dimension_numbers<[1], [0], [0], [1], [0, 0, 1, 1], [], []>} : vector<32x128xbf16>, vector<128x1024xbf16>, vector<32x1024xf32> -> vector<32x1024xf32>
    %c0_14 = arith.constant 0 : index
    %c0_15 = arith.constant 0 : index
    %30 = vector.load %arg7[%c0_14, %c0_15] : memref<1x1024xf32, #tpu.memory_space<vmem>>, vector<1x1024xf32>
    %31 = vector.broadcast %30 : vector<1x1024xf32> to vector<32x1024xf32>
    %32 = arith.addf %29, %31 : vector<32x1024xf32>
    %c0_i32 = arith.constant 0 : i32
    %33 = arith.cmpi eq, %arg1, %c0_i32 : i32
    %34 = arith.extui %33 : i1 to i32
    %c0_i32_16 = arith.constant 0 : i32
    %35 = arith.cmpi ne, %34, %c0_i32_16 : i32
    scf.if %35 {
      %cst_44 = arith.constant 0.000000e+00 : f32
      %69 = vector.broadcast %cst_44 : f32 to vector<2x1024xf32>
      %c0_45 = arith.constant 0 : index
      %c0_46 = arith.constant 0 : index
      %c0_47 = arith.constant 0 : index
      %70 = vector.load %arg8[%c0_45, %c0_46, %c0_47] : memref<1x2x1024xf32, #tpu.memory_space<vmem>>, vector<1x2x1024xf32>
      %71 = vector.shape_cast %70 : vector<1x2x1024xf32> to vector<2x1024xf32>
      %72 = vector.shape_cast %69 : vector<2x1024xf32> to vector<1x2x1024xf32>
      tpu.vector_store %arg8[%c0_45, %c0_46, %c0_47], %72 {strides = array<i32>} : memref<1x2x1024xf32, #tpu.memory_space<vmem>>, vector<1x2x1024xf32>,
      %cst_48 = arith.constant 0xFF800000 : f32
      %73 = vector.broadcast %cst_48 : f32 to vector<1x1024xf32>
      %c0_49 = arith.constant 0 : index
      %c0_50 = arith.constant 0 : index
      %c0_51 = arith.constant 0 : index
      %74 = vector.load %arg9[%c0_49, %c0_50, %c0_51] : memref<1x1x1024xf32, #tpu.memory_space<vmem>>, vector<1x1x1024xf32>
      %75 = vector.shape_cast %74 : vector<1x1x1024xf32> to vector<1x1024xf32>
      %76 = vector.shape_cast %73 : vector<1x1024xf32> to vector<1x1x1024xf32>
      tpu.vector_store %arg9[%c0_49, %c0_50, %c0_51], %76 {strides = array<i32>} : memref<1x1x1024xf32, #tpu.memory_space<vmem>>, vector<1x1x1024xf32>,
      %cst_52 = arith.constant 0x7F800000 : f32
      %77 = vector.broadcast %cst_52 : f32 to vector<1x1024xf32>
      %c0_53 = arith.constant 0 : index
      %c0_54 = arith.constant 0 : index
      %c0_55 = arith.constant 0 : index
      %78 = vector.load %arg10[%c0_53, %c0_54, %c0_55] : memref<1x1x1024xf32, #tpu.memory_space<vmem>>, vector<1x1x1024xf32>
      %79 = vector.shape_cast %78 : vector<1x1x1024xf32> to vector<1x1024xf32>
      %80 = vector.shape_cast %77 : vector<1x1024xf32> to vector<1x1x1024xf32>
      tpu.vector_store %arg10[%c0_53, %c0_54, %c0_55], %80 {strides = array<i32>} : memref<1x1x1024xf32, #tpu.memory_space<vmem>>, vector<1x1x1024xf32>,
    } else {
    }
    %c0_17 = arith.constant 0 : index
    %c0_18 = arith.constant 0 : index
    %c0_19 = arith.constant 0 : index
    %36 = vector.load %arg8[%c0_17, %c0_18, %c0_19] : memref<1x2x1024xf32, #tpu.memory_space<vmem>>, vector<1x1x1024xf32>
    %37 = vector.shape_cast %36 : vector<1x1x1024xf32> to vector<1x1024xf32>
    %cst_20 = arith.constant dense<0.000000e+00> : vector<1024xf32>
    %38 = vector.multi_reduction <add>, %32, %cst_20 [0] : vector<32x1024xf32> to vector<1024xf32>
    %39 = vector.shape_cast %38 : vector<1024xf32> to vector<1x1024xf32>
    %40 = arith.addf %37, %39 : vector<1x1024xf32>
    %c0_21 = arith.constant 0 : index
    %c0_22 = arith.constant 0 : index
    %c0_23 = arith.constant 0 : index
    %41 = vector.load %arg8[%c0_21, %c0_22, %c0_23] : memref<1x2x1024xf32, #tpu.memory_space<vmem>>, vector<1x1x1024xf32>
    %42 = vector.shape_cast %41 : vector<1x1x1024xf32> to vector<1x1024xf32>
    %43 = vector.shape_cast %40 : vector<1x1024xf32> to vector<1x1x1024xf32>
    tpu.vector_store %arg8[%c0_21, %c0_22, %c0_23], %43 {strides = array<i32>} : memref<1x2x1024xf32, #tpu.memory_space<vmem>>, vector<1x1x1024xf32>,
    %c0_24 = arith.constant 0 : index
    %c1 = arith.constant 1 : index
    %c0_25 = arith.constant 0 : index
    %44 = vector.load %arg8[%c0_24, %c1, %c0_25] : memref<1x2x1024xf32, #tpu.memory_space<vmem>>, vector<1x1x1024xf32>
    %45 = vector.shape_cast %44 : vector<1x1x1024xf32> to vector<1x1024xf32>
    %46 = arith.mulf %32, %32 : vector<32x1024xf32>
    %cst_26 = arith.constant dense<0.000000e+00> : vector<1024xf32>
    %47 = vector.multi_reduction <add>, %46, %cst_26 [0] : vector<32x1024xf32> to vector<1024xf32>
    %48 = vector.shape_cast %47 : vector<1024xf32> to vector<1x1024xf32>
    %49 = arith.addf %45, %48 : vector<1x1024xf32>
    %c0_27 = arith.constant 0 : index
    %c1_28 = arith.constant 1 : index
    %c0_29 = arith.constant 0 : index
    %50 = vector.load %arg8[%c0_27, %c1_28, %c0_29] : memref<1x2x1024xf32, #tpu.memory_space<vmem>>, vector<1x1x1024xf32>
    %51 = vector.shape_cast %50 : vector<1x1x1024xf32> to vector<1x1024xf32>
    %52 = vector.shape_cast %49 : vector<1x1024xf32> to vector<1x1x1024xf32>
    tpu.vector_store %arg8[%c0_27, %c1_28, %c0_29], %52 {strides = array<i32>} : memref<1x2x1024xf32, #tpu.memory_space<vmem>>, vector<1x1x1024xf32>,
    %c0_30 = arith.constant 0 : index
    %c0_31 = arith.constant 0 : index
    %c0_32 = arith.constant 0 : index
    %53 = vector.load %arg9[%c0_30, %c0_31, %c0_32] : memref<1x1x1024xf32, #tpu.memory_space<vmem>>, vector<1x1x1024xf32>
    %54 = vector.shape_cast %53 : vector<1x1x1024xf32> to vector<1x1024xf32>
    %cst_33 = arith.constant dense<0xFF800000> : vector<1024xf32>
    %55 = vector.multi_reduction <maximumf>, %32, %cst_33 [0] : vector<32x1024xf32> to vector<1024xf32>
    %56 = vector.shape_cast %55 : vector<1024xf32> to vector<1x1024xf32>
    %57 = arith.maximumf %54, %56 : vector<1x1024xf32>
    %c0_34 = arith.constant 0 : index
    %c0_35 = arith.constant 0 : index
    %c0_36 = arith.constant 0 : index
    %58 = vector.load %arg9[%c0_34, %c0_35, %c0_36] : memref<1x1x1024xf32, #tpu.memory_space<vmem>>, vector<1x1x1024xf32>
    %59 = vector.shape_cast %58 : vector<1x1x1024xf32> to vector<1x1024xf32>
    %60 = vector.shape_cast %57 : vector<1x1024xf32> to vector<1x1x1024xf32>
    tpu.vector_store %arg9[%c0_34, %c0_35, %c0_36], %60 {strides = array<i32>} : memref<1x1x1024xf32, #tpu.memory_space<vmem>>, vector<1x1x1024xf32>,
    %c0_37 = arith.constant 0 : index
    %c0_38 = arith.constant 0 : index
    %c0_39 = arith.constant 0 : index
    %61 = vector.load %arg10[%c0_37, %c0_38, %c0_39] : memref<1x1x1024xf32, #tpu.memory_space<vmem>>, vector<1x1x1024xf32>
    %62 = vector.shape_cast %61 : vector<1x1x1024xf32> to vector<1x1024xf32>
    %cst_40 = arith.constant dense<0x7F800000> : vector<1024xf32>
    %63 = vector.multi_reduction <minimumf>, %32, %cst_40 [0] : vector<32x1024xf32> to vector<1024xf32>
    %64 = vector.shape_cast %63 : vector<1024xf32> to vector<1x1024xf32>
    %65 = arith.minimumf %62, %64 : vector<1x1024xf32>
    %c0_41 = arith.constant 0 : index
    %c0_42 = arith.constant 0 : index
    %c0_43 = arith.constant 0 : index
    %66 = vector.load %arg10[%c0_41, %c0_42, %c0_43] : memref<1x1x1024xf32, #tpu.memory_space<vmem>>, vector<1x1x1024xf32>
    %67 = vector.shape_cast %66 : vector<1x1x1024xf32> to vector<1x1024xf32>
    %68 = vector.shape_cast %65 : vector<1x1024xf32> to vector<1x1x1024xf32>
    tpu.vector_store %arg10[%c0_41, %c0_42, %c0_43], %68 {strides = array<i32>} : memref<1x1x1024xf32, #tpu.memory_space<vmem>>, vector<1x1x1024xf32>,
    return
  }
  func.func @transform_0(%arg0: i32, %arg1: i32) -> (i32, i32) {
    %c4_i32 = arith.constant 4 : i32
    %0 = arith.muli %arg0, %c4_i32 : i32
    %1 = arith.addi %0, %arg1 : i32
    %c0_i32 = arith.constant 0 : i32
    %c0_i32_0 = arith.constant 0 : i32
    return %1, %c0_i32 : i32, i32
  }
  func.func @transform_1(%arg0: i32, %arg1: i32) -> (i32, i32) {
    %c0_i32 = arith.constant 0 : i32
    %c0_i32_0 = arith.constant 0 : i32
    %c0_i32_1 = arith.constant 0 : i32
    return %c0_i32, %c0_i32_0 : i32, i32
  }
  func.func @transform_2(%arg0: i32, %arg1: i32) -> (i32, i32) {
    %c0_i32 = arith.constant 0 : i32
    %c0_i32_0 = arith.constant 0 : i32
    %c0_i32_1 = arith.constant 0 : i32
    return %c0_i32, %c0_i32_0 : i32, i32
  }
  func.func @transform_3(%arg0: i32, %arg1: i32) -> (i32, i32) {
    %c0_i32 = arith.constant 0 : i32
    %c0_i32_0 = arith.constant 0 : i32
    %c0_i32_1 = arith.constant 0 : i32
    return %c0_i32, %c0_i32_0 : i32, i32
  }
  func.func @transform_4(%arg0: i32, %arg1: i32) -> (i32, i32) {
    %c0_i32 = arith.constant 0 : i32
    %c0_i32_0 = arith.constant 0 : i32
    %c0_i32_1 = arith.constant 0 : i32
    return %c0_i32, %c0_i32_0 : i32, i32
  }
  func.func @transform_5(%arg0: i32, %arg1: i32) -> (i32, i32) {
    %c0_i32 = arith.constant 0 : i32
    %c0_i32_0 = arith.constant 0 : i32
    %c0_i32_1 = arith.constant 0 : i32
    return %c0_i32, %c0_i32_0 : i32, i32
  }
  func.func @transform_6(%arg0: i32, %arg1: i32) -> (i32, i32, i32) {
    %c0_i32 = arith.constant 0 : i32
    %c0_i32_0 = arith.constant 0 : i32
    %c0_i32_1 = arith.constant 0 : i32
    return %arg0, %c0_i32, %c0_i32_0 : i32, i32, i32
  }
  func.func @transform_7(%arg0: i32, %arg1: i32) -> (i32, i32, i32) {
    %c0_i32 = arith.constant 0 : i32
    %c0_i32_0 = arith.constant 0 : i32
    %c0_i32_1 = arith.constant 0 : i32
    return %arg0, %c0_i32, %c0_i32_0 : i32, i32, i32
  }
  func.func @transform_8(%arg0: i32, %arg1: i32) -> (i32, i32, i32) {
    %c0_i32 = arith.constant 0 : i32
    %c0_i32_0 = arith.constant 0 : i32
    %c0_i32_1 = arith.constant 0 : i32
    return %arg0, %c0_i32, %c0_i32_0 : i32, i32, i32
  }
}

module attributes {stable_mosaic.version = 11 : i64} {
  func.func @_head_kernel(%arg0: memref<4x1x1024xf32, #tpu.memory_space<vmem>>, %arg1: memref<4x1x1024xf32, #tpu.memory_space<vmem>>, %arg2: memref<4x2x1024xf32, #tpu.memory_space<vmem>>, %arg3: memref<1x1024xf32, #tpu.memory_space<vmem>>, %arg4: memref<1x1024xf32, #tpu.memory_space<vmem>>, %arg5: memref<1024x32xbf16, #tpu.memory_space<vmem>>, %arg6: memref<1x32xf32, #tpu.memory_space<vmem>>, %arg7: memref<1x32xf32, #tpu.memory_space<vmem>>, %arg8: memref<1x32xf32, #tpu.memory_space<vmem>>, %arg9: memref<4x32xf32, #tpu.memory_space<vmem>>) attributes {dimension_semantics = [], scalar_prefetch = 0 : i64, scratch_operands = 0 : i64, tpu.core_type = #tpu.core_type<tc>} {
    %c0 = arith.constant 0 : index
    %c0_0 = arith.constant 0 : index
    %c0_1 = arith.constant 0 : index
    %0 = vector.load %arg2[%c0, %c0_0, %c0_1] : memref<4x2x1024xf32, #tpu.memory_space<vmem>>, vector<4x2x1024xf32>
    %cst = arith.constant dense<0.000000e+00> : vector<2x1024xf32>
    %1 = vector.multi_reduction <add>, %0, %cst [0] : vector<4x2x1024xf32> to vector<2x1024xf32>
    %c0_2 = arith.constant 0 : index
    %c0_3 = arith.constant 0 : index
    %2 = vector.load %arg3[%c0_2, %c0_3] : memref<1x1024xf32, #tpu.memory_space<vmem>>, vector<1x1024xf32>
    %c0_4 = arith.constant 0 : index
    %c0_5 = arith.constant 0 : index
    %3 = vector.load %arg4[%c0_4, %c0_5] : memref<1x1024xf32, #tpu.memory_space<vmem>>, vector<1x1024xf32>
    %4 = vector.extract_strided_slice %1 {offsets = [0, 0], sizes = [1, 1024], strides = [1, 1]} : vector<2x1024xf32> to vector<1x1024xf32>
    %cst_6 = arith.constant 0.001953125 : f32
    %5 = vector.broadcast %cst_6 : f32 to vector<1x1024xf32>
    %6 = arith.mulf %4, %5 : vector<1x1024xf32>
    %7 = vector.extract_strided_slice %1 {offsets = [1, 0], sizes = [1, 1024], strides = [1, 1]} : vector<2x1024xf32> to vector<1x1024xf32>
    %cst_7 = arith.constant 0.001953125 : f32
    %8 = vector.broadcast %cst_7 : f32 to vector<1x1024xf32>
    %9 = arith.mulf %7, %8 : vector<1x1024xf32>
    %10 = arith.mulf %6, %6 : vector<1x1024xf32>
    %11 = arith.subf %9, %10 : vector<1x1024xf32>
    %cst_8 = arith.constant 0.000000e+00 : f32
    %12 = vector.broadcast %cst_8 : f32 to vector<1x1024xf32>
    %13 = arith.maximumf %11, %12 : vector<1x1024xf32>
    %cst_9 = arith.constant 9.99999974E-6 : f32
    %14 = vector.broadcast %cst_9 : f32 to vector<1x1024xf32>
    %15 = arith.addf %13, %14 : vector<1x1024xf32>
    %16 = math.rsqrt %15 : vector<1x1024xf32>
    %17 = arith.mulf %2, %16 : vector<1x1024xf32>
    %18 = arith.mulf %6, %17 : vector<1x1024xf32>
    %19 = arith.subf %3, %18 : vector<1x1024xf32>
    %c0_10 = arith.constant 0 : index
    %c0_11 = arith.constant 0 : index
    %c0_12 = arith.constant 0 : index
    %20 = vector.load %arg0[%c0_10, %c0_11, %c0_12] : memref<4x1x1024xf32, #tpu.memory_space<vmem>>, vector<4x1x1024xf32>
    %21 = vector.shape_cast %20 : vector<4x1x1024xf32> to vector<4x1024xf32>
    %c0_13 = arith.constant 0 : index
    %c0_14 = arith.constant 0 : index
    %c0_15 = arith.constant 0 : index
    %22 = vector.load %arg1[%c0_13, %c0_14, %c0_15] : memref<4x1x1024xf32, #tpu.memory_space<vmem>>, vector<4x1x1024xf32>
    %23 = vector.shape_cast %22 : vector<4x1x1024xf32> to vector<4x1024xf32>
    %cst_16 = arith.constant 0.000000e+00 : f32
    %24 = vector.broadcast %cst_16 : f32 to vector<1x1024xf32>
    %25 = arith.cmpf oge, %17, %24 : vector<1x1024xf32>
    %26 = vector.broadcast %17 : vector<1x1024xf32> to vector<4x1024xf32>
    %27 = arith.mulf %21, %26 : vector<4x1024xf32>
    %28 = vector.broadcast %17 : vector<1x1024xf32> to vector<4x1024xf32>
    %29 = arith.mulf %23, %28 : vector<4x1024xf32>
    %30 = vector.shape_cast %25 : vector<1x1024xi1> to vector<1x1024xi1>
    %31 = vector.broadcast %30 : vector<1x1024xi1> to vector<4x1024xi1>
    %32 = arith.select %31, %27, %29 : vector<4x1024xi1>, vector<4x1024xf32>
    %33 = vector.broadcast %19 : vector<1x1024xf32> to vector<4x1024xf32>
    %34 = arith.addf %32, %33 : vector<4x1024xf32>
    %cst_17 = arith.constant 0.000000e+00 : f32
    %35 = vector.broadcast %cst_17 : f32 to vector<4x1024xf32>
    %36 = arith.maximumf %34, %35 : vector<4x1024xf32>
    %37 = arith.truncf %36 : vector<4x1024xf32> to vector<4x1024xbf16>
    %c0_18 = arith.constant 0 : index
    %c0_19 = arith.constant 0 : index
    %38 = vector.load %arg5[%c0_18, %c0_19] : memref<1024x32xbf16, #tpu.memory_space<vmem>>, vector<1024x32xbf16>
    %cst_20 = arith.constant dense<0.000000e+00> : vector<4x32xf32>
    %39 = tpu.matmul %37, %38, %cst_20 {dimension_numbers = #tpu.dot_dimension_numbers<[1], [0], [0], [1], [0, 0, 1, 1], [], []>} : vector<4x1024xbf16>, vector<1024x32xbf16>, vector<4x32xf32> -> vector<4x32xf32>
    %c0_21 = arith.constant 0 : index
    %c0_22 = arith.constant 0 : index
    %40 = vector.load %arg6[%c0_21, %c0_22] : memref<1x32xf32, #tpu.memory_space<vmem>>, vector<1x32xf32>
    %41 = vector.broadcast %40 : vector<1x32xf32> to vector<4x32xf32>
    %42 = arith.addf %39, %41 : vector<4x32xf32>
    %cst_23 = arith.constant dense<0.000000e+00> : vector<32xf32>
    %43 = vector.multi_reduction <add>, %42, %cst_23 [0] : vector<4x32xf32> to vector<32xf32>
    %44 = vector.shape_cast %43 : vector<32xf32> to vector<1x32xf32>
    %cst_24 = arith.constant 4.000000e+00 : f32
    %45 = vector.broadcast %cst_24 : f32 to vector<1x32xf32>
    %46 = arith.divf %44, %45 : vector<1x32xf32>
    %47 = vector.broadcast %46 : vector<1x32xf32> to vector<4x32xf32>
    %48 = arith.subf %42, %47 : vector<4x32xf32>
    %49 = vector.broadcast %46 : vector<1x32xf32> to vector<4x32xf32>
    %50 = arith.subf %42, %49 : vector<4x32xf32>
    %51 = arith.mulf %48, %50 : vector<4x32xf32>
    %cst_25 = arith.constant dense<0.000000e+00> : vector<32xf32>
    %52 = vector.multi_reduction <add>, %51, %cst_25 [0] : vector<4x32xf32> to vector<32xf32>
    %53 = vector.shape_cast %52 : vector<32xf32> to vector<1x32xf32>
    %cst_26 = arith.constant 4.000000e+00 : f32
    %54 = vector.broadcast %cst_26 : f32 to vector<1x32xf32>
    %55 = arith.divf %53, %54 : vector<1x32xf32>
    %56 = vector.broadcast %46 : vector<1x32xf32> to vector<4x32xf32>
    %57 = arith.subf %42, %56 : vector<4x32xf32>
    %cst_27 = arith.constant 9.99999974E-6 : f32
    %58 = vector.broadcast %cst_27 : f32 to vector<1x32xf32>
    %59 = arith.addf %55, %58 : vector<1x32xf32>
    %60 = math.rsqrt %59 : vector<1x32xf32>
    %61 = vector.broadcast %60 : vector<1x32xf32> to vector<4x32xf32>
    %62 = arith.mulf %57, %61 : vector<4x32xf32>
    %c0_28 = arith.constant 0 : index
    %c0_29 = arith.constant 0 : index
    %63 = vector.load %arg7[%c0_28, %c0_29] : memref<1x32xf32, #tpu.memory_space<vmem>>, vector<1x32xf32>
    %64 = vector.broadcast %63 : vector<1x32xf32> to vector<4x32xf32>
    %65 = arith.mulf %62, %64 : vector<4x32xf32>
    %c0_30 = arith.constant 0 : index
    %c0_31 = arith.constant 0 : index
    %66 = vector.load %arg8[%c0_30, %c0_31] : memref<1x32xf32, #tpu.memory_space<vmem>>, vector<1x32xf32>
    %67 = vector.broadcast %66 : vector<1x32xf32> to vector<4x32xf32>
    %68 = arith.addf %65, %67 : vector<4x32xf32>
    %cst_32 = arith.constant 0.000000e+00 : f32
    %69 = vector.broadcast %cst_32 : f32 to vector<4x32xf32>
    %70 = arith.maximumf %68, %69 : vector<4x32xf32>
    %c0_33 = arith.constant 0 : index
    %c0_34 = arith.constant 0 : index
    %71 = vector.load %arg9[%c0_33, %c0_34] : memref<4x32xf32, #tpu.memory_space<vmem>>, vector<4x32xf32>
    tpu.vector_store %arg9[%c0_33, %c0_34], %70 {strides = array<i32>} : memref<4x32xf32, #tpu.memory_space<vmem>>, vector<4x32xf32>,
    return
  }
}

</mosaic_0001>

<llo_original>
// kernel: pointnet2_forward.6
$region0: #{pointnet2_forward.6}
  #allocation0 [shape = 'u32[]', space=smem, size = 0x4, offset = 0x4, fixed_abs, tag = 'smem constant byte address 0x4 - core index']
  #allocation1 [shape = 'u32[144,128]{1,0:T(1,128)}', space=vmem, size = 0x12000, scoped, tag = 'internal scratch']
  %s0 = inlined_call_operand.vmem [shape: f32[512,3], index: 0, kind: input, shape index: {}]
  %s1 = inlined_call_operand.vmem [shape: f32[3,64], index: 1, kind: input, shape index: {}]
  %s2 = inlined_call_operand.vmem [shape: f32[1,64], index: 2, kind: input, shape index: {}]
  %s3 = inlined_call_operand.vmem [shape: f32[2,64], index: 3, kind: output, shape index: {}]
  %s4 = sld [smem:[#allocation0]]
  $region49: #{pointnet2_forward.6} parent=0
    _
  %s6 = ssub.s32 1, %s4
  %s7 = scalar_select 0, %s6, %s4
  loop: start=0, step=1, limit=6
  $region2: #{pointnet2_forward.6} parent=0 // loop_pre_header
    _
  $region3: #{pointnet2_forward.6} parent=0 // loop_header
    %s9 = sphi 0, %s13
    %p10 = scmp.ge.s32.totalorder %s9, 6
    %s19 = sphi 0, %s21
    %s22 = sphi 0, %s19
    %s23 = sphi 0, %s22
    %s39 = sphi 0, %s23
    %s43 = sphi 0, %s43
    %s45 = sphi 0, %s43
    %s46 = sphi 0, %s45
    %s60 = sphi 0, %s46
    %s64 = sphi 0, %s64
    %s66 = sphi 0, %s64
    %s67 = sphi 0, %s66
    %s81 = sphi 0, %s67
    %s85 = sphi 0, %s85
    %s87 = sphi 0, %s85
    %s88 = sphi 0, %s87
    %s102 = sphi 0, %s88
  $region4: #{pointnet2_forward.6} parent=0 // loop_header_branch
    %12 = sbr.rel (%p10) target = $region8
  $region5: #{pointnet2_forward.6} parent=0 // loop_body
    %s14 = ssub.s32 %s9, 1
    %s15 = ssub.s32 %s9, 2
    %s16 = sadd.s32 %s9, 1
    %s17 = ssub.s32 %s9, %s16
    %p18 = scmp.eq.s32.totalorder %s17, 0
    %s20 = sadd.s32 %s19, 1
    %s21 = scalar_select %p18, %s19, %s20
    %p24 = pneg %p18
    %p25 = scmp.eq.s32.totalorder %s9, 3
    %p26 = por %p24, %p25
    %p27 = scmp.ne.s32.totalorder %s19, %s22
    %p28 = scmp.eq.s32.totalorder %s9, 0
    %p29 = por %p27, %p28
    %p30 = scmp.ne.s32.totalorder %s19, %s22
    %p31 = scmp.eq.s32.totalorder %s14, 3
    %p32 = por %p30, %p31
    %p33 = scmp.ne.s32.totalorder %s22, %s23
    %p34 = scmp.eq.s32.totalorder %s14, 0
    %p35 = por %p33, %p34
    %p36 = scmp.ne.s32.totalorder %s22, %s23
    %p37 = scmp.eq.s32.totalorder %s15, 3
    %p38 = por %p36, %p37
    %p40 = scmp.ne.s32.totalorder %s23, %s39
    %p41 = scmp.eq.s32.totalorder %s15, 0
    %p42 = por %p40, %p41
    %s44 = sadd.s32 %s43, 1
    %p47 = scmp.eq.s32.totalorder %s9, 3
    %p48 = scmp.ne.s32.totalorder %s43, %s45
    %p49 = scmp.eq.s32.totalorder %s9, 0
    %p50 = por %p48, %p49
    %p51 = scmp.ne.s32.totalorder %s43, %s45
    %p52 = scmp.eq.s32.totalorder %s14, 3
    %p53 = por %p51, %p52
    %p54 = scmp.ne.s32.totalorder %s45, %s46
    %p55 = scmp.eq.s32.totalorder %s14, 0
    %p56 = por %p54, %p55
    %p57 = scmp.ne.s32.totalorder %s45, %s46
    %p58 = scmp.eq.s32.totalorder %s15, 3
    %p59 = por %p57, %p58
    %p61 = scmp.ne.s32.totalorder %s46, %s60
    %p62 = scmp.eq.s32.totalorder %s15, 0
    %p63 = por %p61, %p62
    %s65 = sadd.s32 %s64, 1
    %p68 = scmp.eq.s32.totalorder %s9, 3
    %p69 = scmp.ne.s32.totalorder %s64, %s66
    %p70 = scmp.eq.s32.totalorder %s9, 0
    %p71 = por %p69, %p70
    %p72 = scmp.ne.s32.totalorder %s64, %s66
    %p73 = scmp.eq.s32.totalorder %s14, 3
    %p74 = por %p72, %p73
    %p75 = scmp.ne.s32.totalorder %s66, %s67
    %p76 = scmp.eq.s32.totalorder %s14, 0
    %p77 = por %p75, %p76
    %p78 = scmp.ne.s32.totalorder %s66, %s67
    %p79 = scmp.eq.s32.totalorder %s15, 3
    %p80 = por %p78, %p79
    %p82 = scmp.ne.s32.totalorder %s67, %s81
    %p83 = scmp.eq.s32.totalorder %s15, 0
    %p84 = por %p82, %p83
    %s86 = sadd.s32 %s85, 1
    %p89 = scmp.eq.s32.totalorder %s9, 3
    %p90 = scmp.ne.s32.totalorder %s85, %s87
    %p91 = scmp.eq.s32.totalorder %s9, 0
    %p92 = por %p90, %p91
    %p93 = scmp.ne.s32.totalorder %s85, %s87
    %p94 = scmp.eq.s32.totalorder %s14, 3
    %p95 = por %p93, %p94
    %p96 = scmp.ne.s32.totalorder %s87, %s88
    %p97 = scmp.eq.s32.totalorder %s14, 0
    %p98 = por %p96, %p97
    %p99 = scmp.ne.s32.totalorder %s87, %s88
    %p100 = scmp.eq.s32.totalorder %s15, 3
    %p101 = por %p99, %p100
    %p103 = scmp.ne.s32.totalorder %s88, %s102
    %p104 = scmp.eq.s32.totalorder %s15, 0
    %p105 = por %p103, %p104
    %p106 = scmp.le.s32.totalorder 1, %s9
    %p107 = scmp.lt.s32.totalorder %s9, 5
    %p108 = pnand %p106, %p107
    %p109 = pneg %p108
    // Predicated region
    $region9: #{pointnet2_forward.6} parent=5 // pred_check
      _
    $region10: #{pointnet2_forward.6} parent=5 // pred_check_branch
      %111 = sbr.rel (%p108) target = $region12
    $region11: #{pointnet2_forward.6} parent=5 // pred_region
      %s112 = ssub.s32 %s9, 1
      // Predicated region
      $region13: #{pointnet2_forward.6} parent=11 // pred_check
        %p113 = pneg %p56
      $region14: #{pointnet2_forward.6} parent=11 // pred_check_branch
        %115 = sbr.rel (%p113) target = $region16
      $region15: #{pointnet2_forward.6} parent=11 // pred_region
        _
      $region16: #{pointnet2_forward.6} parent=11 // pred_fallthru
        _
      // Predicated region
      $region17: #{pointnet2_forward.6} parent=11 // pred_check
        %p116 = pneg %p77
      $region18: #{pointnet2_forward.6} parent=11 // pred_check_branch
        %118 = sbr.rel (%p116) target = $region20
      $region19: #{pointnet2_forward.6} parent=11 // pred_region
        _
      $region20: #{pointnet2_forward.6} parent=11 // pred_fallthru
        _
    $region12: #{pointnet2_forward.6} parent=5 // pred_fallthru
      _
    %p119 = scmp.lt.s32.totalorder %s9, 4
    // Predicated region
    $region21: #{pointnet2_forward.6} parent=5 // pred_check
      %p120 = pneg %p119
    $region22: #{pointnet2_forward.6} parent=5 // pred_check_branch
      %122 = sbr.rel (%p120) target = $region24
    $region23: #{pointnet2_forward.6} parent=5 // pred_region
      // Predicated region
      $region25: #{pointnet2_forward.6} parent=23 // pred_check
        %p123 = pneg %p29
      $region26: #{pointnet2_forward.6} parent=23 // pred_check_branch
        %125 = sbr.rel (%p123) target = $region28
      $region27: #{pointnet2_forward.6} parent=23 // pred_region
        %s126 = smul.u32 16, %s9
        %p127 = scmp.lt.s32.totalorder %s126, 63
        %s128 = scalar_select %p127, %s126, 63
        %s129 = smul.addr %s128, 8
        %s130 = scalar_lea.vmem %s0, %s129
        %s131 = smul.u32 16, %s9
      $region28: #{pointnet2_forward.6} parent=23 // pred_fallthru
        _
    $region24: #{pointnet2_forward.6} parent=5 // pred_fallthru
      _
    %p132 = scmp.le.s32.totalorder 1, %s9
    %p133 = scmp.lt.s32.totalorder %s9, 5
    %p134 = pnand %p132, %p133
    %p135 = pneg %p134
    // Predicated region
    $region29: #{pointnet2_forward.6} parent=5 // pred_check
      _
    $region30: #{pointnet2_forward.6} parent=5 // pred_check_branch
      %137 = sbr.rel (%p134) target = $region32
    $region31: #{pointnet2_forward.6} parent=5 // pred_region
      %s138 = ssub.s32 %s9, 1
      %s139 = smul.u32 16, %s14
      %p140 = scmp.lt.s32.totalorder %s139, 63
      %s141 = scalar_select %p140, %s139, 63
      %s142 = smul.addr %s141, 8
      %s143 = scalar_lea.vmem %s0, %s142
      %p144 = pneg %p35
      %p145 = pneg %p32
      %p146 = pneg %p56
      %p147 = pneg %p53
      %p148 = pneg %p77
      %p149 = pneg %p74
      %p150 = pneg %p98
      %p151 = pneg %p95
      %s152 = smul.u32 16, %s14
      %p153 = scmp.lt.s32.totalorder %s152, 63
      %s154 = scalar_select %p153, %s152, 63
      %s155 = smul.addr %s154, 8
      %s156 = scalar_lea.vmem %s0, %s155
      %s157 = smul.u32 16, %s14
      %v158 = vld [vmem:[%s156] sm:$0xff]
      %v159 = vld [vmem:[%s156 + $0x8] sm:$0xff]
      %v160 = vld [vmem:[%s156 + $0x10] sm:$0xff]
      %v161 = vld [vmem:[%s156 + $0x18] sm:$0xff]
      %v162 = vld [vmem:[%s156 + $0x20] sm:$0xff]
      %v163 = vld [vmem:[%s156 + $0x28] sm:$0xff]
      %v164 = vld [vmem:[%s156 + $0x30] sm:$0xff]
      %v165 = vld [vmem:[%s156 + $0x38] sm:$0xff]
      %v166 = vld [vmem:[%s156 + $0x40] sm:$0xff]
      %v167 = vld [vmem:[%s156 + $0x48] sm:$0xff]
      %v168 = vld [vmem:[%s156 + $0x50] sm:$0xff]
      %v169 = vld [vmem:[%s156 + $0x58] sm:$0xff]
      %v170 = vld [vmem:[%s156 + $0x60] sm:$0xff]
      %v171 = vld [vmem:[%s156 + $0x68] sm:$0xff]
      %v172 = vld [vmem:[%s156 + $0x70] sm:$0xff]
      %v173 = vld [vmem:[%s156 + $0x78] sm:$0xff]
      %v174 = vld [vmem:[%s1] sm:$0x1]
      %176 = vset.pattern.permute.xlu0 0
      %177 = vperm.xlu0 %176, %v158
      %v178 = vpop.permute.xlu0 %177
      %181 = vset.pattern.permute.xlu0 0
      %182 = vperm.xlu0 %181, %v159
      %v183 = vpop.permute.xlu0 %182
      %186 = vset.pattern.permute.xlu0 0
      %187 = vperm.xlu0 %186, %v160
      %v188 = vpop.permute.xlu0 %187
      %191 = vset.pattern.permute.xlu0 0
      %192 = vperm.xlu0 %191, %v161
      %v193 = vpop.permute.xlu0 %192
      %196 = vset.pattern.permute.xlu0 0
      %197 = vperm.xlu0 %196, %v162
      %v198 = vpop.permute.xlu0 %197
      %201 = vset.pattern.permute.xlu0 0
      %202 = vperm.xlu0 %201, %v163
      %v203 = vpop.permute.xlu0 %202
      %206 = vset.pattern.permute.xlu0 0
      %207 = vperm.xlu0 %206, %v164
      %v208 = vpop.permute.xlu0 %207
      %211 = vset.pattern.permute.xlu0 0
      %212 = vperm.xlu0 %211, %v165
      %v213 = vpop.permute.xlu0 %212
      %216 = vset.pattern.permute.xlu0 0
      %217 = vperm.xlu0 %216, %v166
      %v218 = vpop.permute.xlu0 %217
      %221 = vset.pattern.permute.xlu0 0
      %222 = vperm.xlu0 %221, %v167
      %v223 = vpop.permute.xlu0 %222
      %226 = vset.pattern.permute.xlu0 0
      %227 = vperm.xlu0 %226, %v168
      %v228 = vpop.permute.xlu0 %227
      %231 = vset.pattern.permute.xlu0 0
      %232 = vperm.xlu0 %231, %v169
      %v233 = vpop.permute.xlu0 %232
      %236 = vset.pattern.permute.xlu0 0
      %237 = vperm.xlu0 %236, %v170
      %v238 = vpop.permute.xlu0 %237
      %241 = vset.pattern.permute.xlu0 0
      %242 = vperm.xlu0 %241, %v171
      %v243 = vpop.permute.xlu0 %242
      %246 = vset.pattern.permute.xlu0 0
      %247 = vperm.xlu0 %246, %v172
      %v248 = vpop.permute.xlu0 %247
      %251 = vset.pattern.permute.xlu0 0
      %252 = vperm.xlu0 %251, %v173
      %v253 = vpop.permute.xlu0 %252
      %v255 = vlaneseq
      %v256 = vshrl.u32 %v255, 7
      %v257 = vsub.s32 0, %v256
      %v258 = vrot.slane %v174, %v257
      %v259 = vmul.f32 %v178, %v258
      %v260 = vmul.f32 %v183, %v258
      %v261 = vmul.f32 %v188, %v258
      %v262 = vmul.f32 %v193, %v258
      %v263 = vmul.f32 %v198, %v258
      %v264 = vmul.f32 %v203, %v258
      %v265 = vmul.f32 %v208, %v258
      %v266 = vmul.f32 %v213, %v258
      %v267 = vmul.f32 %v218, %v258
      %v268 = vmul.f32 %v223, %v258
      %v269 = vmul.f32 %v228, %v258
      %v270 = vmul.f32 %v233, %v258
      %v271 = vmul.f32 %v238, %v258
      %v272 = vmul.f32 %v243, %v258
      %v273 = vmul.f32 %v248, %v258
      %v274 = vmul.f32 %v253, %v258
      %v275 = vld [vmem:[%s1 + $0x1] sm:$0x1]
      %276 = vset.pattern.permute.xlu0 1
      %277 = vperm.xlu0 %276, %v158
      %v278 = vpop.permute.xlu0 %277
      %280 = vset.pattern.permute.xlu0 1
      %281 = vperm.xlu0 %280, %v159
      %v282 = vpop.permute.xlu0 %281
      %284 = vset.pattern.permute.xlu0 1
      %285 = vperm.xlu0 %284, %v160
      %v286 = vpop.permute.xlu0 %285
      %288 = vset.pattern.permute.xlu0 1
      %289 = vperm.xlu0 %288, %v161
      %v290 = vpop.permute.xlu0 %289
      %292 = vset.pattern.permute.xlu0 1
      %293 = vperm.xlu0 %292, %v162
      %v294 = vpop.permute.xlu0 %293
      %296 = vset.pattern.permute.xlu0 1
      %297 = vperm.xlu0 %296, %v163
      %v298 = vpop.permute.xlu0 %297
      %300 = vset.pattern.permute.xlu0 1
      %301 = vperm.xlu0 %300, %v164
      %v302 = vpop.permute.xlu0 %301
      %304 = vset.pattern.permute.xlu0 1
      %305 = vperm.xlu0 %304, %v165
      %v306 = vpop.permute.xlu0 %305
      %308 = vset.pattern.permute.xlu0 1
      %309 = vperm.xlu0 %308, %v166
      %v310 = vpop.permute.xlu0 %309
      %312 = vset.pattern.permute.xlu0 1
      %313 = vperm.xlu0 %312, %v167
      %v314 = vpop.permute.xlu0 %313
      %316 = vset.pattern.permute.xlu0 1
      %317 = vperm.xlu0 %316, %v168
      %v318 = vpop.permute.xlu0 %317
      %320 = vset.pattern.permute.xlu0 1
      %321 = vperm.xlu0 %320, %v169
      %v322 = vpop.permute.xlu0 %321
      %324 = vset.pattern.permute.xlu0 1
      %325 = vperm.xlu0 %324, %v170
      %v326 = vpop.permute.xlu0 %325
      %328 = vset.pattern.permute.xlu0 1
      %329 = vperm.xlu0 %328, %v171
      %v330 = vpop.permute.xlu0 %329
      %332 = vset.pattern.permute.xlu0 1
      %333 = vperm.xlu0 %332, %v172
      %v334 = vpop.permute.xlu0 %333
      %336 = vset.pattern.permute.xlu0 1
      %337 = vperm.xlu0 %336, %v173
      %v338 = vpop.permute.xlu0 %337
      %v340 = vlaneseq
      %v341 = vshrl.u32 %v340, 7
      %v342 = vsub.s32 0, %v341
      %v343 = vrot.slane %v275, %v342
      %v344 = vmul.f32 %v278, %v343
      %v345 = vmul.f32 %v282, %v343
      %v346 = vmul.f32 %v286, %v343
      %v347 = vmul.f32 %v290, %v343
      %v348 = vmul.f32 %v294, %v343
      %v349 = vmul.f32 %v298, %v343
      %v350 = vmul.f32 %v302, %v343
      %v351 = vmul.f32 %v306, %v343
      %v352 = vmul.f32 %v310, %v343
      %v353 = vmul.f32 %v314, %v343
      %v354 = vmul.f32 %v318, %v343
      %v355 = vmul.f32 %v322, %v343
      %v356 = vmul.f32 %v326, %v343
      %v357 = vmul.f32 %v330, %v343
      %v358 = vmul.f32 %v334, %v343
      %v359 = vmul.f32 %v338, %v343
      %v360 = vadd.f32 %v259, %v344
      %v361 = vadd.f32 %v260, %v345
      %v362 = vadd.f32 %v261, %v346
      %v363 = vadd.f32 %v262, %v347
      %v364 = vadd.f32 %v263, %v348
      %v365 = vadd.f32 %v264, %v349
      %v366 = vadd.f32 %v265, %v350
      %v367 = vadd.f32 %v266, %v351
      %v368 = vadd.f32 %v267, %v352
      %v369 = vadd.f32 %v268, %v353
      %v370 = vadd.f32 %v269, %v354
      %v371 = vadd.f32 %v270, %v355
      %v372 = vadd.f32 %v271, %v356
      %v373 = vadd.f32 %v272, %v357
      %v374 = vadd.f32 %v273, %v358
      %v375 = vadd.f32 %v274, %v359
      %v376 = vld [vmem:[%s1 + $0x2] sm:$0x1]
      %377 = vset.pattern.permute.xlu0 2
      %378 = vperm.xlu0 %377, %v158
      %v379 = vpop.permute.xlu0 %378
      %381 = vset.pattern.permute.xlu0 2
      %382 = vperm.xlu0 %381, %v159
      %v383 = vpop.permute.xlu0 %382
      %385 = vset.pattern.permute.xlu0 2
      %386 = vperm.xlu0 %385, %v160
      %v387 = vpop.permute.xlu0 %386
      %389 = vset.pattern.permute.xlu0 2
      %390 = vperm.xlu0 %389, %v161
      %v391 = vpop.permute.xlu0 %390
      %393 = vset.pattern.permute.xlu0 2
      %394 = vperm.xlu0 %393, %v162
      %v395 = vpop.permute.xlu0 %394
      %397 = vset.pattern.permute.xlu0 2
      %398 = vperm.xlu0 %397, %v163
      %v399 = vpop.permute.xlu0 %398
      %401 = vset.pattern.permute.xlu0 2
      %402 = vperm.xlu0 %401, %v164
      %v403 = vpop.permute.xlu0 %402
      %405 = vset.pattern.permute.xlu0 2
      %406 = vperm.xlu0 %405, %v165
      %v407 = vpop.permute.xlu0 %406
      %409 = vset.pattern.permute.xlu0 2
      %410 = vperm.xlu0 %409, %v166
      %v411 = vpop.permute.xlu0 %410
      %413 = vset.pattern.permute.xlu0 2
      %414 = vperm.xlu0 %413, %v167
      %v415 = vpop.permute.xlu0 %414
      %417 = vset.pattern.permute.xlu0 2
      %418 = vperm.xlu0 %417, %v168
      %v419 = vpop.permute.xlu0 %418
      %421 = vset.pattern.permute.xlu0 2
      %422 = vperm.xlu0 %421, %v169
      %v423 = vpop.permute.xlu0 %422
      %425 = vset.pattern.permute.xlu0 2
      %426 = vperm.xlu0 %425, %v170
      %v427 = vpop.permute.xlu0 %426
      %429 = vset.pattern.permute.xlu0 2
      %430 = vperm.xlu0 %429, %v171
      %v431 = vpop.permute.xlu0 %430
      %433 = vset.pattern.permute.xlu0 2
      %434 = vperm.xlu0 %433, %v172
      %v435 = vpop.permute.xlu0 %434
      %437 = vset.pattern.permute.xlu0 2
      %438 = vperm.xlu0 %437, %v173
      %v439 = vpop.permute.xlu0 %438
      %v441 = vlaneseq
      %v442 = vshrl.u32 %v441, 7
      %v443 = vsub.s32 0, %v442
      %v444 = vrot.slane %v376, %v443
      %v445 = vmul.f32 %v379, %v444
      %v446 = vmul.f32 %v383, %v444
      %v447 = vmul.f32 %v387, %v444
      %v448 = vmul.f32 %v391, %v444
      %v449 = vmul.f32 %v395, %v444
      %v450 = vmul.f32 %v399, %v444
      %v451 = vmul.f32 %v403, %v444
      %v452 = vmul.f32 %v407, %v444
      %v453 = vmul.f32 %v411, %v444
      %v454 = vmul.f32 %v415, %v444
      %v455 = vmul.f32 %v419, %v444
      %v456 = vmul.f32 %v423, %v444
      %v457 = vmul.f32 %v427, %v444
      %v458 = vmul.f32 %v431, %v444
      %v459 = vmul.f32 %v435, %v444
      %v460 = vmul.f32 %v439, %v444
      %v461 = vadd.f32 %v360, %v445
      %v462 = vadd.f32 %v361, %v446
      %v463 = vadd.f32 %v362, %v447
      %v464 = vadd.f32 %v363, %v448
      %v465 = vadd.f32 %v364, %v449
      %v466 = vadd.f32 %v365, %v450
      %v467 = vadd.f32 %v366, %v451
      %v468 = vadd.f32 %v367, %v452
      %v469 = vadd.f32 %v368, %v453
      %v470 = vadd.f32 %v369, %v454
      %v471 = vadd.f32 %v370, %v455
      %v472 = vadd.f32 %v371, %v456
      %v473 = vadd.f32 %v372, %v457
      %v474 = vadd.f32 %v373, %v458
      %v475 = vadd.f32 %v374, %v459
      %v476 = vadd.f32 %v375, %v460
      %v477 = vld [vmem:[%s2] sm:$0x1]
      %v479 = vlaneseq
      %v480 = vshrl.u32 %v479, 7
      %v481 = vsub.s32 0, %v480
      %v482 = vrot.slane %v477, %v481
      %v484 = vadd.f32 %v461, %v482
      %v485 = vadd.f32 %v462, %v482
      %v486 = vadd.f32 %v463, %v482
      %v487 = vadd.f32 %v464, %v482
      %v488 = vadd.f32 %v465, %v482
      %v489 = vadd.f32 %v466, %v482
      %v490 = vadd.f32 %v467, %v482
      %v491 = vadd.f32 %v468, %v482
      %v492 = vadd.f32 %v469, %v482
      %v493 = vadd.f32 %v470, %v482
      %v494 = vadd.f32 %v471, %v482
      %v495 = vadd.f32 %v472, %v482
      %v496 = vadd.f32 %v473, %v482
      %v497 = vadd.f32 %v474, %v482
      %v498 = vadd.f32 %v475, %v482
      %v499 = vadd.f32 %v476, %v482
      %p500 = scmp.eq.s32.totalorder %s14, 0
      // Predicated region
      $region33: #{pointnet2_forward.6} parent=31 // pred_check
        %p501 = pneg %p500
      $region34: #{pointnet2_forward.6} parent=31 // pred_check_branch
        %503 = sbr.rel (%p501) target = $region36
      $region35: #{pointnet2_forward.6} parent=31 // pred_region
        %vm504 = vcmask 517120
        %505 = vst.msk [vmem:[%s3] sm:$0x3] %vm504, 0.0
      $region36: #{pointnet2_forward.6} parent=31 // pred_fallthru
        _
      %v506 = vld [vmem:[%s3] sm:$0x1]
      %vm507 = vcmask 523264
      %v508 = vsel %vm507, %v484, 0.0
      %v509 = vsel %vm507, %v485, 0.0
      %v510 = vadd.f32 %v508, %v509
      %v511 = vsel %vm507, %v486, 0.0
      %v512 = vadd.f32 %v510, %v511
      %v513 = vsel %vm507, %v487, 0.0
      %v514 = vadd.f32 %v512, %v513
      %v515 = vsel %vm507, %v488, 0.0
      %v516 = vadd.f32 %v514, %v515
      %v517 = vsel %vm507, %v489, 0.0
      %v518 = vadd.f32 %v516, %v517
      %v519 = vsel %vm507, %v490, 0.0
      %v520 = vadd.f32 %v518, %v519
      %v521 = vsel %vm507, %v491, 0.0
      %v522 = vadd.f32 %v520, %v521
      %v523 = vsel %vm507, %v492, 0.0
      %v524 = vadd.f32 %v522, %v523
      %v525 = vsel %vm507, %v493, 0.0
      %v526 = vadd.f32 %v524, %v525
      %v527 = vsel %vm507, %v494, 0.0
      %v528 = vadd.f32 %v526, %v527
      %v529 = vsel %vm507, %v495, 0.0
      %v530 = vadd.f32 %v528, %v529
      %v531 = vsel %vm507, %v496, 0.0
      %v532 = vadd.f32 %v530, %v531
      %v533 = vsel %vm507, %v497, 0.0
      %v534 = vadd.f32 %v532, %v533
      %v535 = vsel %vm507, %v498, 0.0
      %v536 = vadd.f32 %v534, %v535
      %v537 = vsel %vm507, %v499, 0.0
      %v538 = vadd.f32 %v536, %v537
      %v539 = vrot.slane %v538, 4
      %v540 = vadd.f32 %v538, %v539
      %v541 = vrot.slane %v540, 2
      %v542 = vadd.f32 %v540, %v541
      %v543 = vrot.slane %v542, 1
      %v544 = vadd.f32 %v542, %v543
      %v545 = vadd.f32 %v506, %v544
      %vm546 = vcmask 516096
      %547 = vst.msk [vmem:[%s3] sm:$0x1] %vm546, %v545
      %v548 = vld [vmem:[%s3 + $0x1] sm:$0x1]
      %v549 = vmul.f32 %v484, %v484
      %v550 = vmul.f32 %v485, %v485
      %v551 = vmul.f32 %v486, %v486
      %v552 = vmul.f32 %v487, %v487
      %v553 = vmul.f32 %v488, %v488
      %v554 = vmul.f32 %v489, %v489
      %v555 = vmul.f32 %v490, %v490
      %v556 = vmul.f32 %v491, %v491
      %v557 = vmul.f32 %v492, %v492
      %v558 = vmul.f32 %v493, %v493
      %v559 = vmul.f32 %v494, %v494
      %v560 = vmul.f32 %v495, %v495
      %v561 = vmul.f32 %v496, %v496
      %v562 = vmul.f32 %v497, %v497
      %v563 = vmul.f32 %v498, %v498
      %v564 = vmul.f32 %v499, %v499
      %v565 = vsel %vm507, %v549, 0.0
      %v566 = vsel %vm507, %v550, 0.0
      %v567 = vadd.f32 %v565, %v566
      %v568 = vsel %vm507, %v551, 0.0
      %v569 = vadd.f32 %v567, %v568
      %v570 = vsel %vm507, %v552, 0.0
      %v571 = vadd.f32 %v569, %v570
      %v572 = vsel %vm507, %v553, 0.0
      %v573 = vadd.f32 %v571, %v572
      %v574 = vsel %vm507, %v554, 0.0
      %v575 = vadd.f32 %v573, %v574
      %v576 = vsel %vm507, %v555, 0.0
      %v577 = vadd.f32 %v575, %v576
      %v578 = vsel %vm507, %v556, 0.0
      %v579 = vadd.f32 %v577, %v578
      %v580 = vsel %vm507, %v557, 0.0
      %v581 = vadd.f32 %v579, %v580
      %v582 = vsel %vm507, %v558, 0.0
      %v583 = vadd.f32 %v581, %v582
      %v584 = vsel %vm507, %v559, 0.0
      %v585 = vadd.f32 %v583, %v584
      %v586 = vsel %vm507, %v560, 0.0
      %v587 = vadd.f32 %v585, %v586
      %v588 = vsel %vm507, %v561, 0.0
      %v589 = vadd.f32 %v587, %v588
      %v590 = vsel %vm507, %v562, 0.0
      %v591 = vadd.f32 %v589, %v590
      %v592 = vsel %vm507, %v563, 0.0
      %v593 = vadd.f32 %v591, %v592
      %v594 = vsel %vm507, %v564, 0.0
      %v595 = vadd.f32 %v593, %v594
      %v596 = vrot.slane %v595, 4
      %v597 = vadd.f32 %v595, %v596
      %v598 = vrot.slane %v597, 2
      %v599 = vadd.f32 %v597, %v598
      %v600 = vrot.slane %v599, 1
      %v601 = vadd.f32 %v599, %v600
      %v602 = vadd.f32 %v548, %v601
      %603 = vst.msk [vmem:[%s3 + $0x1] sm:$0x1] %vm546, %v602
      // Predicated region
      $region37: #{pointnet2_forward.6} parent=31 // pred_check
        %p604 = pneg %p95
      $region38: #{pointnet2_forward.6} parent=31 // pred_check_branch
        %606 = sbr.rel (%p604) target = $region40
      $region39: #{pointnet2_forward.6} parent=31 // pred_region
        _
      $region40: #{pointnet2_forward.6} parent=31 // pred_fallthru
        _
      // Predicated region
      $region41: #{pointnet2_forward.6} parent=31 // pred_check
        %p607 = pneg %p95
      $region42: #{pointnet2_forward.6} parent=31 // pred_check_branch
        %609 = sbr.rel (%p607) target = $region44
      $region43: #{pointnet2_forward.6} parent=31 // pred_region
        _
      $region44: #{pointnet2_forward.6} parent=31 // pred_fallthru
        _
    $region32: #{pointnet2_forward.6} parent=5 // pred_fallthru
      _
    %p610 = scmp.le.s32.totalorder 2, %s9
    // Predicated region
    $region45: #{pointnet2_forward.6} parent=5 // pred_check
      %p611 = pneg %p610
    $region46: #{pointnet2_forward.6} parent=5 // pred_check_branch
      %613 = sbr.rel (%p611) target = $region48
    $region47: #{pointnet2_forward.6} parent=5 // pred_region
      %s614 = ssub.s32 %s9, 2
    $region48: #{pointnet2_forward.6} parent=5 // pred_fallthru
      _
  $region6: #{pointnet2_forward.6} parent=0 // loop_footer
    %s13 = sadd.s32 1, %s9
  $region7: #{pointnet2_forward.6} parent=0 // loop_footer_branch
    %8 = sbr.rel target = $region3
  $region8: #{pointnet2_forward.6} parent=0 // loop_exit
    _

// kernel: pointnet2_forward.7
$region0: #{pointnet2_forward.7}
  #allocation0 [shape = 'u32[]', space=smem, size = 0x4, offset = 0x4, fixed_abs, tag = 'smem constant byte address 0x4 - core index']
  #allocation1 [shape = 'u32[144,128]{1,0:T(1,128)}', space=vmem, size = 0x12000, scoped, tag = 'internal scratch']
  %s0 = inlined_call_operand.vmem [shape: f32[512,3], index: 0, kind: input, shape index: {}]
  %s1 = inlined_call_operand.vmem [shape: f32[3,64], index: 1, kind: input, shape index: {}]
  %s2 = inlined_call_operand.vmem [shape: f32[1,64], index: 2, kind: input, shape index: {}]
  %s3 = inlined_call_operand.vmem [shape: f32[2,64], index: 3, kind: input, shape index: {}]
  %s4 = inlined_call_operand.vmem [shape: f32[1,64], index: 4, kind: input, shape index: {}]
  %s5 = inlined_call_operand.vmem [shape: f32[1,64], index: 5, kind: input, shape index: {}]
  %s6 = inlined_call_operand.vmem [shape: bf16[64,64], index: 6, kind: input, shape index: {}]
  %s7 = inlined_call_operand.vmem [shape: f32[1,64], index: 7, kind: input, shape index: {}]
  %s8 = inlined_call_operand.vmem [shape: bf16[512,64], index: 8, kind: output, shape index: {0}]
  %s9 = inlined_call_operand.vmem [shape: f32[2,64], index: 9, kind: output, shape index: {1}]
  %10 = xla_tuple %s8, %s9
  %s11 = sld [smem:[#allocation0]]
  $region77: #{pointnet2_forward.7} parent=0
    _
  %s13 = ssub.s32 1, %s11
  %s14 = scalar_select 0, %s13, %s11
  loop: start=0, step=1, limit=6
  $region2: #{pointnet2_forward.7} parent=0 // loop_pre_header
    _
  $region3: #{pointnet2_forward.7} parent=0 // loop_header
    %s16 = sphi 0, %s20
    %p17 = scmp.ge.s32.totalorder %s16, 6
    %s26 = sphi 0, %s28
    %s29 = sphi 0, %s26
    %s30 = sphi 0, %s29
    %s46 = sphi 0, %s30
    %s50 = sphi 0, %s50
    %s52 = sphi 0, %s50
    %s53 = sphi 0, %s52
    %s67 = sphi 0, %s53
    %s71 = sphi 0, %s71
    %s73 = sphi 0, %s71
    %s74 = sphi 0, %s73
    %s88 = sphi 0, %s74
    %s92 = sphi 0, %s92
    %s94 = sphi 0, %s92
    %s95 = sphi 0, %s94
    %s109 = sphi 0, %s95
    %s113 = sphi 0, %s113
    %s115 = sphi 0, %s113
    %s116 = sphi 0, %s115
    %s130 = sphi 0, %s116
    %s134 = sphi 0, %s134
    %s136 = sphi 0, %s134
    %s137 = sphi 0, %s136
    %s151 = sphi 0, %s137
    %s155 = sphi 0, %s155
    %s157 = sphi 0, %s155
    %s158 = sphi 0, %s157
    %s172 = sphi 0, %s158
    %s176 = sphi 0, %s176
    %s178 = sphi 0, %s176
    %s179 = sphi 0, %s178
    %s193 = sphi 0, %s179
    %s199 = sphi 0, %s201
    %s202 = sphi 0, %s199
    %s203 = sphi 0, %s202
    %s219 = sphi 0, %s203
    %s223 = sphi 0, %s223
    %s225 = sphi 0, %s223
    %s226 = sphi 0, %s225
    %s240 = sphi 0, %s226
  $region4: #{pointnet2_forward.7} parent=0 // loop_header_branch
    %19 = sbr.rel (%p17) target = $region8
  $region5: #{pointnet2_forward.7} parent=0 // loop_body
    %s21 = ssub.s32 %s16, 1
    %s22 = ssub.s32 %s16, 2
    %s23 = sadd.s32 %s16, 1
    %s24 = ssub.s32 %s16, %s23
    %p25 = scmp.eq.s32.totalorder %s24, 0
    %s27 = sadd.s32 %s26, 1
    %s28 = scalar_select %p25, %s26, %s27
    %p31 = pneg %p25
    %p32 = scmp.eq.s32.totalorder %s16, 3
    %p33 = por %p31, %p32
    %p34 = scmp.ne.s32.totalorder %s26, %s29
    %p35 = scmp.eq.s32.totalorder %s16, 0
    %p36 = por %p34, %p35
    %p37 = scmp.ne.s32.totalorder %s26, %s29
    %p38 = scmp.eq.s32.totalorder %s21, 3
    %p39 = por %p37, %p38
    %p40 = scmp.ne.s32.totalorder %s29, %s30
    %p41 = scmp.eq.s32.totalorder %s21, 0
    %p42 = por %p40, %p41
    %p43 = scmp.ne.s32.totalorder %s29, %s30
    %p44 = scmp.eq.s32.totalorder %s22, 3
    %p45 = por %p43, %p44
    %p47 = scmp.ne.s32.totalorder %s30, %s46
    %p48 = scmp.eq.s32.totalorder %s22, 0
    %p49 = por %p47, %p48
    %s51 = sadd.s32 %s50, 1
    %p54 = scmp.eq.s32.totalorder %s16, 3
    %p55 = scmp.ne.s32.totalorder %s50, %s52
    %p56 = scmp.eq.s32.totalorder %s16, 0
    %p57 = por %p55, %p56
    %p58 = scmp.ne.s32.totalorder %s50, %s52
    %p59 = scmp.eq.s32.totalorder %s21, 3
    %p60 = por %p58, %p59
    %p61 = scmp.ne.s32.totalorder %s52, %s53
    %p62 = scmp.eq.s32.totalorder %s21, 0
    %p63 = por %p61, %p62
    %p64 = scmp.ne.s32.totalorder %s52, %s53
    %p65 = scmp.eq.s32.totalorder %s22, 3
    %p66 = por %p64, %p65
    %p68 = scmp.ne.s32.totalorder %s53, %s67
    %p69 = scmp.eq.s32.totalorder %s22, 0
    %p70 = por %p68, %p69
    %s72 = sadd.s32 %s71, 1
    %p75 = scmp.eq.s32.totalorder %s16, 3
    %p76 = scmp.ne.s32.totalorder %s71, %s73
    %p77 = scmp.eq.s32.totalorder %s16, 0
    %p78 = por %p76, %p77
    %p79 = scmp.ne.s32.totalorder %s71, %s73
    %p80 = scmp.eq.s32.totalorder %s21, 3
    %p81 = por %p79, %p80
    %p82 = scmp.ne.s32.totalorder %s73, %s74
    %p83 = scmp.eq.s32.totalorder %s21, 0
    %p84 = por %p82, %p83
    %p85 = scmp.ne.s32.totalorder %s73, %s74
    %p86 = scmp.eq.s32.totalorder %s22, 3
    %p87 = por %p85, %p86
    %p89 = scmp.ne.s32.totalorder %s74, %s88
    %p90 = scmp.eq.s32.totalorder %s22, 0
    %p91 = por %p89, %p90
    %s93 = sadd.s32 %s92, 1
    %p96 = scmp.eq.s32.totalorder %s16, 3
    %p97 = scmp.ne.s32.totalorder %s92, %s94
    %p98 = scmp.eq.s32.totalorder %s16, 0
    %p99 = por %p97, %p98
    %p100 = scmp.ne.s32.totalorder %s92, %s94
    %p101 = scmp.eq.s32.totalorder %s21, 3
    %p102 = por %p100, %p101
    %p103 = scmp.ne.s32.totalorder %s94, %s95
    %p104 = scmp.eq.s32.totalorder %s21, 0
    %p105 = por %p103, %p104
    %p106 = scmp.ne.s32.totalorder %s94, %s95
    %p107 = scmp.eq.s32.totalorder %s22, 3
    %p108 = por %p106, %p107
    %p110 = scmp.ne.s32.totalorder %s95, %s109
    %p111 = scmp.eq.s32.totalorder %s22, 0
    %p112 = por %p110, %p111
    %s114 = sadd.s32 %s113, 1
    %p117 = scmp.eq.s32.totalorder %s16, 3
    %p118 = scmp.ne.s32.totalorder %s113, %s115
    %p119 = scmp.eq.s32.totalorder %s16, 0
    %p120 = por %p118, %p119
    %p121 = scmp.ne.s32.totalorder %s113, %s115
    %p122 = scmp.eq.s32.totalorder %s21, 3
    %p123 = por %p121, %p122
    %p124 = scmp.ne.s32.totalorder %s115, %s116
    %p125 = scmp.eq.s32.totalorder %s21, 0
    %p126 = por %p124, %p125
    %p127 = scmp.ne.s32.totalorder %s115, %s116
    %p128 = scmp.eq.s32.totalorder %s22, 3
    %p129 = por %p127, %p128
    %p131 = scmp.ne.s32.totalorder %s116, %s130
    %p132 = scmp.eq.s32.totalorder %s22, 0
    %p133 = por %p131, %p132
    %s135 = sadd.s32 %s134, 1
    %p138 = scmp.eq.s32.totalorder %s16, 3
    %p139 = scmp.ne.s32.totalorder %s134, %s136
    %p140 = scmp.eq.s32.totalorder %s16, 0
    %p141 = por %p139, %p140
    %p142 = scmp.ne.s32.totalorder %s134, %s136
    %p143 = scmp.eq.s32.totalorder %s21, 3
    %p144 = por %p142, %p143
    %p145 = scmp.ne.s32.totalorder %s136, %s137
    %p146 = scmp.eq.s32.totalorder %s21, 0
    %p147 = por %p145, %p146
    %p148 = scmp.ne.s32.totalorder %s136, %s137
    %p149 = scmp.eq.s32.totalorder %s22, 3
    %p150 = por %p148, %p149
    %p152 = scmp.ne.s32.totalorder %s137, %s151
    %p153 = scmp.eq.s32.totalorder %s22, 0
    %p154 = por %p152, %p153
    %s156 = sadd.s32 %s155, 1
    %p159 = scmp.eq.s32.totalorder %s16, 3
    %p160 = scmp.ne.s32.totalorder %s155, %s157
    %p161 = scmp.eq.s32.totalorder %s16, 0
    %p162 = por %p160, %p161
    %p163 = scmp.ne.s32.totalorder %s155, %s157
    %p164 = scmp.eq.s32.totalorder %s21, 3
    %p165 = por %p163, %p164
    %p166 = scmp.ne.s32.totalorder %s157, %s158
    %p167 = scmp.eq.s32.totalorder %s21, 0
    %p168 = por %p166, %p167
    %p169 = scmp.ne.s32.totalorder %s157, %s158
    %p170 = scmp.eq.s32.totalorder %s22, 3
    %p171 = por %p169, %p170
    %p173 = scmp.ne.s32.totalorder %s158, %s172
    %p174 = scmp.eq.s32.totalorder %s22, 0
    %p175 = por %p173, %p174
    %s177 = sadd.s32 %s176, 1
    %p180 = scmp.eq.s32.totalorder %s16, 3
    %p181 = scmp.ne.s32.totalorder %s176, %s178
    %p182 = scmp.eq.s32.totalorder %s16, 0
    %p183 = por %p181, %p182
    %p184 = scmp.ne.s32.totalorder %s176, %s178
    %p185 = scmp.eq.s32.totalorder %s21, 3
    %p186 = por %p184, %p185
    %p187 = scmp.ne.s32.totalorder %s178, %s179
    %p188 = scmp.eq.s32.totalorder %s21, 0
    %p189 = por %p187, %p188
    %p190 = scmp.ne.s32.totalorder %s178, %s179
    %p191 = scmp.eq.s32.totalorder %s22, 3
    %p192 = por %p190, %p191
    %p194 = scmp.ne.s32.totalorder %s179, %s193
    %p195 = scmp.eq.s32.totalorder %s22, 0
    %p196 = por %p194, %p195
    %s197 = ssub.s32 %s16, %s23
    %p198 = scmp.eq.s32.totalorder %s197, 0
    %s200 = sadd.s32 %s199, 1
    %s201 = scalar_select %p198, %s199, %s200
    %p204 = pneg %p198
    %p205 = scmp.eq.s32.totalorder %s16, 3
    %p206 = por %p204, %p205
    %p207 = scmp.ne.s32.totalorder %s199, %s202
    %p208 = scmp.eq.s32.totalorder %s16, 0
    %p209 = por %p207, %p208
    %p210 = scmp.ne.s32.totalorder %s199, %s202
    %p211 = scmp.eq.s32.totalorder %s21, 3
    %p212 = por %p210, %p211
    %p213 = scmp.ne.s32.totalorder %s202, %s203
    %p214 = scmp.eq.s32.totalorder %s21, 0
    %p215 = por %p213, %p214
    %p216 = scmp.ne.s32.totalorder %s202, %s203
    %p217 = scmp.eq.s32.totalorder %s22, 3
    %p218 = por %p216, %p217
    %p220 = scmp.ne.s32.totalorder %s203, %s219
    %p221 = scmp.eq.s32.totalorder %s22, 0
    %p222 = por %p220, %p221
    %s224 = sadd.s32 %s223, 1
    %p227 = scmp.eq.s32.totalorder %s16, 3
    %p228 = scmp.ne.s32.totalorder %s223, %s225
    %p229 = scmp.eq.s32.totalorder %s16, 0
    %p230 = por %p228, %p229
    %p231 = scmp.ne.s32.totalorder %s223, %s225
    %p232 = scmp.eq.s32.totalorder %s21, 3
    %p233 = por %p231, %p232
    %p234 = scmp.ne.s32.totalorder %s225, %s226
    %p235 = scmp.eq.s32.totalorder %s21, 0
    %p236 = por %p234, %p235
    %p237 = scmp.ne.s32.totalorder %s225, %s226
    %p238 = scmp.eq.s32.totalorder %s22, 3
    %p239 = por %p237, %p238
    %p241 = scmp.ne.s32.totalorder %s226, %s240
    %p242 = scmp.eq.s32.totalorder %s22, 0
    %p243 = por %p241, %p242
    %p244 = scmp.le.s32.totalorder 1, %s16
    %p245 = scmp.lt.s32.totalorder %s16, 5
    %p246 = pnand %p244, %p245
    %p247 = pneg %p246
    // Predicated region
    $region9: #{pointnet2_forward.7} parent=5 // pred_check
      _
    $region10: #{pointnet2_forward.7} parent=5 // pred_check_branch
      %249 = sbr.rel (%p246) target = $region12
    $region11: #{pointnet2_forward.7} parent=5 // pred_region
      %s250 = ssub.s32 %s16, 1
      // Predicated region
      $region13: #{pointnet2_forward.7} parent=11 // pred_check
        %p251 = pneg %p63
      $region14: #{pointnet2_forward.7} parent=11 // pred_check_branch
        %253 = sbr.rel (%p251) target = $region16
      $region15: #{pointnet2_forward.7} parent=11 // pred_region
        _
      $region16: #{pointnet2_forward.7} parent=11 // pred_fallthru
        _
      // Predicated region
      $region17: #{pointnet2_forward.7} parent=11 // pred_check
        %p254 = pneg %p84
      $region18: #{pointnet2_forward.7} parent=11 // pred_check_branch
        %256 = sbr.rel (%p254) target = $region20
      $region19: #{pointnet2_forward.7} parent=11 // pred_region
        _
      $region20: #{pointnet2_forward.7} parent=11 // pred_fallthru
        _
      // Predicated region
      $region21: #{pointnet2_forward.7} parent=11 // pred_check
        %p257 = pneg %p105
      $region22: #{pointnet2_forward.7} parent=11 // pred_check_branch
        %259 = sbr.rel (%p257) target = $region24
      $region23: #{pointnet2_forward.7} parent=11 // pred_region
        _
      $region24: #{pointnet2_forward.7} parent=11 // pred_fallthru
        _
      // Predicated region
      $region25: #{pointnet2_forward.7} parent=11 // pred_check
        %p260 = pneg %p126
      $region26: #{pointnet2_forward.7} parent=11 // pred_check_branch
        %262 = sbr.rel (%p260) target = $region28
      $region27: #{pointnet2_forward.7} parent=11 // pred_region
        _
      $region28: #{pointnet2_forward.7} parent=11 // pred_fallthru
        _
      // Predicated region
      $region29: #{pointnet2_forward.7} parent=11 // pred_check
        %p263 = pneg %p147
      $region30: #{pointnet2_forward.7} parent=11 // pred_check_branch
        %265 = sbr.rel (%p263) target = $region32
      $region31: #{pointnet2_forward.7} parent=11 // pred_region
        _
      $region32: #{pointnet2_forward.7} parent=11 // pred_fallthru
        _
      // Predicated region
      $region33: #{pointnet2_forward.7} parent=11 // pred_check
        %p266 = pneg %p168
      $region34: #{pointnet2_forward.7} parent=11 // pred_check_branch
        %268 = sbr.rel (%p266) target = $region36
      $region35: #{pointnet2_forward.7} parent=11 // pred_region
        _
      $region36: #{pointnet2_forward.7} parent=11 // pred_fallthru
        _
      // Predicated region
      $region37: #{pointnet2_forward.7} parent=11 // pred_check
        %p269 = pneg %p189
      $region38: #{pointnet2_forward.7} parent=11 // pred_check_branch
        %271 = sbr.rel (%p269) target = $region40
      $region39: #{pointnet2_forward.7} parent=11 // pred_region
        _
      $region40: #{pointnet2_forward.7} parent=11 // pred_fallthru
        _
    $region12: #{pointnet2_forward.7} parent=5 // pred_fallthru
      _
    %p272 = scmp.lt.s32.totalorder %s16, 4
    // Predicated region
    $region41: #{pointnet2_forward.7} parent=5 // pred_check
      %p273 = pneg %p272
    $region42: #{pointnet2_forward.7} parent=5 // pred_check_branch
      %275 = sbr.rel (%p273) target = $region44
    $region43: #{pointnet2_forward.7} parent=5 // pred_region
      // Predicated region
      $region45: #{pointnet2_forward.7} parent=43 // pred_check
        %p276 = pneg %p36
      $region46: #{pointnet2_forward.7} parent=43 // pred_check_branch
        %278 = sbr.rel (%p276) target = $region48
      $region47: #{pointnet2_forward.7} parent=43 // pred_region
        %s279 = smul.u32 16, %s16
        %p280 = scmp.lt.s32.totalorder %s279, 63
        %s281 = scalar_select %p280, %s279, 63
        %s282 = smul.addr %s281, 8
        %s283 = scalar_lea.vmem %s0, %s282
        %s284 = smul.u32 16, %s16
      $region48: #{pointnet2_forward.7} parent=43 // pred_fallthru
        _
    $region44: #{pointnet2_forward.7} parent=5 // pred_fallthru
      _
    %p285 = scmp.le.s32.totalorder 1, %s16
    %p286 = scmp.lt.s32.totalorder %s16, 5
    %p287 = pnand %p285, %p286
    %p288 = pneg %p287
    // Predicated region
    $region49: #{pointnet2_forward.7} parent=5 // pred_check
      _
    $region50: #{pointnet2_forward.7} parent=5 // pred_check_branch
      %290 = sbr.rel (%p287) target = $region52
    $region51: #{pointnet2_forward.7} parent=5 // pred_region
      %s291 = ssub.s32 %s16, 1
      %s292 = smul.u32 16, %s21
      %p293 = scmp.lt.s32.totalorder %s292, 63
      %s294 = scalar_select %p293, %s292, 63
      %s295 = smul.addr %s294, 8
      %s296 = scalar_lea.vmem %s0, %s295
      %p297 = pneg %p42
      %p298 = pneg %p39
      %p299 = pneg %p63
      %p300 = pneg %p60
      %p301 = pneg %p84
      %p302 = pneg %p81
      %p303 = pneg %p105
      %p304 = pneg %p102
      %p305 = pneg %p126
      %p306 = pneg %p123
      %p307 = pneg %p147
      %p308 = pneg %p144
      %p309 = pneg %p168
      %p310 = pneg %p165
      %p311 = pneg %p189
      %p312 = pneg %p186
      %p313 = pneg %p215
      %p314 = pneg %p212
      %s315 = smul.u32 16, %s21
      %p316 = scmp.lt.s32.totalorder %s315, 63
      %s317 = scalar_select %p316, %s315, 63
      %s318 = smul.addr %s317, 4
      %s319 = scalar_lea.vmem %s8, %s318
      %p320 = pneg %p236
      %p321 = pneg %p233
      %s322 = smul.u32 16, %s21
      %p323 = scmp.lt.s32.totalorder %s322, 63
      %s324 = scalar_select %p323, %s322, 63
      %s325 = smul.addr %s324, 8
      %s326 = scalar_lea.vmem %s0, %s325
      %s327 = smul.u32 16, %s21
      %s328 = smul.u32 16, %s21
      %p329 = scmp.lt.s32.totalorder %s328, 63
      %s330 = scalar_select %p329, %s328, 63
      %s331 = smul.addr %s330, 4
      %s332 = scalar_lea.vmem %s8, %s331
      %s333 = smul.u32 16, %s21
      %v335 = vld [vmem:[%s326] sm:$0xff]
      %v336 = vld [vmem:[%s326 + $0x8] sm:$0xff]
      %v337 = vld [vmem:[%s326 + $0x10] sm:$0xff]
      %v338 = vld [vmem:[%s326 + $0x18] sm:$0xff]
      %v339 = vld [vmem:[%s326 + $0x20] sm:$0xff]
      %v340 = vld [vmem:[%s326 + $0x28] sm:$0xff]
      %v341 = vld [vmem:[%s326 + $0x30] sm:$0xff]
      %v342 = vld [vmem:[%s326 + $0x38] sm:$0xff]
      %v343 = vld [vmem:[%s326 + $0x40] sm:$0xff]
      %v344 = vld [vmem:[%s326 + $0x48] sm:$0xff]
      %v345 = vld [vmem:[%s326 + $0x50] sm:$0xff]
      %v346 = vld [vmem:[%s326 + $0x58] sm:$0xff]
      %v347 = vld [vmem:[%s326 + $0x60] sm:$0xff]
      %v348 = vld [vmem:[%s326 + $0x68] sm:$0xff]
      %v349 = vld [vmem:[%s326 + $0x70] sm:$0xff]
      %v350 = vld [vmem:[%s326 + $0x78] sm:$0xff]
      %v351 = vld [vmem:[%s1] sm:$0x1]
      %353 = vset.pattern.permute.xlu0 0
      %354 = vperm.xlu0 %353, %v335
      %v355 = vpop.permute.xlu0 %354
      %358 = vset.pattern.permute.xlu0 0
      %359 = vperm.xlu0 %358, %v336
      %v360 = vpop.permute.xlu0 %359
      %363 = vset.pattern.permute.xlu0 0
      %364 = vperm.xlu0 %363, %v337
      %v365 = vpop.permute.xlu0 %364
      %368 = vset.pattern.permute.xlu0 0
      %369 = vperm.xlu0 %368, %v338
      %v370 = vpop.permute.xlu0 %369
      %373 = vset.pattern.permute.xlu0 0
      %374 = vperm.xlu0 %373, %v339
      %v375 = vpop.permute.xlu0 %374
      %378 = vset.pattern.permute.xlu0 0
      %379 = vperm.xlu0 %378, %v340
      %v380 = vpop.permute.xlu0 %379
      %383 = vset.pattern.permute.xlu0 0
      %384 = vperm.xlu0 %383, %v341
      %v385 = vpop.permute.xlu0 %384
      %388 = vset.pattern.permute.xlu0 0
      %389 = vperm.xlu0 %388, %v342
      %v390 = vpop.permute.xlu0 %389
      %393 = vset.pattern.permute.xlu0 0
      %394 = vperm.xlu0 %393, %v343
      %v395 = vpop.permute.xlu0 %394
      %398 = vset.pattern.permute.xlu0 0
      %399 = vperm.xlu0 %398, %v344
      %v400 = vpop.permute.xlu0 %399
      %403 = vset.pattern.permute.xlu0 0
      %404 = vperm.xlu0 %403, %v345
      %v405 = vpop.permute.xlu0 %404
      %408 = vset.pattern.permute.xlu0 0
      %409 = vperm.xlu0 %408, %v346
      %v410 = vpop.permute.xlu0 %409
      %413 = vset.pattern.permute.xlu0 0
      %414 = vperm.xlu0 %413, %v347
      %v415 = vpop.permute.xlu0 %414
      %418 = vset.pattern.permute.xlu0 0
      %419 = vperm.xlu0 %418, %v348
      %v420 = vpop.permute.xlu0 %419
      %423 = vset.pattern.permute.xlu0 0
      %424 = vperm.xlu0 %423, %v349
      %v425 = vpop.permute.xlu0 %424
      %428 = vset.pattern.permute.xlu0 0
      %429 = vperm.xlu0 %428, %v350
      %v430 = vpop.permute.xlu0 %429
      %v432 = vlaneseq
      %v433 = vshrl.u32 %v432, 7
      %v434 = vsub.s32 0, %v433
      %v435 = vrot.slane %v351, %v434
      %v436 = vmul.f32 %v355, %v435
      %v437 = vmul.f32 %v360, %v435
      %v438 = vmul.f32 %v365, %v435
      %v439 = vmul.f32 %v370, %v435
      %v440 = vmul.f32 %v375, %v435
      %v441 = vmul.f32 %v380, %v435
      %v442 = vmul.f32 %v385, %v435
      %v443 = vmul.f32 %v390, %v435
      %v444 = vmul.f32 %v395, %v435
      %v445 = vmul.f32 %v400, %v435
      %v446 = vmul.f32 %v405, %v435
      %v447 = vmul.f32 %v410, %v435
      %v448 = vmul.f32 %v415, %v435
      %v449 = vmul.f32 %v420, %v435
      %v450 = vmul.f32 %v425, %v435
      %v451 = vmul.f32 %v430, %v435
      %v452 = vld [vmem:[%s1 + $0x1] sm:$0x1]
      %453 = vset.pattern.permute.xlu0 1
      %454 = vperm.xlu0 %453, %v335
      %v455 = vpop.permute.xlu0 %454
      %457 = vset.pattern.permute.xlu0 1
      %458 = vperm.xlu0 %457, %v336
      %v459 = vpop.permute.xlu0 %458
      %461 = vset.pattern.permute.xlu0 1
      %462 = vperm.xlu0 %461, %v337
      %v463 = vpop.permute.xlu0 %462
      %465 = vset.pattern.permute.xlu0 1
      %466 = vperm.xlu0 %465, %v338
      %v467 = vpop.permute.xlu0 %466
      %469 = vset.pattern.permute.xlu0 1
      %470 = vperm.xlu0 %469, %v339
      %v471 = vpop.permute.xlu0 %470
      %473 = vset.pattern.permute.xlu0 1
      %474 = vperm.xlu0 %473, %v340
      %v475 = vpop.permute.xlu0 %474
      %477 = vset.pattern.permute.xlu0 1
      %478 = vperm.xlu0 %477, %v341
      %v479 = vpop.permute.xlu0 %478
      %481 = vset.pattern.permute.xlu0 1
      %482 = vperm.xlu0 %481, %v342
      %v483 = vpop.permute.xlu0 %482
      %485 = vset.pattern.permute.xlu0 1
      %486 = vperm.xlu0 %485, %v343
      %v487 = vpop.permute.xlu0 %486
      %489 = vset.pattern.permute.xlu0 1
      %490 = vperm.xlu0 %489, %v344
      %v491 = vpop.permute.xlu0 %490
      %493 = vset.pattern.permute.xlu0 1
      %494 = vperm.xlu0 %493, %v345
      %v495 = vpop.permute.xlu0 %494
      %497 = vset.pattern.permute.xlu0 1
      %498 = vperm.xlu0 %497, %v346
      %v499 = vpop.permute.xlu0 %498
      %501 = vset.pattern.permute.xlu0 1
      %502 = vperm.xlu0 %501, %v347
      %v503 = vpop.permute.xlu0 %502
      %505 = vset.pattern.permute.xlu0 1
      %506 = vperm.xlu0 %505, %v348
      %v507 = vpop.permute.xlu0 %506
      %509 = vset.pattern.permute.xlu0 1
      %510 = vperm.xlu0 %509, %v349
      %v511 = vpop.permute.xlu0 %510
      %513 = vset.pattern.permute.xlu0 1
      %514 = vperm.xlu0 %513, %v350
      %v515 = vpop.permute.xlu0 %514
      %v517 = vlaneseq
      %v518 = vshrl.u32 %v517, 7
      %v519 = vsub.s32 0, %v518
      %v520 = vrot.slane %v452, %v519
      %v521 = vmul.f32 %v455, %v520
      %v522 = vmul.f32 %v459, %v520
      %v523 = vmul.f32 %v463, %v520
      %v524 = vmul.f32 %v467, %v520
      %v525 = vmul.f32 %v471, %v520
      %v526 = vmul.f32 %v475, %v520
      %v527 = vmul.f32 %v479, %v520
      %v528 = vmul.f32 %v483, %v520
      %v529 = vmul.f32 %v487, %v520
      %v530 = vmul.f32 %v491, %v520
      %v531 = vmul.f32 %v495, %v520
      %v532 = vmul.f32 %v499, %v520
      %v533 = vmul.f32 %v503, %v520
      %v534 = vmul.f32 %v507, %v520
      %v535 = vmul.f32 %v511, %v520
      %v536 = vmul.f32 %v515, %v520
      %v537 = vadd.f32 %v436, %v521
      %v538 = vadd.f32 %v437, %v522
      %v539 = vadd.f32 %v438, %v523
      %v540 = vadd.f32 %v439, %v524
      %v541 = vadd.f32 %v440, %v525
      %v542 = vadd.f32 %v441, %v526
      %v543 = vadd.f32 %v442, %v527
      %v544 = vadd.f32 %v443, %v528
      %v545 = vadd.f32 %v444, %v529
      %v546 = vadd.f32 %v445, %v530
      %v547 = vadd.f32 %v446, %v531
      %v548 = vadd.f32 %v447, %v532
      %v549 = vadd.f32 %v448, %v533
      %v550 = vadd.f32 %v449, %v534
      %v551 = vadd.f32 %v450, %v535
      %v552 = vadd.f32 %v451, %v536
      %v553 = vld [vmem:[%s1 + $0x2] sm:$0x1]
      %554 = vset.pattern.permute.xlu0 2
      %555 = vperm.xlu0 %554, %v335
      %v556 = vpop.permute.xlu0 %555
      %558 = vset.pattern.permute.xlu0 2
      %559 = vperm.xlu0 %558, %v336
      %v560 = vpop.permute.xlu0 %559
      %562 = vset.pattern.permute.xlu0 2
      %563 = vperm.xlu0 %562, %v337
      %v564 = vpop.permute.xlu0 %563
      %566 = vset.pattern.permute.xlu0 2
      %567 = vperm.xlu0 %566, %v338
      %v568 = vpop.permute.xlu0 %567
      %570 = vset.pattern.permute.xlu0 2
      %571 = vperm.xlu0 %570, %v339
      %v572 = vpop.permute.xlu0 %571
      %574 = vset.pattern.permute.xlu0 2
      %575 = vperm.xlu0 %574, %v340
      %v576 = vpop.permute.xlu0 %575
      %578 = vset.pattern.permute.xlu0 2
      %579 = vperm.xlu0 %578, %v341
      %v580 = vpop.permute.xlu0 %579
      %582 = vset.pattern.permute.xlu0 2
      %583 = vperm.xlu0 %582, %v342
      %v584 = vpop.permute.xlu0 %583
      %586 = vset.pattern.permute.xlu0 2
      %587 = vperm.xlu0 %586, %v343
      %v588 = vpop.permute.xlu0 %587
      %590 = vset.pattern.permute.xlu0 2
      %591 = vperm.xlu0 %590, %v344
      %v592 = vpop.permute.xlu0 %591
      %594 = vset.pattern.permute.xlu0 2
      %595 = vperm.xlu0 %594, %v345
      %v596 = vpop.permute.xlu0 %595
      %598 = vset.pattern.permute.xlu0 2
      %599 = vperm.xlu0 %598, %v346
      %v600 = vpop.permute.xlu0 %599
      %602 = vset.pattern.permute.xlu0 2
      %603 = vperm.xlu0 %602, %v347
      %v604 = vpop.permute.xlu0 %603
      %606 = vset.pattern.permute.xlu0 2
      %607 = vperm.xlu0 %606, %v348
      %v608 = vpop.permute.xlu0 %607
      %610 = vset.pattern.permute.xlu0 2
      %611 = vperm.xlu0 %610, %v349
      %v612 = vpop.permute.xlu0 %611
      %614 = vset.pattern.permute.xlu0 2
      %615 = vperm.xlu0 %614, %v350
      %v616 = vpop.permute.xlu0 %615
      %v618 = vlaneseq
      %v619 = vshrl.u32 %v618, 7
      %v620 = vsub.s32 0, %v619
      %v621 = vrot.slane %v553, %v620
      %v622 = vmul.f32 %v556, %v621
      %v623 = vmul.f32 %v560, %v621
      %v624 = vmul.f32 %v564, %v621
      %v625 = vmul.f32 %v568, %v621
      %v626 = vmul.f32 %v572, %v621
      %v627 = vmul.f32 %v576, %v621
      %v628 = vmul.f32 %v580, %v621
      %v629 = vmul.f32 %v584, %v621
      %v630 = vmul.f32 %v588, %v621
      %v631 = vmul.f32 %v592, %v621
      %v632 = vmul.f32 %v596, %v621
      %v633 = vmul.f32 %v600, %v621
      %v634 = vmul.f32 %v604, %v621
      %v635 = vmul.f32 %v608, %v621
      %v636 = vmul.f32 %v612, %v621
      %v637 = vmul.f32 %v616, %v621
      %v638 = vadd.f32 %v537, %v622
      %v639 = vadd.f32 %v538, %v623
      %v640 = vadd.f32 %v539, %v624
      %v641 = vadd.f32 %v540, %v625
      %v642 = vadd.f32 %v541, %v626
      %v643 = vadd.f32 %v542, %v627
      %v644 = vadd.f32 %v543, %v628
      %v645 = vadd.f32 %v544, %v629
      %v646 = vadd.f32 %v545, %v630
      %v647 = vadd.f32 %v546, %v631
      %v648 = vadd.f32 %v547, %v632
      %v649 = vadd.f32 %v548, %v633
      %v650 = vadd.f32 %v549, %v634
      %v651 = vadd.f32 %v550, %v635
      %v652 = vadd.f32 %v551, %v636
      %v653 = vadd.f32 %v552, %v637
      %v654 = vld [vmem:[%s2] sm:$0x1]
      %v656 = vlaneseq
      %v657 = vshrl.u32 %v656, 7
      %v658 = vsub.s32 0, %v657
      %v659 = vrot.slane %v654, %v658
      %v661 = vadd.f32 %v638, %v659
      %v662 = vadd.f32 %v639, %v659
      %v663 = vadd.f32 %v640, %v659
      %v664 = vadd.f32 %v641, %v659
      %v665 = vadd.f32 %v642, %v659
      %v666 = vadd.f32 %v643, %v659
      %v667 = vadd.f32 %v644, %v659
      %v668 = vadd.f32 %v645, %v659
      %v669 = vadd.f32 %v646, %v659
      %v670 = vadd.f32 %v647, %v659
      %v671 = vadd.f32 %v648, %v659
      %v672 = vadd.f32 %v649, %v659
      %v673 = vadd.f32 %v650, %v659
      %v674 = vadd.f32 %v651, %v659
      %v675 = vadd.f32 %v652, %v659
      %v676 = vadd.f32 %v653, %v659
      %v677 = vld [vmem:[%s3] sm:$0x3]
      %v678 = vld [vmem:[%s4] sm:$0x1]
      %v679 = vld [vmem:[%s5] sm:$0x1]
      %v680 = vmul.f32 %v677, 0.001953125
      %v681 = vmul.f32 %v680, %v680
      %v683 = vrot.slane %v681, 7
      %v685 = vsub.f32 %v680, %v683
      %v686 = vmax.f32 %v685, 0.0
      %v687 = vadd.f32 %v686, 1e-05
      %v688 = vrsqrt.pop %v687
      %v691 = vunpack.c.l.s4 1966171168
      %v692 = vunpack.c.0.s8 %v691
      %v693 = vlaneseq
      %v694 = vshrl.u32 %v693, 7
      %v695 = vsub.s32 %v692, %v694
      %v696 = vrot.slane %v688, %v695
      %v697 = vcombine.high %v696, %v696
      %v699 = vunpack.c.l.s4 1966171168
      %v700 = vunpack.c.0.s8 %v699
      %v701 = vlaneseq
      %v702 = vshrl.u32 %v701, 7
      %v703 = vsub.s32 %v700, %v702
      %v704 = vrot.slane %v697, %v703
      %v706 = vmul.f32 %v678, %v704
      %v707 = vmul.f32 %v680, %v706
      %v708 = vsub.f32 %v679, %v707
      %v710 = vlaneseq
      %v711 = vshrl.u32 %v710, 7
      %v712 = vsub.s32 0, %v711
      %v713 = vrot.slane %v706, %v712
      %v715 = vmul.f32 %v661, %v713
      %v716 = vmul.f32 %v662, %v713
      %v717 = vmul.f32 %v663, %v713
      %v718 = vmul.f32 %v664, %v713
      %v719 = vmul.f32 %v665, %v713
      %v720 = vmul.f32 %v666, %v713
      %v721 = vmul.f32 %v667, %v713
      %v722 = vmul.f32 %v668, %v713
      %v723 = vmul.f32 %v669, %v713
      %v724 = vmul.f32 %v670, %v713
      %v725 = vmul.f32 %v671, %v713
      %v726 = vmul.f32 %v672, %v713
      %v727 = vmul.f32 %v673, %v713
      %v728 = vmul.f32 %v674, %v713
      %v729 = vmul.f32 %v675, %v713
      %v730 = vmul.f32 %v676, %v713
      %v732 = vlaneseq
      %v733 = vshrl.u32 %v732, 7
      %v734 = vsub.s32 0, %v733
      %v735 = vrot.slane %v708, %v734
      %v737 = vadd.f32 %v715, %v735
      %v738 = vadd.f32 %v716, %v735
      %v739 = vadd.f32 %v717, %v735
      %v740 = vadd.f32 %v718, %v735
      %v741 = vadd.f32 %v719, %v735
      %v742 = vadd.f32 %v720, %v735
      %v743 = vadd.f32 %v721, %v735
      %v744 = vadd.f32 %v722, %v735
      %v745 = vadd.f32 %v723, %v735
      %v746 = vadd.f32 %v724, %v735
      %v747 = vadd.f32 %v725, %v735
      %v748 = vadd.f32 %v726, %v735
      %v749 = vadd.f32 %v727, %v735
      %v750 = vadd.f32 %v728, %v735
      %v751 = vadd.f32 %v729, %v735
      %v752 = vadd.f32 %v730, %v735
      %v753 = vmax.f32 %v737, 0.0
      %v754 = vmax.f32 %v738, 0.0
      %v755 = vmax.f32 %v739, 0.0
      %v756 = vmax.f32 %v740, 0.0
      %v757 = vmax.f32 %v741, 0.0
      %v758 = vmax.f32 %v742, 0.0
      %v759 = vmax.f32 %v743, 0.0
      %v760 = vmax.f32 %v744, 0.0
      %v761 = vmax.f32 %v745, 0.0
      %v762 = vmax.f32 %v746, 0.0
      %v763 = vmax.f32 %v747, 0.0
      %v764 = vmax.f32 %v748, 0.0
      %v765 = vmax.f32 %v749, 0.0
      %v766 = vmax.f32 %v750, 0.0
      %v767 = vmax.f32 %v751, 0.0
      %v768 = vmax.f32 %v752, 0.0
      %v769 = vpack.c.bf16 %v754, %v753
      %v770 = vpack.c.bf16 %v756, %v755
      %v771 = vpack.c.bf16 %v758, %v757
      %v772 = vpack.c.bf16 %v760, %v759
      %v773 = vpack.c.bf16 %v762, %v761
      %v774 = vpack.c.bf16 %v764, %v763
      %v775 = vpack.c.bf16 %v766, %v765
      %v776 = vpack.c.bf16 %v768, %v767
      %v777 = vld [vmem:[%s6] sm:$0xf]
      %v778 = vld [vmem:[%s6 + $0x4] sm:$0xf]
      %v779 = vld [vmem:[%s6 + $0x8] sm:$0xf]
      %v780 = vld [vmem:[%s6 + $0xc] sm:$0xf]
      %v781 = vld [vmem:[%s6 + $0x10] sm:$0xf]
      %v782 = vld [vmem:[%s6 + $0x14] sm:$0xf]
      %v783 = vld [vmem:[%s6 + $0x18] sm:$0xf]
      %v784 = vld [vmem:[%s6 + $0x1c] sm:$0xf]
      %v785 = vld [vmem:[%s7] sm:$0x1]
      %v787 = vlaneseq
      %v788 = vshrl.u32 %v787, 7
      %v789 = vsub.s32 0, %v788
      %v790 = vrot.slane %v785, %v789
      %v800 = vunpack.c.l.b16 %v777
      %v801 = vunpack.c.l.b16 %v778
      %v802 = vunpack.c.l.b16 %v779
      %v803 = vunpack.c.l.b16 %v780
      %v804 = vunpack.c.l.b16 %v781
      %v805 = vunpack.c.l.b16 %v782
      %v806 = vunpack.c.l.b16 %v783
      %v807 = vunpack.c.l.b16 %v784
      %v808 = vpack.c.b16 %v801, %v800
      %v809 = vpack.c.b16 %v803, %v802
      %v810 = vpack.c.b16 %v805, %v804
      %v811 = vpack.c.b16 %v807, %v806
      %vm816 = vcmask 523264
      %v818 = vsel %vm816, %v769, 0
      %v821 = vsel %vm816, %v770, 0
      %v824 = vsel %vm816, %v771, 0
      %v827 = vsel %vm816, %v772, 0
      %v830 = vsel %vm816, %v773, 0
      %v833 = vsel %vm816, %v774, 0
      %v836 = vsel %vm816, %v775, 0
      %v839 = vsel %vm816, %v776, 0
      %841 = vmatprep.subr.bf16.mxu0 0
      %842 = vmatpush1.bf16.msra.mxu0 %v808
      %843 = vmatprep.subr.bf16.mxu0 0
      %844 = vmatpush1.bf16.msra.mxu0 %v809
      %845 = vmatprep.subr.bf16.mxu0 0
      %846 = vmatpush1.bf16.msra.mxu0 %v810
      %847 = vmatprep.subr.bf16.mxu0 0
      %848 = vmatpush1.bf16.msra.mxu0 %v811
      %849 = vmatprep.subr.bf16.mxu0 0
      %850 = vmatpush1.bf16.msra.mxu0 0
      %851 = vmatprep.subr.bf16.mxu0 0
      %852 = vmatpush1.bf16.msra.mxu0 0
      %853 = vmatprep.subr.bf16.mxu0 0
      %854 = vmatpush1.bf16.msra.mxu0 0
      %855 = vmatprep.subr.bf16.mxu0 0
      %856 = vmatpush1.bf16.msra.mxu0 0
      %857 = vmatprep.subr.bf16.mxu0 0
      %858 = vmatpush1.bf16.msra.mxu0 0
      %859 = vmatprep.subr.bf16.mxu0 0
      %860 = vmatpush1.bf16.msra.mxu0 0
      %861 = vmatprep.subr.bf16.mxu0 0
      %862 = vmatpush1.bf16.msra.mxu0 0
      %863 = vmatprep.subr.bf16.mxu0 0
      %864 = vmatpush1.bf16.msra.mxu0 0
      %865 = vmatprep.subr.bf16.mxu0 0
      %866 = vmatpush1.bf16.msra.mxu0 0
      %867 = vmatprep.subr.bf16.mxu0 0
      %868 = vmatpush1.bf16.msra.mxu0 0
      %869 = vmatprep.subr.bf16.mxu0 0
      %870 = vmatpush1.bf16.msra.mxu0 0
      %871 = vmatprep.subr.bf16.mxu0 0
      %872 = vmatpush1.bf16.msra.mxu0 0
      %873 = vmatprep.mubr.bf16.mxu0 0
      %874 = vmatmul.mubr.bf16.gmra.mrb[0].mxu0 %v818
      %v875 = vpop.f32.mrb[0].mxu0
      %v876 = vadd.f32 %v790, %v875
      %v877 = vpop.f32.mrb[0].mxu0
      %v878 = vpop.f32.mrb[0].mxu0
      %v879 = vadd.f32 %v790, %v878
      %v880 = vpop.f32.mrb[0].mxu0
      %881 = vmatprep.mubr.bf16.mxu0 0
      %882 = vmatmul.mubr.bf16.gmra.mrb[0].mxu0 %v821
      %v883 = vpop.f32.mrb[0].mxu0
      %v884 = vadd.f32 %v790, %v883
      %v885 = vpop.f32.mrb[0].mxu0
      %v886 = vpop.f32.mrb[0].mxu0
      %v887 = vadd.f32 %v790, %v886
      %v888 = vpop.f32.mrb[0].mxu0
      %889 = vmatprep.mubr.bf16.mxu0 0
      %890 = vmatmul.mubr.bf16.gmra.mrb[0].mxu0 %v824
      %v891 = vpop.f32.mrb[0].mxu0
      %v892 = vadd.f32 %v790, %v891
      %v893 = vpop.f32.mrb[0].mxu0
      %v894 = vpop.f32.mrb[0].mxu0
      %v895 = vadd.f32 %v790, %v894
      %v896 = vpop.f32.mrb[0].mxu0
      %897 = vmatprep.mubr.bf16.mxu0 0
      %898 = vmatmul.mubr.bf16.gmra.mrb[0].mxu0 %v827
      %v899 = vpop.f32.mrb[0].mxu0
      %v900 = vadd.f32 %v790, %v899
      %v901 = vpop.f32.mrb[0].mxu0
      %v902 = vpop.f32.mrb[0].mxu0
      %v903 = vadd.f32 %v790, %v902
      %v904 = vpop.f32.mrb[0].mxu0
      %905 = vmatprep.mubr.bf16.mxu0 0
      %906 = vmatmul.mubr.bf16.gmra.mrb[0].mxu0 %v830
      %v907 = vpop.f32.mrb[0].mxu0
      %v908 = vadd.f32 %v790, %v907
      %v909 = vpop.f32.mrb[0].mxu0
      %v910 = vpop.f32.mrb[0].mxu0
      %v911 = vadd.f32 %v790, %v910
      %v912 = vpop.f32.mrb[0].mxu0
      %913 = vmatprep.mubr.bf16.mxu0 0
      %914 = vmatmul.mubr.bf16.gmra.mrb[0].mxu0 %v833
      %v915 = vpop.f32.mrb[0].mxu0
      %v916 = vadd.f32 %v790, %v915
      %v917 = vpop.f32.mrb[0].mxu0
      %v918 = vpop.f32.mrb[0].mxu0
      %v919 = vadd.f32 %v790, %v918
      %v920 = vpop.f32.mrb[0].mxu0
      %921 = vmatprep.mubr.bf16.mxu0 0
      %922 = vmatmul.mubr.bf16.gmra.mrb[0].mxu0 %v836
      %v923 = vpop.f32.mrb[0].mxu0
      %v924 = vadd.f32 %v790, %v923
      %v925 = vpop.f32.mrb[0].mxu0
      %v926 = vpop.f32.mrb[0].mxu0
      %v927 = vadd.f32 %v790, %v926
      %v928 = vpop.f32.mrb[0].mxu0
      %929 = vmatprep.mubr.bf16.mxu0 0
      %930 = vmatmul.mubr.bf16.gmra.mrb[0].mxu0 %v839
      %v931 = vpop.f32.mrb[0].mxu0
      %v932 = vadd.f32 %v790, %v931
      %v933 = vpop.f32.mrb[0].mxu0
      %v934 = vpop.f32.mrb[0].mxu0
      %v935 = vadd.f32 %v790, %v934
      %v936 = vpop.f32.mrb[0].mxu0
      %937 = vdwg.mxu0
      %v938 = vpack.c.bf16 %v879, %v876
      %v939 = vpack.c.bf16 %v887, %v884
      %v940 = vpack.c.bf16 %v895, %v892
      %v941 = vpack.c.bf16 %v903, %v900
      %v942 = vpack.c.bf16 %v911, %v908
      %v943 = vpack.c.bf16 %v919, %v916
      %v944 = vpack.c.bf16 %v927, %v924
      %v945 = vpack.c.bf16 %v935, %v932
      %v954 = vunpack.c.l.b16 %v938
      %v955 = vunpack.c.h.b16 %v938
      %v956 = vunpack.c.l.b16 %v939
      %v957 = vunpack.c.h.b16 %v939
      %v958 = vunpack.c.l.b16 %v940
      %v959 = vunpack.c.h.b16 %v940
      %v960 = vunpack.c.l.b16 %v941
      %v961 = vunpack.c.h.b16 %v941
      %v962 = vunpack.c.l.b16 %v942
      %v963 = vunpack.c.h.b16 %v942
      %v964 = vunpack.c.l.b16 %v943
      %v965 = vunpack.c.h.b16 %v943
      %v966 = vunpack.c.l.b16 %v944
      %v967 = vunpack.c.h.b16 %v944
      %v968 = vunpack.c.l.b16 %v945
      %v969 = vunpack.c.h.b16 %v945
      %v970 = vpack.c.b16 %v954, %v954
      %v971 = vpack.c.b16 %v955, %v955
      %v972 = vpack.c.b16 %v956, %v956
      %v973 = vpack.c.b16 %v957, %v957
      %v974 = vpack.c.b16 %v958, %v958
      %v975 = vpack.c.b16 %v959, %v959
      %v976 = vpack.c.b16 %v960, %v960
      %v977 = vpack.c.b16 %v961, %v961
      %v978 = vpack.c.b16 %v962, %v962
      %v979 = vpack.c.b16 %v963, %v963
      %v980 = vpack.c.b16 %v964, %v964
      %v981 = vpack.c.b16 %v965, %v965
      %v982 = vpack.c.b16 %v966, %v966
      %v983 = vpack.c.b16 %v967, %v967
      %v984 = vpack.c.b16 %v968, %v968
      %v985 = vpack.c.b16 %v969, %v969
      %vm1002 = vcmask 519168
      %1003 = vst.msk [vmem:[%s332] sm:$0xf] %vm1002, %v970
      %1004 = vst.msk [vmem:[%s332 + $0x4] sm:$0xf] %vm1002, %v971
      %1005 = vst.msk [vmem:[%s332 + $0x8] sm:$0xf] %vm1002, %v972
      %1006 = vst.msk [vmem:[%s332 + $0xc] sm:$0xf] %vm1002, %v973
      %1007 = vst.msk [vmem:[%s332 + $0x10] sm:$0xf] %vm1002, %v974
      %1008 = vst.msk [vmem:[%s332 + $0x14] sm:$0xf] %vm1002, %v975
      %1009 = vst.msk [vmem:[%s332 + $0x18] sm:$0xf] %vm1002, %v976
      %1010 = vst.msk [vmem:[%s332 + $0x1c] sm:$0xf] %vm1002, %v977
      %1011 = vst.msk [vmem:[%s332 + $0x20] sm:$0xf] %vm1002, %v978
      %1012 = vst.msk [vmem:[%s332 + $0x24] sm:$0xf] %vm1002, %v979
      %1013 = vst.msk [vmem:[%s332 + $0x28] sm:$0xf] %vm1002, %v980
      %1014 = vst.msk [vmem:[%s332 + $0x2c] sm:$0xf] %vm1002, %v981
      %1015 = vst.msk [vmem:[%s332 + $0x30] sm:$0xf] %vm1002, %v982
      %1016 = vst.msk [vmem:[%s332 + $0x34] sm:$0xf] %vm1002, %v983
      %1017 = vst.msk [vmem:[%s332 + $0x38] sm:$0xf] %vm1002, %v984
      %1018 = vst.msk [vmem:[%s332 + $0x3c] sm:$0xf] %vm1002, %v985
      %p1019 = scmp.eq.s32.totalorder %s21, 0
      // Predicated region
      $region53: #{pointnet2_forward.7} parent=51 // pred_check
        %p1020 = pneg %p1019
      $region54: #{pointnet2_forward.7} parent=51 // pred_check_branch
        %1022 = sbr.rel (%p1020) target = $region56
      $region55: #{pointnet2_forward.7} parent=51 // pred_region
        %vm1023 = vcmask 517120
        %1024 = vst.msk [vmem:[%s9] sm:$0x3] %vm1023, 0.0
      $region56: #{pointnet2_forward.7} parent=51 // pred_fallthru
        _
      %v1025 = vld [vmem:[%s9] sm:$0x1]
      %v1026 = vsel %vm816, %v876, 0.0
      %v1027 = vsel %vm816, %v879, 0.0
      %v1028 = vadd.f32 %v1026, %v1027
      %v1029 = vsel %vm816, %v884, 0.0
      %v1030 = vadd.f32 %v1028, %v1029
      %v1031 = vsel %vm816, %v887, 0.0
      %v1032 = vadd.f32 %v1030, %v1031
      %v1033 = vsel %vm816, %v892, 0.0
      %v1034 = vadd.f32 %v1032, %v1033
      %v1035 = vsel %vm816, %v895, 0.0
      %v1036 = vadd.f32 %v1034, %v1035
      %v1037 = vsel %vm816, %v900, 0.0
      %v1038 = vadd.f32 %v1036, %v1037
      %v1039 = vsel %vm816, %v903, 0.0
      %v1040 = vadd.f32 %v1038, %v1039
      %v1041 = vsel %vm816, %v908, 0.0
      %v1042 = vadd.f32 %v1040, %v1041
      %v1043 = vsel %vm816, %v911, 0.0
      %v1044 = vadd.f32 %v1042, %v1043
      %v1045 = vsel %vm816, %v916, 0.0
      %v1046 = vadd.f32 %v1044, %v1045
      %v1047 = vsel %vm816, %v919, 0.0
      %v1048 = vadd.f32 %v1046, %v1047
      %v1049 = vsel %vm816, %v924, 0.0
      %v1050 = vadd.f32 %v1048, %v1049
      %v1051 = vsel %vm816, %v927, 0.0
      %v1052 = vadd.f32 %v1050, %v1051
      %v1053 = vsel %vm816, %v932, 0.0
      %v1054 = vadd.f32 %v1052, %v1053
      %v1055 = vsel %vm816, %v935, 0.0
      %v1056 = vadd.f32 %v1054, %v1055
      %v1057 = vrot.slane %v1056, 4
      %v1058 = vadd.f32 %v1056, %v1057
      %v1059 = vrot.slane %v1058, 2
      %v1060 = vadd.f32 %v1058, %v1059
      %v1061 = vrot.slane %v1060, 1
      %v1062 = vadd.f32 %v1060, %v1061
      %v1063 = vadd.f32 %v1025, %v1062
      %vm1064 = vcmask 516096
      %1065 = vst.msk [vmem:[%s9] sm:$0x1] %vm1064, %v1063
      %v1066 = vld [vmem:[%s9 + $0x1] sm:$0x1]
      %v1067 = vmul.f32 %v876, %v876
      %v1068 = vmul.f32 %v879, %v879
      %v1069 = vmul.f32 %v884, %v884
      %v1070 = vmul.f32 %v887, %v887
      %v1071 = vmul.f32 %v892, %v892
      %v1072 = vmul.f32 %v895, %v895
      %v1073 = vmul.f32 %v900, %v900
      %v1074 = vmul.f32 %v903, %v903
      %v1075 = vmul.f32 %v908, %v908
      %v1076 = vmul.f32 %v911, %v911
      %v1077 = vmul.f32 %v916, %v916
      %v1078 = vmul.f32 %v919, %v919
      %v1079 = vmul.f32 %v924, %v924
      %v1080 = vmul.f32 %v927, %v927
      %v1081 = vmul.f32 %v932, %v932
      %v1082 = vmul.f32 %v935, %v935
      %v1083 = vsel %vm816, %v1067, 0.0
      %v1084 = vsel %vm816, %v1068, 0.0
      %v1085 = vadd.f32 %v1083, %v1084
      %v1086 = vsel %vm816, %v1069, 0.0
      %v1087 = vadd.f32 %v1085, %v1086
      %v1088 = vsel %vm816, %v1070, 0.0
      %v1089 = vadd.f32 %v1087, %v1088
      %v1090 = vsel %vm816, %v1071, 0.0
      %v1091 = vadd.f32 %v1089, %v1090
      %v1092 = vsel %vm816, %v1072, 0.0
      %v1093 = vadd.f32 %v1091, %v1092
      %v1094 = vsel %vm816, %v1073, 0.0
      %v1095 = vadd.f32 %v1093, %v1094
      %v1096 = vsel %vm816, %v1074, 0.0
      %v1097 = vadd.f32 %v1095, %v1096
      %v1098 = vsel %vm816, %v1075, 0.0
      %v1099 = vadd.f32 %v1097, %v1098
      %v1100 = vsel %vm816, %v1076, 0.0
      %v1101 = vadd.f32 %v1099, %v1100
      %v1102 = vsel %vm816, %v1077, 0.0
      %v1103 = vadd.f32 %v1101, %v1102
      %v1104 = vsel %vm816, %v1078, 0.0
      %v1105 = vadd.f32 %v1103, %v1104
      %v1106 = vsel %vm816, %v1079, 0.0
      %v1107 = vadd.f32 %v1105, %v1106
      %v1108 = vsel %vm816, %v1080, 0.0
      %v1109 = vadd.f32 %v1107, %v1108
      %v1110 = vsel %vm816, %v1081, 0.0
      %v1111 = vadd.f32 %v1109, %v1110
      %v1112 = vsel %vm816, %v1082, 0.0
      %v1113 = vadd.f32 %v1111, %v1112
      %v1114 = vrot.slane %v1113, 4
      %v1115 = vadd.f32 %v1113, %v1114
      %v1116 = vrot.slane %v1115, 2
      %v1117 = vadd.f32 %v1115, %v1116
      %v1118 = vrot.slane %v1117, 1
      %v1119 = vadd.f32 %v1117, %v1118
      %v1120 = vadd.f32 %v1066, %v1119
      %1121 = vst.msk [vmem:[%s9 + $0x1] sm:$0x1] %vm1064, %v1120
      %s1122 = smul.u32 16, %s21
      %p1123 = scmp.lt.s32.totalorder %s1122, 63
      %s1124 = scalar_select %p1123, %s1122, 63
      %s1125 = smul.addr %s1124, 4
      %s1126 = scalar_lea.vmem %s8, %s1125
      // Predicated region
      $region57: #{pointnet2_forward.7} parent=51 // pred_check
        %p1127 = pneg %p212
      $region58: #{pointnet2_forward.7} parent=51 // pred_check_branch
        %1129 = sbr.rel (%p1127) target = $region60
      $region59: #{pointnet2_forward.7} parent=51 // pred_region
        %s1130 = smul.u32 16, %s21
      $region60: #{pointnet2_forward.7} parent=51 // pred_fallthru
        _
      // Predicated region
      $region61: #{pointnet2_forward.7} parent=51 // pred_check
        %p1131 = pneg %p233
      $region62: #{pointnet2_forward.7} parent=51 // pred_check_branch
        %1133 = sbr.rel (%p1131) target = $region64
      $region63: #{pointnet2_forward.7} parent=51 // pred_region
        _
      $region64: #{pointnet2_forward.7} parent=51 // pred_fallthru
        _
      // Predicated region
      $region65: #{pointnet2_forward.7} parent=51 // pred_check
        %p1134 = pneg %p233
      $region66: #{pointnet2_forward.7} parent=51 // pred_check_branch
        %1136 = sbr.rel (%p1134) target = $region68
      $region67: #{pointnet2_forward.7} parent=51 // pred_region
        _
      $region68: #{pointnet2_forward.7} parent=51 // pred_fallthru
        _
    $region52: #{pointnet2_forward.7} parent=5 // pred_fallthru
      _
    %p1137 = scmp.le.s32.totalorder 2, %s16
    // Predicated region
    $region69: #{pointnet2_forward.7} parent=5 // pred_check
      %p1138 = pneg %p1137
    $region70: #{pointnet2_forward.7} parent=5 // pred_check_branch
      %1140 = sbr.rel (%p1138) target = $region72
    $region71: #{pointnet2_forward.7} parent=5 // pred_region
      %s1141 = ssub.s32 %s16, 2
      // Predicated region
      $region73: #{pointnet2_forward.7} parent=71 // pred_check
        %p1142 = pneg %p218
      $region74: #{pointnet2_forward.7} parent=71 // pred_check_branch
        %1144 = sbr.rel (%p1142) target = $region76
      $region75: #{pointnet2_forward.7} parent=71 // pred_region
        %s1145 = smul.u32 16, %s22
        %p1146 = scmp.lt.s32.totalorder %s1145, 63
        %s1147 = scalar_select %p1146, %s1145, 63
        %s1148 = smul.addr %s1147, 4
        %s1149 = scalar_lea.vmem %s8, %s1148
      $region76: #{pointnet2_forward.7} parent=71 // pred_fallthru
        _
    $region72: #{pointnet2_forward.7} parent=5 // pred_fallthru
      _
  $region6: #{pointnet2_forward.7} parent=0 // loop_footer
    %s20 = sadd.s32 1, %s16
  $region7: #{pointnet2_forward.7} parent=0 // loop_footer_branch
    %15 = sbr.rel target = $region3
  $region8: #{pointnet2_forward.7} parent=0 // loop_exit
    _

// kernel: pointnet2_forward.8
$region0: #{pointnet2_forward.8}
  #allocation0 [shape = 'u32[]', space=smem, size = 0x4, offset = 0x4, fixed_abs, tag = 'smem constant byte address 0x4 - core index']
  #allocation1 [shape = 'u32[144,128]{1,0:T(1,128)}', space=vmem, size = 0x12000, scoped, tag = 'internal scratch']
  %s0 = inlined_call_operand.vmem [shape: bf16[512,64], index: 0, kind: input, shape index: {}]
  %s1 = inlined_call_operand.vmem [shape: f32[2,64], index: 1, kind: input, shape index: {}]
  %s2 = inlined_call_operand.vmem [shape: f32[1,64], index: 2, kind: input, shape index: {}]
  %s3 = inlined_call_operand.vmem [shape: f32[1,64], index: 3, kind: input, shape index: {}]
  %s4 = inlined_call_operand.vmem [shape: bf16[64,64], index: 4, kind: input, shape index: {}]
  %s5 = inlined_call_operand.vmem [shape: f32[1,64], index: 5, kind: input, shape index: {}]
  %s6 = inlined_call_operand.vmem [shape: bf16[512,64], index: 6, kind: output, shape index: {0}]
  %s7 = inlined_call_operand.vmem [shape: f32[2,64], index: 7, kind: output, shape index: {1}]
  %8 = xla_tuple %s6, %s7
  %s9 = sld [smem:[#allocation0]]
  $region69: #{pointnet2_forward.8} parent=0
    _
  %s11 = ssub.s32 1, %s9
  %s12 = scalar_select 0, %s11, %s9
  loop: start=0, step=1, limit=6
  $region2: #{pointnet2_forward.8} parent=0 // loop_pre_header
    _
  $region3: #{pointnet2_forward.8} parent=0 // loop_header
    %s14 = sphi 0, %s18
    %p15 = scmp.ge.s32.totalorder %s14, 6
    %s24 = sphi 0, %s26
    %s27 = sphi 0, %s24
    %s28 = sphi 0, %s27
    %s44 = sphi 0, %s28
    %s48 = sphi 0, %s48
    %s50 = sphi 0, %s48
    %s51 = sphi 0, %s50
    %s65 = sphi 0, %s51
    %s69 = sphi 0, %s69
    %s71 = sphi 0, %s69
    %s72 = sphi 0, %s71
    %s86 = sphi 0, %s72
    %s90 = sphi 0, %s90
    %s92 = sphi 0, %s90
    %s93 = sphi 0, %s92
    %s107 = sphi 0, %s93
    %s111 = sphi 0, %s111
    %s113 = sphi 0, %s111
    %s114 = sphi 0, %s113
    %s128 = sphi 0, %s114
    %s132 = sphi 0, %s132
    %s134 = sphi 0, %s132
    %s135 = sphi 0, %s134
    %s149 = sphi 0, %s135
    %s155 = sphi 0, %s157
    %s158 = sphi 0, %s155
    %s159 = sphi 0, %s158
    %s175 = sphi 0, %s159
    %s179 = sphi 0, %s179
    %s181 = sphi 0, %s179
    %s182 = sphi 0, %s181
    %s196 = sphi 0, %s182
  $region4: #{pointnet2_forward.8} parent=0 // loop_header_branch
    %17 = sbr.rel (%p15) target = $region8
  $region5: #{pointnet2_forward.8} parent=0 // loop_body
    %s19 = ssub.s32 %s14, 1
    %s20 = ssub.s32 %s14, 2
    %s21 = sadd.s32 %s14, 1
    %s22 = ssub.s32 %s14, %s21
    %p23 = scmp.eq.s32.totalorder %s22, 0
    %s25 = sadd.s32 %s24, 1
    %s26 = scalar_select %p23, %s24, %s25
    %p29 = pneg %p23
    %p30 = scmp.eq.s32.totalorder %s14, 3
    %p31 = por %p29, %p30
    %p32 = scmp.ne.s32.totalorder %s24, %s27
    %p33 = scmp.eq.s32.totalorder %s14, 0
    %p34 = por %p32, %p33
    %p35 = scmp.ne.s32.totalorder %s24, %s27
    %p36 = scmp.eq.s32.totalorder %s19, 3
    %p37 = por %p35, %p36
    %p38 = scmp.ne.s32.totalorder %s27, %s28
    %p39 = scmp.eq.s32.totalorder %s19, 0
    %p40 = por %p38, %p39
    %p41 = scmp.ne.s32.totalorder %s27, %s28
    %p42 = scmp.eq.s32.totalorder %s20, 3
    %p43 = por %p41, %p42
    %p45 = scmp.ne.s32.totalorder %s28, %s44
    %p46 = scmp.eq.s32.totalorder %s20, 0
    %p47 = por %p45, %p46
    %s49 = sadd.s32 %s48, 1
    %p52 = scmp.eq.s32.totalorder %s14, 3
    %p53 = scmp.ne.s32.totalorder %s48, %s50
    %p54 = scmp.eq.s32.totalorder %s14, 0
    %p55 = por %p53, %p54
    %p56 = scmp.ne.s32.totalorder %s48, %s50
    %p57 = scmp.eq.s32.totalorder %s19, 3
    %p58 = por %p56, %p57
    %p59 = scmp.ne.s32.totalorder %s50, %s51
    %p60 = scmp.eq.s32.totalorder %s19, 0
    %p61 = por %p59, %p60
    %p62 = scmp.ne.s32.totalorder %s50, %s51
    %p63 = scmp.eq.s32.totalorder %s20, 3
    %p64 = por %p62, %p63
    %p66 = scmp.ne.s32.totalorder %s51, %s65
    %p67 = scmp.eq.s32.totalorder %s20, 0
    %p68 = por %p66, %p67
    %s70 = sadd.s32 %s69, 1
    %p73 = scmp.eq.s32.totalorder %s14, 3
    %p74 = scmp.ne.s32.totalorder %s69, %s71
    %p75 = scmp.eq.s32.totalorder %s14, 0
    %p76 = por %p74, %p75
    %p77 = scmp.ne.s32.totalorder %s69, %s71
    %p78 = scmp.eq.s32.totalorder %s19, 3
    %p79 = por %p77, %p78
    %p80 = scmp.ne.s32.totalorder %s71, %s72
    %p81 = scmp.eq.s32.totalorder %s19, 0
    %p82 = por %p80, %p81
    %p83 = scmp.ne.s32.totalorder %s71, %s72
    %p84 = scmp.eq.s32.totalorder %s20, 3
    %p85 = por %p83, %p84
    %p87 = scmp.ne.s32.totalorder %s72, %s86
    %p88 = scmp.eq.s32.totalorder %s20, 0
    %p89 = por %p87, %p88
    %s91 = sadd.s32 %s90, 1
    %p94 = scmp.eq.s32.totalorder %s14, 3
    %p95 = scmp.ne.s32.totalorder %s90, %s92
    %p96 = scmp.eq.s32.totalorder %s14, 0
    %p97 = por %p95, %p96
    %p98 = scmp.ne.s32.totalorder %s90, %s92
    %p99 = scmp.eq.s32.totalorder %s19, 3
    %p100 = por %p98, %p99
    %p101 = scmp.ne.s32.totalorder %s92, %s93
    %p102 = scmp.eq.s32.totalorder %s19, 0
    %p103 = por %p101, %p102
    %p104 = scmp.ne.s32.totalorder %s92, %s93
    %p105 = scmp.eq.s32.totalorder %s20, 3
    %p106 = por %p104, %p105
    %p108 = scmp.ne.s32.totalorder %s93, %s107
    %p109 = scmp.eq.s32.totalorder %s20, 0
    %p110 = por %p108, %p109
    %s112 = sadd.s32 %s111, 1
    %p115 = scmp.eq.s32.totalorder %s14, 3
    %p116 = scmp.ne.s32.totalorder %s111, %s113
    %p117 = scmp.eq.s32.totalorder %s14, 0
    %p118 = por %p116, %p117
    %p119 = scmp.ne.s32.totalorder %s111, %s113
    %p120 = scmp.eq.s32.totalorder %s19, 3
    %p121 = por %p119, %p120
    %p122 = scmp.ne.s32.totalorder %s113, %s114
    %p123 = scmp.eq.s32.totalorder %s19, 0
    %p124 = por %p122, %p123
    %p125 = scmp.ne.s32.totalorder %s113, %s114
    %p126 = scmp.eq.s32.totalorder %s20, 3
    %p127 = por %p125, %p126
    %p129 = scmp.ne.s32.totalorder %s114, %s128
    %p130 = scmp.eq.s32.totalorder %s20, 0
    %p131 = por %p129, %p130
    %s133 = sadd.s32 %s132, 1
    %p136 = scmp.eq.s32.totalorder %s14, 3
    %p137 = scmp.ne.s32.totalorder %s132, %s134
    %p138 = scmp.eq.s32.totalorder %s14, 0
    %p139 = por %p137, %p138
    %p140 = scmp.ne.s32.totalorder %s132, %s134
    %p141 = scmp.eq.s32.totalorder %s19, 3
    %p142 = por %p140, %p141
    %p143 = scmp.ne.s32.totalorder %s134, %s135
    %p144 = scmp.eq.s32.totalorder %s19, 0
    %p145 = por %p143, %p144
    %p146 = scmp.ne.s32.totalorder %s134, %s135
    %p147 = scmp.eq.s32.totalorder %s20, 3
    %p148 = por %p146, %p147
    %p150 = scmp.ne.s32.totalorder %s135, %s149
    %p151 = scmp.eq.s32.totalorder %s20, 0
    %p152 = por %p150, %p151
    %s153 = ssub.s32 %s14, %s21
    %p154 = scmp.eq.s32.totalorder %s153, 0
    %s156 = sadd.s32 %s155, 1
    %s157 = scalar_select %p154, %s155, %s156
    %p160 = pneg %p154
    %p161 = scmp.eq.s32.totalorder %s14, 3
    %p162 = por %p160, %p161
    %p163 = scmp.ne.s32.totalorder %s155, %s158
    %p164 = scmp.eq.s32.totalorder %s14, 0
    %p165 = por %p163, %p164
    %p166 = scmp.ne.s32.totalorder %s155, %s158
    %p167 = scmp.eq.s32.totalorder %s19, 3
    %p168 = por %p166, %p167
    %p169 = scmp.ne.s32.totalorder %s158, %s159
    %p170 = scmp.eq.s32.totalorder %s19, 0
    %p171 = por %p169, %p170
    %p172 = scmp.ne.s32.totalorder %s158, %s159
    %p173 = scmp.eq.s32.totalorder %s20, 3
    %p174 = por %p172, %p173
    %p176 = scmp.ne.s32.totalorder %s159, %s175
    %p177 = scmp.eq.s32.totalorder %s20, 0
    %p178 = por %p176, %p177
    %s180 = sadd.s32 %s179, 1
    %p183 = scmp.eq.s32.totalorder %s14, 3
    %p184 = scmp.ne.s32.totalorder %s179, %s181
    %p185 = scmp.eq.s32.totalorder %s14, 0
    %p186 = por %p184, %p185
    %p187 = scmp.ne.s32.totalorder %s179, %s181
    %p188 = scmp.eq.s32.totalorder %s19, 3
    %p189 = por %p187, %p188
    %p190 = scmp.ne.s32.totalorder %s181, %s182
    %p191 = scmp.eq.s32.totalorder %s19, 0
    %p192 = por %p190, %p191
    %p193 = scmp.ne.s32.totalorder %s181, %s182
    %p194 = scmp.eq.s32.totalorder %s20, 3
    %p195 = por %p193, %p194
    %p197 = scmp.ne.s32.totalorder %s182, %s196
    %p198 = scmp.eq.s32.totalorder %s20, 0
    %p199 = por %p197, %p198
    %p200 = scmp.le.s32.totalorder 1, %s14
    %p201 = scmp.lt.s32.totalorder %s14, 5
    %p202 = pnand %p200, %p201
    %p203 = pneg %p202
    // Predicated region
    $region9: #{pointnet2_forward.8} parent=5 // pred_check
      _
    $region10: #{pointnet2_forward.8} parent=5 // pred_check_branch
      %205 = sbr.rel (%p202) target = $region12
    $region11: #{pointnet2_forward.8} parent=5 // pred_region
      %s206 = ssub.s32 %s14, 1
      // Predicated region
      $region13: #{pointnet2_forward.8} parent=11 // pred_check
        %p207 = pneg %p61
      $region14: #{pointnet2_forward.8} parent=11 // pred_check_branch
        %209 = sbr.rel (%p207) target = $region16
      $region15: #{pointnet2_forward.8} parent=11 // pred_region
        _
      $region16: #{pointnet2_forward.8} parent=11 // pred_fallthru
        _
      // Predicated region
      $region17: #{pointnet2_forward.8} parent=11 // pred_check
        %p210 = pneg %p82
      $region18: #{pointnet2_forward.8} parent=11 // pred_check_branch
        %212 = sbr.rel (%p210) target = $region20
      $region19: #{pointnet2_forward.8} parent=11 // pred_region
        _
      $region20: #{pointnet2_forward.8} parent=11 // pred_fallthru
        _
      // Predicated region
      $region21: #{pointnet2_forward.8} parent=11 // pred_check
        %p213 = pneg %p103
      $region22: #{pointnet2_forward.8} parent=11 // pred_check_branch
        %215 = sbr.rel (%p213) target = $region24
      $region23: #{pointnet2_forward.8} parent=11 // pred_region
        _
      $region24: #{pointnet2_forward.8} parent=11 // pred_fallthru
        _
      // Predicated region
      $region25: #{pointnet2_forward.8} parent=11 // pred_check
        %p216 = pneg %p124
      $region26: #{pointnet2_forward.8} parent=11 // pred_check_branch
        %218 = sbr.rel (%p216) target = $region28
      $region27: #{pointnet2_forward.8} parent=11 // pred_region
        _
      $region28: #{pointnet2_forward.8} parent=11 // pred_fallthru
        _
      // Predicated region
      $region29: #{pointnet2_forward.8} parent=11 // pred_check
        %p219 = pneg %p145
      $region30: #{pointnet2_forward.8} parent=11 // pred_check_branch
        %221 = sbr.rel (%p219) target = $region32
      $region31: #{pointnet2_forward.8} parent=11 // pred_region
        _
      $region32: #{pointnet2_forward.8} parent=11 // pred_fallthru
        _
    $region12: #{pointnet2_forward.8} parent=5 // pred_fallthru
      _
    %p222 = scmp.lt.s32.totalorder %s14, 4
    // Predicated region
    $region33: #{pointnet2_forward.8} parent=5 // pred_check
      %p223 = pneg %p222
    $region34: #{pointnet2_forward.8} parent=5 // pred_check_branch
      %225 = sbr.rel (%p223) target = $region36
    $region35: #{pointnet2_forward.8} parent=5 // pred_region
      // Predicated region
      $region37: #{pointnet2_forward.8} parent=35 // pred_check
        %p226 = pneg %p34
      $region38: #{pointnet2_forward.8} parent=35 // pred_check_branch
        %228 = sbr.rel (%p226) target = $region40
      $region39: #{pointnet2_forward.8} parent=35 // pred_region
        %s229 = smul.u32 16, %s14
        %p230 = scmp.lt.s32.totalorder %s229, 63
        %s231 = scalar_select %p230, %s229, 63
        %s232 = smul.addr %s231, 4
        %s233 = scalar_lea.vmem %s0, %s232
        %s234 = smul.u32 16, %s14
      $region40: #{pointnet2_forward.8} parent=35 // pred_fallthru
        _
    $region36: #{pointnet2_forward.8} parent=5 // pred_fallthru
      _
    %p235 = scmp.le.s32.totalorder 1, %s14
    %p236 = scmp.lt.s32.totalorder %s14, 5
    %p237 = pnand %p235, %p236
    %p238 = pneg %p237
    // Predicated region
    $region41: #{pointnet2_forward.8} parent=5 // pred_check
      _
    $region42: #{pointnet2_forward.8} parent=5 // pred_check_branch
      %240 = sbr.rel (%p237) target = $region44
    $region43: #{pointnet2_forward.8} parent=5 // pred_region
      %s241 = ssub.s32 %s14, 1
      %s242 = smul.u32 16, %s19
      %p243 = scmp.lt.s32.totalorder %s242, 63
      %s244 = scalar_select %p243, %s242, 63
      %s245 = smul.addr %s244, 4
      %s246 = scalar_lea.vmem %s0, %s245
      %p247 = pneg %p40
      %p248 = pneg %p37
      %p249 = pneg %p61
      %p250 = pneg %p58
      %p251 = pneg %p82
      %p252 = pneg %p79
      %p253 = pneg %p103
      %p254 = pneg %p100
      %p255 = pneg %p124
      %p256 = pneg %p121
      %p257 = pneg %p145
      %p258 = pneg %p142
      %p259 = pneg %p171
      %p260 = pneg %p168
      %s261 = smul.u32 16, %s19
      %p262 = scmp.lt.s32.totalorder %s261, 63
      %s263 = scalar_select %p262, %s261, 63
      %s264 = smul.addr %s263, 4
      %s265 = scalar_lea.vmem %s6, %s264
      %p266 = pneg %p192
      %p267 = pneg %p189
      %s268 = smul.u32 16, %s19
      %p269 = scmp.lt.s32.totalorder %s268, 63
      %s270 = scalar_select %p269, %s268, 63
      %s271 = smul.addr %s270, 4
      %s272 = scalar_lea.vmem %s0, %s271
      %s273 = smul.u32 16, %s19
      %s274 = smul.u32 16, %s19
      %p275 = scmp.lt.s32.totalorder %s274, 63
      %s276 = scalar_select %p275, %s274, 63
      %s277 = smul.addr %s276, 4
      %s278 = scalar_lea.vmem %s6, %s277
      %s279 = smul.u32 16, %s19
      %v281 = vld [vmem:[%s1] sm:$0x3]
      %v282 = vld [vmem:[%s2] sm:$0x1]
      %v283 = vld [vmem:[%s3] sm:$0x1]
      %v284 = vmul.f32 %v281, 0.001953125
      %v285 = vmul.f32 %v284, %v284
      %v287 = vrot.slane %v285, 7
      %v289 = vsub.f32 %v284, %v287
      %v290 = vmax.f32 %v289, 0.0
      %v291 = vadd.f32 %v290, 1e-05
      %v292 = vrsqrt.pop %v291
      %v295 = vunpack.c.l.s4 1966171168
      %v296 = vunpack.c.0.s8 %v295
      %v297 = vlaneseq
      %v298 = vshrl.u32 %v297, 7
      %v299 = vsub.s32 %v296, %v298
      %v300 = vrot.slane %v292, %v299
      %v301 = vcombine.high %v300, %v300
      %v303 = vunpack.c.l.s4 1966171168
      %v304 = vunpack.c.0.s8 %v303
      %v305 = vlaneseq
      %v306 = vshrl.u32 %v305, 7
      %v307 = vsub.s32 %v304, %v306
      %v308 = vrot.slane %v301, %v307
      %v310 = vmul.f32 %v282, %v308
      %v311 = vmul.f32 %v284, %v310
      %v312 = vsub.f32 %v283, %v311
      %v313 = vld [vmem:[%s272] sm:$0xf]
      %v314 = vld [vmem:[%s272 + $0x4] sm:$0xf]
      %v315 = vld [vmem:[%s272 + $0x8] sm:$0xf]
      %v316 = vld [vmem:[%s272 + $0xc] sm:$0xf]
      %v317 = vld [vmem:[%s272 + $0x10] sm:$0xf]
      %v318 = vld [vmem:[%s272 + $0x14] sm:$0xf]
      %v319 = vld [vmem:[%s272 + $0x18] sm:$0xf]
      %v320 = vld [vmem:[%s272 + $0x1c] sm:$0xf]
      %v321 = vld [vmem:[%s272 + $0x20] sm:$0xf]
      %v322 = vld [vmem:[%s272 + $0x24] sm:$0xf]
      %v323 = vld [vmem:[%s272 + $0x28] sm:$0xf]
      %v324 = vld [vmem:[%s272 + $0x2c] sm:$0xf]
      %v325 = vld [vmem:[%s272 + $0x30] sm:$0xf]
      %v326 = vld [vmem:[%s272 + $0x34] sm:$0xf]
      %v327 = vld [vmem:[%s272 + $0x38] sm:$0xf]
      %v328 = vld [vmem:[%s272 + $0x3c] sm:$0xf]
      %v329 = vunpack.c.l.bf16 %v313
      %v330 = vunpack.c.l.bf16 %v314
      %v331 = vunpack.c.l.bf16 %v315
      %v332 = vunpack.c.l.bf16 %v316
      %v333 = vunpack.c.l.bf16 %v317
      %v334 = vunpack.c.l.bf16 %v318
      %v335 = vunpack.c.l.bf16 %v319
      %v336 = vunpack.c.l.bf16 %v320
      %v337 = vunpack.c.l.bf16 %v321
      %v338 = vunpack.c.l.bf16 %v322
      %v339 = vunpack.c.l.bf16 %v323
      %v340 = vunpack.c.l.bf16 %v324
      %v341 = vunpack.c.l.bf16 %v325
      %v342 = vunpack.c.l.bf16 %v326
      %v343 = vunpack.c.l.bf16 %v327
      %v344 = vunpack.c.l.bf16 %v328
      %v346 = vlaneseq
      %v347 = vshrl.u32 %v346, 7
      %v348 = vsub.s32 0, %v347
      %v349 = vrot.slane %v310, %v348
      %v351 = vmul.f32 %v329, %v349
      %v352 = vmul.f32 %v330, %v349
      %v353 = vmul.f32 %v331, %v349
      %v354 = vmul.f32 %v332, %v349
      %v355 = vmul.f32 %v333, %v349
      %v356 = vmul.f32 %v334, %v349
      %v357 = vmul.f32 %v335, %v349
      %v358 = vmul.f32 %v336, %v349
      %v359 = vmul.f32 %v337, %v349
      %v360 = vmul.f32 %v338, %v349
      %v361 = vmul.f32 %v339, %v349
      %v362 = vmul.f32 %v340, %v349
      %v363 = vmul.f32 %v341, %v349
      %v364 = vmul.f32 %v342, %v349
      %v365 = vmul.f32 %v343, %v349
      %v366 = vmul.f32 %v344, %v349
      %v368 = vlaneseq
      %v369 = vshrl.u32 %v368, 7
      %v370 = vsub.s32 0, %v369
      %v371 = vrot.slane %v312, %v370
      %v373 = vadd.f32 %v351, %v371
      %v374 = vadd.f32 %v352, %v371
      %v375 = vadd.f32 %v353, %v371
      %v376 = vadd.f32 %v354, %v371
      %v377 = vadd.f32 %v355, %v371
      %v378 = vadd.f32 %v356, %v371
      %v379 = vadd.f32 %v357, %v371
      %v380 = vadd.f32 %v358, %v371
      %v381 = vadd.f32 %v359, %v371
      %v382 = vadd.f32 %v360, %v371
      %v383 = vadd.f32 %v361, %v371
      %v384 = vadd.f32 %v362, %v371
      %v385 = vadd.f32 %v363, %v371
      %v386 = vadd.f32 %v364, %v371
      %v387 = vadd.f32 %v365, %v371
      %v388 = vadd.f32 %v366, %v371
      %v389 = vmax.f32 %v373, 0.0
      %v390 = vmax.f32 %v374, 0.0
      %v391 = vmax.f32 %v375, 0.0
      %v392 = vmax.f32 %v376, 0.0
      %v393 = vmax.f32 %v377, 0.0
      %v394 = vmax.f32 %v378, 0.0
      %v395 = vmax.f32 %v379, 0.0
      %v396 = vmax.f32 %v380, 0.0
      %v397 = vmax.f32 %v381, 0.0
      %v398 = vmax.f32 %v382, 0.0
      %v399 = vmax.f32 %v383, 0.0
      %v400 = vmax.f32 %v384, 0.0
      %v401 = vmax.f32 %v385, 0.0
      %v402 = vmax.f32 %v386, 0.0
      %v403 = vmax.f32 %v387, 0.0
      %v404 = vmax.f32 %v388, 0.0
      %v405 = vpack.c.bf16 %v390, %v389
      %v406 = vpack.c.bf16 %v392, %v391
      %v407 = vpack.c.bf16 %v394, %v393
      %v408 = vpack.c.bf16 %v396, %v395
      %v409 = vpack.c.bf16 %v398, %v397
      %v410 = vpack.c.bf16 %v400, %v399
      %v411 = vpack.c.bf16 %v402, %v401
      %v412 = vpack.c.bf16 %v404, %v403
      %v413 = vld [vmem:[%s4] sm:$0xf]
      %v414 = vld [vmem:[%s4 + $0x4] sm:$0xf]
      %v415 = vld [vmem:[%s4 + $0x8] sm:$0xf]
      %v416 = vld [vmem:[%s4 + $0xc] sm:$0xf]
      %v417 = vld [vmem:[%s4 + $0x10] sm:$0xf]
      %v418 = vld [vmem:[%s4 + $0x14] sm:$0xf]
      %v419 = vld [vmem:[%s4 + $0x18] sm:$0xf]
      %v420 = vld [vmem:[%s4 + $0x1c] sm:$0xf]
      %v421 = vld [vmem:[%s5] sm:$0x1]
      %v423 = vlaneseq
      %v424 = vshrl.u32 %v423, 7
      %v425 = vsub.s32 0, %v424
      %v426 = vrot.slane %v421, %v425
      %v436 = vunpack.c.l.b16 %v413
      %v437 = vunpack.c.l.b16 %v414
      %v438 = vunpack.c.l.b16 %v415
      %v439 = vunpack.c.l.b16 %v416
      %v440 = vunpack.c.l.b16 %v417
      %v441 = vunpack.c.l.b16 %v418
      %v442 = vunpack.c.l.b16 %v419
      %v443 = vunpack.c.l.b16 %v420
      %v444 = vpack.c.b16 %v437, %v436
      %v445 = vpack.c.b16 %v439, %v438
      %v446 = vpack.c.b16 %v441, %v440
      %v447 = vpack.c.b16 %v443, %v442
      %vm452 = vcmask 523264
      %v454 = vsel %vm452, %v405, 0
      %v457 = vsel %vm452, %v406, 0
      %v460 = vsel %vm452, %v407, 0
      %v463 = vsel %vm452, %v408, 0
      %v466 = vsel %vm452, %v409, 0
      %v469 = vsel %vm452, %v410, 0
      %v472 = vsel %vm452, %v411, 0
      %v475 = vsel %vm452, %v412, 0
      %477 = vmatprep.subr.bf16.mxu0 0
      %478 = vmatpush1.bf16.msra.mxu0 %v444
      %479 = vmatprep.subr.bf16.mxu0 0
      %480 = vmatpush1.bf16.msra.mxu0 %v445
      %481 = vmatprep.subr.bf16.mxu0 0
      %482 = vmatpush1.bf16.msra.mxu0 %v446
      %483 = vmatprep.subr.bf16.mxu0 0
      %484 = vmatpush1.bf16.msra.mxu0 %v447
      %485 = vmatprep.subr.bf16.mxu0 0
      %486 = vmatpush1.bf16.msra.mxu0 0
      %487 = vmatprep.subr.bf16.mxu0 0
      %488 = vmatpush1.bf16.msra.mxu0 0
      %489 = vmatprep.subr.bf16.mxu0 0
      %490 = vmatpush1.bf16.msra.mxu0 0
      %491 = vmatprep.subr.bf16.mxu0 0
      %492 = vmatpush1.bf16.msra.mxu0 0
      %493 = vmatprep.subr.bf16.mxu0 0
      %494 = vmatpush1.bf16.msra.mxu0 0
      %495 = vmatprep.subr.bf16.mxu0 0
      %496 = vmatpush1.bf16.msra.mxu0 0
      %497 = vmatprep.subr.bf16.mxu0 0
      %498 = vmatpush1.bf16.msra.mxu0 0
      %499 = vmatprep.subr.bf16.mxu0 0
      %500 = vmatpush1.bf16.msra.mxu0 0
      %501 = vmatprep.subr.bf16.mxu0 0
      %502 = vmatpush1.bf16.msra.mxu0 0
      %503 = vmatprep.subr.bf16.mxu0 0
      %504 = vmatpush1.bf16.msra.mxu0 0
      %505 = vmatprep.subr.bf16.mxu0 0
      %506 = vmatpush1.bf16.msra.mxu0 0
      %507 = vmatprep.subr.bf16.mxu0 0
      %508 = vmatpush1.bf16.msra.mxu0 0
      %509 = vmatprep.mubr.bf16.mxu0 0
      %510 = vmatmul.mubr.bf16.gmra.mrb[0].mxu0 %v454
      %v511 = vpop.f32.mrb[0].mxu0
      %v512 = vadd.f32 %v426, %v511
      %v513 = vpop.f32.mrb[0].mxu0
      %v514 = vpop.f32.mrb[0].mxu0
      %v515 = vadd.f32 %v426, %v514
      %v516 = vpop.f32.mrb[0].mxu0
      %517 = vmatprep.mubr.bf16.mxu0 0
      %518 = vmatmul.mubr.bf16.gmra.mrb[0].mxu0 %v457
      %v519 = vpop.f32.mrb[0].mxu0
      %v520 = vadd.f32 %v426, %v519
      %v521 = vpop.f32.mrb[0].mxu0
      %v522 = vpop.f32.mrb[0].mxu0
      %v523 = vadd.f32 %v426, %v522
      %v524 = vpop.f32.mrb[0].mxu0
      %525 = vmatprep.mubr.bf16.mxu0 0
      %526 = vmatmul.mubr.bf16.gmra.mrb[0].mxu0 %v460
      %v527 = vpop.f32.mrb[0].mxu0
      %v528 = vadd.f32 %v426, %v527
      %v529 = vpop.f32.mrb[0].mxu0
      %v530 = vpop.f32.mrb[0].mxu0
      %v531 = vadd.f32 %v426, %v530
      %v532 = vpop.f32.mrb[0].mxu0
      %533 = vmatprep.mubr.bf16.mxu0 0
      %534 = vmatmul.mubr.bf16.gmra.mrb[0].mxu0 %v463
      %v535 = vpop.f32.mrb[0].mxu0
      %v536 = vadd.f32 %v426, %v535
      %v537 = vpop.f32.mrb[0].mxu0
      %v538 = vpop.f32.mrb[0].mxu0
      %v539 = vadd.f32 %v426, %v538
      %v540 = vpop.f32.mrb[0].mxu0
      %541 = vmatprep.mubr.bf16.mxu0 0
      %542 = vmatmul.mubr.bf16.gmra.mrb[0].mxu0 %v466
      %v543 = vpop.f32.mrb[0].mxu0
      %v544 = vadd.f32 %v426, %v543
      %v545 = vpop.f32.mrb[0].mxu0
      %v546 = vpop.f32.mrb[0].mxu0
      %v547 = vadd.f32 %v426, %v546
      %v548 = vpop.f32.mrb[0].mxu0
      %549 = vmatprep.mubr.bf16.mxu0 0
      %550 = vmatmul.mubr.bf16.gmra.mrb[0].mxu0 %v469
      %v551 = vpop.f32.mrb[0].mxu0
      %v552 = vadd.f32 %v426, %v551
      %v553 = vpop.f32.mrb[0].mxu0
      %v554 = vpop.f32.mrb[0].mxu0
      %v555 = vadd.f32 %v426, %v554
      %v556 = vpop.f32.mrb[0].mxu0
      %557 = vmatprep.mubr.bf16.mxu0 0
      %558 = vmatmul.mubr.bf16.gmra.mrb[0].mxu0 %v472
      %v559 = vpop.f32.mrb[0].mxu0
      %v560 = vadd.f32 %v426, %v559
      %v561 = vpop.f32.mrb[0].mxu0
      %v562 = vpop.f32.mrb[0].mxu0
      %v563 = vadd.f32 %v426, %v562
      %v564 = vpop.f32.mrb[0].mxu0
      %565 = vmatprep.mubr.bf16.mxu0 0
      %566 = vmatmul.mubr.bf16.gmra.mrb[0].mxu0 %v475
      %v567 = vpop.f32.mrb[0].mxu0
      %v568 = vadd.f32 %v426, %v567
      %v569 = vpop.f32.mrb[0].mxu0
      %v570 = vpop.f32.mrb[0].mxu0
      %v571 = vadd.f32 %v426, %v570
      %v572 = vpop.f32.mrb[0].mxu0
      %573 = vdwg.mxu0
      %v574 = vpack.c.bf16 %v515, %v512
      %v575 = vpack.c.bf16 %v523, %v520
      %v576 = vpack.c.bf16 %v531, %v528
      %v577 = vpack.c.bf16 %v539, %v536
      %v578 = vpack.c.bf16 %v547, %v544
      %v579 = vpack.c.bf16 %v555, %v552
      %v580 = vpack.c.bf16 %v563, %v560
      %v581 = vpack.c.bf16 %v571, %v568
      %v590 = vunpack.c.l.b16 %v574
      %v591 = vunpack.c.h.b16 %v574
      %v592 = vunpack.c.l.b16 %v575
      %v593 = vunpack.c.h.b16 %v575
      %v594 = vunpack.c.l.b16 %v576
      %v595 = vunpack.c.h.b16 %v576
      %v596 = vunpack.c.l.b16 %v577
      %v597 = vunpack.c.h.b16 %v577
      %v598 = vunpack.c.l.b16 %v578
      %v599 = vunpack.c.h.b16 %v578
      %v600 = vunpack.c.l.b16 %v579
      %v601 = vunpack.c.h.b16 %v579
      %v602 = vunpack.c.l.b16 %v580
      %v603 = vunpack.c.h.b16 %v580
      %v604 = vunpack.c.l.b16 %v581
      %v605 = vunpack.c.h.b16 %v581
      %v606 = vpack.c.b16 %v590, %v590
      %v607 = vpack.c.b16 %v591, %v591
      %v608 = vpack.c.b16 %v592, %v592
      %v609 = vpack.c.b16 %v593, %v593
      %v610 = vpack.c.b16 %v594, %v594
      %v611 = vpack.c.b16 %v595, %v595
      %v612 = vpack.c.b16 %v596, %v596
      %v613 = vpack.c.b16 %v597, %v597
      %v614 = vpack.c.b16 %v598, %v598
      %v615 = vpack.c.b16 %v599, %v599
      %v616 = vpack.c.b16 %v600, %v600
      %v617 = vpack.c.b16 %v601, %v601
      %v618 = vpack.c.b16 %v602, %v602
      %v619 = vpack.c.b16 %v603, %v603
      %v620 = vpack.c.b16 %v604, %v604
      %v621 = vpack.c.b16 %v605, %v605
      %vm638 = vcmask 519168
      %639 = vst.msk [vmem:[%s278] sm:$0xf] %vm638, %v606
      %640 = vst.msk [vmem:[%s278 + $0x4] sm:$0xf] %vm638, %v607
      %641 = vst.msk [vmem:[%s278 + $0x8] sm:$0xf] %vm638, %v608
      %642 = vst.msk [vmem:[%s278 + $0xc] sm:$0xf] %vm638, %v609
      %643 = vst.msk [vmem:[%s278 + $0x10] sm:$0xf] %vm638, %v610
      %644 = vst.msk [vmem:[%s278 + $0x14] sm:$0xf] %vm638, %v611
      %645 = vst.msk [vmem:[%s278 + $0x18] sm:$0xf] %vm638, %v612
      %646 = vst.msk [vmem:[%s278 + $0x1c] sm:$0xf] %vm638, %v613
      %647 = vst.msk [vmem:[%s278 + $0x20] sm:$0xf] %vm638, %v614
      %648 = vst.msk [vmem:[%s278 + $0x24] sm:$0xf] %vm638, %v615
      %649 = vst.msk [vmem:[%s278 + $0x28] sm:$0xf] %vm638, %v616
      %650 = vst.msk [vmem:[%s278 + $0x2c] sm:$0xf] %vm638, %v617
      %651 = vst.msk [vmem:[%s278 + $0x30] sm:$0xf] %vm638, %v618
      %652 = vst.msk [vmem:[%s278 + $0x34] sm:$0xf] %vm638, %v619
      %653 = vst.msk [vmem:[%s278 + $0x38] sm:$0xf] %vm638, %v620
      %654 = vst.msk [vmem:[%s278 + $0x3c] sm:$0xf] %vm638, %v621
      %p655 = scmp.eq.s32.totalorder %s19, 0
      // Predicated region
      $region45: #{pointnet2_forward.8} parent=43 // pred_check
        %p656 = pneg %p655
      $region46: #{pointnet2_forward.8} parent=43 // pred_check_branch
        %658 = sbr.rel (%p656) target = $region48
      $region47: #{pointnet2_forward.8} parent=43 // pred_region
        %vm659 = vcmask 517120
        %660 = vst.msk [vmem:[%s7] sm:$0x3] %vm659, 0.0
      $region48: #{pointnet2_forward.8} parent=43 // pred_fallthru
        _
      %v661 = vld [vmem:[%s7] sm:$0x1]
      %v662 = vsel %vm452, %v512, 0.0
      %v663 = vsel %vm452, %v515, 0.0
      %v664 = vadd.f32 %v662, %v663
      %v665 = vsel %vm452, %v520, 0.0
      %v666 = vadd.f32 %v664, %v665
      %v667 = vsel %vm452, %v523, 0.0
      %v668 = vadd.f32 %v666, %v667
      %v669 = vsel %vm452, %v528, 0.0
      %v670 = vadd.f32 %v668, %v669
      %v671 = vsel %vm452, %v531, 0.0
      %v672 = vadd.f32 %v670, %v671
      %v673 = vsel %vm452, %v536, 0.0
      %v674 = vadd.f32 %v672, %v673
      %v675 = vsel %vm452, %v539, 0.0
      %v676 = vadd.f32 %v674, %v675
      %v677 = vsel %vm452, %v544, 0.0
      %v678 = vadd.f32 %v676, %v677
      %v679 = vsel %vm452, %v547, 0.0
      %v680 = vadd.f32 %v678, %v679
      %v681 = vsel %vm452, %v552, 0.0
      %v682 = vadd.f32 %v680, %v681
      %v683 = vsel %vm452, %v555, 0.0
      %v684 = vadd.f32 %v682, %v683
      %v685 = vsel %vm452, %v560, 0.0
      %v686 = vadd.f32 %v684, %v685
      %v687 = vsel %vm452, %v563, 0.0
      %v688 = vadd.f32 %v686, %v687
      %v689 = vsel %vm452, %v568, 0.0
      %v690 = vadd.f32 %v688, %v689
      %v691 = vsel %vm452, %v571, 0.0
      %v692 = vadd.f32 %v690, %v691
      %v693 = vrot.slane %v692, 4
      %v694 = vadd.f32 %v692, %v693
      %v695 = vrot.slane %v694, 2
      %v696 = vadd.f32 %v694, %v695
      %v697 = vrot.slane %v696, 1
      %v698 = vadd.f32 %v696, %v697
      %v699 = vadd.f32 %v661, %v698
      %vm700 = vcmask 516096
      %701 = vst.msk [vmem:[%s7] sm:$0x1] %vm700, %v699
      %v702 = vld [vmem:[%s7 + $0x1] sm:$0x1]
      %v703 = vmul.f32 %v512, %v512
      %v704 = vmul.f32 %v515, %v515
      %v705 = vmul.f32 %v520, %v520
      %v706 = vmul.f32 %v523, %v523
      %v707 = vmul.f32 %v528, %v528
      %v708 = vmul.f32 %v531, %v531
      %v709 = vmul.f32 %v536, %v536
      %v710 = vmul.f32 %v539, %v539
      %v711 = vmul.f32 %v544, %v544
      %v712 = vmul.f32 %v547, %v547
      %v713 = vmul.f32 %v552, %v552
      %v714 = vmul.f32 %v555, %v555
      %v715 = vmul.f32 %v560, %v560
      %v716 = vmul.f32 %v563, %v563
      %v717 = vmul.f32 %v568, %v568
      %v718 = vmul.f32 %v571, %v571
      %v719 = vsel %vm452, %v703, 0.0
      %v720 = vsel %vm452, %v704, 0.0
      %v721 = vadd.f32 %v719, %v720
      %v722 = vsel %vm452, %v705, 0.0
      %v723 = vadd.f32 %v721, %v722
      %v724 = vsel %vm452, %v706, 0.0
      %v725 = vadd.f32 %v723, %v724
      %v726 = vsel %vm452, %v707, 0.0
      %v727 = vadd.f32 %v725, %v726
      %v728 = vsel %vm452, %v708, 0.0
      %v729 = vadd.f32 %v727, %v728
      %v730 = vsel %vm452, %v709, 0.0
      %v731 = vadd.f32 %v729, %v730
      %v732 = vsel %vm452, %v710, 0.0
      %v733 = vadd.f32 %v731, %v732
      %v734 = vsel %vm452, %v711, 0.0
      %v735 = vadd.f32 %v733, %v734
      %v736 = vsel %vm452, %v712, 0.0
      %v737 = vadd.f32 %v735, %v736
      %v738 = vsel %vm452, %v713, 0.0
      %v739 = vadd.f32 %v737, %v738
      %v740 = vsel %vm452, %v714, 0.0
      %v741 = vadd.f32 %v739, %v740
      %v742 = vsel %vm452, %v715, 0.0
      %v743 = vadd.f32 %v741, %v742
      %v744 = vsel %vm452, %v716, 0.0
      %v745 = vadd.f32 %v743, %v744
      %v746 = vsel %vm452, %v717, 0.0
      %v747 = vadd.f32 %v745, %v746
      %v748 = vsel %vm452, %v718, 0.0
      %v749 = vadd.f32 %v747, %v748
      %v750 = vrot.slane %v749, 4
      %v751 = vadd.f32 %v749, %v750
      %v752 = vrot.slane %v751, 2
      %v753 = vadd.f32 %v751, %v752
      %v754 = vrot.slane %v753, 1
      %v755 = vadd.f32 %v753, %v754
      %v756 = vadd.f32 %v702, %v755
      %757 = vst.msk [vmem:[%s7 + $0x1] sm:$0x1] %vm700, %v756
      %s758 = smul.u32 16, %s19
      %p759 = scmp.lt.s32.totalorder %s758, 63
      %s760 = scalar_select %p759, %s758, 63
      %s761 = smul.addr %s760, 4
      %s762 = scalar_lea.vmem %s6, %s761
      // Predicated region
      $region49: #{pointnet2_forward.8} parent=43 // pred_check
        %p763 = pneg %p168
      $region50: #{pointnet2_forward.8} parent=43 // pred_check_branch
        %765 = sbr.rel (%p763) target = $region52
      $region51: #{pointnet2_forward.8} parent=43 // pred_region
        %s766 = smul.u32 16, %s19
      $region52: #{pointnet2_forward.8} parent=43 // pred_fallthru
        _
      // Predicated region
      $region53: #{pointnet2_forward.8} parent=43 // pred_check
        %p767 = pneg %p189
      $region54: #{pointnet2_forward.8} parent=43 // pred_check_branch
        %769 = sbr.rel (%p767) target = $region56
      $region55: #{pointnet2_forward.8} parent=43 // pred_region
        _
      $region56: #{pointnet2_forward.8} parent=43 // pred_fallthru
        _
      // Predicated region
      $region57: #{pointnet2_forward.8} parent=43 // pred_check
        %p770 = pneg %p189
      $region58: #{pointnet2_forward.8} parent=43 // pred_check_branch
        %772 = sbr.rel (%p770) target = $region60
      $region59: #{pointnet2_forward.8} parent=43 // pred_region
        _
      $region60: #{pointnet2_forward.8} parent=43 // pred_fallthru
        _
    $region44: #{pointnet2_forward.8} parent=5 // pred_fallthru
      _
    %p773 = scmp.le.s32.totalorder 2, %s14
    // Predicated region
    $region61: #{pointnet2_forward.8} parent=5 // pred_check
      %p774 = pneg %p773
    $region62: #{pointnet2_forward.8} parent=5 // pred_check_branch
      %776 = sbr.rel (%p774) target = $region64
    $region63: #{pointnet2_forward.8} parent=5 // pred_region
      %s777 = ssub.s32 %s14, 2
      // Predicated region
      $region65: #{pointnet2_forward.8} parent=63 // pred_check
        %p778 = pneg %p174
      $region66: #{pointnet2_forward.8} parent=63 // pred_check_branch
        %780 = sbr.rel (%p778) target = $region68
      $region67: #{pointnet2_forward.8} parent=63 // pred_region
        %s781 = smul.u32 16, %s20
        %p782 = scmp.lt.s32.totalorder %s781, 63
        %s783 = scalar_select %p782, %s781, 63
        %s784 = smul.addr %s783, 4
        %s785 = scalar_lea.vmem %s6, %s784
      $region68: #{pointnet2_forward.8} parent=63 // pred_fallthru
        _
    $region64: #{pointnet2_forward.8} parent=5 // pred_fallthru
      _
  $region6: #{pointnet2_forward.8} parent=0 // loop_footer
    %s18 = sadd.s32 1, %s14
  $region7: #{pointnet2_forward.8} parent=0 // loop_footer_branch
    %13 = sbr.rel target = $region3
  $region8: #{pointnet2_forward.8} parent=0 // loop_exit
    _

// kernel: pointnet2_forward.9
$region0: #{pointnet2_forward.9}
  #allocation0 [shape = 'u32[]', space=smem, size = 0x4, offset = 0x4, fixed_abs, tag = 'smem constant byte address 0x4 - core index']
  #allocation1 [shape = 'u32[144,128]{1,0:T(1,128)}', space=vmem, size = 0x12000, scoped, tag = 'internal scratch']
  %s0 = inlined_call_operand.vmem [shape: bf16[512,64], index: 0, kind: input, shape index: {}]
  %s1 = inlined_call_operand.vmem [shape: f32[2,64], index: 1, kind: input, shape index: {}]
  %s2 = inlined_call_operand.vmem [shape: f32[1,64], index: 2, kind: input, shape index: {}]
  %s3 = inlined_call_operand.vmem [shape: f32[1,64], index: 3, kind: input, shape index: {}]
  %s4 = inlined_call_operand.vmem [shape: bf16[64,128], index: 4, kind: input, shape index: {}]
  %s5 = inlined_call_operand.vmem [shape: f32[1,128], index: 5, kind: input, shape index: {}]
  %s6 = inlined_call_operand.vmem [shape: bf16[512,128], index: 6, kind: output, shape index: {0}]
  %s7 = inlined_call_operand.vmem [shape: f32[2,128], index: 7, kind: output, shape index: {1}]
  %8 = xla_tuple %s6, %s7
  %s9 = sld [smem:[#allocation0]]
  $region69: #{pointnet2_forward.9} parent=0
    _
  %s11 = ssub.s32 1, %s9
  %s12 = scalar_select 0, %s11, %s9
  loop: start=0, step=1, limit=6
  $region2: #{pointnet2_forward.9} parent=0 // loop_pre_header
    _
  $region3: #{pointnet2_forward.9} parent=0 // loop_header
    %s14 = sphi 0, %s18
    %p15 = scmp.ge.s32.totalorder %s14, 6
    %s24 = sphi 0, %s26
    %s27 = sphi 0, %s24
    %s28 = sphi 0, %s27
    %s44 = sphi 0, %s28
    %s48 = sphi 0, %s48
    %s50 = sphi 0, %s48
    %s51 = sphi 0, %s50
    %s65 = sphi 0, %s51
    %s69 = sphi 0, %s69
    %s71 = sphi 0, %s69
    %s72 = sphi 0, %s71
    %s86 = sphi 0, %s72
    %s90 = sphi 0, %s90
    %s92 = sphi 0, %s90
    %s93 = sphi 0, %s92
    %s107 = sphi 0, %s93
    %s111 = sphi 0, %s111
    %s113 = sphi 0, %s111
    %s114 = sphi 0, %s113
    %s128 = sphi 0, %s114
    %s132 = sphi 0, %s132
    %s134 = sphi 0, %s132
    %s135 = sphi 0, %s134
    %s149 = sphi 0, %s135
    %s155 = sphi 0, %s157
    %s158 = sphi 0, %s155
    %s159 = sphi 0, %s158
    %s175 = sphi 0, %s159
    %s179 = sphi 0, %s179
    %s181 = sphi 0, %s179
    %s182 = sphi 0, %s181
    %s196 = sphi 0, %s182
  $region4: #{pointnet2_forward.9} parent=0 // loop_header_branch
    %17 = sbr.rel (%p15) target = $region8
  $region5: #{pointnet2_forward.9} parent=0 // loop_body
    %s19 = ssub.s32 %s14, 1
    %s20 = ssub.s32 %s14, 2
    %s21 = sadd.s32 %s14, 1
    %s22 = ssub.s32 %s14, %s21
    %p23 = scmp.eq.s32.totalorder %s22, 0
    %s25 = sadd.s32 %s24, 1
    %s26 = scalar_select %p23, %s24, %s25
    %p29 = pneg %p23
    %p30 = scmp.eq.s32.totalorder %s14, 3
    %p31 = por %p29, %p30
    %p32 = scmp.ne.s32.totalorder %s24, %s27
    %p33 = scmp.eq.s32.totalorder %s14, 0
    %p34 = por %p32, %p33
    %p35 = scmp.ne.s32.totalorder %s24, %s27
    %p36 = scmp.eq.s32.totalorder %s19, 3
    %p37 = por %p35, %p36
    %p38 = scmp.ne.s32.totalorder %s27, %s28
    %p39 = scmp.eq.s32.totalorder %s19, 0
    %p40 = por %p38, %p39
    %p41 = scmp.ne.s32.totalorder %s27, %s28
    %p42 = scmp.eq.s32.totalorder %s20, 3
    %p43 = por %p41, %p42
    %p45 = scmp.ne.s32.totalorder %s28, %s44
    %p46 = scmp.eq.s32.totalorder %s20, 0
    %p47 = por %p45, %p46
    %s49 = sadd.s32 %s48, 1
    %p52 = scmp.eq.s32.totalorder %s14, 3
    %p53 = scmp.ne.s32.totalorder %s48, %s50
    %p54 = scmp.eq.s32.totalorder %s14, 0
    %p55 = por %p53, %p54
    %p56 = scmp.ne.s32.totalorder %s48, %s50
    %p57 = scmp.eq.s32.totalorder %s19, 3
    %p58 = por %p56, %p57
    %p59 = scmp.ne.s32.totalorder %s50, %s51
    %p60 = scmp.eq.s32.totalorder %s19, 0
    %p61 = por %p59, %p60
    %p62 = scmp.ne.s32.totalorder %s50, %s51
    %p63 = scmp.eq.s32.totalorder %s20, 3
    %p64 = por %p62, %p63
    %p66 = scmp.ne.s32.totalorder %s51, %s65
    %p67 = scmp.eq.s32.totalorder %s20, 0
    %p68 = por %p66, %p67
    %s70 = sadd.s32 %s69, 1
    %p73 = scmp.eq.s32.totalorder %s14, 3
    %p74 = scmp.ne.s32.totalorder %s69, %s71
    %p75 = scmp.eq.s32.totalorder %s14, 0
    %p76 = por %p74, %p75
    %p77 = scmp.ne.s32.totalorder %s69, %s71
    %p78 = scmp.eq.s32.totalorder %s19, 3
    %p79 = por %p77, %p78
    %p80 = scmp.ne.s32.totalorder %s71, %s72
    %p81 = scmp.eq.s32.totalorder %s19, 0
    %p82 = por %p80, %p81
    %p83 = scmp.ne.s32.totalorder %s71, %s72
    %p84 = scmp.eq.s32.totalorder %s20, 3
    %p85 = por %p83, %p84
    %p87 = scmp.ne.s32.totalorder %s72, %s86
    %p88 = scmp.eq.s32.totalorder %s20, 0
    %p89 = por %p87, %p88
    %s91 = sadd.s32 %s90, 1
    %p94 = scmp.eq.s32.totalorder %s14, 3
    %p95 = scmp.ne.s32.totalorder %s90, %s92
    %p96 = scmp.eq.s32.totalorder %s14, 0
    %p97 = por %p95, %p96
    %p98 = scmp.ne.s32.totalorder %s90, %s92
    %p99 = scmp.eq.s32.totalorder %s19, 3
    %p100 = por %p98, %p99
    %p101 = scmp.ne.s32.totalorder %s92, %s93
    %p102 = scmp.eq.s32.totalorder %s19, 0
    %p103 = por %p101, %p102
    %p104 = scmp.ne.s32.totalorder %s92, %s93
    %p105 = scmp.eq.s32.totalorder %s20, 3
    %p106 = por %p104, %p105
    %p108 = scmp.ne.s32.totalorder %s93, %s107
    %p109 = scmp.eq.s32.totalorder %s20, 0
    %p110 = por %p108, %p109
    %s112 = sadd.s32 %s111, 1
    %p115 = scmp.eq.s32.totalorder %s14, 3
    %p116 = scmp.ne.s32.totalorder %s111, %s113
    %p117 = scmp.eq.s32.totalorder %s14, 0
    %p118 = por %p116, %p117
    %p119 = scmp.ne.s32.totalorder %s111, %s113
    %p120 = scmp.eq.s32.totalorder %s19, 3
    %p121 = por %p119, %p120
    %p122 = scmp.ne.s32.totalorder %s113, %s114
    %p123 = scmp.eq.s32.totalorder %s19, 0
    %p124 = por %p122, %p123
    %p125 = scmp.ne.s32.totalorder %s113, %s114
    %p126 = scmp.eq.s32.totalorder %s20, 3
    %p127 = por %p125, %p126
    %p129 = scmp.ne.s32.totalorder %s114, %s128
    %p130 = scmp.eq.s32.totalorder %s20, 0
    %p131 = por %p129, %p130
    %s133 = sadd.s32 %s132, 1
    %p136 = scmp.eq.s32.totalorder %s14, 3
    %p137 = scmp.ne.s32.totalorder %s132, %s134
    %p138 = scmp.eq.s32.totalorder %s14, 0
    %p139 = por %p137, %p138
    %p140 = scmp.ne.s32.totalorder %s132, %s134
    %p141 = scmp.eq.s32.totalorder %s19, 3
    %p142 = por %p140, %p141
    %p143 = scmp.ne.s32.totalorder %s134, %s135
    %p144 = scmp.eq.s32.totalorder %s19, 0
    %p145 = por %p143, %p144
    %p146 = scmp.ne.s32.totalorder %s134, %s135
    %p147 = scmp.eq.s32.totalorder %s20, 3
    %p148 = por %p146, %p147
    %p150 = scmp.ne.s32.totalorder %s135, %s149
    %p151 = scmp.eq.s32.totalorder %s20, 0
    %p152 = por %p150, %p151
    %s153 = ssub.s32 %s14, %s21
    %p154 = scmp.eq.s32.totalorder %s153, 0
    %s156 = sadd.s32 %s155, 1
    %s157 = scalar_select %p154, %s155, %s156
    %p160 = pneg %p154
    %p161 = scmp.eq.s32.totalorder %s14, 3
    %p162 = por %p160, %p161
    %p163 = scmp.ne.s32.totalorder %s155, %s158
    %p164 = scmp.eq.s32.totalorder %s14, 0
    %p165 = por %p163, %p164
    %p166 = scmp.ne.s32.totalorder %s155, %s158
    %p167 = scmp.eq.s32.totalorder %s19, 3
    %p168 = por %p166, %p167
    %p169 = scmp.ne.s32.totalorder %s158, %s159
    %p170 = scmp.eq.s32.totalorder %s19, 0
    %p171 = por %p169, %p170
    %p172 = scmp.ne.s32.totalorder %s158, %s159
    %p173 = scmp.eq.s32.totalorder %s20, 3
    %p174 = por %p172, %p173
    %p176 = scmp.ne.s32.totalorder %s159, %s175
    %p177 = scmp.eq.s32.totalorder %s20, 0
    %p178 = por %p176, %p177
    %s180 = sadd.s32 %s179, 1
    %p183 = scmp.eq.s32.totalorder %s14, 3
    %p184 = scmp.ne.s32.totalorder %s179, %s181
    %p185 = scmp.eq.s32.totalorder %s14, 0
    %p186 = por %p184, %p185
    %p187 = scmp.ne.s32.totalorder %s179, %s181
    %p188 = scmp.eq.s32.totalorder %s19, 3
    %p189 = por %p187, %p188
    %p190 = scmp.ne.s32.totalorder %s181, %s182
    %p191 = scmp.eq.s32.totalorder %s19, 0
    %p192 = por %p190, %p191
    %p193 = scmp.ne.s32.totalorder %s181, %s182
    %p194 = scmp.eq.s32.totalorder %s20, 3
    %p195 = por %p193, %p194
    %p197 = scmp.ne.s32.totalorder %s182, %s196
    %p198 = scmp.eq.s32.totalorder %s20, 0
    %p199 = por %p197, %p198
    %p200 = scmp.le.s32.totalorder 1, %s14
    %p201 = scmp.lt.s32.totalorder %s14, 5
    %p202 = pnand %p200, %p201
    %p203 = pneg %p202
    // Predicated region
    $region9: #{pointnet2_forward.9} parent=5 // pred_check
      _
    $region10: #{pointnet2_forward.9} parent=5 // pred_check_branch
      %205 = sbr.rel (%p202) target = $region12
    $region11: #{pointnet2_forward.9} parent=5 // pred_region
      %s206 = ssub.s32 %s14, 1
      // Predicated region
      $region13: #{pointnet2_forward.9} parent=11 // pred_check
        %p207 = pneg %p61
      $region14: #{pointnet2_forward.9} parent=11 // pred_check_branch
        %209 = sbr.rel (%p207) target = $region16
      $region15: #{pointnet2_forward.9} parent=11 // pred_region
        _
      $region16: #{pointnet2_forward.9} parent=11 // pred_fallthru
        _
      // Predicated region
      $region17: #{pointnet2_forward.9} parent=11 // pred_check
        %p210 = pneg %p82
      $region18: #{pointnet2_forward.9} parent=11 // pred_check_branch
        %212 = sbr.rel (%p210) target = $region20
      $region19: #{pointnet2_forward.9} parent=11 // pred_region
        _
      $region20: #{pointnet2_forward.9} parent=11 // pred_fallthru
        _
      // Predicated region
      $region21: #{pointnet2_forward.9} parent=11 // pred_check
        %p213 = pneg %p103
      $region22: #{pointnet2_forward.9} parent=11 // pred_check_branch
        %215 = sbr.rel (%p213) target = $region24
      $region23: #{pointnet2_forward.9} parent=11 // pred_region
        _
      $region24: #{pointnet2_forward.9} parent=11 // pred_fallthru
        _
      // Predicated region
      $region25: #{pointnet2_forward.9} parent=11 // pred_check
        %p216 = pneg %p124
      $region26: #{pointnet2_forward.9} parent=11 // pred_check_branch
        %218 = sbr.rel (%p216) target = $region28
      $region27: #{pointnet2_forward.9} parent=11 // pred_region
        _
      $region28: #{pointnet2_forward.9} parent=11 // pred_fallthru
        _
      // Predicated region
      $region29: #{pointnet2_forward.9} parent=11 // pred_check
        %p219 = pneg %p145
      $region30: #{pointnet2_forward.9} parent=11 // pred_check_branch
        %221 = sbr.rel (%p219) target = $region32
      $region31: #{pointnet2_forward.9} parent=11 // pred_region
        _
      $region32: #{pointnet2_forward.9} parent=11 // pred_fallthru
        _
    $region12: #{pointnet2_forward.9} parent=5 // pred_fallthru
      _
    %p222 = scmp.lt.s32.totalorder %s14, 4
    // Predicated region
    $region33: #{pointnet2_forward.9} parent=5 // pred_check
      %p223 = pneg %p222
    $region34: #{pointnet2_forward.9} parent=5 // pred_check_branch
      %225 = sbr.rel (%p223) target = $region36
    $region35: #{pointnet2_forward.9} parent=5 // pred_region
      // Predicated region
      $region37: #{pointnet2_forward.9} parent=35 // pred_check
        %p226 = pneg %p34
      $region38: #{pointnet2_forward.9} parent=35 // pred_check_branch
        %228 = sbr.rel (%p226) target = $region40
      $region39: #{pointnet2_forward.9} parent=35 // pred_region
        %s229 = smul.u32 16, %s14
        %p230 = scmp.lt.s32.totalorder %s229, 63
        %s231 = scalar_select %p230, %s229, 63
        %s232 = smul.addr %s231, 4
        %s233 = scalar_lea.vmem %s0, %s232
        %s234 = smul.u32 16, %s14
      $region40: #{pointnet2_forward.9} parent=35 // pred_fallthru
        _
    $region36: #{pointnet2_forward.9} parent=5 // pred_fallthru
      _
    %p235 = scmp.le.s32.totalorder 1, %s14
    %p236 = scmp.lt.s32.totalorder %s14, 5
    %p237 = pnand %p235, %p236
    %p238 = pneg %p237
    // Predicated region
    $region41: #{pointnet2_forward.9} parent=5 // pred_check
      _
    $region42: #{pointnet2_forward.9} parent=5 // pred_check_branch
      %240 = sbr.rel (%p237) target = $region44
    $region43: #{pointnet2_forward.9} parent=5 // pred_region
      %s241 = ssub.s32 %s14, 1
      %s242 = smul.u32 16, %s19
      %p243 = scmp.lt.s32.totalorder %s242, 63
      %s244 = scalar_select %p243, %s242, 63
      %s245 = smul.addr %s244, 4
      %s246 = scalar_lea.vmem %s0, %s245
      %p247 = pneg %p40
      %p248 = pneg %p37
      %p249 = pneg %p61
      %p250 = pneg %p58
      %p251 = pneg %p82
      %p252 = pneg %p79
      %p253 = pneg %p103
      %p254 = pneg %p100
      %p255 = pneg %p124
      %p256 = pneg %p121
      %p257 = pneg %p145
      %p258 = pneg %p142
      %p259 = pneg %p171
      %p260 = pneg %p168
      %s261 = smul.u32 16, %s19
      %p262 = scmp.lt.s32.totalorder %s261, 63
      %s263 = scalar_select %p262, %s261, 63
      %s264 = smul.addr %s263, 4
      %s265 = scalar_lea.vmem %s6, %s264
      %p266 = pneg %p192
      %p267 = pneg %p189
      %s268 = smul.u32 16, %s19
      %p269 = scmp.lt.s32.totalorder %s268, 63
      %s270 = scalar_select %p269, %s268, 63
      %s271 = smul.addr %s270, 4
      %s272 = scalar_lea.vmem %s0, %s271
      %s273 = smul.u32 16, %s19
      %s274 = smul.u32 16, %s19
      %p275 = scmp.lt.s32.totalorder %s274, 63
      %s276 = scalar_select %p275, %s274, 63
      %s277 = smul.addr %s276, 4
      %s278 = scalar_lea.vmem %s6, %s277
      %s279 = smul.u32 16, %s19
      %v281 = vld [vmem:[%s1] sm:$0x3]
      %v282 = vld [vmem:[%s2] sm:$0x1]
      %v283 = vld [vmem:[%s3] sm:$0x1]
      %v284 = vmul.f32 %v281, 0.001953125
      %v285 = vmul.f32 %v284, %v284
      %v287 = vrot.slane %v285, 7
      %v289 = vsub.f32 %v284, %v287
      %v290 = vmax.f32 %v289, 0.0
      %v291 = vadd.f32 %v290, 1e-05
      %v292 = vrsqrt.pop %v291
      %v295 = vunpack.c.l.s4 1966171168
      %v296 = vunpack.c.0.s8 %v295
      %v297 = vlaneseq
      %v298 = vshrl.u32 %v297, 7
      %v299 = vsub.s32 %v296, %v298
      %v300 = vrot.slane %v292, %v299
      %v301 = vcombine.high %v300, %v300
      %v303 = vunpack.c.l.s4 1966171168
      %v304 = vunpack.c.0.s8 %v303
      %v305 = vlaneseq
      %v306 = vshrl.u32 %v305, 7
      %v307 = vsub.s32 %v304, %v306
      %v308 = vrot.slane %v301, %v307
      %v310 = vmul.f32 %v282, %v308
      %v311 = vmul.f32 %v284, %v310
      %v312 = vsub.f32 %v283, %v311
      %v313 = vld [vmem:[%s272] sm:$0xf]
      %v314 = vld [vmem:[%s272 + $0x4] sm:$0xf]
      %v315 = vld [vmem:[%s272 + $0x8] sm:$0xf]
      %v316 = vld [vmem:[%s272 + $0xc] sm:$0xf]
      %v317 = vld [vmem:[%s272 + $0x10] sm:$0xf]
      %v318 = vld [vmem:[%s272 + $0x14] sm:$0xf]
      %v319 = vld [vmem:[%s272 + $0x18] sm:$0xf]
      %v320 = vld [vmem:[%s272 + $0x1c] sm:$0xf]
      %v321 = vld [vmem:[%s272 + $0x20] sm:$0xf]
      %v322 = vld [vmem:[%s272 + $0x24] sm:$0xf]
      %v323 = vld [vmem:[%s272 + $0x28] sm:$0xf]
      %v324 = vld [vmem:[%s272 + $0x2c] sm:$0xf]
      %v325 = vld [vmem:[%s272 + $0x30] sm:$0xf]
      %v326 = vld [vmem:[%s272 + $0x34] sm:$0xf]
      %v327 = vld [vmem:[%s272 + $0x38] sm:$0xf]
      %v328 = vld [vmem:[%s272 + $0x3c] sm:$0xf]
      %v329 = vunpack.c.l.bf16 %v313
      %v330 = vunpack.c.l.bf16 %v314
      %v331 = vunpack.c.l.bf16 %v315
      %v332 = vunpack.c.l.bf16 %v316
      %v333 = vunpack.c.l.bf16 %v317
      %v334 = vunpack.c.l.bf16 %v318
      %v335 = vunpack.c.l.bf16 %v319
      %v336 = vunpack.c.l.bf16 %v320
      %v337 = vunpack.c.l.bf16 %v321
      %v338 = vunpack.c.l.bf16 %v322
      %v339 = vunpack.c.l.bf16 %v323
      %v340 = vunpack.c.l.bf16 %v324
      %v341 = vunpack.c.l.bf16 %v325
      %v342 = vunpack.c.l.bf16 %v326
      %v343 = vunpack.c.l.bf16 %v327
      %v344 = vunpack.c.l.bf16 %v328
      %v346 = vlaneseq
      %v347 = vshrl.u32 %v346, 7
      %v348 = vsub.s32 0, %v347
      %v349 = vrot.slane %v310, %v348
      %v351 = vmul.f32 %v329, %v349
      %v352 = vmul.f32 %v330, %v349
      %v353 = vmul.f32 %v331, %v349
      %v354 = vmul.f32 %v332, %v349
      %v355 = vmul.f32 %v333, %v349
      %v356 = vmul.f32 %v334, %v349
      %v357 = vmul.f32 %v335, %v349
      %v358 = vmul.f32 %v336, %v349
      %v359 = vmul.f32 %v337, %v349
      %v360 = vmul.f32 %v338, %v349
      %v361 = vmul.f32 %v339, %v349
      %v362 = vmul.f32 %v340, %v349
      %v363 = vmul.f32 %v341, %v349
      %v364 = vmul.f32 %v342, %v349
      %v365 = vmul.f32 %v343, %v349
      %v366 = vmul.f32 %v344, %v349
      %v368 = vlaneseq
      %v369 = vshrl.u32 %v368, 7
      %v370 = vsub.s32 0, %v369
      %v371 = vrot.slane %v312, %v370
      %v373 = vadd.f32 %v351, %v371
      %v374 = vadd.f32 %v352, %v371
      %v375 = vadd.f32 %v353, %v371
      %v376 = vadd.f32 %v354, %v371
      %v377 = vadd.f32 %v355, %v371
      %v378 = vadd.f32 %v356, %v371
      %v379 = vadd.f32 %v357, %v371
      %v380 = vadd.f32 %v358, %v371
      %v381 = vadd.f32 %v359, %v371
      %v382 = vadd.f32 %v360, %v371
      %v383 = vadd.f32 %v361, %v371
      %v384 = vadd.f32 %v362, %v371
      %v385 = vadd.f32 %v363, %v371
      %v386 = vadd.f32 %v364, %v371
      %v387 = vadd.f32 %v365, %v371
      %v388 = vadd.f32 %v366, %v371
      %v389 = vmax.f32 %v373, 0.0
      %v390 = vmax.f32 %v374, 0.0
      %v391 = vmax.f32 %v375, 0.0
      %v392 = vmax.f32 %v376, 0.0
      %v393 = vmax.f32 %v377, 0.0
      %v394 = vmax.f32 %v378, 0.0
      %v395 = vmax.f32 %v379, 0.0
      %v396 = vmax.f32 %v380, 0.0
      %v397 = vmax.f32 %v381, 0.0
      %v398 = vmax.f32 %v382, 0.0
      %v399 = vmax.f32 %v383, 0.0
      %v400 = vmax.f32 %v384, 0.0
      %v401 = vmax.f32 %v385, 0.0
      %v402 = vmax.f32 %v386, 0.0
      %v403 = vmax.f32 %v387, 0.0
      %v404 = vmax.f32 %v388, 0.0
      %v405 = vpack.c.bf16 %v390, %v389
      %v406 = vpack.c.bf16 %v392, %v391
      %v407 = vpack.c.bf16 %v394, %v393
      %v408 = vpack.c.bf16 %v396, %v395
      %v409 = vpack.c.bf16 %v398, %v397
      %v410 = vpack.c.bf16 %v400, %v399
      %v411 = vpack.c.bf16 %v402, %v401
      %v412 = vpack.c.bf16 %v404, %v403
      %v413 = vld [vmem:[%s4] sm:$0xf]
      %v414 = vld [vmem:[%s4 + $0x4] sm:$0xf]
      %v415 = vld [vmem:[%s4 + $0x8] sm:$0xf]
      %v416 = vld [vmem:[%s4 + $0xc] sm:$0xf]
      %v417 = vld [vmem:[%s4 + $0x10] sm:$0xf]
      %v418 = vld [vmem:[%s4 + $0x14] sm:$0xf]
      %v419 = vld [vmem:[%s4 + $0x18] sm:$0xf]
      %v420 = vld [vmem:[%s4 + $0x1c] sm:$0xf]
      %v421 = vld [vmem:[%s5] sm:$0x1]
      %v423 = vlaneseq
      %v424 = vshrl.u32 %v423, 7
      %v425 = vsub.s32 0, %v424
      %v426 = vrot.slane %v421, %v425
      %v436 = vunpack.c.l.b16 %v413
      %v437 = vunpack.c.l.b16 %v414
      %v438 = vunpack.c.l.b16 %v415
      %v439 = vunpack.c.l.b16 %v416
      %v440 = vunpack.c.l.b16 %v417
      %v441 = vunpack.c.l.b16 %v418
      %v442 = vunpack.c.l.b16 %v419
      %v443 = vunpack.c.l.b16 %v420
      %v444 = vpack.c.b16 %v437, %v436
      %v445 = vpack.c.b16 %v439, %v438
      %v446 = vpack.c.b16 %v441, %v440
      %v447 = vpack.c.b16 %v443, %v442
      %vm452 = vcmask 523264
      %v454 = vsel %vm452, %v405, 0
      %v457 = vsel %vm452, %v406, 0
      %v460 = vsel %vm452, %v407, 0
      %v463 = vsel %vm452, %v408, 0
      %v466 = vsel %vm452, %v409, 0
      %v469 = vsel %vm452, %v410, 0
      %v472 = vsel %vm452, %v411, 0
      %v475 = vsel %vm452, %v412, 0
      %477 = vmatprep.subr.bf16.mxu0 0
      %478 = vmatpush1.bf16.msra.mxu0 %v444
      %479 = vmatprep.subr.bf16.mxu0 0
      %480 = vmatpush1.bf16.msra.mxu0 %v445
      %481 = vmatprep.subr.bf16.mxu0 0
      %482 = vmatpush1.bf16.msra.mxu0 %v446
      %483 = vmatprep.subr.bf16.mxu0 0
      %484 = vmatpush1.bf16.msra.mxu0 %v447
      %485 = vmatprep.subr.bf16.mxu0 0
      %486 = vmatpush1.bf16.msra.mxu0 0
      %487 = vmatprep.subr.bf16.mxu0 0
      %488 = vmatpush1.bf16.msra.mxu0 0
      %489 = vmatprep.subr.bf16.mxu0 0
      %490 = vmatpush1.bf16.msra.mxu0 0
      %491 = vmatprep.subr.bf16.mxu0 0
      %492 = vmatpush1.bf16.msra.mxu0 0
      %493 = vmatprep.subr.bf16.mxu0 0
      %494 = vmatpush1.bf16.msra.mxu0 0
      %495 = vmatprep.subr.bf16.mxu0 0
      %496 = vmatpush1.bf16.msra.mxu0 0
      %497 = vmatprep.subr.bf16.mxu0 0
      %498 = vmatpush1.bf16.msra.mxu0 0
      %499 = vmatprep.subr.bf16.mxu0 0
      %500 = vmatpush1.bf16.msra.mxu0 0
      %501 = vmatprep.subr.bf16.mxu0 0
      %502 = vmatpush1.bf16.msra.mxu0 0
      %503 = vmatprep.subr.bf16.mxu0 0
      %504 = vmatpush1.bf16.msra.mxu0 0
      %505 = vmatprep.subr.bf16.mxu0 0
      %506 = vmatpush1.bf16.msra.mxu0 0
      %507 = vmatprep.subr.bf16.mxu0 0
      %508 = vmatpush1.bf16.msra.mxu0 0
      %509 = vmatprep.mubr.bf16.mxu0 0
      %510 = vmatmul.mubr.bf16.gmra.mrb[0].mxu0 %v454
      %v511 = vpop.f32.mrb[0].mxu0
      %v512 = vadd.f32 %v426, %v511
      %v513 = vpop.f32.mrb[0].mxu0
      %v514 = vpop.f32.mrb[0].mxu0
      %v515 = vadd.f32 %v426, %v514
      %v516 = vpop.f32.mrb[0].mxu0
      %517 = vmatprep.mubr.bf16.mxu0 0
      %518 = vmatmul.mubr.bf16.gmra.mrb[0].mxu0 %v457
      %v519 = vpop.f32.mrb[0].mxu0
      %v520 = vadd.f32 %v426, %v519
      %v521 = vpop.f32.mrb[0].mxu0
      %v522 = vpop.f32.mrb[0].mxu0
      %v523 = vadd.f32 %v426, %v522
      %v524 = vpop.f32.mrb[0].mxu0
      %525 = vmatprep.mubr.bf16.mxu0 0
      %526 = vmatmul.mubr.bf16.gmra.mrb[0].mxu0 %v460
      %v527 = vpop.f32.mrb[0].mxu0
      %v528 = vadd.f32 %v426, %v527
      %v529 = vpop.f32.mrb[0].mxu0
      %v530 = vpop.f32.mrb[0].mxu0
      %v531 = vadd.f32 %v426, %v530
      %v532 = vpop.f32.mrb[0].mxu0
      %533 = vmatprep.mubr.bf16.mxu0 0
      %534 = vmatmul.mubr.bf16.gmra.mrb[0].mxu0 %v463
      %v535 = vpop.f32.mrb[0].mxu0
      %v536 = vadd.f32 %v426, %v535
      %v537 = vpop.f32.mrb[0].mxu0
      %v538 = vpop.f32.mrb[0].mxu0
      %v539 = vadd.f32 %v426, %v538
      %v540 = vpop.f32.mrb[0].mxu0
      %541 = vmatprep.mubr.bf16.mxu0 0
      %542 = vmatmul.mubr.bf16.gmra.mrb[0].mxu0 %v466
      %v543 = vpop.f32.mrb[0].mxu0
      %v544 = vadd.f32 %v426, %v543
      %v545 = vpop.f32.mrb[0].mxu0
      %v546 = vpop.f32.mrb[0].mxu0
      %v547 = vadd.f32 %v426, %v546
      %v548 = vpop.f32.mrb[0].mxu0
      %549 = vmatprep.mubr.bf16.mxu0 0
      %550 = vmatmul.mubr.bf16.gmra.mrb[0].mxu0 %v469
      %v551 = vpop.f32.mrb[0].mxu0
      %v552 = vadd.f32 %v426, %v551
      %v553 = vpop.f32.mrb[0].mxu0
      %v554 = vpop.f32.mrb[0].mxu0
      %v555 = vadd.f32 %v426, %v554
      %v556 = vpop.f32.mrb[0].mxu0
      %557 = vmatprep.mubr.bf16.mxu0 0
      %558 = vmatmul.mubr.bf16.gmra.mrb[0].mxu0 %v472
      %v559 = vpop.f32.mrb[0].mxu0
      %v560 = vadd.f32 %v426, %v559
      %v561 = vpop.f32.mrb[0].mxu0
      %v562 = vpop.f32.mrb[0].mxu0
      %v563 = vadd.f32 %v426, %v562
      %v564 = vpop.f32.mrb[0].mxu0
      %565 = vmatprep.mubr.bf16.mxu0 0
      %566 = vmatmul.mubr.bf16.gmra.mrb[0].mxu0 %v475
      %v567 = vpop.f32.mrb[0].mxu0
      %v568 = vadd.f32 %v426, %v567
      %v569 = vpop.f32.mrb[0].mxu0
      %v570 = vpop.f32.mrb[0].mxu0
      %v571 = vadd.f32 %v426, %v570
      %v572 = vpop.f32.mrb[0].mxu0
      %573 = vdwg.mxu0
      %v574 = vpack.c.bf16 %v515, %v512
      %v575 = vpack.c.bf16 %v523, %v520
      %v576 = vpack.c.bf16 %v531, %v528
      %v577 = vpack.c.bf16 %v539, %v536
      %v578 = vpack.c.bf16 %v547, %v544
      %v579 = vpack.c.bf16 %v555, %v552
      %v580 = vpack.c.bf16 %v563, %v560
      %v581 = vpack.c.bf16 %v571, %v568
      %v590 = vunpack.c.l.b16 %v574
      %v591 = vunpack.c.h.b16 %v574
      %v592 = vunpack.c.l.b16 %v575
      %v593 = vunpack.c.h.b16 %v575
      %v594 = vunpack.c.l.b16 %v576
      %v595 = vunpack.c.h.b16 %v576
      %v596 = vunpack.c.l.b16 %v577
      %v597 = vunpack.c.h.b16 %v577
      %v598 = vunpack.c.l.b16 %v578
      %v599 = vunpack.c.h.b16 %v578
      %v600 = vunpack.c.l.b16 %v579
      %v601 = vunpack.c.h.b16 %v579
      %v602 = vunpack.c.l.b16 %v580
      %v603 = vunpack.c.h.b16 %v580
      %v604 = vunpack.c.l.b16 %v581
      %v605 = vunpack.c.h.b16 %v581
      %v606 = vpack.c.b16 %v590, %v590
      %v607 = vpack.c.b16 %v591, %v591
      %v608 = vpack.c.b16 %v592, %v592
      %v609 = vpack.c.b16 %v593, %v593
      %v610 = vpack.c.b16 %v594, %v594
      %v611 = vpack.c.b16 %v595, %v595
      %v612 = vpack.c.b16 %v596, %v596
      %v613 = vpack.c.b16 %v597, %v597
      %v614 = vpack.c.b16 %v598, %v598
      %v615 = vpack.c.b16 %v599, %v599
      %v616 = vpack.c.b16 %v600, %v600
      %v617 = vpack.c.b16 %v601, %v601
      %v618 = vpack.c.b16 %v602, %v602
      %v619 = vpack.c.b16 %v603, %v603
      %v620 = vpack.c.b16 %v604, %v604
      %v621 = vpack.c.b16 %v605, %v605
      %638 = vst [vmem:[%s278] sm:$0xf] %v606
      %639 = vst [vmem:[%s278 + $0x4] sm:$0xf] %v607
      %640 = vst [vmem:[%s278 + $0x8] sm:$0xf] %v608
      %641 = vst [vmem:[%s278 + $0xc] sm:$0xf] %v609
      %642 = vst [vmem:[%s278 + $0x10] sm:$0xf] %v610
      %643 = vst [vmem:[%s278 + $0x14] sm:$0xf] %v611
      %644 = vst [vmem:[%s278 + $0x18] sm:$0xf] %v612
      %645 = vst [vmem:[%s278 + $0x1c] sm:$0xf] %v613
      %646 = vst [vmem:[%s278 + $0x20] sm:$0xf] %v614
      %647 = vst [vmem:[%s278 + $0x24] sm:$0xf] %v615
      %648 = vst [vmem:[%s278 + $0x28] sm:$0xf] %v616
      %649 = vst [vmem:[%s278 + $0x2c] sm:$0xf] %v617
      %650 = vst [vmem:[%s278 + $0x30] sm:$0xf] %v618
      %651 = vst [vmem:[%s278 + $0x34] sm:$0xf] %v619
      %652 = vst [vmem:[%s278 + $0x38] sm:$0xf] %v620
      %653 = vst [vmem:[%s278 + $0x3c] sm:$0xf] %v621
      %p654 = scmp.eq.s32.totalorder %s19, 0
      // Predicated region
      $region45: #{pointnet2_forward.9} parent=43 // pred_check
        %p655 = pneg %p654
      $region46: #{pointnet2_forward.9} parent=43 // pred_check_branch
        %657 = sbr.rel (%p655) target = $region48
      $region47: #{pointnet2_forward.9} parent=43 // pred_region
        %658 = vst [vmem:[%s7] sm:$0x3] 0.0
      $region48: #{pointnet2_forward.9} parent=43 // pred_fallthru
        _
      %v659 = vld [vmem:[%s7] sm:$0x1]
      %v660 = vadd.f32 %v512, %v515
      %v661 = vadd.f32 %v660, %v520
      %v662 = vadd.f32 %v661, %v523
      %v663 = vadd.f32 %v662, %v528
      %v664 = vadd.f32 %v663, %v531
      %v665 = vadd.f32 %v664, %v536
      %v666 = vadd.f32 %v665, %v539
      %v667 = vadd.f32 %v666, %v544
      %v668 = vadd.f32 %v667, %v547
      %v669 = vadd.f32 %v668, %v552
      %v670 = vadd.f32 %v669, %v555
      %v671 = vadd.f32 %v670, %v560
      %v672 = vadd.f32 %v671, %v563
      %v673 = vadd.f32 %v672, %v568
      %v674 = vadd.f32 %v673, %v571
      %v675 = vrot.slane %v674, 4
      %v676 = vadd.f32 %v674, %v675
      %v677 = vrot.slane %v676, 2
      %v678 = vadd.f32 %v676, %v677
      %v679 = vrot.slane %v678, 1
      %v680 = vadd.f32 %v678, %v679
      %v681 = vadd.f32 %v659, %v680
      %682 = vst [vmem:[%s7] sm:$0x1] %v681
      %v683 = vld [vmem:[%s7 + $0x1] sm:$0x1]
      %v684 = vmul.f32 %v512, %v512
      %v685 = vmul.f32 %v515, %v515
      %v686 = vmul.f32 %v520, %v520
      %v687 = vmul.f32 %v523, %v523
      %v688 = vmul.f32 %v528, %v528
      %v689 = vmul.f32 %v531, %v531
      %v690 = vmul.f32 %v536, %v536
      %v691 = vmul.f32 %v539, %v539
      %v692 = vmul.f32 %v544, %v544
      %v693 = vmul.f32 %v547, %v547
      %v694 = vmul.f32 %v552, %v552
      %v695 = vmul.f32 %v555, %v555
      %v696 = vmul.f32 %v560, %v560
      %v697 = vmul.f32 %v563, %v563
      %v698 = vmul.f32 %v568, %v568
      %v699 = vmul.f32 %v571, %v571
      %v700 = vadd.f32 %v684, %v685
      %v701 = vadd.f32 %v700, %v686
      %v702 = vadd.f32 %v701, %v687
      %v703 = vadd.f32 %v702, %v688
      %v704 = vadd.f32 %v703, %v689
      %v705 = vadd.f32 %v704, %v690
      %v706 = vadd.f32 %v705, %v691
      %v707 = vadd.f32 %v706, %v692
      %v708 = vadd.f32 %v707, %v693
      %v709 = vadd.f32 %v708, %v694
      %v710 = vadd.f32 %v709, %v695
      %v711 = vadd.f32 %v710, %v696
      %v712 = vadd.f32 %v711, %v697
      %v713 = vadd.f32 %v712, %v698
      %v714 = vadd.f32 %v713, %v699
      %v715 = vrot.slane %v714, 4
      %v716 = vadd.f32 %v714, %v715
      %v717 = vrot.slane %v716, 2
      %v718 = vadd.f32 %v716, %v717
      %v719 = vrot.slane %v718, 1
      %v720 = vadd.f32 %v718, %v719
      %v721 = vadd.f32 %v683, %v720
      %722 = vst [vmem:[%s7 + $0x1] sm:$0x1] %v721
      %s723 = smul.u32 16, %s19
      %p724 = scmp.lt.s32.totalorder %s723, 63
      %s725 = scalar_select %p724, %s723, 63
      %s726 = smul.addr %s725, 4
      %s727 = scalar_lea.vmem %s6, %s726
      // Predicated region
      $region49: #{pointnet2_forward.9} parent=43 // pred_check
        %p728 = pneg %p168
      $region50: #{pointnet2_forward.9} parent=43 // pred_check_branch
        %730 = sbr.rel (%p728) target = $region52
      $region51: #{pointnet2_forward.9} parent=43 // pred_region
        %s731 = smul.u32 16, %s19
      $region52: #{pointnet2_forward.9} parent=43 // pred_fallthru
        _
      // Predicated region
      $region53: #{pointnet2_forward.9} parent=43 // pred_check
        %p732 = pneg %p189
      $region54: #{pointnet2_forward.9} parent=43 // pred_check_branch
        %734 = sbr.rel (%p732) target = $region56
      $region55: #{pointnet2_forward.9} parent=43 // pred_region
        _
      $region56: #{pointnet2_forward.9} parent=43 // pred_fallthru
        _
      // Predicated region
      $region57: #{pointnet2_forward.9} parent=43 // pred_check
        %p735 = pneg %p189
      $region58: #{pointnet2_forward.9} parent=43 // pred_check_branch
        %737 = sbr.rel (%p735) target = $region60
      $region59: #{pointnet2_forward.9} parent=43 // pred_region
        _
      $region60: #{pointnet2_forward.9} parent=43 // pred_fallthru
        _
    $region44: #{pointnet2_forward.9} parent=5 // pred_fallthru
      _
    %p738 = scmp.le.s32.totalorder 2, %s14
    // Predicated region
    $region61: #{pointnet2_forward.9} parent=5 // pred_check
      %p739 = pneg %p738
    $region62: #{pointnet2_forward.9} parent=5 // pred_check_branch
      %741 = sbr.rel (%p739) target = $region64
    $region63: #{pointnet2_forward.9} parent=5 // pred_region
      %s742 = ssub.s32 %s14, 2
      // Predicated region
      $region65: #{pointnet2_forward.9} parent=63 // pred_check
        %p743 = pneg %p174
      $region66: #{pointnet2_forward.9} parent=63 // pred_check_branch
        %745 = sbr.rel (%p743) target = $region68
      $region67: #{pointnet2_forward.9} parent=63 // pred_region
        %s746 = smul.u32 16, %s20
        %p747 = scmp.lt.s32.totalorder %s746, 63
        %s748 = scalar_select %p747, %s746, 63
        %s749 = smul.addr %s748, 4
        %s750 = scalar_lea.vmem %s6, %s749
      $region68: #{pointnet2_forward.9} parent=63 // pred_fallthru
        _
    $region64: #{pointnet2_forward.9} parent=5 // pred_fallthru
      _
  $region6: #{pointnet2_forward.9} parent=0 // loop_footer
    %s18 = sadd.s32 1, %s14
  $region7: #{pointnet2_forward.9} parent=0 // loop_footer_branch
    %13 = sbr.rel target = $region3
  $region8: #{pointnet2_forward.9} parent=0 // loop_exit
    _

// kernel: pointnet2_forward.10
$region0: #{pointnet2_forward.10}
  #allocation0 [shape = 'u32[]', space=smem, size = 0x4, offset = 0x4, fixed_abs, tag = 'smem constant byte address 0x4 - core index']
  #allocation1 [shape = 'u32[144,128]{1,0:T(1,128)}', space=vmem, size = 0x12000, scoped, tag = 'internal scratch']
  %s0 = inlined_call_operand.vmem [shape: bf16[512,128], index: 0, kind: input, shape index: {}]
  %s1 = inlined_call_operand.vmem [shape: f32[2,128], index: 1, kind: input, shape index: {}]
  %s2 = inlined_call_operand.vmem [shape: f32[1,128], index: 2, kind: input, shape index: {}]
  %s3 = inlined_call_operand.vmem [shape: f32[1,128], index: 3, kind: input, shape index: {}]
  %s4 = inlined_call_operand.vmem [shape: bf16[128,1024], index: 4, kind: input, shape index: {}]
  %s5 = inlined_call_operand.vmem [shape: f32[1,1024], index: 5, kind: input, shape index: {}]
  %s6 = inlined_call_operand.vmem [shape: f32[4,2,1024], index: 6, kind: output, shape index: {0}]
  %s7 = inlined_call_operand.vmem [shape: f32[4,1,1024], index: 7, kind: output, shape index: {1}]
  %s8 = inlined_call_operand.vmem [shape: f32[4,1,1024], index: 8, kind: output, shape index: {2}]
  %9 = xla_tuple %s6, %s7, %s8
  %s10 = sld [smem:[#allocation0]]
  $region77: #{pointnet2_forward.10} parent=0
    _
  %s12 = ssub.s32 1, %s10
  %s13 = scalar_select 0, %s12, %s10
  loop: start=0, step=1, limit=18
  $region2: #{pointnet2_forward.10} parent=0 // loop_pre_header
    _
  $region3: #{pointnet2_forward.10} parent=0 // loop_header
    %s15 = sphi 0, %s19
    %p16 = scmp.ge.s32.totalorder %s15, 18
    %s22 = sphi 0, %s34
    %s23 = sphi 0, %s30
    %s24 = sphi 0, %s22
    %s25 = sphi 0, %s23
    %s26 = sphi 0, %s24
    %s27 = sphi 0, %s25
    %s41 = sphi 0, %s43
    %s44 = sphi 0, %s41
    %s45 = sphi 0, %s44
    %s61 = sphi 0, %s45
    %s65 = sphi 0, %s65
    %s67 = sphi 0, %s65
    %s68 = sphi 0, %s67
    %s82 = sphi 0, %s68
    %s86 = sphi 0, %s86
    %s88 = sphi 0, %s86
    %s89 = sphi 0, %s88
    %s103 = sphi 0, %s89
    %s107 = sphi 0, %s107
    %s109 = sphi 0, %s107
    %s110 = sphi 0, %s109
    %s124 = sphi 0, %s110
    %s128 = sphi 0, %s128
    %s130 = sphi 0, %s128
    %s131 = sphi 0, %s130
    %s145 = sphi 0, %s131
    %s149 = sphi 0, %s149
    %s151 = sphi 0, %s149
    %s152 = sphi 0, %s151
    %s166 = sphi 0, %s152
    %s172 = sphi 0, %s174
    %s175 = sphi 0, %s172
    %s176 = sphi 0, %s175
    %s192 = sphi 0, %s176
    %s198 = sphi 0, %s200
    %s201 = sphi 0, %s198
    %s202 = sphi 0, %s201
    %s218 = sphi 0, %s202
    %s224 = sphi 0, %s226
    %s227 = sphi 0, %s224
    %s228 = sphi 0, %s227
    %s244 = sphi 0, %s228
  $region4: #{pointnet2_forward.10} parent=0 // loop_header_branch
    %18 = sbr.rel (%p16) target = $region8
  $region5: #{pointnet2_forward.10} parent=0 // loop_body
    %s20 = ssub.s32 %s15, 1
    %s21 = ssub.s32 %s15, 2
    %s28 = sadd.s32 1, %s23
    %p29 = scmp.ge.s32.totalorder %s28, 4
    %s30 = scalar_select %p29, 0, %s28
    %s31 = sadd.s32 1, %s22
    %s32 = scalar_select %p29, %s31, %s22
    %p33 = scmp.ge.s32.totalorder %s32, 4
    %s34 = scalar_select %p33, 0, %s32
    %s35 = smul.u32 %s22, 4
    %s36 = sadd.s32 %s35, %s23
    %s37 = smul.u32 %s34, 4
    %s38 = sadd.s32 %s37, %s30
    %s39 = ssub.s32 %s36, %s38
    %p40 = scmp.eq.s32.totalorder %s39, 0
    %s42 = sadd.s32 %s41, 1
    %s43 = scalar_select %p40, %s41, %s42
    %p46 = pneg %p40
    %p47 = scmp.eq.s32.totalorder %s15, 15
    %p48 = por %p46, %p47
    %p49 = scmp.ne.s32.totalorder %s41, %s44
    %p50 = scmp.eq.s32.totalorder %s15, 0
    %p51 = por %p49, %p50
    %p52 = scmp.ne.s32.totalorder %s41, %s44
    %p53 = scmp.eq.s32.totalorder %s20, 15
    %p54 = por %p52, %p53
    %p55 = scmp.ne.s32.totalorder %s44, %s45
    %p56 = scmp.eq.s32.totalorder %s20, 0
    %p57 = por %p55, %p56
    %p58 = scmp.ne.s32.totalorder %s44, %s45
    %p59 = scmp.eq.s32.totalorder %s21, 15
    %p60 = por %p58, %p59
    %p62 = scmp.ne.s32.totalorder %s45, %s61
    %p63 = scmp.eq.s32.totalorder %s21, 0
    %p64 = por %p62, %p63
    %s66 = sadd.s32 %s65, 1
    %p69 = scmp.eq.s32.totalorder %s15, 15
    %p70 = scmp.ne.s32.totalorder %s65, %s67
    %p71 = scmp.eq.s32.totalorder %s15, 0
    %p72 = por %p70, %p71
    %p73 = scmp.ne.s32.totalorder %s65, %s67
    %p74 = scmp.eq.s32.totalorder %s20, 15
    %p75 = por %p73, %p74
    %p76 = scmp.ne.s32.totalorder %s67, %s68
    %p77 = scmp.eq.s32.totalorder %s20, 0
    %p78 = por %p76, %p77
    %p79 = scmp.ne.s32.totalorder %s67, %s68
    %p80 = scmp.eq.s32.totalorder %s21, 15
    %p81 = por %p79, %p80
    %p83 = scmp.ne.s32.totalorder %s68, %s82
    %p84 = scmp.eq.s32.totalorder %s21, 0
    %p85 = por %p83, %p84
    %s87 = sadd.s32 %s86, 1
    %p90 = scmp.eq.s32.totalorder %s15, 15
    %p91 = scmp.ne.s32.totalorder %s86, %s88
    %p92 = scmp.eq.s32.totalorder %s15, 0
    %p93 = por %p91, %p92
    %p94 = scmp.ne.s32.totalorder %s86, %s88
    %p95 = scmp.eq.s32.totalorder %s20, 15
    %p96 = por %p94, %p95
    %p97 = scmp.ne.s32.totalorder %s88, %s89
    %p98 = scmp.eq.s32.totalorder %s20, 0
    %p99 = por %p97, %p98
    %p100 = scmp.ne.s32.totalorder %s88, %s89
    %p101 = scmp.eq.s32.totalorder %s21, 15
    %p102 = por %p100, %p101
    %p104 = scmp.ne.s32.totalorder %s89, %s103
    %p105 = scmp.eq.s32.totalorder %s21, 0
    %p106 = por %p104, %p105
    %s108 = sadd.s32 %s107, 1
    %p111 = scmp.eq.s32.totalorder %s15, 15
    %p112 = scmp.ne.s32.totalorder %s107, %s109
    %p113 = scmp.eq.s32.totalorder %s15, 0
    %p114 = por %p112, %p113
    %p115 = scmp.ne.s32.totalorder %s107, %s109
    %p116 = scmp.eq.s32.totalorder %s20, 15
    %p117 = por %p115, %p116
    %p118 = scmp.ne.s32.totalorder %s109, %s110
    %p119 = scmp.eq.s32.totalorder %s20, 0
    %p120 = por %p118, %p119
    %p121 = scmp.ne.s32.totalorder %s109, %s110
    %p122 = scmp.eq.s32.totalorder %s21, 15
    %p123 = por %p121, %p122
    %p125 = scmp.ne.s32.totalorder %s110, %s124
    %p126 = scmp.eq.s32.totalorder %s21, 0
    %p127 = por %p125, %p126
    %s129 = sadd.s32 %s128, 1
    %p132 = scmp.eq.s32.totalorder %s15, 15
    %p133 = scmp.ne.s32.totalorder %s128, %s130
    %p134 = scmp.eq.s32.totalorder %s15, 0
    %p135 = por %p133, %p134
    %p136 = scmp.ne.s32.totalorder %s128, %s130
    %p137 = scmp.eq.s32.totalorder %s20, 15
    %p138 = por %p136, %p137
    %p139 = scmp.ne.s32.totalorder %s130, %s131
    %p140 = scmp.eq.s32.totalorder %s20, 0
    %p141 = por %p139, %p140
    %p142 = scmp.ne.s32.totalorder %s130, %s131
    %p143 = scmp.eq.s32.totalorder %s21, 15
    %p144 = por %p142, %p143
    %p146 = scmp.ne.s32.totalorder %s131, %s145
    %p147 = scmp.eq.s32.totalorder %s21, 0
    %p148 = por %p146, %p147
    %s150 = sadd.s32 %s149, 1
    %p153 = scmp.eq.s32.totalorder %s15, 15
    %p154 = scmp.ne.s32.totalorder %s149, %s151
    %p155 = scmp.eq.s32.totalorder %s15, 0
    %p156 = por %p154, %p155
    %p157 = scmp.ne.s32.totalorder %s149, %s151
    %p158 = scmp.eq.s32.totalorder %s20, 15
    %p159 = por %p157, %p158
    %p160 = scmp.ne.s32.totalorder %s151, %s152
    %p161 = scmp.eq.s32.totalorder %s20, 0
    %p162 = por %p160, %p161
    %p163 = scmp.ne.s32.totalorder %s151, %s152
    %p164 = scmp.eq.s32.totalorder %s21, 15
    %p165 = por %p163, %p164
    %p167 = scmp.ne.s32.totalorder %s152, %s166
    %p168 = scmp.eq.s32.totalorder %s21, 0
    %p169 = por %p167, %p168
    %s170 = ssub.s32 %s22, %s34
    %p171 = scmp.eq.s32.totalorder %s170, 0
    %s173 = sadd.s32 %s172, 1
    %s174 = scalar_select %p171, %s172, %s173
    %p177 = pneg %p171
    %p178 = scmp.eq.s32.totalorder %s15, 15
    %p179 = por %p177, %p178
    %p180 = scmp.ne.s32.totalorder %s172, %s175
    %p181 = scmp.eq.s32.totalorder %s15, 0
    %p182 = por %p180, %p181
    %p183 = scmp.ne.s32.totalorder %s172, %s175
    %p184 = scmp.eq.s32.totalorder %s20, 15
    %p185 = por %p183, %p184
    %p186 = scmp.ne.s32.totalorder %s175, %s176
    %p187 = scmp.eq.s32.totalorder %s20, 0
    %p188 = por %p186, %p187
    %p189 = scmp.ne.s32.totalorder %s175, %s176
    %p190 = scmp.eq.s32.totalorder %s21, 15
    %p191 = por %p189, %p190
    %p193 = scmp.ne.s32.totalorder %s176, %s192
    %p194 = scmp.eq.s32.totalorder %s21, 0
    %p195 = por %p193, %p194
    %s196 = ssub.s32 %s22, %s34
    %p197 = scmp.eq.s32.totalorder %s196, 0
    %s199 = sadd.s32 %s198, 1
    %s200 = scalar_select %p197, %s198, %s199
    %p203 = pneg %p197
    %p204 = scmp.eq.s32.totalorder %s15, 15
    %p205 = por %p203, %p204
    %p206 = scmp.ne.s32.totalorder %s198, %s201
    %p207 = scmp.eq.s32.totalorder %s15, 0
    %p208 = por %p206, %p207
    %p209 = scmp.ne.s32.totalorder %s198, %s201
    %p210 = scmp.eq.s32.totalorder %s20, 15
    %p211 = por %p209, %p210
    %p212 = scmp.ne.s32.totalorder %s201, %s202
    %p213 = scmp.eq.s32.totalorder %s20, 0
    %p214 = por %p212, %p213
    %p215 = scmp.ne.s32.totalorder %s201, %s202
    %p216 = scmp.eq.s32.totalorder %s21, 15
    %p217 = por %p215, %p216
    %p219 = scmp.ne.s32.totalorder %s202, %s218
    %p220 = scmp.eq.s32.totalorder %s21, 0
    %p221 = por %p219, %p220
    %s222 = ssub.s32 %s22, %s34
    %p223 = scmp.eq.s32.totalorder %s222, 0
    %s225 = sadd.s32 %s224, 1
    %s226 = scalar_select %p223, %s224, %s225
    %p229 = pneg %p223
    %p230 = scmp.eq.s32.totalorder %s15, 15
    %p231 = por %p229, %p230
    %p232 = scmp.ne.s32.totalorder %s224, %s227
    %p233 = scmp.eq.s32.totalorder %s15, 0
    %p234 = por %p232, %p233
    %p235 = scmp.ne.s32.totalorder %s224, %s227
    %p236 = scmp.eq.s32.totalorder %s20, 15
    %p237 = por %p235, %p236
    %p238 = scmp.ne.s32.totalorder %s227, %s228
    %p239 = scmp.eq.s32.totalorder %s20, 0
    %p240 = por %p238, %p239
    %p241 = scmp.ne.s32.totalorder %s227, %s228
    %p242 = scmp.eq.s32.totalorder %s21, 15
    %p243 = por %p241, %p242
    %p245 = scmp.ne.s32.totalorder %s228, %s244
    %p246 = scmp.eq.s32.totalorder %s21, 0
    %p247 = por %p245, %p246
    %p248 = scmp.le.s32.totalorder 1, %s15
    %p249 = scmp.lt.s32.totalorder %s15, 17
    %p250 = pnand %p248, %p249
    %p251 = pneg %p250
    // Predicated region
    $region9: #{pointnet2_forward.10} parent=5 // pred_check
      _
    $region10: #{pointnet2_forward.10} parent=5 // pred_check_branch
      %253 = sbr.rel (%p250) target = $region12
    $region11: #{pointnet2_forward.10} parent=5 // pred_region
      %s254 = ssub.s32 %s15, 1
      // Predicated region
      $region13: #{pointnet2_forward.10} parent=11 // pred_check
        %p255 = pneg %p78
      $region14: #{pointnet2_forward.10} parent=11 // pred_check_branch
        %257 = sbr.rel (%p255) target = $region16
      $region15: #{pointnet2_forward.10} parent=11 // pred_region
        _
      $region16: #{pointnet2_forward.10} parent=11 // pred_fallthru
        _
      // Predicated region
      $region17: #{pointnet2_forward.10} parent=11 // pred_check
        %p258 = pneg %p99
      $region18: #{pointnet2_forward.10} parent=11 // pred_check_branch
        %260 = sbr.rel (%p258) target = $region20
      $region19: #{pointnet2_forward.10} parent=11 // pred_region
        _
      $region20: #{pointnet2_forward.10} parent=11 // pred_fallthru
        _
      // Predicated region
      $region21: #{pointnet2_forward.10} parent=11 // pred_check
        %p261 = pneg %p120
      $region22: #{pointnet2_forward.10} parent=11 // pred_check_branch
        %263 = sbr.rel (%p261) target = $region24
      $region23: #{pointnet2_forward.10} parent=11 // pred_region
        _
      $region24: #{pointnet2_forward.10} parent=11 // pred_fallthru
        _
      // Predicated region
      $region25: #{pointnet2_forward.10} parent=11 // pred_check
        %p264 = pneg %p141
      $region26: #{pointnet2_forward.10} parent=11 // pred_check_branch
        %266 = sbr.rel (%p264) target = $region28
      $region27: #{pointnet2_forward.10} parent=11 // pred_region
        _
      $region28: #{pointnet2_forward.10} parent=11 // pred_fallthru
        _
      // Predicated region
      $region29: #{pointnet2_forward.10} parent=11 // pred_check
        %p267 = pneg %p162
      $region30: #{pointnet2_forward.10} parent=11 // pred_check_branch
        %269 = sbr.rel (%p267) target = $region32
      $region31: #{pointnet2_forward.10} parent=11 // pred_region
        _
      $region32: #{pointnet2_forward.10} parent=11 // pred_fallthru
        _
    $region12: #{pointnet2_forward.10} parent=5 // pred_fallthru
      _
    %p270 = scmp.lt.s32.totalorder %s15, 16
    // Predicated region
    $region33: #{pointnet2_forward.10} parent=5 // pred_check
      %p271 = pneg %p270
    $region34: #{pointnet2_forward.10} parent=5 // pred_check_branch
      %273 = sbr.rel (%p271) target = $region36
    $region35: #{pointnet2_forward.10} parent=5 // pred_region
      // Predicated region
      $region37: #{pointnet2_forward.10} parent=35 // pred_check
        %p274 = pneg %p51
      $region38: #{pointnet2_forward.10} parent=35 // pred_check_branch
        %276 = sbr.rel (%p274) target = $region40
      $region39: #{pointnet2_forward.10} parent=35 // pred_region
        %s277 = smul.u32 %s22, 4
        %s278 = sadd.s32 %s277, %s23
        %s279 = smul.u32 4, %s278
        %p280 = scmp.lt.s32.totalorder %s279, 63
        %s281 = scalar_select %p280, %s279, 63
        %s282 = smul.addr %s281, 4
        %s283 = scalar_lea.vmem %s0, %s282
        %s284 = smul.u32 %s22, 4
        %s285 = sadd.s32 %s284, %s23
        %s286 = smul.u32 4, %s285
      $region40: #{pointnet2_forward.10} parent=35 // pred_fallthru
        _
    $region36: #{pointnet2_forward.10} parent=5 // pred_fallthru
      _
    %p287 = scmp.le.s32.totalorder 1, %s15
    %p288 = scmp.lt.s32.totalorder %s15, 17
    %p289 = pnand %p287, %p288
    %p290 = pneg %p289
    // Predicated region
    $region41: #{pointnet2_forward.10} parent=5 // pred_check
      _
    $region42: #{pointnet2_forward.10} parent=5 // pred_check_branch
      %292 = sbr.rel (%p289) target = $region44
    $region43: #{pointnet2_forward.10} parent=5 // pred_region
      %s293 = ssub.s32 %s15, 1
      %s294 = smul.u32 %s24, 4
      %s295 = sadd.s32 %s294, %s25
      %s296 = smul.u32 4, %s295
      %p297 = scmp.lt.s32.totalorder %s296, 63
      %s298 = scalar_select %p297, %s296, 63
      %s299 = smul.addr %s298, 4
      %s300 = scalar_lea.vmem %s0, %s299
      %p301 = pneg %p57
      %p302 = pneg %p54
      %p303 = pneg %p78
      %p304 = pneg %p75
      %p305 = pneg %p99
      %p306 = pneg %p96
      %p307 = pneg %p120
      %p308 = pneg %p117
      %p309 = pneg %p141
      %p310 = pneg %p138
      %p311 = pneg %p162
      %p312 = pneg %p159
      %p313 = pneg %p188
      %p314 = pneg %p185
      %p315 = scmp.lt.s32.totalorder %s24, 3
      %s316 = scalar_select %p315, %s24, 3
      %s317 = smul.addr %s316, 8
      %s318 = smul.addr %s317, 2
      %s319 = scalar_lea.vmem %s6, %s318
      %p320 = pneg %p214
      %p321 = pneg %p211
      %p322 = scmp.lt.s32.totalorder %s24, 3
      %s323 = scalar_select %p322, %s24, 3
      %s324 = smul.addr %s323, 8
      %s325 = scalar_lea.vmem %s7, %s324
      %p326 = pneg %p240
      %p327 = pneg %p237
      %p328 = scmp.lt.s32.totalorder %s24, 3
      %s329 = scalar_select %p328, %s24, 3
      %s330 = smul.addr %s329, 8
      %s331 = scalar_lea.vmem %s8, %s330
      %s332 = smul.u32 %s24, 4
      %s333 = sadd.s32 %s332, %s25
      %s334 = smul.u32 4, %s333
      %p335 = scmp.lt.s32.totalorder %s334, 63
      %s336 = scalar_select %p335, %s334, 63
      %s337 = smul.addr %s336, 4
      %s338 = scalar_lea.vmem %s0, %s337
      %s339 = smul.u32 %s24, 4
      %s340 = sadd.s32 %s339, %s25
      %s341 = smul.u32 4, %s340
      %p342 = scmp.lt.s32.totalorder %s24, 3
      %s343 = scalar_select %p342, %s24, 3
      %s344 = smul.addr %s343, 8
      %s345 = smul.addr %s344, 2
      %s346 = scalar_lea.vmem %s6, %s345
      %p347 = scmp.lt.s32.totalorder %s24, 3
      %s348 = scalar_select %p347, %s24, 3
      %s349 = smul.addr %s348, 8
      %s350 = scalar_lea.vmem %s7, %s349
      %p351 = scmp.lt.s32.totalorder %s24, 3
      %s352 = scalar_select %p351, %s24, 3
      %s353 = smul.addr %s352, 8
      %s354 = scalar_lea.vmem %s8, %s353
      %v356 = vld [vmem:[%s1] sm:$0x3]
      %v357 = vld [vmem:[%s2] sm:$0x1]
      %v358 = vld [vmem:[%s3] sm:$0x1]
      %v359 = vmul.f32 %v356, 0.001953125
      %v360 = vmul.f32 %v359, %v359
      %v362 = vrot.slane %v360, 7
      %v364 = vsub.f32 %v359, %v362
      %v365 = vmax.f32 %v364, 0.0
      %v366 = vadd.f32 %v365, 1e-05
      %v367 = vrsqrt.pop %v366
      %v370 = vunpack.c.l.s4 1966171168
      %v371 = vunpack.c.0.s8 %v370
      %v372 = vlaneseq
      %v373 = vshrl.u32 %v372, 7
      %v374 = vsub.s32 %v371, %v373
      %v375 = vrot.slane %v367, %v374
      %v376 = vcombine.high %v375, %v375
      %v378 = vunpack.c.l.s4 1966171168
      %v379 = vunpack.c.0.s8 %v378
      %v380 = vlaneseq
      %v381 = vshrl.u32 %v380, 7
      %v382 = vsub.s32 %v379, %v381
      %v383 = vrot.slane %v376, %v382
      %v385 = vmul.f32 %v357, %v383
      %v386 = vmul.f32 %v359, %v385
      %v387 = vsub.f32 %v358, %v386
      %v388 = vld [vmem:[%s338] sm:$0xf]
      %v389 = vld [vmem:[%s338 + $0x4] sm:$0xf]
      %v390 = vld [vmem:[%s338 + $0x8] sm:$0xf]
      %v391 = vld [vmem:[%s338 + $0xc] sm:$0xf]
      %v392 = vunpack.c.l.bf16 %v388
      %v393 = vunpack.c.l.bf16 %v389
      %v394 = vunpack.c.l.bf16 %v390
      %v395 = vunpack.c.l.bf16 %v391
      %v397 = vlaneseq
      %v398 = vshrl.u32 %v397, 7
      %v399 = vsub.s32 0, %v398
      %v400 = vrot.slane %v385, %v399
      %v402 = vmul.f32 %v392, %v400
      %v403 = vmul.f32 %v393, %v400
      %v404 = vmul.f32 %v394, %v400
      %v405 = vmul.f32 %v395, %v400
      %v407 = vlaneseq
      %v408 = vshrl.u32 %v407, 7
      %v409 = vsub.s32 0, %v408
      %v410 = vrot.slane %v387, %v409
      %v412 = vadd.f32 %v402, %v410
      %v413 = vadd.f32 %v403, %v410
      %v414 = vadd.f32 %v404, %v410
      %v415 = vadd.f32 %v405, %v410
      %v416 = vmax.f32 %v412, 0.0
      %v417 = vmax.f32 %v413, 0.0
      %v418 = vmax.f32 %v414, 0.0
      %v419 = vmax.f32 %v415, 0.0
      %v420 = vpack.c.bf16 %v417, %v416
      %v421 = vpack.c.bf16 %v419, %v418
      %v422 = vld [vmem:[%s4] sm:$0xff]
      %v423 = vld [vmem:[%s4 + $0x8] sm:$0xff]
      %v424 = vld [vmem:[%s4 + $0x10] sm:$0xff]
      %v425 = vld [vmem:[%s4 + $0x18] sm:$0xff]
      %v426 = vld [vmem:[%s4 + $0x20] sm:$0xff]
      %v427 = vld [vmem:[%s4 + $0x28] sm:$0xff]
      %v428 = vld [vmem:[%s4 + $0x30] sm:$0xff]
      %v429 = vld [vmem:[%s4 + $0x38] sm:$0xff]
      %v430 = vld [vmem:[%s4 + $0x40] sm:$0xff]
      %v431 = vld [vmem:[%s4 + $0x48] sm:$0xff]
      %v432 = vld [vmem:[%s4 + $0x50] sm:$0xff]
      %v433 = vld [vmem:[%s4 + $0x58] sm:$0xff]
      %v434 = vld [vmem:[%s4 + $0x60] sm:$0xff]
      %v435 = vld [vmem:[%s4 + $0x68] sm:$0xff]
      %v436 = vld [vmem:[%s4 + $0x70] sm:$0xff]
      %v437 = vld [vmem:[%s4 + $0x78] sm:$0xff]
      %v438 = vld [vmem:[%s4 + $0x80] sm:$0xff]
      %v439 = vld [vmem:[%s4 + $0x88] sm:$0xff]
      %v440 = vld [vmem:[%s4 + $0x90] sm:$0xff]
      %v441 = vld [vmem:[%s4 + $0x98] sm:$0xff]
      %v442 = vld [vmem:[%s4 + $0xa0] sm:$0xff]
      %v443 = vld [vmem:[%s4 + $0xa8] sm:$0xff]
      %v444 = vld [vmem:[%s4 + $0xb0] sm:$0xff]
      %v445 = vld [vmem:[%s4 + $0xb8] sm:$0xff]
      %v446 = vld [vmem:[%s4 + $0xc0] sm:$0xff]
      %v447 = vld [vmem:[%s4 + $0xc8] sm:$0xff]
      %v448 = vld [vmem:[%s4 + $0xd0] sm:$0xff]
      %v449 = vld [vmem:[%s4 + $0xd8] sm:$0xff]
      %v450 = vld [vmem:[%s4 + $0xe0] sm:$0xff]
      %v451 = vld [vmem:[%s4 + $0xe8] sm:$0xff]
      %v452 = vld [vmem:[%s4 + $0xf0] sm:$0xff]
      %v453 = vld [vmem:[%s4 + $0xf8] sm:$0xff]
      %v454 = vld [vmem:[%s4 + $0x100] sm:$0xff]
      %v455 = vld [vmem:[%s4 + $0x108] sm:$0xff]
      %v456 = vld [vmem:[%s4 + $0x110] sm:$0xff]
      %v457 = vld [vmem:[%s4 + $0x118] sm:$0xff]
      %v458 = vld [vmem:[%s4 + $0x120] sm:$0xff]
      %v459 = vld [vmem:[%s4 + $0x128] sm:$0xff]
      %v460 = vld [vmem:[%s4 + $0x130] sm:$0xff]
      %v461 = vld [vmem:[%s4 + $0x138] sm:$0xff]
      %v462 = vld [vmem:[%s4 + $0x140] sm:$0xff]
      %v463 = vld [vmem:[%s4 + $0x148] sm:$0xff]
      %v464 = vld [vmem:[%s4 + $0x150] sm:$0xff]
      %v465 = vld [vmem:[%s4 + $0x158] sm:$0xff]
      %v466 = vld [vmem:[%s4 + $0x160] sm:$0xff]
      %v467 = vld [vmem:[%s4 + $0x168] sm:$0xff]
      %v468 = vld [vmem:[%s4 + $0x170] sm:$0xff]
      %v469 = vld [vmem:[%s4 + $0x178] sm:$0xff]
      %v470 = vld [vmem:[%s4 + $0x180] sm:$0xff]
      %v471 = vld [vmem:[%s4 + $0x188] sm:$0xff]
      %v472 = vld [vmem:[%s4 + $0x190] sm:$0xff]
      %v473 = vld [vmem:[%s4 + $0x198] sm:$0xff]
      %v474 = vld [vmem:[%s4 + $0x1a0] sm:$0xff]
      %v475 = vld [vmem:[%s4 + $0x1a8] sm:$0xff]
      %v476 = vld [vmem:[%s4 + $0x1b0] sm:$0xff]
      %v477 = vld [vmem:[%s4 + $0x1b8] sm:$0xff]
      %v478 = vld [vmem:[%s4 + $0x1c0] sm:$0xff]
      %v479 = vld [vmem:[%s4 + $0x1c8] sm:$0xff]
      %v480 = vld [vmem:[%s4 + $0x1d0] sm:$0xff]
      %v481 = vld [vmem:[%s4 + $0x1d8] sm:$0xff]
      %v482 = vld [vmem:[%s4 + $0x1e0] sm:$0xff]
      %v483 = vld [vmem:[%s4 + $0x1e8] sm:$0xff]
      %v484 = vld [vmem:[%s4 + $0x1f0] sm:$0xff]
      %v485 = vld [vmem:[%s4 + $0x1f8] sm:$0xff]
      %v486 = vld [vmem:[%s5] sm:$0xff]
      %v488 = vlaneseq
      %v489 = vshrl.u32 %v488, 7
      %v490 = vsub.s32 0, %v489
      %v491 = vrot.slane %v486, %v490
      %v492 = vlaneseq
      %v493 = vshrl.u32 %v492, 7
      %v494 = vsub.s32 1, %v493
      %v495 = vrot.slane %v486, %v494
      %v496 = vlaneseq
      %v497 = vshrl.u32 %v496, 7
      %v498 = vsub.s32 2, %v497
      %v499 = vrot.slane %v486, %v498
      %v500 = vlaneseq
      %v501 = vshrl.u32 %v500, 7
      %v502 = vsub.s32 3, %v501
      %v503 = vrot.slane %v486, %v502
      %v504 = vlaneseq
      %v505 = vshrl.u32 %v504, 7
      %v506 = vsub.s32 4, %v505
      %v507 = vrot.slane %v486, %v506
      %v508 = vlaneseq
      %v509 = vshrl.u32 %v508, 7
      %v510 = vsub.s32 5, %v509
      %v511 = vrot.slane %v486, %v510
      %v512 = vlaneseq
      %v513 = vshrl.u32 %v512, 7
      %v514 = vsub.s32 6, %v513
      %v515 = vrot.slane %v486, %v514
      %v516 = vlaneseq
      %v517 = vshrl.u32 %v516, 7
      %v518 = vsub.s32 7, %v517
      %v519 = vrot.slane %v486, %v518
      %v592 = vunpack.c.l.b16 %v422
      %v593 = vunpack.c.h.b16 %v422
      %v594 = vunpack.c.l.b16 %v423
      %v595 = vunpack.c.h.b16 %v423
      %v596 = vunpack.c.l.b16 %v424
      %v597 = vunpack.c.h.b16 %v424
      %v598 = vunpack.c.l.b16 %v425
      %v599 = vunpack.c.h.b16 %v425
      %v600 = vunpack.c.l.b16 %v426
      %v601 = vunpack.c.h.b16 %v426
      %v602 = vunpack.c.l.b16 %v427
      %v603 = vunpack.c.h.b16 %v427
      %v604 = vunpack.c.l.b16 %v428
      %v605 = vunpack.c.h.b16 %v428
      %v606 = vunpack.c.l.b16 %v429
      %v607 = vunpack.c.h.b16 %v429
      %v608 = vunpack.c.l.b16 %v430
      %v609 = vunpack.c.h.b16 %v430
      %v610 = vunpack.c.l.b16 %v431
      %v611 = vunpack.c.h.b16 %v431
      %v612 = vunpack.c.l.b16 %v432
      %v613 = vunpack.c.h.b16 %v432
      %v614 = vunpack.c.l.b16 %v433
      %v615 = vunpack.c.h.b16 %v433
      %v616 = vunpack.c.l.b16 %v434
      %v617 = vunpack.c.h.b16 %v434
      %v618 = vunpack.c.l.b16 %v435
      %v619 = vunpack.c.h.b16 %v435
      %v620 = vunpack.c.l.b16 %v436
      %v621 = vunpack.c.h.b16 %v436
      %v622 = vunpack.c.l.b16 %v437
      %v623 = vunpack.c.h.b16 %v437
      %v624 = vunpack.c.l.b16 %v438
      %v625 = vunpack.c.h.b16 %v438
      %v626 = vunpack.c.l.b16 %v439
      %v627 = vunpack.c.h.b16 %v439
      %v628 = vunpack.c.l.b16 %v440
      %v629 = vunpack.c.h.b16 %v440
      %v630 = vunpack.c.l.b16 %v441
      %v631 = vunpack.c.h.b16 %v441
      %v632 = vunpack.c.l.b16 %v442
      %v633 = vunpack.c.h.b16 %v442
      %v634 = vunpack.c.l.b16 %v443
      %v635 = vunpack.c.h.b16 %v443
      %v636 = vunpack.c.l.b16 %v444
      %v637 = vunpack.c.h.b16 %v444
      %v638 = vunpack.c.l.b16 %v445
      %v639 = vunpack.c.h.b16 %v445
      %v640 = vunpack.c.l.b16 %v446
      %v641 = vunpack.c.h.b16 %v446
      %v642 = vunpack.c.l.b16 %v447
      %v643 = vunpack.c.h.b16 %v447
      %v644 = vunpack.c.l.b16 %v448
      %v645 = vunpack.c.h.b16 %v448
      %v646 = vunpack.c.l.b16 %v449
      %v647 = vunpack.c.h.b16 %v449
      %v648 = vunpack.c.l.b16 %v450
      %v649 = vunpack.c.h.b16 %v450
      %v650 = vunpack.c.l.b16 %v451
      %v651 = vunpack.c.h.b16 %v451
      %v652 = vunpack.c.l.b16 %v452
      %v653 = vunpack.c.h.b16 %v452
      %v654 = vunpack.c.l.b16 %v453
      %v655 = vunpack.c.h.b16 %v453
      %v656 = vunpack.c.l.b16 %v454
      %v657 = vunpack.c.h.b16 %v454
      %v658 = vunpack.c.l.b16 %v455
      %v659 = vunpack.c.h.b16 %v455
      %v660 = vunpack.c.l.b16 %v456
      %v661 = vunpack.c.h.b16 %v456
      %v662 = vunpack.c.l.b16 %v457
      %v663 = vunpack.c.h.b16 %v457
      %v664 = vunpack.c.l.b16 %v458
      %v665 = vunpack.c.h.b16 %v458
      %v666 = vunpack.c.l.b16 %v459
      %v667 = vunpack.c.h.b16 %v459
      %v668 = vunpack.c.l.b16 %v460
      %v669 = vunpack.c.h.b16 %v460
      %v670 = vunpack.c.l.b16 %v461
      %v671 = vunpack.c.h.b16 %v461
      %v672 = vunpack.c.l.b16 %v462
      %v673 = vunpack.c.h.b16 %v462
      %v674 = vunpack.c.l.b16 %v463
      %v675 = vunpack.c.h.b16 %v463
      %v676 = vunpack.c.l.b16 %v464
      %v677 = vunpack.c.h.b16 %v464
      %v678 = vunpack.c.l.b16 %v465
      %v679 = vunpack.c.h.b16 %v465
      %v680 = vunpack.c.l.b16 %v466
      %v681 = vunpack.c.h.b16 %v466
      %v682 = vunpack.c.l.b16 %v467
      %v683 = vunpack.c.h.b16 %v467
      %v684 = vunpack.c.l.b16 %v468
      %v685 = vunpack.c.h.b16 %v468
      %v686 = vunpack.c.l.b16 %v469
      %v687 = vunpack.c.h.b16 %v469
      %v688 = vunpack.c.l.b16 %v470
      %v689 = vunpack.c.h.b16 %v470
      %v690 = vunpack.c.l.b16 %v471
      %v691 = vunpack.c.h.b16 %v471
      %v692 = vunpack.c.l.b16 %v472
      %v693 = vunpack.c.h.b16 %v472
      %v694 = vunpack.c.l.b16 %v473
      %v695 = vunpack.c.h.b16 %v473
      %v696 = vunpack.c.l.b16 %v474
      %v697 = vunpack.c.h.b16 %v474
      %v698 = vunpack.c.l.b16 %v475
      %v699 = vunpack.c.h.b16 %v475
      %v700 = vunpack.c.l.b16 %v476
      %v701 = vunpack.c.h.b16 %v476
      %v702 = vunpack.c.l.b16 %v477
      %v703 = vunpack.c.h.b16 %v477
      %v704 = vunpack.c.l.b16 %v478
      %v705 = vunpack.c.h.b16 %v478
      %v706 = vunpack.c.l.b16 %v479
      %v707 = vunpack.c.h.b16 %v479
      %v708 = vunpack.c.l.b16 %v480
      %v709 = vunpack.c.h.b16 %v480
      %v710 = vunpack.c.l.b16 %v481
      %v711 = vunpack.c.h.b16 %v481
      %v712 = vunpack.c.l.b16 %v482
      %v713 = vunpack.c.h.b16 %v482
      %v714 = vunpack.c.l.b16 %v483
      %v715 = vunpack.c.h.b16 %v483
      %v716 = vunpack.c.l.b16 %v484
      %v717 = vunpack.c.h.b16 %v484
      %v718 = vunpack.c.l.b16 %v485
      %v719 = vunpack.c.h.b16 %v485
      %v720 = vpack.c.b16 %v600, %v592
      %v721 = vpack.c.b16 %v601, %v593
      %v722 = vpack.c.b16 %v602, %v594
      %v723 = vpack.c.b16 %v603, %v595
      %v724 = vpack.c.b16 %v604, %v596
      %v725 = vpack.c.b16 %v605, %v597
      %v726 = vpack.c.b16 %v606, %v598
      %v727 = vpack.c.b16 %v607, %v599
      %v728 = vpack.c.b16 %v616, %v608
      %v729 = vpack.c.b16 %v617, %v609
      %v730 = vpack.c.b16 %v618, %v610
      %v731 = vpack.c.b16 %v619, %v611
      %v732 = vpack.c.b16 %v620, %v612
      %v733 = vpack.c.b16 %v621, %v613
      %v734 = vpack.c.b16 %v622, %v614
      %v735 = vpack.c.b16 %v623, %v615
      %v736 = vpack.c.b16 %v632, %v624
      %v737 = vpack.c.b16 %v633, %v625
      %v738 = vpack.c.b16 %v634, %v626
      %v739 = vpack.c.b16 %v635, %v627
      %v740 = vpack.c.b16 %v636, %v628
      %v741 = vpack.c.b16 %v637, %v629
      %v742 = vpack.c.b16 %v638, %v630
      %v743 = vpack.c.b16 %v639, %v631
      %v744 = vpack.c.b16 %v648, %v640
      %v745 = vpack.c.b16 %v649, %v641
      %v746 = vpack.c.b16 %v650, %v642
      %v747 = vpack.c.b16 %v651, %v643
      %v748 = vpack.c.b16 %v652, %v644
      %v749 = vpack.c.b16 %v653, %v645
      %v750 = vpack.c.b16 %v654, %v646
      %v751 = vpack.c.b16 %v655, %v647
      %v752 = vpack.c.b16 %v664, %v656
      %v753 = vpack.c.b16 %v665, %v657
      %v754 = vpack.c.b16 %v666, %v658
      %v755 = vpack.c.b16 %v667, %v659
      %v756 = vpack.c.b16 %v668, %v660
      %v757 = vpack.c.b16 %v669, %v661
      %v758 = vpack.c.b16 %v670, %v662
      %v759 = vpack.c.b16 %v671, %v663
      %v760 = vpack.c.b16 %v680, %v672
      %v761 = vpack.c.b16 %v681, %v673
      %v762 = vpack.c.b16 %v682, %v674
      %v763 = vpack.c.b16 %v683, %v675
      %v764 = vpack.c.b16 %v684, %v676
      %v765 = vpack.c.b16 %v685, %v677
      %v766 = vpack.c.b16 %v686, %v678
      %v767 = vpack.c.b16 %v687, %v679
      %v768 = vpack.c.b16 %v696, %v688
      %v769 = vpack.c.b16 %v697, %v689
      %v770 = vpack.c.b16 %v698, %v690
      %v771 = vpack.c.b16 %v699, %v691
      %v772 = vpack.c.b16 %v700, %v692
      %v773 = vpack.c.b16 %v701, %v693
      %v774 = vpack.c.b16 %v702, %v694
      %v775 = vpack.c.b16 %v703, %v695
      %v776 = vpack.c.b16 %v712, %v704
      %v777 = vpack.c.b16 %v713, %v705
      %v778 = vpack.c.b16 %v714, %v706
      %v779 = vpack.c.b16 %v715, %v707
      %v780 = vpack.c.b16 %v716, %v708
      %v781 = vpack.c.b16 %v717, %v709
      %v782 = vpack.c.b16 %v718, %v710
      %v783 = vpack.c.b16 %v719, %v711
      %848 = vmatprep.subr.bf16.mxu0 %v721
      %849 = vmatpush1.bf16.msra.mxu0 %v720
      %850 = vmatprep.subr.bf16.mxu0 %v729
      %851 = vmatpush1.bf16.msra.mxu0 %v728
      %852 = vmatprep.subr.bf16.mxu0 %v737
      %853 = vmatpush1.bf16.msra.mxu0 %v736
      %854 = vmatprep.subr.bf16.mxu0 %v745
      %855 = vmatpush1.bf16.msra.mxu0 %v744
      %856 = vmatprep.subr.bf16.mxu0 %v753
      %857 = vmatpush1.bf16.msra.mxu0 %v752
      %858 = vmatprep.subr.bf16.mxu0 %v761
      %859 = vmatpush1.bf16.msra.mxu0 %v760
      %860 = vmatprep.subr.bf16.mxu0 %v769
      %861 = vmatpush1.bf16.msra.mxu0 %v768
      %862 = vmatprep.subr.bf16.mxu0 %v777
      %863 = vmatpush1.bf16.msra.mxu0 %v776
      %864 = vmatprep.subr.bf16.mxu0 0
      %865 = vmatpush1.bf16.msra.mxu0 0
      %866 = vmatprep.subr.bf16.mxu0 0
      %867 = vmatpush1.bf16.msra.mxu0 0
      %868 = vmatprep.subr.bf16.mxu0 0
      %869 = vmatpush1.bf16.msra.mxu0 0
      %870 = vmatprep.subr.bf16.mxu0 0
      %871 = vmatpush1.bf16.msra.mxu0 0
      %872 = vmatprep.subr.bf16.mxu0 0
      %873 = vmatpush1.bf16.msra.mxu0 0
      %874 = vmatprep.subr.bf16.mxu0 0
      %875 = vmatpush1.bf16.msra.mxu0 0
      %876 = vmatprep.subr.bf16.mxu0 0
      %877 = vmatpush1.bf16.msra.mxu0 0
      %878 = vmatprep.subr.bf16.mxu0 0
      %879 = vmatpush1.bf16.msra.mxu0 0
      %880 = vmatprep.mubr.bf16.mxu0 0
      %881 = vmatmul.mubr.bf16.gmra.mrb[0].mxu0 %v420
      %v882 = vpop.f32.mrb[0].mxu0
      %v883 = vadd.f32 %v491, %v882
      %v884 = vpop.f32.mrb[0].mxu0
      %v885 = vadd.f32 %v495, %v884
      %v886 = vpop.f32.mrb[0].mxu0
      %v887 = vadd.f32 %v491, %v886
      %v888 = vpop.f32.mrb[0].mxu0
      %v889 = vadd.f32 %v495, %v888
      %890 = vmatprep.mubr.bf16.mxu0 0
      %891 = vmatmul.mubr.bf16.gmra.mrb[0].mxu0 %v421
      %v892 = vpop.f32.mrb[0].mxu0
      %v893 = vadd.f32 %v491, %v892
      %v894 = vpop.f32.mrb[0].mxu0
      %v895 = vadd.f32 %v495, %v894
      %v896 = vpop.f32.mrb[0].mxu0
      %v897 = vadd.f32 %v491, %v896
      %v898 = vpop.f32.mrb[0].mxu0
      %v899 = vadd.f32 %v495, %v898
      %900 = vdwg.mxu0
      %901 = vmatprep.subr.bf16.mxu0 %v723
      %902 = vmatpush1.bf16.msra.mxu0 %v722
      %903 = vmatprep.subr.bf16.mxu0 %v731
      %904 = vmatpush1.bf16.msra.mxu0 %v730
      %905 = vmatprep.subr.bf16.mxu0 %v739
      %906 = vmatpush1.bf16.msra.mxu0 %v738
      %907 = vmatprep.subr.bf16.mxu0 %v747
      %908 = vmatpush1.bf16.msra.mxu0 %v746
      %909 = vmatprep.subr.bf16.mxu0 %v755
      %910 = vmatpush1.bf16.msra.mxu0 %v754
      %911 = vmatprep.subr.bf16.mxu0 %v763
      %912 = vmatpush1.bf16.msra.mxu0 %v762
      %913 = vmatprep.subr.bf16.mxu0 %v771
      %914 = vmatpush1.bf16.msra.mxu0 %v770
      %915 = vmatprep.subr.bf16.mxu0 %v779
      %916 = vmatpush1.bf16.msra.mxu0 %v778
      %917 = vmatprep.subr.bf16.mxu0 0
      %918 = vmatpush1.bf16.msra.mxu0 0
      %919 = vmatprep.subr.bf16.mxu0 0
      %920 = vmatpush1.bf16.msra.mxu0 0
      %921 = vmatprep.subr.bf16.mxu0 0
      %922 = vmatpush1.bf16.msra.mxu0 0
      %923 = vmatprep.subr.bf16.mxu0 0
      %924 = vmatpush1.bf16.msra.mxu0 0
      %925 = vmatprep.subr.bf16.mxu0 0
      %926 = vmatpush1.bf16.msra.mxu0 0
      %927 = vmatprep.subr.bf16.mxu0 0
      %928 = vmatpush1.bf16.msra.mxu0 0
      %929 = vmatprep.subr.bf16.mxu0 0
      %930 = vmatpush1.bf16.msra.mxu0 0
      %931 = vmatprep.subr.bf16.mxu0 0
      %932 = vmatpush1.bf16.msra.mxu0 0
      %933 = vmatprep.mubr.bf16.mxu0 0
      %934 = vmatmul.mubr.bf16.gmra.mrb[0].mxu0 %v420
      %v935 = vpop.f32.mrb[0].mxu0
      %v936 = vadd.f32 %v499, %v935
      %v937 = vpop.f32.mrb[0].mxu0
      %v938 = vadd.f32 %v503, %v937
      %v939 = vpop.f32.mrb[0].mxu0
      %v940 = vadd.f32 %v499, %v939
      %v941 = vpop.f32.mrb[0].mxu0
      %v942 = vadd.f32 %v503, %v941
      %943 = vmatprep.mubr.bf16.mxu0 0
      %944 = vmatmul.mubr.bf16.gmra.mrb[0].mxu0 %v421
      %v945 = vpop.f32.mrb[0].mxu0
      %v946 = vadd.f32 %v499, %v945
      %v947 = vpop.f32.mrb[0].mxu0
      %v948 = vadd.f32 %v503, %v947
      %v949 = vpop.f32.mrb[0].mxu0
      %v950 = vadd.f32 %v499, %v949
      %v951 = vpop.f32.mrb[0].mxu0
      %v952 = vadd.f32 %v503, %v951
      %953 = vdwg.mxu0
      %954 = vmatprep.subr.bf16.mxu0 %v725
      %955 = vmatpush1.bf16.msra.mxu0 %v724
      %956 = vmatprep.subr.bf16.mxu0 %v733
      %957 = vmatpush1.bf16.msra.mxu0 %v732
      %958 = vmatprep.subr.bf16.mxu0 %v741
      %959 = vmatpush1.bf16.msra.mxu0 %v740
      %960 = vmatprep.subr.bf16.mxu0 %v749
      %961 = vmatpush1.bf16.msra.mxu0 %v748
      %962 = vmatprep.subr.bf16.mxu0 %v757
      %963 = vmatpush1.bf16.msra.mxu0 %v756
      %964 = vmatprep.subr.bf16.mxu0 %v765
      %965 = vmatpush1.bf16.msra.mxu0 %v764
      %966 = vmatprep.subr.bf16.mxu0 %v773
      %967 = vmatpush1.bf16.msra.mxu0 %v772
      %968 = vmatprep.subr.bf16.mxu0 %v781
      %969 = vmatpush1.bf16.msra.mxu0 %v780
      %970 = vmatprep.subr.bf16.mxu0 0
      %971 = vmatpush1.bf16.msra.mxu0 0
      %972 = vmatprep.subr.bf16.mxu0 0
      %973 = vmatpush1.bf16.msra.mxu0 0
      %974 = vmatprep.subr.bf16.mxu0 0
      %975 = vmatpush1.bf16.msra.mxu0 0
      %976 = vmatprep.subr.bf16.mxu0 0
      %977 = vmatpush1.bf16.msra.mxu0 0
      %978 = vmatprep.subr.bf16.mxu0 0
      %979 = vmatpush1.bf16.msra.mxu0 0
      %980 = vmatprep.subr.bf16.mxu0 0
      %981 = vmatpush1.bf16.msra.mxu0 0
      %982 = vmatprep.subr.bf16.mxu0 0
      %983 = vmatpush1.bf16.msra.mxu0 0
      %984 = vmatprep.subr.bf16.mxu0 0
      %985 = vmatpush1.bf16.msra.mxu0 0
      %986 = vmatprep.mubr.bf16.mxu0 0
      %987 = vmatmul.mubr.bf16.gmra.mrb[0].mxu0 %v420
      %v988 = vpop.f32.mrb[0].mxu0
      %v989 = vadd.f32 %v507, %v988
      %v990 = vpop.f32.mrb[0].mxu0
      %v991 = vadd.f32 %v511, %v990
      %v992 = vpop.f32.mrb[0].mxu0
      %v993 = vadd.f32 %v507, %v992
      %v994 = vpop.f32.mrb[0].mxu0
      %v995 = vadd.f32 %v511, %v994
      %996 = vmatprep.mubr.bf16.mxu0 0
      %997 = vmatmul.mubr.bf16.gmra.mrb[0].mxu0 %v421
      %v998 = vpop.f32.mrb[0].mxu0
      %v999 = vadd.f32 %v507, %v998
      %v1000 = vpop.f32.mrb[0].mxu0
      %v1001 = vadd.f32 %v511, %v1000
      %v1002 = vpop.f32.mrb[0].mxu0
      %v1003 = vadd.f32 %v507, %v1002
      %v1004 = vpop.f32.mrb[0].mxu0
      %v1005 = vadd.f32 %v511, %v1004
      %1006 = vdwg.mxu0
      %1007 = vmatprep.subr.bf16.mxu0 %v727
      %1008 = vmatpush1.bf16.msra.mxu0 %v726
      %1009 = vmatprep.subr.bf16.mxu0 %v735
      %1010 = vmatpush1.bf16.msra.mxu0 %v734
      %1011 = vmatprep.subr.bf16.mxu0 %v743
      %1012 = vmatpush1.bf16.msra.mxu0 %v742
      %1013 = vmatprep.subr.bf16.mxu0 %v751
      %1014 = vmatpush1.bf16.msra.mxu0 %v750
      %1015 = vmatprep.subr.bf16.mxu0 %v759
      %1016 = vmatpush1.bf16.msra.mxu0 %v758
      %1017 = vmatprep.subr.bf16.mxu0 %v767
      %1018 = vmatpush1.bf16.msra.mxu0 %v766
      %1019 = vmatprep.subr.bf16.mxu0 %v775
      %1020 = vmatpush1.bf16.msra.mxu0 %v774
      %1021 = vmatprep.subr.bf16.mxu0 %v783
      %1022 = vmatpush1.bf16.msra.mxu0 %v782
      %1023 = vmatprep.subr.bf16.mxu0 0
      %1024 = vmatpush1.bf16.msra.mxu0 0
      %1025 = vmatprep.subr.bf16.mxu0 0
      %1026 = vmatpush1.bf16.msra.mxu0 0
      %1027 = vmatprep.subr.bf16.mxu0 0
      %1028 = vmatpush1.bf16.msra.mxu0 0
      %1029 = vmatprep.subr.bf16.mxu0 0
      %1030 = vmatpush1.bf16.msra.mxu0 0
      %1031 = vmatprep.subr.bf16.mxu0 0
      %1032 = vmatpush1.bf16.msra.mxu0 0
      %1033 = vmatprep.subr.bf16.mxu0 0
      %1034 = vmatpush1.bf16.msra.mxu0 0
      %1035 = vmatprep.subr.bf16.mxu0 0
      %1036 = vmatpush1.bf16.msra.mxu0 0
      %1037 = vmatprep.subr.bf16.mxu0 0
      %1038 = vmatpush1.bf16.msra.mxu0 0
      %1039 = vmatprep.mubr.bf16.mxu0 0
      %1040 = vmatmul.mubr.bf16.gmra.mrb[0].mxu0 %v420
      %v1041 = vpop.f32.mrb[0].mxu0
      %v1042 = vadd.f32 %v515, %v1041
      %v1043 = vpop.f32.mrb[0].mxu0
      %v1044 = vadd.f32 %v519, %v1043
      %v1045 = vpop.f32.mrb[0].mxu0
      %v1046 = vadd.f32 %v515, %v1045
      %v1047 = vpop.f32.mrb[0].mxu0
      %v1048 = vadd.f32 %v519, %v1047
      %1049 = vmatprep.mubr.bf16.mxu0 0
      %1050 = vmatmul.mubr.bf16.gmra.mrb[0].mxu0 %v421
      %v1051 = vpop.f32.mrb[0].mxu0
      %v1052 = vadd.f32 %v515, %v1051
      %v1053 = vpop.f32.mrb[0].mxu0
      %v1054 = vadd.f32 %v519, %v1053
      %v1055 = vpop.f32.mrb[0].mxu0
      %v1056 = vadd.f32 %v515, %v1055
      %v1057 = vpop.f32.mrb[0].mxu0
      %v1058 = vadd.f32 %v519, %v1057
      %1059 = vdwg.mxu0
      %p1060 = scmp.eq.s32.totalorder %s25, 0
      // Predicated region
      $region45: #{pointnet2_forward.10} parent=43 // pred_check
        %p1061 = pneg %p1060
      $region46: #{pointnet2_forward.10} parent=43 // pred_check_branch
        %1063 = sbr.rel (%p1061) target = $region48
      $region47: #{pointnet2_forward.10} parent=43 // pred_region
        %1064 = vst [vmem:[%s346] sm:$0xff] 0.0
        %1065 = vst [vmem:[%s346 + $0x8] sm:$0xff] 0.0
        %1066 = vst [vmem:[%s350] sm:$0xff] -inf
        %1067 = vst [vmem:[%s354] sm:$0xff] inf
      $region48: #{pointnet2_forward.10} parent=43 // pred_fallthru
        _
      %v1068 = vld [vmem:[%s346] ss:$2 sm:$0xff]
      %v1069 = vadd.f32 %v883, %v887
      %v1070 = vadd.f32 %v1069, %v893
      %v1071 = vadd.f32 %v1070, %v897
      %v1072 = vrot.slane %v1071, 4
      %v1073 = vadd.f32 %v1071, %v1072
      %v1074 = vrot.slane %v1073, 2
      %v1075 = vadd.f32 %v1073, %v1074
      %v1076 = vrot.slane %v1075, 1
      %v1077 = vadd.f32 %v1075, %v1076
      %v1078 = vadd.f32 %v885, %v889
      %v1079 = vadd.f32 %v1078, %v895
      %v1080 = vadd.f32 %v1079, %v899
      %v1081 = vrot.slane %v1080, 4
      %v1082 = vadd.f32 %v1080, %v1081
      %v1083 = vrot.slane %v1082, 2
      %v1084 = vadd.f32 %v1082, %v1083
      %v1085 = vrot.slane %v1084, 1
      %v1086 = vadd.f32 %v1084, %v1085
      %v1087 = vadd.f32 %v936, %v940
      %v1088 = vadd.f32 %v1087, %v946
      %v1089 = vadd.f32 %v1088, %v950
      %v1090 = vrot.slane %v1089, 4
      %v1091 = vadd.f32 %v1089, %v1090
      %v1092 = vrot.slane %v1091, 2
      %v1093 = vadd.f32 %v1091, %v1092
      %v1094 = vrot.slane %v1093, 1
      %v1095 = vadd.f32 %v1093, %v1094
      %v1096 = vadd.f32 %v938, %v942
      %v1097 = vadd.f32 %v1096, %v948
      %v1098 = vadd.f32 %v1097, %v952
      %v1099 = vrot.slane %v1098, 4
      %v1100 = vadd.f32 %v1098, %v1099
      %v1101 = vrot.slane %v1100, 2
      %v1102 = vadd.f32 %v1100, %v1101
      %v1103 = vrot.slane %v1102, 1
      %v1104 = vadd.f32 %v1102, %v1103
      %v1105 = vadd.f32 %v989, %v993
      %v1106 = vadd.f32 %v1105, %v999
      %v1107 = vadd.f32 %v1106, %v1003
      %v1108 = vrot.slane %v1107, 4
      %v1109 = vadd.f32 %v1107, %v1108
      %v1110 = vrot.slane %v1109, 2
      %v1111 = vadd.f32 %v1109, %v1110
      %v1112 = vrot.slane %v1111, 1
      %v1113 = vadd.f32 %v1111, %v1112
      %v1114 = vadd.f32 %v991, %v995
      %v1115 = vadd.f32 %v1114, %v1001
      %v1116 = vadd.f32 %v1115, %v1005
      %v1117 = vrot.slane %v1116, 4
      %v1118 = vadd.f32 %v1116, %v1117
      %v1119 = vrot.slane %v1118, 2
      %v1120 = vadd.f32 %v1118, %v1119
      %v1121 = vrot.slane %v1120, 1
      %v1122 = vadd.f32 %v1120, %v1121
      %v1123 = vadd.f32 %v1042, %v1046
      %v1124 = vadd.f32 %v1123, %v1052
      %v1125 = vadd.f32 %v1124, %v1056
      %v1126 = vrot.slane %v1125, 4
      %v1127 = vadd.f32 %v1125, %v1126
      %v1128 = vrot.slane %v1127, 2
      %v1129 = vadd.f32 %v1127, %v1128
      %v1130 = vrot.slane %v1129, 1
      %v1131 = vadd.f32 %v1129, %v1130
      %v1132 = vadd.f32 %v1044, %v1048
      %v1133 = vadd.f32 %v1132, %v1054
      %v1134 = vadd.f32 %v1133, %v1058
      %v1135 = vrot.slane %v1134, 4
      %v1136 = vadd.f32 %v1134, %v1135
      %v1137 = vrot.slane %v1136, 2
      %v1138 = vadd.f32 %v1136, %v1137
      %v1139 = vrot.slane %v1138, 1
      %v1140 = vadd.f32 %v1138, %v1139
      %v1149 = vcombine.low %v1077, %v1086
      %v1150 = vcombine.low %v1095, %v1104
      %v1151 = vcombine.low %v1113, %v1122
      %v1152 = vcombine.low %v1131, %v1140
      %v1154 = vunpack.c.l.s4 1966171168
      %v1155 = vunpack.c.0.s8 %v1154
      %v1156 = vlaneseq
      %v1157 = vshrl.u32 %v1156, 7
      %v1158 = vsub.s32 %v1155, %v1157
      %v1159 = vrot.slane %v1149, %v1158
      %v1161 = vunpack.c.l.s4 1966171168
      %v1162 = vunpack.c.0.s8 %v1161
      %v1163 = vlaneseq
      %v1164 = vshrl.u32 %v1163, 7
      %v1165 = vsub.s32 %v1162, %v1164
      %v1166 = vrot.slane %v1150, %v1165
      %v1168 = vunpack.c.l.s4 1966171168
      %v1169 = vunpack.c.0.s8 %v1168
      %v1170 = vlaneseq
      %v1171 = vshrl.u32 %v1170, 7
      %v1172 = vsub.s32 %v1169, %v1171
      %v1173 = vrot.slane %v1151, %v1172
      %v1175 = vunpack.c.l.s4 1966171168
      %v1176 = vunpack.c.0.s8 %v1175
      %v1177 = vlaneseq
      %v1178 = vshrl.u32 %v1177, 7
      %v1179 = vsub.s32 %v1176, %v1178
      %v1180 = vrot.slane %v1152, %v1179
      %v1181 = vcombine.low %v1159, %v1166
      %v1182 = vcombine.low %v1173, %v1180
      %v1184 = vunpack.c.l.s4 1966171168
      %v1185 = vunpack.c.0.s8 %v1184
      %v1186 = vlaneseq
      %v1187 = vshrl.u32 %v1186, 7
      %v1188 = vsub.s32 %v1185, %v1187
      %v1189 = vrot.slane %v1181, %v1188
      %v1191 = vunpack.c.l.s4 1966171168
      %v1192 = vunpack.c.0.s8 %v1191
      %v1193 = vlaneseq
      %v1194 = vshrl.u32 %v1193, 7
      %v1195 = vsub.s32 %v1192, %v1194
      %v1196 = vrot.slane %v1182, %v1195
      %v1197 = vcombine.low %v1189, %v1196
      %v1199 = vadd.f32 %v1068, %v1197
      %1200 = vst [vmem:[%s346] ss:$2 sm:$0xff] %v1199
      %s1201 = scalar_lea.vmem %s346, 1
      %v1202 = vld [vmem:[%s1201] ss:$2 sm:$0xff]
      %v1203 = vmul.f32 %v883, %v883
      %v1204 = vmul.f32 %v885, %v885
      %v1205 = vmul.f32 %v936, %v936
      %v1206 = vmul.f32 %v938, %v938
      %v1207 = vmul.f32 %v989, %v989
      %v1208 = vmul.f32 %v991, %v991
      %v1209 = vmul.f32 %v1042, %v1042
      %v1210 = vmul.f32 %v1044, %v1044
      %v1211 = vmul.f32 %v887, %v887
      %v1212 = vmul.f32 %v889, %v889
      %v1213 = vmul.f32 %v940, %v940
      %v1214 = vmul.f32 %v942, %v942
      %v1215 = vmul.f32 %v993, %v993
      %v1216 = vmul.f32 %v995, %v995
      %v1217 = vmul.f32 %v1046, %v1046
      %v1218 = vmul.f32 %v1048, %v1048
      %v1219 = vmul.f32 %v893, %v893
      %v1220 = vmul.f32 %v895, %v895
      %v1221 = vmul.f32 %v946, %v946
      %v1222 = vmul.f32 %v948, %v948
      %v1223 = vmul.f32 %v999, %v999
      %v1224 = vmul.f32 %v1001, %v1001
      %v1225 = vmul.f32 %v1052, %v1052
      %v1226 = vmul.f32 %v1054, %v1054
      %v1227 = vmul.f32 %v897, %v897
      %v1228 = vmul.f32 %v899, %v899
      %v1229 = vmul.f32 %v950, %v950
      %v1230 = vmul.f32 %v952, %v952
      %v1231 = vmul.f32 %v1003, %v1003
      %v1232 = vmul.f32 %v1005, %v1005
      %v1233 = vmul.f32 %v1056, %v1056
      %v1234 = vmul.f32 %v1058, %v1058
      %v1235 = vadd.f32 %v1203, %v1211
      %v1236 = vadd.f32 %v1235, %v1219
      %v1237 = vadd.f32 %v1236, %v1227
      %v1238 = vrot.slane %v1237, 4
      %v1239 = vadd.f32 %v1237, %v1238
      %v1240 = vrot.slane %v1239, 2
      %v1241 = vadd.f32 %v1239, %v1240
      %v1242 = vrot.slane %v1241, 1
      %v1243 = vadd.f32 %v1241, %v1242
      %v1244 = vadd.f32 %v1204, %v1212
      %v1245 = vadd.f32 %v1244, %v1220
      %v1246 = vadd.f32 %v1245, %v1228
      %v1247 = vrot.slane %v1246, 4
      %v1248 = vadd.f32 %v1246, %v1247
      %v1249 = vrot.slane %v1248, 2
      %v1250 = vadd.f32 %v1248, %v1249
      %v1251 = vrot.slane %v1250, 1
      %v1252 = vadd.f32 %v1250, %v1251
      %v1253 = vadd.f32 %v1205, %v1213
      %v1254 = vadd.f32 %v1253, %v1221
      %v1255 = vadd.f32 %v1254, %v1229
      %v1256 = vrot.slane %v1255, 4
      %v1257 = vadd.f32 %v1255, %v1256
      %v1258 = vrot.slane %v1257, 2
      %v1259 = vadd.f32 %v1257, %v1258
      %v1260 = vrot.slane %v1259, 1
      %v1261 = vadd.f32 %v1259, %v1260
      %v1262 = vadd.f32 %v1206, %v1214
      %v1263 = vadd.f32 %v1262, %v1222
      %v1264 = vadd.f32 %v1263, %v1230
      %v1265 = vrot.slane %v1264, 4
      %v1266 = vadd.f32 %v1264, %v1265
      %v1267 = vrot.slane %v1266, 2
      %v1268 = vadd.f32 %v1266, %v1267
      %v1269 = vrot.slane %v1268, 1
      %v1270 = vadd.f32 %v1268, %v1269
      %v1271 = vadd.f32 %v1207, %v1215
      %v1272 = vadd.f32 %v1271, %v1223
      %v1273 = vadd.f32 %v1272, %v1231
      %v1274 = vrot.slane %v1273, 4
      %v1275 = vadd.f32 %v1273, %v1274
      %v1276 = vrot.slane %v1275, 2
      %v1277 = vadd.f32 %v1275, %v1276
      %v1278 = vrot.slane %v1277, 1
      %v1279 = vadd.f32 %v1277, %v1278
      %v1280 = vadd.f32 %v1208, %v1216
      %v1281 = vadd.f32 %v1280, %v1224
      %v1282 = vadd.f32 %v1281, %v1232
      %v1283 = vrot.slane %v1282, 4
      %v1284 = vadd.f32 %v1282, %v1283
      %v1285 = vrot.slane %v1284, 2
      %v1286 = vadd.f32 %v1284, %v1285
      %v1287 = vrot.slane %v1286, 1
      %v1288 = vadd.f32 %v1286, %v1287
      %v1289 = vadd.f32 %v1209, %v1217
      %v1290 = vadd.f32 %v1289, %v1225
      %v1291 = vadd.f32 %v1290, %v1233
      %v1292 = vrot.slane %v1291, 4
      %v1293 = vadd.f32 %v1291, %v1292
      %v1294 = vrot.slane %v1293, 2
      %v1295 = vadd.f32 %v1293, %v1294
      %v1296 = vrot.slane %v1295, 1
      %v1297 = vadd.f32 %v1295, %v1296
      %v1298 = vadd.f32 %v1210, %v1218
      %v1299 = vadd.f32 %v1298, %v1226
      %v1300 = vadd.f32 %v1299, %v1234
      %v1301 = vrot.slane %v1300, 4
      %v1302 = vadd.f32 %v1300, %v1301
      %v1303 = vrot.slane %v1302, 2
      %v1304 = vadd.f32 %v1302, %v1303
      %v1305 = vrot.slane %v1304, 1
      %v1306 = vadd.f32 %v1304, %v1305
      %v1315 = vcombine.low %v1243, %v1252
      %v1316 = vcombine.low %v1261, %v1270
      %v1317 = vcombine.low %v1279, %v1288
      %v1318 = vcombine.low %v1297, %v1306
      %v1320 = vunpack.c.l.s4 1966171168
      %v1321 = vunpack.c.0.s8 %v1320
      %v1322 = vlaneseq
      %v1323 = vshrl.u32 %v1322, 7
      %v1324 = vsub.s32 %v1321, %v1323
      %v1325 = vrot.slane %v1315, %v1324
      %v1327 = vunpack.c.l.s4 1966171168
      %v1328 = vunpack.c.0.s8 %v1327
      %v1329 = vlaneseq
      %v1330 = vshrl.u32 %v1329, 7
      %v1331 = vsub.s32 %v1328, %v1330
      %v1332 = vrot.slane %v1316, %v1331
      %v1334 = vunpack.c.l.s4 1966171168
      %v1335 = vunpack.c.0.s8 %v1334
      %v1336 = vlaneseq
      %v1337 = vshrl.u32 %v1336, 7
      %v1338 = vsub.s32 %v1335, %v1337
      %v1339 = vrot.slane %v1317, %v1338
      %v1341 = vunpack.c.l.s4 1966171168
      %v1342 = vunpack.c.0.s8 %v1341
      %v1343 = vlaneseq
      %v1344 = vshrl.u32 %v1343, 7
      %v1345 = vsub.s32 %v1342, %v1344
      %v1346 = vrot.slane %v1318, %v1345
      %v1347 = vcombine.low %v1325, %v1332
      %v1348 = vcombine.low %v1339, %v1346
      %v1350 = vunpack.c.l.s4 1966171168
      %v1351 = vunpack.c.0.s8 %v1350
      %v1352 = vlaneseq
      %v1353 = vshrl.u32 %v1352, 7
      %v1354 = vsub.s32 %v1351, %v1353
      %v1355 = vrot.slane %v1347, %v1354
      %v1357 = vunpack.c.l.s4 1966171168
      %v1358 = vunpack.c.0.s8 %v1357
      %v1359 = vlaneseq
      %v1360 = vshrl.u32 %v1359, 7
      %v1361 = vsub.s32 %v1358, %v1360
      %v1362 = vrot.slane %v1348, %v1361
      %v1363 = vcombine.low %v1355, %v1362
      %v1365 = vadd.f32 %v1202, %v1363
      %1366 = vst [vmem:[%s1201] ss:$2 sm:$0xff] %v1365
      %v1367 = vld [vmem:[%s350] sm:$0xff]
      %v1368 = vmax.f32 %v883, %v887
      %v1369 = vmax.f32 %v1368, %v893
      %v1370 = vmax.f32 %v1369, %v897
      %v1371 = vrot.slane %v1370, 4
      %v1372 = vmax.f32 %v1370, %v1371
      %v1373 = vrot.slane %v1372, 2
      %v1374 = vmax.f32 %v1372, %v1373
      %v1375 = vrot.slane %v1374, 1
      %v1376 = vmax.f32 %v1374, %v1375
      %v1377 = vmax.f32 %v885, %v889
      %v1378 = vmax.f32 %v1377, %v895
      %v1379 = vmax.f32 %v1378, %v899
      %v1380 = vrot.slane %v1379, 4
      %v1381 = vmax.f32 %v1379, %v1380
      %v1382 = vrot.slane %v1381, 2
      %v1383 = vmax.f32 %v1381, %v1382
      %v1384 = vrot.slane %v1383, 1
      %v1385 = vmax.f32 %v1383, %v1384
      %v1386 = vmax.f32 %v936, %v940
      %v1387 = vmax.f32 %v1386, %v946
      %v1388 = vmax.f32 %v1387, %v950
      %v1389 = vrot.slane %v1388, 4
      %v1390 = vmax.f32 %v1388, %v1389
      %v1391 = vrot.slane %v1390, 2
      %v1392 = vmax.f32 %v1390, %v1391
      %v1393 = vrot.slane %v1392, 1
      %v1394 = vmax.f32 %v1392, %v1393
      %v1395 = vmax.f32 %v938, %v942
      %v1396 = vmax.f32 %v1395, %v948
      %v1397 = vmax.f32 %v1396, %v952
      %v1398 = vrot.slane %v1397, 4
      %v1399 = vmax.f32 %v1397, %v1398
      %v1400 = vrot.slane %v1399, 2
      %v1401 = vmax.f32 %v1399, %v1400
      %v1402 = vrot.slane %v1401, 1
      %v1403 = vmax.f32 %v1401, %v1402
      %v1404 = vmax.f32 %v989, %v993
      %v1405 = vmax.f32 %v1404, %v999
      %v1406 = vmax.f32 %v1405, %v1003
      %v1407 = vrot.slane %v1406, 4
      %v1408 = vmax.f32 %v1406, %v1407
      %v1409 = vrot.slane %v1408, 2
      %v1410 = vmax.f32 %v1408, %v1409
      %v1411 = vrot.slane %v1410, 1
      %v1412 = vmax.f32 %v1410, %v1411
      %v1413 = vmax.f32 %v991, %v995
      %v1414 = vmax.f32 %v1413, %v1001
      %v1415 = vmax.f32 %v1414, %v1005
      %v1416 = vrot.slane %v1415, 4
      %v1417 = vmax.f32 %v1415, %v1416
      %v1418 = vrot.slane %v1417, 2
      %v1419 = vmax.f32 %v1417, %v1418
      %v1420 = vrot.slane %v1419, 1
      %v1421 = vmax.f32 %v1419, %v1420
      %v1422 = vmax.f32 %v1042, %v1046
      %v1423 = vmax.f32 %v1422, %v1052
      %v1424 = vmax.f32 %v1423, %v1056
      %v1425 = vrot.slane %v1424, 4
      %v1426 = vmax.f32 %v1424, %v1425
      %v1427 = vrot.slane %v1426, 2
      %v1428 = vmax.f32 %v1426, %v1427
      %v1429 = vrot.slane %v1428, 1
      %v1430 = vmax.f32 %v1428, %v1429
      %v1431 = vmax.f32 %v1044, %v1048
      %v1432 = vmax.f32 %v1431, %v1054
      %v1433 = vmax.f32 %v1432, %v1058
      %v1434 = vrot.slane %v1433, 4
      %v1435 = vmax.f32 %v1433, %v1434
      %v1436 = vrot.slane %v1435, 2
      %v1437 = vmax.f32 %v1435, %v1436
      %v1438 = vrot.slane %v1437, 1
      %v1439 = vmax.f32 %v1437, %v1438
      %v1448 = vcombine.low %v1376, %v1385
      %v1449 = vcombine.low %v1394, %v1403
      %v1450 = vcombine.low %v1412, %v1421
      %v1451 = vcombine.low %v1430, %v1439
      %v1453 = vunpack.c.l.s4 1966171168
      %v1454 = vunpack.c.0.s8 %v1453
      %v1455 = vlaneseq
      %v1456 = vshrl.u32 %v1455, 7
      %v1457 = vsub.s32 %v1454, %v1456
      %v1458 = vrot.slane %v1448, %v1457
      %v1460 = vunpack.c.l.s4 1966171168
      %v1461 = vunpack.c.0.s8 %v1460
      %v1462 = vlaneseq
      %v1463 = vshrl.u32 %v1462, 7
      %v1464 = vsub.s32 %v1461, %v1463
      %v1465 = vrot.slane %v1449, %v1464
      %v1467 = vunpack.c.l.s4 1966171168
      %v1468 = vunpack.c.0.s8 %v1467
      %v1469 = vlaneseq
      %v1470 = vshrl.u32 %v1469, 7
      %v1471 = vsub.s32 %v1468, %v1470
      %v1472 = vrot.slane %v1450, %v1471
      %v1474 = vunpack.c.l.s4 1966171168
      %v1475 = vunpack.c.0.s8 %v1474
      %v1476 = vlaneseq
      %v1477 = vshrl.u32 %v1476, 7
      %v1478 = vsub.s32 %v1475, %v1477
      %v1479 = vrot.slane %v1451, %v1478
      %v1480 = vcombine.low %v1458, %v1465
      %v1481 = vcombine.low %v1472, %v1479
      %v1483 = vunpack.c.l.s4 1966171168
      %v1484 = vunpack.c.0.s8 %v1483
      %v1485 = vlaneseq
      %v1486 = vshrl.u32 %v1485, 7
      %v1487 = vsub.s32 %v1484, %v1486
      %v1488 = vrot.slane %v1480, %v1487
      %v1490 = vunpack.c.l.s4 1966171168
      %v1491 = vunpack.c.0.s8 %v1490
      %v1492 = vlaneseq
      %v1493 = vshrl.u32 %v1492, 7
      %v1494 = vsub.s32 %v1491, %v1493
      %v1495 = vrot.slane %v1481, %v1494
      %v1496 = vcombine.low %v1488, %v1495
      %v1498 = vmax.f32 %v1367, %v1496
      %1499 = vst [vmem:[%s350] sm:$0xff] %v1498
      %v1500 = vld [vmem:[%s354] sm:$0xff]
      %v1501 = vmin.f32 %v883, %v887
      %v1502 = vmin.f32 %v1501, %v893
      %v1503 = vmin.f32 %v1502, %v897
      %v1504 = vrot.slane %v1503, 4
      %v1505 = vmin.f32 %v1503, %v1504
      %v1506 = vrot.slane %v1505, 2
      %v1507 = vmin.f32 %v1505, %v1506
      %v1508 = vrot.slane %v1507, 1
      %v1509 = vmin.f32 %v1507, %v1508
      %v1510 = vmin.f32 %v885, %v889
      %v1511 = vmin.f32 %v1510, %v895
      %v1512 = vmin.f32 %v1511, %v899
      %v1513 = vrot.slane %v1512, 4
      %v1514 = vmin.f32 %v1512, %v1513
      %v1515 = vrot.slane %v1514, 2
      %v1516 = vmin.f32 %v1514, %v1515
      %v1517 = vrot.slane %v1516, 1
      %v1518 = vmin.f32 %v1516, %v1517
      %v1519 = vmin.f32 %v936, %v940
      %v1520 = vmin.f32 %v1519, %v946
      %v1521 = vmin.f32 %v1520, %v950
      %v1522 = vrot.slane %v1521, 4
      %v1523 = vmin.f32 %v1521, %v1522
      %v1524 = vrot.slane %v1523, 2
      %v1525 = vmin.f32 %v1523, %v1524
      %v1526 = vrot.slane %v1525, 1
      %v1527 = vmin.f32 %v1525, %v1526
      %v1528 = vmin.f32 %v938, %v942
      %v1529 = vmin.f32 %v1528, %v948
      %v1530 = vmin.f32 %v1529, %v952
      %v1531 = vrot.slane %v1530, 4
      %v1532 = vmin.f32 %v1530, %v1531
      %v1533 = vrot.slane %v1532, 2
      %v1534 = vmin.f32 %v1532, %v1533
      %v1535 = vrot.slane %v1534, 1
      %v1536 = vmin.f32 %v1534, %v1535
      %v1537 = vmin.f32 %v989, %v993
      %v1538 = vmin.f32 %v1537, %v999
      %v1539 = vmin.f32 %v1538, %v1003
      %v1540 = vrot.slane %v1539, 4
      %v1541 = vmin.f32 %v1539, %v1540
      %v1542 = vrot.slane %v1541, 2
      %v1543 = vmin.f32 %v1541, %v1542
      %v1544 = vrot.slane %v1543, 1
      %v1545 = vmin.f32 %v1543, %v1544
      %v1546 = vmin.f32 %v991, %v995
      %v1547 = vmin.f32 %v1546, %v1001
      %v1548 = vmin.f32 %v1547, %v1005
      %v1549 = vrot.slane %v1548, 4
      %v1550 = vmin.f32 %v1548, %v1549
      %v1551 = vrot.slane %v1550, 2
      %v1552 = vmin.f32 %v1550, %v1551
      %v1553 = vrot.slane %v1552, 1
      %v1554 = vmin.f32 %v1552, %v1553
      %v1555 = vmin.f32 %v1042, %v1046
      %v1556 = vmin.f32 %v1555, %v1052
      %v1557 = vmin.f32 %v1556, %v1056
      %v1558 = vrot.slane %v1557, 4
      %v1559 = vmin.f32 %v1557, %v1558
      %v1560 = vrot.slane %v1559, 2
      %v1561 = vmin.f32 %v1559, %v1560
      %v1562 = vrot.slane %v1561, 1
      %v1563 = vmin.f32 %v1561, %v1562
      %v1564 = vmin.f32 %v1044, %v1048
      %v1565 = vmin.f32 %v1564, %v1054
      %v1566 = vmin.f32 %v1565, %v1058
      %v1567 = vrot.slane %v1566, 4
      %v1568 = vmin.f32 %v1566, %v1567
      %v1569 = vrot.slane %v1568, 2
      %v1570 = vmin.f32 %v1568, %v1569
      %v1571 = vrot.slane %v1570, 1
      %v1572 = vmin.f32 %v1570, %v1571
      %v1581 = vcombine.low %v1509, %v1518
      %v1582 = vcombine.low %v1527, %v1536
      %v1583 = vcombine.low %v1545, %v1554
      %v1584 = vcombine.low %v1563, %v1572
      %v1586 = vunpack.c.l.s4 1966171168
      %v1587 = vunpack.c.0.s8 %v1586
      %v1588 = vlaneseq
      %v1589 = vshrl.u32 %v1588, 7
      %v1590 = vsub.s32 %v1587, %v1589
      %v1591 = vrot.slane %v1581, %v1590
      %v1593 = vunpack.c.l.s4 1966171168
      %v1594 = vunpack.c.0.s8 %v1593
      %v1595 = vlaneseq
      %v1596 = vshrl.u32 %v1595, 7
      %v1597 = vsub.s32 %v1594, %v1596
      %v1598 = vrot.slane %v1582, %v1597
      %v1600 = vunpack.c.l.s4 1966171168
      %v1601 = vunpack.c.0.s8 %v1600
      %v1602 = vlaneseq
      %v1603 = vshrl.u32 %v1602, 7
      %v1604 = vsub.s32 %v1601, %v1603
      %v1605 = vrot.slane %v1583, %v1604
      %v1607 = vunpack.c.l.s4 1966171168
      %v1608 = vunpack.c.0.s8 %v1607
      %v1609 = vlaneseq
      %v1610 = vshrl.u32 %v1609, 7
      %v1611 = vsub.s32 %v1608, %v1610
      %v1612 = vrot.slane %v1584, %v1611
      %v1613 = vcombine.low %v1591, %v1598
      %v1614 = vcombine.low %v1605, %v1612
      %v1616 = vunpack.c.l.s4 1966171168
      %v1617 = vunpack.c.0.s8 %v1616
      %v1618 = vlaneseq
      %v1619 = vshrl.u32 %v1618, 7
      %v1620 = vsub.s32 %v1617, %v1619
      %v1621 = vrot.slane %v1613, %v1620
      %v1623 = vunpack.c.l.s4 1966171168
      %v1624 = vunpack.c.0.s8 %v1623
      %v1625 = vlaneseq
      %v1626 = vshrl.u32 %v1625, 7
      %v1627 = vsub.s32 %v1624, %v1626
      %v1628 = vrot.slane %v1614, %v1627
      %v1629 = vcombine.low %v1621, %v1628
      %v1631 = vmin.f32 %v1500, %v1629
      %1632 = vst [vmem:[%s354] sm:$0xff] %v1631
      %p1633 = scmp.lt.s32.totalorder %s24, 3
      %s1634 = scalar_select %p1633, %s24, 3
      %s1635 = smul.addr %s1634, 8
      %s1636 = smul.addr %s1635, 2
      %s1637 = scalar_lea.vmem %s6, %s1636
      %p1638 = scmp.lt.s32.totalorder %s24, 3
      %s1639 = scalar_select %p1638, %s24, 3
      %s1640 = smul.addr %s1639, 8
      %s1641 = scalar_lea.vmem %s7, %s1640
      %p1642 = scmp.lt.s32.totalorder %s24, 3
      %s1643 = scalar_select %p1642, %s24, 3
      %s1644 = smul.addr %s1643, 8
      %s1645 = scalar_lea.vmem %s8, %s1644
      // Predicated region
      $region49: #{pointnet2_forward.10} parent=43 // pred_check
        %p1646 = pneg %p185
      $region50: #{pointnet2_forward.10} parent=43 // pred_check_branch
        %1648 = sbr.rel (%p1646) target = $region52
      $region51: #{pointnet2_forward.10} parent=43 // pred_region
        _
      $region52: #{pointnet2_forward.10} parent=43 // pred_fallthru
        _
      // Predicated region
      $region53: #{pointnet2_forward.10} parent=43 // pred_check
        %p1649 = pneg %p211
      $region54: #{pointnet2_forward.10} parent=43 // pred_check_branch
        %1651 = sbr.rel (%p1649) target = $region56
      $region55: #{pointnet2_forward.10} parent=43 // pred_region
        _
      $region56: #{pointnet2_forward.10} parent=43 // pred_fallthru
        _
      // Predicated region
      $region57: #{pointnet2_forward.10} parent=43 // pred_check
        %p1652 = pneg %p237
      $region58: #{pointnet2_forward.10} parent=43 // pred_check_branch
        %1654 = sbr.rel (%p1652) target = $region60
      $region59: #{pointnet2_forward.10} parent=43 // pred_region
        _
      $region60: #{pointnet2_forward.10} parent=43 // pred_fallthru
        _
    $region44: #{pointnet2_forward.10} parent=5 // pred_fallthru
      _
    %p1655 = scmp.le.s32.totalorder 2, %s15
    // Predicated region
    $region61: #{pointnet2_forward.10} parent=5 // pred_check
      %p1656 = pneg %p1655
    $region62: #{pointnet2_forward.10} parent=5 // pred_check_branch
      %1658 = sbr.rel (%p1656) target = $region64
    $region63: #{pointnet2_forward.10} parent=5 // pred_region
      %s1659 = ssub.s32 %s15, 2
      // Predicated region
      $region65: #{pointnet2_forward.10} parent=63 // pred_check
        %p1660 = pneg %p191
      $region66: #{pointnet2_forward.10} parent=63 // pred_check_branch
        %1662 = sbr.rel (%p1660) target = $region68
      $region67: #{pointnet2_forward.10} parent=63 // pred_region
        %p1663 = scmp.lt.s32.totalorder %s26, 3
        %s1664 = scalar_select %p1663, %s26, 3
        %s1665 = smul.addr %s1664, 8
        %s1666 = smul.addr %s1665, 2
        %s1667 = scalar_lea.vmem %s6, %s1666
      $region68: #{pointnet2_forward.10} parent=63 // pred_fallthru
        _
      // Predicated region
      $region69: #{pointnet2_forward.10} parent=63 // pred_check
        %p1668 = pneg %p217
      $region70: #{pointnet2_forward.10} parent=63 // pred_check_branch
        %1670 = sbr.rel (%p1668) target = $region72
      $region71: #{pointnet2_forward.10} parent=63 // pred_region
        %p1671 = scmp.lt.s32.totalorder %s26, 3
        %s1672 = scalar_select %p1671, %s26, 3
        %s1673 = smul.addr %s1672, 8
        %s1674 = scalar_lea.vmem %s7, %s1673
      $region72: #{pointnet2_forward.10} parent=63 // pred_fallthru
        _
      // Predicated region
      $region73: #{pointnet2_forward.10} parent=63 // pred_check
        %p1675 = pneg %p243
      $region74: #{pointnet2_forward.10} parent=63 // pred_check_branch
        %1677 = sbr.rel (%p1675) target = $region76
      $region75: #{pointnet2_forward.10} parent=63 // pred_region
        %p1678 = scmp.lt.s32.totalorder %s26, 3
        %s1679 = scalar_select %p1678, %s26, 3
        %s1680 = smul.addr %s1679, 8
        %s1681 = scalar_lea.vmem %s8, %s1680
      $region76: #{pointnet2_forward.10} parent=63 // pred_fallthru
        _
    $region64: #{pointnet2_forward.10} parent=5 // pred_fallthru
      _
  $region6: #{pointnet2_forward.10} parent=0 // loop_footer
    %s19 = sadd.s32 1, %s15
  $region7: #{pointnet2_forward.10} parent=0 // loop_footer_branch
    %14 = sbr.rel target = $region3
  $region8: #{pointnet2_forward.10} parent=0 // loop_exit
    _

// kernel: pointnet2_forward.11
$region0: #{pointnet2_forward.11}
  #allocation0 [shape = 'u32[]', space=smem, size = 0x4, offset = 0x4, fixed_abs, tag = 'smem constant byte address 0x4 - core index']
  #allocation1 [shape = 'u32[144,128]{1,0:T(1,128)}', space=vmem, size = 0x12000, scoped, tag = 'internal scratch']
  %s0 = inlined_call_operand.vmem [shape: f32[4,1,1024], index: 0, kind: input, shape index: {}]
  %s1 = inlined_call_operand.vmem [shape: f32[4,1,1024], index: 1, kind: input, shape index: {}]
  %s2 = inlined_call_operand.vmem [shape: f32[4,2,1024], index: 2, kind: input, shape index: {}]
  %s3 = inlined_call_operand.vmem [shape: f32[1,1024], index: 3, kind: input, shape index: {}]
  %s4 = inlined_call_operand.vmem [shape: f32[1,1024], index: 4, kind: input, shape index: {}]
  %s5 = inlined_call_operand.vmem [shape: bf16[1024,32], index: 5, kind: input, shape index: {}]
  %s6 = inlined_call_operand.vmem [shape: f32[1,32], index: 6, kind: input, shape index: {}]
  %s7 = inlined_call_operand.vmem [shape: f32[1,32], index: 7, kind: input, shape index: {}]
  %s8 = inlined_call_operand.vmem [shape: f32[1,32], index: 8, kind: input, shape index: {}]
  %s9 = inlined_call_operand.hbm [shape: f32[4,32], index: 9, kind: output, shape index: {}]
  %s10 = sld [smem:[#allocation0]]
  $region46: #{pointnet2_forward.11} parent=0
    _
  %s12 = ssub.s32 1, %s10
  %s13 = scalar_select 0, %s12, %s10
  $region1: #{pointnet2_forward.11} parent=0
    #allocation2 [shape = 'u8[2048]{0}', space=vmem, size = 0x800, scoped, tag = 'output window, operand 0, single buffered']
    #allocation3 [shape = 's32[1]{0}', space=sflag, size = 0x4, scoped, tag = 'scoped memory for pointnet2_forward.11']
    %14 = vsyncpa [#allocation3], 0
    // Predicated region
    $region2: #{pointnet2_forward.11} parent=1 // pred_check
      _
    $region3: #{pointnet2_forward.11} parent=1 // pred_check_branch
      %16 = sbr.rel (0) target = $region5
    $region4: #{pointnet2_forward.11} parent=1 // pred_region
      _
    $region5: #{pointnet2_forward.11} parent=1 // pred_fallthru
      _
    // Predicated region
    $region6: #{pointnet2_forward.11} parent=1 // pred_check
      _
    $region7: #{pointnet2_forward.11} parent=1 // pred_check_branch
      %18 = sbr.rel (0) target = $region9
    $region8: #{pointnet2_forward.11} parent=1 // pred_region
      _
    $region9: #{pointnet2_forward.11} parent=1 // pred_fallthru
      _
    // Predicated region
    $region10: #{pointnet2_forward.11} parent=1 // pred_check
      _
    $region11: #{pointnet2_forward.11} parent=1 // pred_check_branch
      %20 = sbr.rel (0) target = $region13
    $region12: #{pointnet2_forward.11} parent=1 // pred_region
      _
    $region13: #{pointnet2_forward.11} parent=1 // pred_fallthru
      _
    // Predicated region
    $region14: #{pointnet2_forward.11} parent=1 // pred_check
      _
    $region15: #{pointnet2_forward.11} parent=1 // pred_check_branch
      %22 = sbr.rel (0) target = $region17
    $region16: #{pointnet2_forward.11} parent=1 // pred_region
      _
    $region17: #{pointnet2_forward.11} parent=1 // pred_fallthru
      _
    // Predicated region
    $region18: #{pointnet2_forward.11} parent=1 // pred_check
      _
    $region19: #{pointnet2_forward.11} parent=1 // pred_check_branch
      %24 = sbr.rel (0) target = $region21
    $region20: #{pointnet2_forward.11} parent=1 // pred_region
      _
    $region21: #{pointnet2_forward.11} parent=1 // pred_fallthru
      _
    // Predicated region
    $region22: #{pointnet2_forward.11} parent=1 // pred_check
      _
    $region23: #{pointnet2_forward.11} parent=1 // pred_check_branch
      %26 = sbr.rel (0) target = $region25
    $region24: #{pointnet2_forward.11} parent=1 // pred_region
      _
    $region25: #{pointnet2_forward.11} parent=1 // pred_fallthru
      _
    // Predicated region
    $region26: #{pointnet2_forward.11} parent=1 // pred_check
      _
    $region27: #{pointnet2_forward.11} parent=1 // pred_check_branch
      %28 = sbr.rel (0) target = $region29
    $region28: #{pointnet2_forward.11} parent=1 // pred_region
      _
    $region29: #{pointnet2_forward.11} parent=1 // pred_fallthru
      _
    // Predicated region
    $region30: #{pointnet2_forward.11} parent=1 // pred_check
      _
    $region31: #{pointnet2_forward.11} parent=1 // pred_check_branch
      %30 = sbr.rel (0) target = $region33
    $region32: #{pointnet2_forward.11} parent=1 // pred_region
      _
    $region33: #{pointnet2_forward.11} parent=1 // pred_fallthru
      _
    // Predicated region
    $region34: #{pointnet2_forward.11} parent=1 // pred_check
      _
    $region35: #{pointnet2_forward.11} parent=1 // pred_check_branch
      %32 = sbr.rel (0) target = $region37
    $region36: #{pointnet2_forward.11} parent=1 // pred_region
      _
    $region37: #{pointnet2_forward.11} parent=1 // pred_fallthru
      _
    %v34 = vld [vmem:[%s2] sm:$0xff]
    %v35 = vld [vmem:[%s2 + $0x8] sm:$0xff]
    %v36 = vld [vmem:[%s2 + $0x10] sm:$0xff]
    %v37 = vld [vmem:[%s2 + $0x18] sm:$0xff]
    %v38 = vld [vmem:[%s2 + $0x20] sm:$0xff]
    %v39 = vld [vmem:[%s2 + $0x28] sm:$0xff]
    %v40 = vld [vmem:[%s2 + $0x30] sm:$0xff]
    %v41 = vld [vmem:[%s2 + $0x38] sm:$0xff]
    %v50 = vcombine.high %v34, %v34
    %v52 = vunpack.c.l.s4 1983009808
    %v53 = vunpack.c.0.s8 %v52
    %v54 = vlaneseq
    %v55 = vshrl.u32 %v54, 7
    %v56 = vsub.s32 %v53, %v55
    %v57 = vrot.slane %v34, %v56
    %v59 = vunpack.c.l.s4 1983009808
    %v60 = vunpack.c.0.s8 %v59
    %v61 = vlaneseq
    %v62 = vshrl.u32 %v61, 7
    %v63 = vsub.s32 %v60, %v62
    %v64 = vrot.slane %v50, %v63
    %v65 = vcombine.high %v57, %v57
    %v66 = vcombine.high %v64, %v64
    %v67 = vcombine.high %v35, %v35
    %v69 = vunpack.c.l.s4 1983009808
    %v70 = vunpack.c.0.s8 %v69
    %v71 = vlaneseq
    %v72 = vshrl.u32 %v71, 7
    %v73 = vsub.s32 %v70, %v72
    %v74 = vrot.slane %v35, %v73
    %v76 = vunpack.c.l.s4 1983009808
    %v77 = vunpack.c.0.s8 %v76
    %v78 = vlaneseq
    %v79 = vshrl.u32 %v78, 7
    %v80 = vsub.s32 %v77, %v79
    %v81 = vrot.slane %v67, %v80
    %v82 = vcombine.high %v74, %v74
    %v83 = vcombine.high %v81, %v81
    %v84 = vcombine.high %v36, %v36
    %v86 = vunpack.c.l.s4 1983009808
    %v87 = vunpack.c.0.s8 %v86
    %v88 = vlaneseq
    %v89 = vshrl.u32 %v88, 7
    %v90 = vsub.s32 %v87, %v89
    %v91 = vrot.slane %v36, %v90
    %v93 = vunpack.c.l.s4 1983009808
    %v94 = vunpack.c.0.s8 %v93
    %v95 = vlaneseq
    %v96 = vshrl.u32 %v95, 7
    %v97 = vsub.s32 %v94, %v96
    %v98 = vrot.slane %v84, %v97
    %v99 = vcombine.high %v91, %v91
    %v100 = vcombine.high %v98, %v98
    %v101 = vcombine.high %v37, %v37
    %v103 = vunpack.c.l.s4 1983009808
    %v104 = vunpack.c.0.s8 %v103
    %v105 = vlaneseq
    %v106 = vshrl.u32 %v105, 7
    %v107 = vsub.s32 %v104, %v106
    %v108 = vrot.slane %v37, %v107
    %v110 = vunpack.c.l.s4 1983009808
    %v111 = vunpack.c.0.s8 %v110
    %v112 = vlaneseq
    %v113 = vshrl.u32 %v112, 7
    %v114 = vsub.s32 %v111, %v113
    %v115 = vrot.slane %v101, %v114
    %v116 = vcombine.high %v108, %v108
    %v117 = vcombine.high %v115, %v115
    %v118 = vcombine.high %v38, %v38
    %v120 = vunpack.c.l.s4 1983009808
    %v121 = vunpack.c.0.s8 %v120
    %v122 = vlaneseq
    %v123 = vshrl.u32 %v122, 7
    %v124 = vsub.s32 %v121, %v123
    %v125 = vrot.slane %v38, %v124
    %v127 = vunpack.c.l.s4 1983009808
    %v128 = vunpack.c.0.s8 %v127
    %v129 = vlaneseq
    %v130 = vshrl.u32 %v129, 7
    %v131 = vsub.s32 %v128, %v130
    %v132 = vrot.slane %v118, %v131
    %v133 = vcombine.high %v125, %v125
    %v134 = vcombine.high %v132, %v132
    %v135 = vcombine.high %v39, %v39
    %v137 = vunpack.c.l.s4 1983009808
    %v138 = vunpack.c.0.s8 %v137
    %v139 = vlaneseq
    %v140 = vshrl.u32 %v139, 7
    %v141 = vsub.s32 %v138, %v140
    %v142 = vrot.slane %v39, %v141
    %v144 = vunpack.c.l.s4 1983009808
    %v145 = vunpack.c.0.s8 %v144
    %v146 = vlaneseq
    %v147 = vshrl.u32 %v146, 7
    %v148 = vsub.s32 %v145, %v147
    %v149 = vrot.slane %v135, %v148
    %v150 = vcombine.high %v142, %v142
    %v151 = vcombine.high %v149, %v149
    %v152 = vcombine.high %v40, %v40
    %v154 = vunpack.c.l.s4 1983009808
    %v155 = vunpack.c.0.s8 %v154
    %v156 = vlaneseq
    %v157 = vshrl.u32 %v156, 7
    %v158 = vsub.s32 %v155, %v157
    %v159 = vrot.slane %v40, %v158
    %v161 = vunpack.c.l.s4 1983009808
    %v162 = vunpack.c.0.s8 %v161
    %v163 = vlaneseq
    %v164 = vshrl.u32 %v163, 7
    %v165 = vsub.s32 %v162, %v164
    %v166 = vrot.slane %v152, %v165
    %v167 = vcombine.high %v159, %v159
    %v168 = vcombine.high %v166, %v166
    %v169 = vcombine.high %v41, %v41
    %v171 = vunpack.c.l.s4 1983009808
    %v172 = vunpack.c.0.s8 %v171
    %v173 = vlaneseq
    %v174 = vshrl.u32 %v173, 7
    %v175 = vsub.s32 %v172, %v174
    %v176 = vrot.slane %v41, %v175
    %v178 = vunpack.c.l.s4 1983009808
    %v179 = vunpack.c.0.s8 %v178
    %v180 = vlaneseq
    %v181 = vshrl.u32 %v180, 7
    %v182 = vsub.s32 %v179, %v181
    %v183 = vrot.slane %v169, %v182
    %v184 = vcombine.high %v176, %v176
    %v185 = vcombine.high %v183, %v183
    %vm218 = vcmask 1041408
    %v219 = vsel %vm218, %v57, 0.0
    %v220 = vsel %vm218, %v91, 0.0
    %v221 = vadd.f32 %v219, %v220
    %v222 = vsel %vm218, %v125, 0.0
    %v223 = vadd.f32 %v221, %v222
    %v224 = vsel %vm218, %v159, 0.0
    %v225 = vadd.f32 %v223, %v224
    %v226 = vsel %vm218, %v65, 0.0
    %v227 = vsel %vm218, %v99, 0.0
    %v228 = vadd.f32 %v226, %v227
    %v229 = vsel %vm218, %v133, 0.0
    %v230 = vadd.f32 %v228, %v229
    %v231 = vsel %vm218, %v167, 0.0
    %v232 = vadd.f32 %v230, %v231
    %v233 = vsel %vm218, %v64, 0.0
    %v234 = vsel %vm218, %v98, 0.0
    %v235 = vadd.f32 %v233, %v234
    %v236 = vsel %vm218, %v132, 0.0
    %v237 = vadd.f32 %v235, %v236
    %v238 = vsel %vm218, %v166, 0.0
    %v239 = vadd.f32 %v237, %v238
    %v240 = vsel %vm218, %v66, 0.0
    %v241 = vsel %vm218, %v100, 0.0
    %v242 = vadd.f32 %v240, %v241
    %v243 = vsel %vm218, %v134, 0.0
    %v244 = vadd.f32 %v242, %v243
    %v245 = vsel %vm218, %v168, 0.0
    %v246 = vadd.f32 %v244, %v245
    %v247 = vsel %vm218, %v74, 0.0
    %v248 = vsel %vm218, %v108, 0.0
    %v249 = vadd.f32 %v247, %v248
    %v250 = vsel %vm218, %v142, 0.0
    %v251 = vadd.f32 %v249, %v250
    %v252 = vsel %vm218, %v176, 0.0
    %v253 = vadd.f32 %v251, %v252
    %v254 = vsel %vm218, %v82, 0.0
    %v255 = vsel %vm218, %v116, 0.0
    %v256 = vadd.f32 %v254, %v255
    %v257 = vsel %vm218, %v150, 0.0
    %v258 = vadd.f32 %v256, %v257
    %v259 = vsel %vm218, %v184, 0.0
    %v260 = vadd.f32 %v258, %v259
    %v261 = vsel %vm218, %v81, 0.0
    %v262 = vsel %vm218, %v115, 0.0
    %v263 = vadd.f32 %v261, %v262
    %v264 = vsel %vm218, %v149, 0.0
    %v265 = vadd.f32 %v263, %v264
    %v266 = vsel %vm218, %v183, 0.0
    %v267 = vadd.f32 %v265, %v266
    %v268 = vsel %vm218, %v83, 0.0
    %v269 = vsel %vm218, %v117, 0.0
    %v270 = vadd.f32 %v268, %v269
    %v271 = vsel %vm218, %v151, 0.0
    %v272 = vadd.f32 %v270, %v271
    %v273 = vsel %vm218, %v185, 0.0
    %v274 = vadd.f32 %v272, %v273
    %v275 = vld [vmem:[%s3] sm:$0xff]
    %v276 = vld [vmem:[%s4] sm:$0xff]
    %v277 = vmul.f32 %v225, 0.001953125
    %v278 = vmul.f32 %v232, 0.001953125
    %v279 = vmul.f32 %v239, 0.001953125
    %v280 = vmul.f32 %v246, 0.001953125
    %v281 = vmul.f32 %v253, 0.001953125
    %v282 = vmul.f32 %v260, 0.001953125
    %v283 = vmul.f32 %v267, 0.001953125
    %v284 = vmul.f32 %v274, 0.001953125
    %v285 = vmul.f32 %v277, %v277
    %v286 = vmul.f32 %v278, %v278
    %v287 = vmul.f32 %v279, %v279
    %v288 = vmul.f32 %v280, %v280
    %v289 = vmul.f32 %v281, %v281
    %v290 = vmul.f32 %v282, %v282
    %v291 = vmul.f32 %v283, %v283
    %v292 = vmul.f32 %v284, %v284
    %v301 = vrot.slane %v285, 7
    %v302 = vrot.slane %v286, 7
    %v303 = vrot.slane %v287, 7
    %v304 = vrot.slane %v288, 7
    %v305 = vrot.slane %v289, 7
    %v306 = vrot.slane %v290, 7
    %v307 = vrot.slane %v291, 7
    %v308 = vrot.slane %v292, 7
    %v317 = vsub.f32 %v277, %v301
    %v318 = vsub.f32 %v278, %v302
    %v319 = vsub.f32 %v279, %v303
    %v320 = vsub.f32 %v280, %v304
    %v321 = vsub.f32 %v281, %v305
    %v322 = vsub.f32 %v282, %v306
    %v323 = vsub.f32 %v283, %v307
    %v324 = vsub.f32 %v284, %v308
    %v325 = vmax.f32 %v317, 0.0
    %v326 = vmax.f32 %v318, 0.0
    %v327 = vmax.f32 %v319, 0.0
    %v328 = vmax.f32 %v320, 0.0
    %v329 = vmax.f32 %v321, 0.0
    %v330 = vmax.f32 %v322, 0.0
    %v331 = vmax.f32 %v323, 0.0
    %v332 = vmax.f32 %v324, 0.0
    %v333 = vadd.f32 %v325, 1e-05
    %v334 = vadd.f32 %v326, 1e-05
    %v335 = vadd.f32 %v327, 1e-05
    %v336 = vadd.f32 %v328, 1e-05
    %v337 = vadd.f32 %v329, 1e-05
    %v338 = vadd.f32 %v330, 1e-05
    %v339 = vadd.f32 %v331, 1e-05
    %v340 = vadd.f32 %v332, 1e-05
    %v341 = vrsqrt.pop %v333
    %v342 = vrsqrt.pop %v334
    %v343 = vrsqrt.pop %v335
    %v344 = vrsqrt.pop %v336
    %v345 = vrsqrt.pop %v337
    %v346 = vrsqrt.pop %v338
    %v347 = vrsqrt.pop %v339
    %v348 = vrsqrt.pop %v340
    %v357 = vcombine.low %v341, %v342
    %v358 = vcombine.low %v343, %v344
    %v359 = vcombine.low %v345, %v346
    %v360 = vcombine.low %v347, %v348
    %v362 = vunpack.c.l.s4 1966171168
    %v363 = vunpack.c.0.s8 %v362
    %v364 = vlaneseq
    %v365 = vshrl.u32 %v364, 7
    %v366 = vsub.s32 %v363, %v365
    %v367 = vrot.slane %v357, %v366
    %v369 = vunpack.c.l.s4 1966171168
    %v370 = vunpack.c.0.s8 %v369
    %v371 = vlaneseq
    %v372 = vshrl.u32 %v371, 7
    %v373 = vsub.s32 %v370, %v372
    %v374 = vrot.slane %v358, %v373
    %v376 = vunpack.c.l.s4 1966171168
    %v377 = vunpack.c.0.s8 %v376
    %v378 = vlaneseq
    %v379 = vshrl.u32 %v378, 7
    %v380 = vsub.s32 %v377, %v379
    %v381 = vrot.slane %v359, %v380
    %v383 = vunpack.c.l.s4 1966171168
    %v384 = vunpack.c.0.s8 %v383
    %v385 = vlaneseq
    %v386 = vshrl.u32 %v385, 7
    %v387 = vsub.s32 %v384, %v386
    %v388 = vrot.slane %v360, %v387
    %v389 = vcombine.high %v367, %v374
    %v390 = vcombine.high %v381, %v388
    %v392 = vunpack.c.l.s4 1966171168
    %v393 = vunpack.c.0.s8 %v392
    %v394 = vlaneseq
    %v395 = vshrl.u32 %v394, 7
    %v396 = vsub.s32 %v393, %v395
    %v397 = vrot.slane %v389, %v396
    %v399 = vunpack.c.l.s4 1966171168
    %v400 = vunpack.c.0.s8 %v399
    %v401 = vlaneseq
    %v402 = vshrl.u32 %v401, 7
    %v403 = vsub.s32 %v400, %v402
    %v404 = vrot.slane %v390, %v403
    %v405 = vcombine.low %v397, %v404
    %v407 = vmul.f32 %v275, %v405
    %v409 = vlaneseq
    %v410 = vshrl.u32 %v409, 7
    %v411 = vsub.s32 0, %v410
    %v412 = vrot.slane %v407, %v411
    %v413 = vlaneseq
    %v414 = vshrl.u32 %v413, 7
    %v415 = vsub.s32 1, %v414
    %v416 = vrot.slane %v407, %v415
    %v417 = vlaneseq
    %v418 = vshrl.u32 %v417, 7
    %v419 = vsub.s32 2, %v418
    %v420 = vrot.slane %v407, %v419
    %v421 = vlaneseq
    %v422 = vshrl.u32 %v421, 7
    %v423 = vsub.s32 3, %v422
    %v424 = vrot.slane %v407, %v423
    %v425 = vlaneseq
    %v426 = vshrl.u32 %v425, 7
    %v427 = vsub.s32 4, %v426
    %v428 = vrot.slane %v407, %v427
    %v429 = vlaneseq
    %v430 = vshrl.u32 %v429, 7
    %v431 = vsub.s32 5, %v430
    %v432 = vrot.slane %v407, %v431
    %v433 = vlaneseq
    %v434 = vshrl.u32 %v433, 7
    %v435 = vsub.s32 6, %v434
    %v436 = vrot.slane %v407, %v435
    %v437 = vlaneseq
    %v438 = vshrl.u32 %v437, 7
    %v439 = vsub.s32 7, %v438
    %v440 = vrot.slane %v407, %v439
    %v449 = vmul.f32 %v277, %v412
    %v450 = vmul.f32 %v278, %v416
    %v451 = vmul.f32 %v279, %v420
    %v452 = vmul.f32 %v280, %v424
    %v453 = vmul.f32 %v281, %v428
    %v454 = vmul.f32 %v282, %v432
    %v455 = vmul.f32 %v283, %v436
    %v456 = vmul.f32 %v284, %v440
    %v465 = vcombine.low %v449, %v450
    %v466 = vcombine.low %v451, %v452
    %v467 = vcombine.low %v453, %v454
    %v468 = vcombine.low %v455, %v456
    %v470 = vunpack.c.l.s4 1966171168
    %v471 = vunpack.c.0.s8 %v470
    %v472 = vlaneseq
    %v473 = vshrl.u32 %v472, 7
    %v474 = vsub.s32 %v471, %v473
    %v475 = vrot.slane %v465, %v474
    %v477 = vunpack.c.l.s4 1966171168
    %v478 = vunpack.c.0.s8 %v477
    %v479 = vlaneseq
    %v480 = vshrl.u32 %v479, 7
    %v481 = vsub.s32 %v478, %v480
    %v482 = vrot.slane %v466, %v481
    %v484 = vunpack.c.l.s4 1966171168
    %v485 = vunpack.c.0.s8 %v484
    %v486 = vlaneseq
    %v487 = vshrl.u32 %v486, 7
    %v488 = vsub.s32 %v485, %v487
    %v489 = vrot.slane %v467, %v488
    %v491 = vunpack.c.l.s4 1966171168
    %v492 = vunpack.c.0.s8 %v491
    %v493 = vlaneseq
    %v494 = vshrl.u32 %v493, 7
    %v495 = vsub.s32 %v492, %v494
    %v496 = vrot.slane %v468, %v495
    %v497 = vcombine.low %v475, %v482
    %v498 = vcombine.low %v489, %v496
    %v500 = vunpack.c.l.s4 1966171168
    %v501 = vunpack.c.0.s8 %v500
    %v502 = vlaneseq
    %v503 = vshrl.u32 %v502, 7
    %v504 = vsub.s32 %v501, %v503
    %v505 = vrot.slane %v497, %v504
    %v507 = vunpack.c.l.s4 1966171168
    %v508 = vunpack.c.0.s8 %v507
    %v509 = vlaneseq
    %v510 = vshrl.u32 %v509, 7
    %v511 = vsub.s32 %v508, %v510
    %v512 = vrot.slane %v498, %v511
    %v513 = vcombine.low %v505, %v512
    %v515 = vsub.f32 %v276, %v513
    %v516 = vld [vmem:[%s0] sm:$0xff]
    %v517 = vld [vmem:[%s0 + $0x8] sm:$0xff]
    %v518 = vld [vmem:[%s0 + $0x10] sm:$0xff]
    %v519 = vld [vmem:[%s0 + $0x18] sm:$0xff]
    %v520 = vld [vmem:[%s1] sm:$0xff]
    %v521 = vld [vmem:[%s1 + $0x8] sm:$0xff]
    %v522 = vld [vmem:[%s1 + $0x10] sm:$0xff]
    %v523 = vld [vmem:[%s1 + $0x18] sm:$0xff]
    %vm524 = vcmp.ge.f32.partialorder %v407, 0.0
    %v525 = vcombine.low %v412, %v416
    %v526 = vcombine.low %v420, %v424
    %v527 = vcombine.low %v428, %v432
    %v528 = vcombine.low %v436, %v440
    %v530 = vunpack.c.l.s4 1966171168
    %v531 = vunpack.c.0.s8 %v530
    %v532 = vlaneseq
    %v533 = vshrl.u32 %v532, 7
    %v534 = vsub.s32 %v531, %v533
    %v535 = vrot.slane %v525, %v534
    %v537 = vunpack.c.l.s4 1966171168
    %v538 = vunpack.c.0.s8 %v537
    %v539 = vlaneseq
    %v540 = vshrl.u32 %v539, 7
    %v541 = vsub.s32 %v538, %v540
    %v542 = vrot.slane %v526, %v541
    %v544 = vunpack.c.l.s4 1966171168
    %v545 = vunpack.c.0.s8 %v544
    %v546 = vlaneseq
    %v547 = vshrl.u32 %v546, 7
    %v548 = vsub.s32 %v545, %v547
    %v549 = vrot.slane %v527, %v548
    %v551 = vunpack.c.l.s4 1966171168
    %v552 = vunpack.c.0.s8 %v551
    %v553 = vlaneseq
    %v554 = vshrl.u32 %v553, 7
    %v555 = vsub.s32 %v552, %v554
    %v556 = vrot.slane %v528, %v555
    %v557 = vcombine.low %v535, %v542
    %v558 = vcombine.high %v535, %v542
    %v559 = vcombine.low %v549, %v556
    %v560 = vcombine.high %v549, %v556
    %v562 = vunpack.c.l.s4 1966171168
    %v563 = vunpack.c.0.s8 %v562
    %v564 = vlaneseq
    %v565 = vshrl.u32 %v564, 7
    %v566 = vsub.s32 %v563, %v565
    %v567 = vrot.slane %v557, %v566
    %v569 = vunpack.c.l.s4 1966171168
    %v570 = vunpack.c.0.s8 %v569
    %v571 = vlaneseq
    %v572 = vshrl.u32 %v571, 7
    %v573 = vsub.s32 %v570, %v572
    %v574 = vrot.slane %v558, %v573
    %v576 = vunpack.c.l.s4 1966171168
    %v577 = vunpack.c.0.s8 %v576
    %v578 = vlaneseq
    %v579 = vshrl.u32 %v578, 7
    %v580 = vsub.s32 %v577, %v579
    %v581 = vrot.slane %v559, %v580
    %v583 = vunpack.c.l.s4 1966171168
    %v584 = vunpack.c.0.s8 %v583
    %v585 = vlaneseq
    %v586 = vshrl.u32 %v585, 7
    %v587 = vsub.s32 %v584, %v586
    %v588 = vrot.slane %v560, %v587
    %v589 = vcombine.low %v567, %v581
    %v590 = vcombine.high %v567, %v581
    %v591 = vcombine.low %v574, %v588
    %v592 = vcombine.high %v574, %v588
    %v597 = vmul.f32 %v516, %v589
    %v598 = vmul.f32 %v517, %v591
    %v599 = vmul.f32 %v518, %v590
    %v600 = vmul.f32 %v519, %v592
    %v601 = vmul.f32 %v520, %v589
    %v602 = vmul.f32 %v521, %v591
    %v603 = vmul.f32 %v522, %v590
    %v604 = vmul.f32 %v523, %v592
    %v605 = vsel %vm524, 1, 0
    %v606 = vlaneseq
    %v607 = vshrl.u32 %v606, 7
    %v608 = vsub.s32 0, %v607
    %v609 = vrot.slane %v605, %v608
    %v610 = vlaneseq
    %v611 = vshrl.u32 %v610, 7
    %v612 = vsub.s32 1, %v611
    %v613 = vrot.slane %v605, %v612
    %v614 = vlaneseq
    %v615 = vshrl.u32 %v614, 7
    %v616 = vsub.s32 2, %v615
    %v617 = vrot.slane %v605, %v616
    %v618 = vlaneseq
    %v619 = vshrl.u32 %v618, 7
    %v620 = vsub.s32 3, %v619
    %v621 = vrot.slane %v605, %v620
    %v622 = vlaneseq
    %v623 = vshrl.u32 %v622, 7
    %v624 = vsub.s32 4, %v623
    %v625 = vrot.slane %v605, %v624
    %v626 = vlaneseq
    %v627 = vshrl.u32 %v626, 7
    %v628 = vsub.s32 5, %v627
    %v629 = vrot.slane %v605, %v628
    %v630 = vlaneseq
    %v631 = vshrl.u32 %v630, 7
    %v632 = vsub.s32 6, %v631
    %v633 = vrot.slane %v605, %v632
    %v634 = vlaneseq
    %v635 = vshrl.u32 %v634, 7
    %v636 = vsub.s32 7, %v635
    %v637 = vrot.slane %v605, %v636
    %vm638 = vcmp.eq.s32.totalorder %v609, 1
    %vm639 = vcmp.eq.s32.totalorder %v613, 1
    %vm640 = vcmp.eq.s32.totalorder %v617, 1
    %vm641 = vcmp.eq.s32.totalorder %v621, 1
    %vm642 = vcmp.eq.s32.totalorder %v625, 1
    %vm643 = vcmp.eq.s32.totalorder %v629, 1
    %vm644 = vcmp.eq.s32.totalorder %v633, 1
    %vm645 = vcmp.eq.s32.totalorder %v637, 1
    %v650 = vcombine.low %v597, %v598
    %v651 = vcombine.high %v597, %v598
    %v652 = vcombine.low %v599, %v600
    %v653 = vcombine.high %v599, %v600
    %v655 = vunpack.c.l.s4 1966171168
    %v656 = vunpack.c.0.s8 %v655
    %v657 = vlaneseq
    %v658 = vshrl.u32 %v657, 7
    %v659 = vsub.s32 %v656, %v658
    %v660 = vrot.slane %v650, %v659
    %v662 = vunpack.c.l.s4 1966171168
    %v663 = vunpack.c.0.s8 %v662
    %v664 = vlaneseq
    %v665 = vshrl.u32 %v664, 7
    %v666 = vsub.s32 %v663, %v665
    %v667 = vrot.slane %v651, %v666
    %v669 = vunpack.c.l.s4 1966171168
    %v670 = vunpack.c.0.s8 %v669
    %v671 = vlaneseq
    %v672 = vshrl.u32 %v671, 7
    %v673 = vsub.s32 %v670, %v672
    %v674 = vrot.slane %v652, %v673
    %v676 = vunpack.c.l.s4 1966171168
    %v677 = vunpack.c.0.s8 %v676
    %v678 = vlaneseq
    %v679 = vshrl.u32 %v678, 7
    %v680 = vsub.s32 %v677, %v679
    %v681 = vrot.slane %v653, %v680
    %v682 = vcombine.low %v660, %v674
    %v683 = vcombine.high %v660, %v674
    %v684 = vcombine.low %v667, %v681
    %v685 = vcombine.high %v667, %v681
    %v687 = vunpack.c.l.s4 1966171168
    %v688 = vunpack.c.0.s8 %v687
    %v689 = vlaneseq
    %v690 = vshrl.u32 %v689, 7
    %v691 = vsub.s32 %v688, %v690
    %v692 = vrot.slane %v682, %v691
    %v694 = vunpack.c.l.s4 1966171168
    %v695 = vunpack.c.0.s8 %v694
    %v696 = vlaneseq
    %v697 = vshrl.u32 %v696, 7
    %v698 = vsub.s32 %v695, %v697
    %v699 = vrot.slane %v684, %v698
    %v701 = vunpack.c.l.s4 1966171168
    %v702 = vunpack.c.0.s8 %v701
    %v703 = vlaneseq
    %v704 = vshrl.u32 %v703, 7
    %v705 = vsub.s32 %v702, %v704
    %v706 = vrot.slane %v683, %v705
    %v708 = vunpack.c.l.s4 1966171168
    %v709 = vunpack.c.0.s8 %v708
    %v710 = vlaneseq
    %v711 = vshrl.u32 %v710, 7
    %v712 = vsub.s32 %v709, %v711
    %v713 = vrot.slane %v685, %v712
    %v714 = vcombine.high %v692, %v692
    %v715 = vcombine.high %v699, %v699
    %v716 = vcombine.high %v706, %v706
    %v717 = vcombine.high %v713, %v713
    %v730 = vcombine.low %v601, %v602
    %v731 = vcombine.high %v601, %v602
    %v732 = vcombine.low %v603, %v604
    %v733 = vcombine.high %v603, %v604
    %v735 = vunpack.c.l.s4 1966171168
    %v736 = vunpack.c.0.s8 %v735
    %v737 = vlaneseq
    %v738 = vshrl.u32 %v737, 7
    %v739 = vsub.s32 %v736, %v738
    %v740 = vrot.slane %v730, %v739
    %v742 = vunpack.c.l.s4 1966171168
    %v743 = vunpack.c.0.s8 %v742
    %v744 = vlaneseq
    %v745 = vshrl.u32 %v744, 7
    %v746 = vsub.s32 %v743, %v745
    %v747 = vrot.slane %v731, %v746
    %v749 = vunpack.c.l.s4 1966171168
    %v750 = vunpack.c.0.s8 %v749
    %v751 = vlaneseq
    %v752 = vshrl.u32 %v751, 7
    %v753 = vsub.s32 %v750, %v752
    %v754 = vrot.slane %v732, %v753
    %v756 = vunpack.c.l.s4 1966171168
    %v757 = vunpack.c.0.s8 %v756
    %v758 = vlaneseq
    %v759 = vshrl.u32 %v758, 7
    %v760 = vsub.s32 %v757, %v759
    %v761 = vrot.slane %v733, %v760
    %v762 = vcombine.low %v740, %v754
    %v763 = vcombine.high %v740, %v754
    %v764 = vcombine.low %v747, %v761
    %v765 = vcombine.high %v747, %v761
    %v767 = vunpack.c.l.s4 1966171168
    %v768 = vunpack.c.0.s8 %v767
    %v769 = vlaneseq
    %v770 = vshrl.u32 %v769, 7
    %v771 = vsub.s32 %v768, %v770
    %v772 = vrot.slane %v762, %v771
    %v774 = vunpack.c.l.s4 1966171168
    %v775 = vunpack.c.0.s8 %v774
    %v776 = vlaneseq
    %v777 = vshrl.u32 %v776, 7
    %v778 = vsub.s32 %v775, %v777
    %v779 = vrot.slane %v764, %v778
    %v781 = vunpack.c.l.s4 1966171168
    %v782 = vunpack.c.0.s8 %v781
    %v783 = vlaneseq
    %v784 = vshrl.u32 %v783, 7
    %v785 = vsub.s32 %v782, %v784
    %v786 = vrot.slane %v763, %v785
    %v788 = vunpack.c.l.s4 1966171168
    %v789 = vunpack.c.0.s8 %v788
    %v790 = vlaneseq
    %v791 = vshrl.u32 %v790, 7
    %v792 = vsub.s32 %v789, %v791
    %v793 = vrot.slane %v765, %v792
    %v794 = vcombine.high %v772, %v772
    %v795 = vcombine.high %v779, %v779
    %v796 = vcombine.high %v786, %v786
    %v797 = vcombine.high %v793, %v793
    %v806 = vsel %vm638, %v692, %v772
    %v807 = vsel %vm639, %v706, %v786
    %v808 = vsel %vm640, %v714, %v794
    %v809 = vsel %vm641, %v716, %v796
    %v810 = vsel %vm642, %v699, %v779
    %v811 = vsel %vm643, %v713, %v793
    %v812 = vsel %vm644, %v715, %v795
    %v813 = vsel %vm645, %v717, %v797
    %v815 = vlaneseq
    %v816 = vshrl.u32 %v815, 7
    %v817 = vsub.s32 0, %v816
    %v818 = vrot.slane %v515, %v817
    %v819 = vlaneseq
    %v820 = vshrl.u32 %v819, 7
    %v821 = vsub.s32 1, %v820
    %v822 = vrot.slane %v515, %v821
    %v823 = vlaneseq
    %v824 = vshrl.u32 %v823, 7
    %v825 = vsub.s32 2, %v824
    %v826 = vrot.slane %v515, %v825
    %v827 = vlaneseq
    %v828 = vshrl.u32 %v827, 7
    %v829 = vsub.s32 3, %v828
    %v830 = vrot.slane %v515, %v829
    %v831 = vlaneseq
    %v832 = vshrl.u32 %v831, 7
    %v833 = vsub.s32 4, %v832
    %v834 = vrot.slane %v515, %v833
    %v835 = vlaneseq
    %v836 = vshrl.u32 %v835, 7
    %v837 = vsub.s32 5, %v836
    %v838 = vrot.slane %v515, %v837
    %v839 = vlaneseq
    %v840 = vshrl.u32 %v839, 7
    %v841 = vsub.s32 6, %v840
    %v842 = vrot.slane %v515, %v841
    %v843 = vlaneseq
    %v844 = vshrl.u32 %v843, 7
    %v845 = vsub.s32 7, %v844
    %v846 = vrot.slane %v515, %v845
    %v855 = vadd.f32 %v806, %v818
    %v856 = vadd.f32 %v807, %v822
    %v857 = vadd.f32 %v808, %v826
    %v858 = vadd.f32 %v809, %v830
    %v859 = vadd.f32 %v810, %v834
    %v860 = vadd.f32 %v811, %v838
    %v861 = vadd.f32 %v812, %v842
    %v862 = vadd.f32 %v813, %v846
    %v863 = vmax.f32 %v855, 0.0
    %v864 = vmax.f32 %v856, 0.0
    %v865 = vmax.f32 %v857, 0.0
    %v866 = vmax.f32 %v858, 0.0
    %v867 = vmax.f32 %v859, 0.0
    %v868 = vmax.f32 %v860, 0.0
    %v869 = vmax.f32 %v861, 0.0
    %v870 = vmax.f32 %v862, 0.0
    %v871 = vpack.c.bf16 %v863, %v863
    %v872 = vpack.c.bf16 %v864, %v864
    %v873 = vpack.c.bf16 %v865, %v865
    %v874 = vpack.c.bf16 %v866, %v866
    %v875 = vpack.c.bf16 %v867, %v867
    %v876 = vpack.c.bf16 %v868, %v868
    %v877 = vpack.c.bf16 %v869, %v869
    %v878 = vpack.c.bf16 %v870, %v870
    %v879 = vld [vmem:[%s5] sm:$0xf]
    %v880 = vld [vmem:[%s5 + $0x4] sm:$0xf]
    %v881 = vld [vmem:[%s5 + $0x8] sm:$0xf]
    %v882 = vld [vmem:[%s5 + $0xc] sm:$0xf]
    %v883 = vld [vmem:[%s5 + $0x10] sm:$0xf]
    %v884 = vld [vmem:[%s5 + $0x14] sm:$0xf]
    %v885 = vld [vmem:[%s5 + $0x18] sm:$0xf]
    %v886 = vld [vmem:[%s5 + $0x1c] sm:$0xf]
    %v887 = vld [vmem:[%s5 + $0x20] sm:$0xf]
    %v888 = vld [vmem:[%s5 + $0x24] sm:$0xf]
    %v889 = vld [vmem:[%s5 + $0x28] sm:$0xf]
    %v890 = vld [vmem:[%s5 + $0x2c] sm:$0xf]
    %v891 = vld [vmem:[%s5 + $0x30] sm:$0xf]
    %v892 = vld [vmem:[%s5 + $0x34] sm:$0xf]
    %v893 = vld [vmem:[%s5 + $0x38] sm:$0xf]
    %v894 = vld [vmem:[%s5 + $0x3c] sm:$0xf]
    %v895 = vld [vmem:[%s5 + $0x40] sm:$0xf]
    %v896 = vld [vmem:[%s5 + $0x44] sm:$0xf]
    %v897 = vld [vmem:[%s5 + $0x48] sm:$0xf]
    %v898 = vld [vmem:[%s5 + $0x4c] sm:$0xf]
    %v899 = vld [vmem:[%s5 + $0x50] sm:$0xf]
    %v900 = vld [vmem:[%s5 + $0x54] sm:$0xf]
    %v901 = vld [vmem:[%s5 + $0x58] sm:$0xf]
    %v902 = vld [vmem:[%s5 + $0x5c] sm:$0xf]
    %v903 = vld [vmem:[%s5 + $0x60] sm:$0xf]
    %v904 = vld [vmem:[%s5 + $0x64] sm:$0xf]
    %v905 = vld [vmem:[%s5 + $0x68] sm:$0xf]
    %v906 = vld [vmem:[%s5 + $0x6c] sm:$0xf]
    %v907 = vld [vmem:[%s5 + $0x70] sm:$0xf]
    %v908 = vld [vmem:[%s5 + $0x74] sm:$0xf]
    %v909 = vld [vmem:[%s5 + $0x78] sm:$0xf]
    %v910 = vld [vmem:[%s5 + $0x7c] sm:$0xf]
    %v911 = vld [vmem:[%s5 + $0x80] sm:$0xf]
    %v912 = vld [vmem:[%s5 + $0x84] sm:$0xf]
    %v913 = vld [vmem:[%s5 + $0x88] sm:$0xf]
    %v914 = vld [vmem:[%s5 + $0x8c] sm:$0xf]
    %v915 = vld [vmem:[%s5 + $0x90] sm:$0xf]
    %v916 = vld [vmem:[%s5 + $0x94] sm:$0xf]
    %v917 = vld [vmem:[%s5 + $0x98] sm:$0xf]
    %v918 = vld [vmem:[%s5 + $0x9c] sm:$0xf]
    %v919 = vld [vmem:[%s5 + $0xa0] sm:$0xf]
    %v920 = vld [vmem:[%s5 + $0xa4] sm:$0xf]
    %v921 = vld [vmem:[%s5 + $0xa8] sm:$0xf]
    %v922 = vld [vmem:[%s5 + $0xac] sm:$0xf]
    %v923 = vld [vmem:[%s5 + $0xb0] sm:$0xf]
    %v924 = vld [vmem:[%s5 + $0xb4] sm:$0xf]
    %v925 = vld [vmem:[%s5 + $0xb8] sm:$0xf]
    %v926 = vld [vmem:[%s5 + $0xbc] sm:$0xf]
    %v927 = vld [vmem:[%s5 + $0xc0] sm:$0xf]
    %v928 = vld [vmem:[%s5 + $0xc4] sm:$0xf]
    %v929 = vld [vmem:[%s5 + $0xc8] sm:$0xf]
    %v930 = vld [vmem:[%s5 + $0xcc] sm:$0xf]
    %v931 = vld [vmem:[%s5 + $0xd0] sm:$0xf]
    %v932 = vld [vmem:[%s5 + $0xd4] sm:$0xf]
    %v933 = vld [vmem:[%s5 + $0xd8] sm:$0xf]
    %v934 = vld [vmem:[%s5 + $0xdc] sm:$0xf]
    %v935 = vld [vmem:[%s5 + $0xe0] sm:$0xf]
    %v936 = vld [vmem:[%s5 + $0xe4] sm:$0xf]
    %v937 = vld [vmem:[%s5 + $0xe8] sm:$0xf]
    %v938 = vld [vmem:[%s5 + $0xec] sm:$0xf]
    %v939 = vld [vmem:[%s5 + $0xf0] sm:$0xf]
    %v940 = vld [vmem:[%s5 + $0xf4] sm:$0xf]
    %v941 = vld [vmem:[%s5 + $0xf8] sm:$0xf]
    %v942 = vld [vmem:[%s5 + $0xfc] sm:$0xf]
    %v943 = vld [vmem:[%s5 + $0x100] sm:$0xf]
    %v944 = vld [vmem:[%s5 + $0x104] sm:$0xf]
    %v945 = vld [vmem:[%s5 + $0x108] sm:$0xf]
    %v946 = vld [vmem:[%s5 + $0x10c] sm:$0xf]
    %v947 = vld [vmem:[%s5 + $0x110] sm:$0xf]
    %v948 = vld [vmem:[%s5 + $0x114] sm:$0xf]
    %v949 = vld [vmem:[%s5 + $0x118] sm:$0xf]
    %v950 = vld [vmem:[%s5 + $0x11c] sm:$0xf]
    %v951 = vld [vmem:[%s5 + $0x120] sm:$0xf]
    %v952 = vld [vmem:[%s5 + $0x124] sm:$0xf]
    %v953 = vld [vmem:[%s5 + $0x128] sm:$0xf]
    %v954 = vld [vmem:[%s5 + $0x12c] sm:$0xf]
    %v955 = vld [vmem:[%s5 + $0x130] sm:$0xf]
    %v956 = vld [vmem:[%s5 + $0x134] sm:$0xf]
    %v957 = vld [vmem:[%s5 + $0x138] sm:$0xf]
    %v958 = vld [vmem:[%s5 + $0x13c] sm:$0xf]
    %v959 = vld [vmem:[%s5 + $0x140] sm:$0xf]
    %v960 = vld [vmem:[%s5 + $0x144] sm:$0xf]
    %v961 = vld [vmem:[%s5 + $0x148] sm:$0xf]
    %v962 = vld [vmem:[%s5 + $0x14c] sm:$0xf]
    %v963 = vld [vmem:[%s5 + $0x150] sm:$0xf]
    %v964 = vld [vmem:[%s5 + $0x154] sm:$0xf]
    %v965 = vld [vmem:[%s5 + $0x158] sm:$0xf]
    %v966 = vld [vmem:[%s5 + $0x15c] sm:$0xf]
    %v967 = vld [vmem:[%s5 + $0x160] sm:$0xf]
    %v968 = vld [vmem:[%s5 + $0x164] sm:$0xf]
    %v969 = vld [vmem:[%s5 + $0x168] sm:$0xf]
    %v970 = vld [vmem:[%s5 + $0x16c] sm:$0xf]
    %v971 = vld [vmem:[%s5 + $0x170] sm:$0xf]
    %v972 = vld [vmem:[%s5 + $0x174] sm:$0xf]
    %v973 = vld [vmem:[%s5 + $0x178] sm:$0xf]
    %v974 = vld [vmem:[%s5 + $0x17c] sm:$0xf]
    %v975 = vld [vmem:[%s5 + $0x180] sm:$0xf]
    %v976 = vld [vmem:[%s5 + $0x184] sm:$0xf]
    %v977 = vld [vmem:[%s5 + $0x188] sm:$0xf]
    %v978 = vld [vmem:[%s5 + $0x18c] sm:$0xf]
    %v979 = vld [vmem:[%s5 + $0x190] sm:$0xf]
    %v980 = vld [vmem:[%s5 + $0x194] sm:$0xf]
    %v981 = vld [vmem:[%s5 + $0x198] sm:$0xf]
    %v982 = vld [vmem:[%s5 + $0x19c] sm:$0xf]
    %v983 = vld [vmem:[%s5 + $0x1a0] sm:$0xf]
    %v984 = vld [vmem:[%s5 + $0x1a4] sm:$0xf]
    %v985 = vld [vmem:[%s5 + $0x1a8] sm:$0xf]
    %v986 = vld [vmem:[%s5 + $0x1ac] sm:$0xf]
    %v987 = vld [vmem:[%s5 + $0x1b0] sm:$0xf]
    %v988 = vld [vmem:[%s5 + $0x1b4] sm:$0xf]
    %v989 = vld [vmem:[%s5 + $0x1b8] sm:$0xf]
    %v990 = vld [vmem:[%s5 + $0x1bc] sm:$0xf]
    %v991 = vld [vmem:[%s5 + $0x1c0] sm:$0xf]
    %v992 = vld [vmem:[%s5 + $0x1c4] sm:$0xf]
    %v993 = vld [vmem:[%s5 + $0x1c8] sm:$0xf]
    %v994 = vld [vmem:[%s5 + $0x1cc] sm:$0xf]
    %v995 = vld [vmem:[%s5 + $0x1d0] sm:$0xf]
    %v996 = vld [vmem:[%s5 + $0x1d4] sm:$0xf]
    %v997 = vld [vmem:[%s5 + $0x1d8] sm:$0xf]
    %v998 = vld [vmem:[%s5 + $0x1dc] sm:$0xf]
    %v999 = vld [vmem:[%s5 + $0x1e0] sm:$0xf]
    %v1000 = vld [vmem:[%s5 + $0x1e4] sm:$0xf]
    %v1001 = vld [vmem:[%s5 + $0x1e8] sm:$0xf]
    %v1002 = vld [vmem:[%s5 + $0x1ec] sm:$0xf]
    %v1003 = vld [vmem:[%s5 + $0x1f0] sm:$0xf]
    %v1004 = vld [vmem:[%s5 + $0x1f4] sm:$0xf]
    %v1005 = vld [vmem:[%s5 + $0x1f8] sm:$0xf]
    %v1006 = vld [vmem:[%s5 + $0x1fc] sm:$0xf]
    %v1007 = vld [vmem:[%s6] sm:$0x1]
    %v1009 = vlaneseq
    %v1010 = vshrl.u32 %v1009, 7
    %v1011 = vsub.s32 0, %v1010
    %v1012 = vrot.slane %v1007, %v1011
    %v1142 = vunpack.c.l.b16 %v879
    %v1143 = vunpack.c.l.b16 %v880
    %v1144 = vunpack.c.l.b16 %v881
    %v1145 = vunpack.c.l.b16 %v882
    %v1146 = vunpack.c.l.b16 %v883
    %v1147 = vunpack.c.l.b16 %v884
    %v1148 = vunpack.c.l.b16 %v885
    %v1149 = vunpack.c.l.b16 %v886
    %v1150 = vunpack.c.l.b16 %v887
    %v1151 = vunpack.c.l.b16 %v888
    %v1152 = vunpack.c.l.b16 %v889
    %v1153 = vunpack.c.l.b16 %v890
    %v1154 = vunpack.c.l.b16 %v891
    %v1155 = vunpack.c.l.b16 %v892
    %v1156 = vunpack.c.l.b16 %v893
    %v1157 = vunpack.c.l.b16 %v894
    %v1158 = vunpack.c.l.b16 %v895
    %v1159 = vunpack.c.l.b16 %v896
    %v1160 = vunpack.c.l.b16 %v897
    %v1161 = vunpack.c.l.b16 %v898
    %v1162 = vunpack.c.l.b16 %v899
    %v1163 = vunpack.c.l.b16 %v900
    %v1164 = vunpack.c.l.b16 %v901
    %v1165 = vunpack.c.l.b16 %v902
    %v1166 = vunpack.c.l.b16 %v903
    %v1167 = vunpack.c.l.b16 %v904
    %v1168 = vunpack.c.l.b16 %v905
    %v1169 = vunpack.c.l.b16 %v906
    %v1170 = vunpack.c.l.b16 %v907
    %v1171 = vunpack.c.l.b16 %v908
    %v1172 = vunpack.c.l.b16 %v909
    %v1173 = vunpack.c.l.b16 %v910
    %v1174 = vunpack.c.l.b16 %v911
    %v1175 = vunpack.c.l.b16 %v912
    %v1176 = vunpack.c.l.b16 %v913
    %v1177 = vunpack.c.l.b16 %v914
    %v1178 = vunpack.c.l.b16 %v915
    %v1179 = vunpack.c.l.b16 %v916
    %v1180 = vunpack.c.l.b16 %v917
    %v1181 = vunpack.c.l.b16 %v918
    %v1182 = vunpack.c.l.b16 %v919
    %v1183 = vunpack.c.l.b16 %v920
    %v1184 = vunpack.c.l.b16 %v921
    %v1185 = vunpack.c.l.b16 %v922
    %v1186 = vunpack.c.l.b16 %v923
    %v1187 = vunpack.c.l.b16 %v924
    %v1188 = vunpack.c.l.b16 %v925
    %v1189 = vunpack.c.l.b16 %v926
    %v1190 = vunpack.c.l.b16 %v927
    %v1191 = vunpack.c.l.b16 %v928
    %v1192 = vunpack.c.l.b16 %v929
    %v1193 = vunpack.c.l.b16 %v930
    %v1194 = vunpack.c.l.b16 %v931
    %v1195 = vunpack.c.l.b16 %v932
    %v1196 = vunpack.c.l.b16 %v933
    %v1197 = vunpack.c.l.b16 %v934
    %v1198 = vunpack.c.l.b16 %v935
    %v1199 = vunpack.c.l.b16 %v936
    %v1200 = vunpack.c.l.b16 %v937
    %v1201 = vunpack.c.l.b16 %v938
    %v1202 = vunpack.c.l.b16 %v939
    %v1203 = vunpack.c.l.b16 %v940
    %v1204 = vunpack.c.l.b16 %v941
    %v1205 = vunpack.c.l.b16 %v942
    %v1206 = vunpack.c.l.b16 %v943
    %v1207 = vunpack.c.l.b16 %v944
    %v1208 = vunpack.c.l.b16 %v945
    %v1209 = vunpack.c.l.b16 %v946
    %v1210 = vunpack.c.l.b16 %v947
    %v1211 = vunpack.c.l.b16 %v948
    %v1212 = vunpack.c.l.b16 %v949
    %v1213 = vunpack.c.l.b16 %v950
    %v1214 = vunpack.c.l.b16 %v951
    %v1215 = vunpack.c.l.b16 %v952
    %v1216 = vunpack.c.l.b16 %v953
    %v1217 = vunpack.c.l.b16 %v954
    %v1218 = vunpack.c.l.b16 %v955
    %v1219 = vunpack.c.l.b16 %v956
    %v1220 = vunpack.c.l.b16 %v957
    %v1221 = vunpack.c.l.b16 %v958
    %v1222 = vunpack.c.l.b16 %v959
    %v1223 = vunpack.c.l.b16 %v960
    %v1224 = vunpack.c.l.b16 %v961
    %v1225 = vunpack.c.l.b16 %v962
    %v1226 = vunpack.c.l.b16 %v963
    %v1227 = vunpack.c.l.b16 %v964
    %v1228 = vunpack.c.l.b16 %v965
    %v1229 = vunpack.c.l.b16 %v966
    %v1230 = vunpack.c.l.b16 %v967
    %v1231 = vunpack.c.l.b16 %v968
    %v1232 = vunpack.c.l.b16 %v969
    %v1233 = vunpack.c.l.b16 %v970
    %v1234 = vunpack.c.l.b16 %v971
    %v1235 = vunpack.c.l.b16 %v972
    %v1236 = vunpack.c.l.b16 %v973
    %v1237 = vunpack.c.l.b16 %v974
    %v1238 = vunpack.c.l.b16 %v975
    %v1239 = vunpack.c.l.b16 %v976
    %v1240 = vunpack.c.l.b16 %v977
    %v1241 = vunpack.c.l.b16 %v978
    %v1242 = vunpack.c.l.b16 %v979
    %v1243 = vunpack.c.l.b16 %v980
    %v1244 = vunpack.c.l.b16 %v981
    %v1245 = vunpack.c.l.b16 %v982
    %v1246 = vunpack.c.l.b16 %v983
    %v1247 = vunpack.c.l.b16 %v984
    %v1248 = vunpack.c.l.b16 %v985
    %v1249 = vunpack.c.l.b16 %v986
    %v1250 = vunpack.c.l.b16 %v987
    %v1251 = vunpack.c.l.b16 %v988
    %v1252 = vunpack.c.l.b16 %v989
    %v1253 = vunpack.c.l.b16 %v990
    %v1254 = vunpack.c.l.b16 %v991
    %v1255 = vunpack.c.l.b16 %v992
    %v1256 = vunpack.c.l.b16 %v993
    %v1257 = vunpack.c.l.b16 %v994
    %v1258 = vunpack.c.l.b16 %v995
    %v1259 = vunpack.c.l.b16 %v996
    %v1260 = vunpack.c.l.b16 %v997
    %v1261 = vunpack.c.l.b16 %v998
    %v1262 = vunpack.c.l.b16 %v999
    %v1263 = vunpack.c.l.b16 %v1000
    %v1264 = vunpack.c.l.b16 %v1001
    %v1265 = vunpack.c.l.b16 %v1002
    %v1266 = vunpack.c.l.b16 %v1003
    %v1267 = vunpack.c.l.b16 %v1004
    %v1268 = vunpack.c.l.b16 %v1005
    %v1269 = vunpack.c.l.b16 %v1006
    %v1270 = vpack.c.b16 %v1143, %v1142
    %v1271 = vpack.c.b16 %v1145, %v1144
    %v1272 = vpack.c.b16 %v1147, %v1146
    %v1273 = vpack.c.b16 %v1149, %v1148
    %v1274 = vpack.c.b16 %v1151, %v1150
    %v1275 = vpack.c.b16 %v1153, %v1152
    %v1276 = vpack.c.b16 %v1155, %v1154
    %v1277 = vpack.c.b16 %v1157, %v1156
    %v1278 = vpack.c.b16 %v1159, %v1158
    %v1279 = vpack.c.b16 %v1161, %v1160
    %v1280 = vpack.c.b16 %v1163, %v1162
    %v1281 = vpack.c.b16 %v1165, %v1164
    %v1282 = vpack.c.b16 %v1167, %v1166
    %v1283 = vpack.c.b16 %v1169, %v1168
    %v1284 = vpack.c.b16 %v1171, %v1170
    %v1285 = vpack.c.b16 %v1173, %v1172
    %v1286 = vpack.c.b16 %v1175, %v1174
    %v1287 = vpack.c.b16 %v1177, %v1176
    %v1288 = vpack.c.b16 %v1179, %v1178
    %v1289 = vpack.c.b16 %v1181, %v1180
    %v1290 = vpack.c.b16 %v1183, %v1182
    %v1291 = vpack.c.b16 %v1185, %v1184
    %v1292 = vpack.c.b16 %v1187, %v1186
    %v1293 = vpack.c.b16 %v1189, %v1188
    %v1294 = vpack.c.b16 %v1191, %v1190
    %v1295 = vpack.c.b16 %v1193, %v1192
    %v1296 = vpack.c.b16 %v1195, %v1194
    %v1297 = vpack.c.b16 %v1197, %v1196
    %v1298 = vpack.c.b16 %v1199, %v1198
    %v1299 = vpack.c.b16 %v1201, %v1200
    %v1300 = vpack.c.b16 %v1203, %v1202
    %v1301 = vpack.c.b16 %v1205, %v1204
    %v1302 = vpack.c.b16 %v1207, %v1206
    %v1303 = vpack.c.b16 %v1209, %v1208
    %v1304 = vpack.c.b16 %v1211, %v1210
    %v1305 = vpack.c.b16 %v1213, %v1212
    %v1306 = vpack.c.b16 %v1215, %v1214
    %v1307 = vpack.c.b16 %v1217, %v1216
    %v1308 = vpack.c.b16 %v1219, %v1218
    %v1309 = vpack.c.b16 %v1221, %v1220
    %v1310 = vpack.c.b16 %v1223, %v1222
    %v1311 = vpack.c.b16 %v1225, %v1224
    %v1312 = vpack.c.b16 %v1227, %v1226
    %v1313 = vpack.c.b16 %v1229, %v1228
    %v1314 = vpack.c.b16 %v1231, %v1230
    %v1315 = vpack.c.b16 %v1233, %v1232
    %v1316 = vpack.c.b16 %v1235, %v1234
    %v1317 = vpack.c.b16 %v1237, %v1236
    %v1318 = vpack.c.b16 %v1239, %v1238
    %v1319 = vpack.c.b16 %v1241, %v1240
    %v1320 = vpack.c.b16 %v1243, %v1242
    %v1321 = vpack.c.b16 %v1245, %v1244
    %v1322 = vpack.c.b16 %v1247, %v1246
    %v1323 = vpack.c.b16 %v1249, %v1248
    %v1324 = vpack.c.b16 %v1251, %v1250
    %v1325 = vpack.c.b16 %v1253, %v1252
    %v1326 = vpack.c.b16 %v1255, %v1254
    %v1327 = vpack.c.b16 %v1257, %v1256
    %v1328 = vpack.c.b16 %v1259, %v1258
    %v1329 = vpack.c.b16 %v1261, %v1260
    %v1330 = vpack.c.b16 %v1263, %v1262
    %v1331 = vpack.c.b16 %v1265, %v1264
    %v1332 = vpack.c.b16 %v1267, %v1266
    %v1333 = vpack.c.b16 %v1269, %v1268
    %1398 = vmatprep.subr.bf16.mxu0 0
    %1399 = vmatpush1.bf16.msra.mxu0 %v1270
    %1400 = vmatprep.subr.bf16.mxu0 0
    %1401 = vmatpush1.bf16.msra.mxu0 %v1271
    %1402 = vmatprep.subr.bf16.mxu0 0
    %1403 = vmatpush1.bf16.msra.mxu0 %v1272
    %1404 = vmatprep.subr.bf16.mxu0 0
    %1405 = vmatpush1.bf16.msra.mxu0 %v1273
    %1406 = vmatprep.subr.bf16.mxu0 0
    %1407 = vmatpush1.bf16.msra.mxu0 %v1274
    %1408 = vmatprep.subr.bf16.mxu0 0
    %1409 = vmatpush1.bf16.msra.mxu0 %v1275
    %1410 = vmatprep.subr.bf16.mxu0 0
    %1411 = vmatpush1.bf16.msra.mxu0 %v1276
    %1412 = vmatprep.subr.bf16.mxu0 0
    %1413 = vmatpush1.bf16.msra.mxu0 %v1277
    %1414 = vmatprep.subr.bf16.mxu0 0
    %1415 = vmatpush1.bf16.msra.mxu0 %v1278
    %1416 = vmatprep.subr.bf16.mxu0 0
    %1417 = vmatpush1.bf16.msra.mxu0 %v1279
    %1418 = vmatprep.subr.bf16.mxu0 0
    %1419 = vmatpush1.bf16.msra.mxu0 %v1280
    %1420 = vmatprep.subr.bf16.mxu0 0
    %1421 = vmatpush1.bf16.msra.mxu0 %v1281
    %1422 = vmatprep.subr.bf16.mxu0 0
    %1423 = vmatpush1.bf16.msra.mxu0 %v1282
    %1424 = vmatprep.subr.bf16.mxu0 0
    %1425 = vmatpush1.bf16.msra.mxu0 %v1283
    %1426 = vmatprep.subr.bf16.mxu0 0
    %1427 = vmatpush1.bf16.msra.mxu0 %v1284
    %1428 = vmatprep.subr.bf16.mxu0 0
    %1429 = vmatpush1.bf16.msra.mxu0 %v1285
    %1430 = vmatprep.mubr.bf16.mxu0 %v872
    %1431 = vmatmul.mubr.bf16.gmra.mrb[0].mxu0 %v871
    %v1432 = vpop.f32.mrb[0].mxu0
    %v1433 = vadd.f32 %v1012, %v1432
    %v1434 = vpop.f32.mrb[0].mxu0
    %v1435 = vpop.f32.mrb[0].mxu0
    %v1436 = vpop.f32.mrb[0].mxu0
    %1437 = vdwg.mxu0
    %1438 = vmatprep.subr.bf16.mxu0 0
    %1439 = vmatpush1.bf16.msra.mxu0 %v1286
    %1440 = vmatprep.subr.bf16.mxu0 0
    %1441 = vmatpush1.bf16.msra.mxu0 %v1287
    %1442 = vmatprep.subr.bf16.mxu0 0
    %1443 = vmatpush1.bf16.msra.mxu0 %v1288
    %1444 = vmatprep.subr.bf16.mxu0 0
    %1445 = vmatpush1.bf16.msra.mxu0 %v1289
    %1446 = vmatprep.subr.bf16.mxu0 0
    %1447 = vmatpush1.bf16.msra.mxu0 %v1290
    %1448 = vmatprep.subr.bf16.mxu0 0
    %1449 = vmatpush1.bf16.msra.mxu0 %v1291
    %1450 = vmatprep.subr.bf16.mxu0 0
    %1451 = vmatpush1.bf16.msra.mxu0 %v1292
    %1452 = vmatprep.subr.bf16.mxu0 0
    %1453 = vmatpush1.bf16.msra.mxu0 %v1293
    %1454 = vmatprep.subr.bf16.mxu0 0
    %1455 = vmatpush1.bf16.msra.mxu0 %v1294
    %1456 = vmatprep.subr.bf16.mxu0 0
    %1457 = vmatpush1.bf16.msra.mxu0 %v1295
    %1458 = vmatprep.subr.bf16.mxu0 0
    %1459 = vmatpush1.bf16.msra.mxu0 %v1296
    %1460 = vmatprep.subr.bf16.mxu0 0
    %1461 = vmatpush1.bf16.msra.mxu0 %v1297
    %1462 = vmatprep.subr.bf16.mxu0 0
    %1463 = vmatpush1.bf16.msra.mxu0 %v1298
    %1464 = vmatprep.subr.bf16.mxu0 0
    %1465 = vmatpush1.bf16.msra.mxu0 %v1299
    %1466 = vmatprep.subr.bf16.mxu0 0
    %1467 = vmatpush1.bf16.msra.mxu0 %v1300
    %1468 = vmatprep.subr.bf16.mxu0 0
    %1469 = vmatpush1.bf16.msra.mxu0 %v1301
    %1470 = vmatprep.mubr.bf16.mxu0 %v874
    %1471 = vmatmul.mubr.bf16.gmra.mrb[0].mxu0 %v873
    %v1472 = vpop.f32.mrb[0].mxu0
    %v1473 = vadd.f32 %v1433, %v1472
    %v1474 = vpop.f32.mrb[0].mxu0
    %v1475 = vpop.f32.mrb[0].mxu0
    %v1476 = vpop.f32.mrb[0].mxu0
    %1477 = vdwg.mxu0
    %1478 = vmatprep.subr.bf16.mxu0 0
    %1479 = vmatpush1.bf16.msra.mxu0 %v1302
    %1480 = vmatprep.subr.bf16.mxu0 0
    %1481 = vmatpush1.bf16.msra.mxu0 %v1303
    %1482 = vmatprep.subr.bf16.mxu0 0
    %1483 = vmatpush1.bf16.msra.mxu0 %v1304
    %1484 = vmatprep.subr.bf16.mxu0 0
    %1485 = vmatpush1.bf16.msra.mxu0 %v1305
    %1486 = vmatprep.subr.bf16.mxu0 0
    %1487 = vmatpush1.bf16.msra.mxu0 %v1306
    %1488 = vmatprep.subr.bf16.mxu0 0
    %1489 = vmatpush1.bf16.msra.mxu0 %v1307
    %1490 = vmatprep.subr.bf16.mxu0 0
    %1491 = vmatpush1.bf16.msra.mxu0 %v1308
    %1492 = vmatprep.subr.bf16.mxu0 0
    %1493 = vmatpush1.bf16.msra.mxu0 %v1309
    %1494 = vmatprep.subr.bf16.mxu0 0
    %1495 = vmatpush1.bf16.msra.mxu0 %v1310
    %1496 = vmatprep.subr.bf16.mxu0 0
    %1497 = vmatpush1.bf16.msra.mxu0 %v1311
    %1498 = vmatprep.subr.bf16.mxu0 0
    %1499 = vmatpush1.bf16.msra.mxu0 %v1312
    %1500 = vmatprep.subr.bf16.mxu0 0
    %1501 = vmatpush1.bf16.msra.mxu0 %v1313
    %1502 = vmatprep.subr.bf16.mxu0 0
    %1503 = vmatpush1.bf16.msra.mxu0 %v1314
    %1504 = vmatprep.subr.bf16.mxu0 0
    %1505 = vmatpush1.bf16.msra.mxu0 %v1315
    %1506 = vmatprep.subr.bf16.mxu0 0
    %1507 = vmatpush1.bf16.msra.mxu0 %v1316
    %1508 = vmatprep.subr.bf16.mxu0 0
    %1509 = vmatpush1.bf16.msra.mxu0 %v1317
    %1510 = vmatprep.mubr.bf16.mxu0 %v876
    %1511 = vmatmul.mubr.bf16.gmra.mrb[0].mxu0 %v875
    %v1512 = vpop.f32.mrb[0].mxu0
    %v1513 = vadd.f32 %v1473, %v1512
    %v1514 = vpop.f32.mrb[0].mxu0
    %v1515 = vpop.f32.mrb[0].mxu0
    %v1516 = vpop.f32.mrb[0].mxu0
    %1517 = vdwg.mxu0
    %1518 = vmatprep.subr.bf16.mxu0 0
    %1519 = vmatpush1.bf16.msra.mxu0 %v1318
    %1520 = vmatprep.subr.bf16.mxu0 0
    %1521 = vmatpush1.bf16.msra.mxu0 %v1319
    %1522 = vmatprep.subr.bf16.mxu0 0
    %1523 = vmatpush1.bf16.msra.mxu0 %v1320
    %1524 = vmatprep.subr.bf16.mxu0 0
    %1525 = vmatpush1.bf16.msra.mxu0 %v1321
    %1526 = vmatprep.subr.bf16.mxu0 0
    %1527 = vmatpush1.bf16.msra.mxu0 %v1322
    %1528 = vmatprep.subr.bf16.mxu0 0
    %1529 = vmatpush1.bf16.msra.mxu0 %v1323
    %1530 = vmatprep.subr.bf16.mxu0 0
    %1531 = vmatpush1.bf16.msra.mxu0 %v1324
    %1532 = vmatprep.subr.bf16.mxu0 0
    %1533 = vmatpush1.bf16.msra.mxu0 %v1325
    %1534 = vmatprep.subr.bf16.mxu0 0
    %1535 = vmatpush1.bf16.msra.mxu0 %v1326
    %1536 = vmatprep.subr.bf16.mxu0 0
    %1537 = vmatpush1.bf16.msra.mxu0 %v1327
    %1538 = vmatprep.subr.bf16.mxu0 0
    %1539 = vmatpush1.bf16.msra.mxu0 %v1328
    %1540 = vmatprep.subr.bf16.mxu0 0
    %1541 = vmatpush1.bf16.msra.mxu0 %v1329
    %1542 = vmatprep.subr.bf16.mxu0 0
    %1543 = vmatpush1.bf16.msra.mxu0 %v1330
    %1544 = vmatprep.subr.bf16.mxu0 0
    %1545 = vmatpush1.bf16.msra.mxu0 %v1331
    %1546 = vmatprep.subr.bf16.mxu0 0
    %1547 = vmatpush1.bf16.msra.mxu0 %v1332
    %1548 = vmatprep.subr.bf16.mxu0 0
    %1549 = vmatpush1.bf16.msra.mxu0 %v1333
    %1550 = vmatprep.mubr.bf16.mxu0 %v878
    %1551 = vmatmul.mubr.bf16.gmra.mrb[0].mxu0 %v877
    %v1552 = vpop.f32.mrb[0].mxu0
    %v1553 = vadd.f32 %v1513, %v1552
    %v1554 = vpop.f32.mrb[0].mxu0
    %v1555 = vpop.f32.mrb[0].mxu0
    %v1556 = vpop.f32.mrb[0].mxu0
    %1557 = vdwg.mxu0
    %vm1558 = vcmask 257024
    %v1559 = vsel %vm1558, %v1553, 0.0
    %v1560 = vrot.slane %v1559, 4
    %v1561 = vadd.f32 %v1559, %v1560
    %v1562 = vrot.slane %v1561, 2
    %v1563 = vadd.f32 %v1561, %v1562
    %v1564 = vrot.slane %v1563, 1
    %v1565 = vadd.f32 %v1563, %v1564
    %v1566 = vrcp.pop 4.0
    %v1567 = vmul.f32 %v1565, %v1566
    %v1568 = vsub.f32 %v1553, %v1567
    %v1569 = vmul.f32 %v1568, %v1568
    %v1570 = vsel %vm1558, %v1569, 0.0
    %v1571 = vrot.slane %v1570, 4
    %v1572 = vadd.f32 %v1570, %v1571
    %v1573 = vrot.slane %v1572, 2
    %v1574 = vadd.f32 %v1572, %v1573
    %v1575 = vrot.slane %v1574, 1
    %v1576 = vadd.f32 %v1574, %v1575
    %v1577 = vmul.f32 %v1576, %v1566
    %v1578 = vadd.f32 %v1577, 1e-05
    %v1579 = vrsqrt.pop %v1578
    %v1580 = vmul.f32 %v1568, %v1579
    %v1581 = vld [vmem:[%s7] sm:$0x1]
    %v1583 = vlaneseq
    %v1584 = vshrl.u32 %v1583, 7
    %v1585 = vsub.s32 0, %v1584
    %v1586 = vrot.slane %v1581, %v1585
    %v1588 = vmul.f32 %v1580, %v1586
    %v1589 = vld [vmem:[%s8] sm:$0x1]
    %v1591 = vlaneseq
    %v1592 = vshrl.u32 %v1591, 7
    %v1593 = vsub.s32 0, %v1592
    %v1594 = vrot.slane %v1589, %v1593
    %v1596 = vadd.f32 %v1588, %v1594
    %v1597 = vmax.f32 %v1596, 0.0
    %1598 = vst.msk [vmem:[#allocation2] sm:$0xf] %vm1558, %v1597
    // Predicated region
    $region38: #{pointnet2_forward.11} parent=1 // pred_check
      _
    $region39: #{pointnet2_forward.11} parent=1 // pred_check_branch
      %1600 = sbr.rel (0) target = $region41
    $region40: #{pointnet2_forward.11} parent=1 // pred_region
      %s1602 = ssub.s32 64, 64
      %1603 = vsyncadd [#allocation3], %s1602
      %s1605 = sshll.u32 [#allocation2], 4
      %s1606 = int_to_ptr.vmem [resolvable:$true] %s1605
      %1608 = dma.vmem_to_hbm [thread:$0]  %s1606, 64, %s9, [#allocation3]
    $region41: #{pointnet2_forward.11} parent=1 // pred_fallthru
      _
    // Predicated region
    $region42: #{pointnet2_forward.11} parent=1 // pred_check
      _
    $region43: #{pointnet2_forward.11} parent=1 // pred_check_branch
      %1610 = sbr.rel (0) target = $region45
    $region44: #{pointnet2_forward.11} parent=1 // pred_region
      %1611 = dma.done [#allocation3], 64
    $region45: #{pointnet2_forward.11} parent=1 // pred_fallthru
      _
    %1612 = vsyncpa [#allocation3], 1

</llo_original>
